<compile_context>
chip_gen: v7x
topology: tpu7x:2x2x1
jax: 0.10.0
libtpu: 0.0.40
codegen_flags: <defaults>
</compile_context>

<pallas_src>
import functools

import numpy as np
import jax
import jax.numpy as jnp
from jax import lax
from jax.experimental import pallas as pl
from jax.experimental.pallas import tpu as pltpu


KERNEL_SIZE = 9


# ----------------------------- Pallas kernel --------------------------------
def _tcn_kernel(p_ref, x_ref, xsc_ref, y_ref, *, S, K, L, dilations, off):
    """One grid step: TB samples.

    p_ref   : SMEM f32[P]   -- packed weights/biases (scalar reads)
    x_ref   : VMEM f32[TB,L] -- time series (channel 0; num_input_ts == 1)
    xsc_ref : VMEM f32[TB,S] -- input scalars
    y_ref   : VMEM f32[TB,L] -- output
    """
    d1, d2, d3 = dilations
    half = (K - 1) // 2
    x0 = x_ref[...].astype(jnp.float32)                         # (TB, L)

    def rolled(x, j, dil):
        # circular conv tap: want xr[t] = x[(t + (j - half)*dil) mod L]
        shift = (-(j - half) * dil) % L
        return pltpu.roll(x, shift, 1) if shift else x

    # ---- ts_branch: circular Conv1d(1 -> S+1, dil=d1) + tanh ---------------
    C1 = S + 1
    acc1 = [None] * C1
    for j in range(K):                                          # 9 rolls, shared
        xr = rolled(x0, j, d1)
        for co in range(C1):
            w = p_ref[off["w1"] + co * K + j]                   # scalar from SMEM
            t = xr * w
            acc1[co] = t if acc1[co] is None else acc1[co] + t
    h1 = [jnp.tanh(acc1[co] + p_ref[off["b1"] + co]) for co in range(C1)]

    # ---- scalar_branch: Linear(S -> S) + tanh, added to last S channels ----
    xsc = xsc_ref[...].astype(jnp.float32)                      # (TB, S)
    for i in range(S):
        a = None
        for k in range(S):
            t = xsc[:, k:k + 1] * p_ref[off["wl"] + i * S + k]  # (TB, 1)
            a = t if a is None else a + t
        sc_i = jnp.tanh(a + p_ref[off["bl"] + i])               # (TB, 1)
        # cat([b_proc[:, :-S], b_proc[:, -S:] + scalars[..., None]]) == add to
        # channels 1..S (channel 0 untouched)
        h1[1 + i] = h1[1 + i] + sc_i                            # lane broadcast

    # ---- upper_tcn[0]: circular Conv1d(S+1 -> 8, dil=d2) + tanh ------------
    C2 = 8
    acc2 = [None] * C2
    for ci in range(C1):
        for j in range(K):                                      # 45 rolls, shared
            xr = rolled(h1[ci], j, d2)
            for co in range(C2):
                w = p_ref[off["w2"] + (co * C1 + ci) * K + j]
                t = xr * w
                acc2[co] = t if acc2[co] is None else acc2[co] + t
    h2 = [jnp.tanh(acc2[co] + p_ref[off["b2"] + co]) for co in range(C2)]

    # ---- upper_tcn[1]: circular Conv1d(8 -> 1, dil=d3) + Identity ----------
    acc3 = None
    for ci in range(C2):
        for j in range(K):
            xr = rolled(h2[ci], j, d3)
            w = p_ref[off["w3"] + ci * K + j]
            t = xr * w
            acc3 = t if acc3 is None else acc3 + t
    y = acc3 + p_ref[off["b3"]]                                 # (TB, L)

    # ---- residual with input channel 0 + per-sample mean removal -----------
    y = y + x0
    y = y - jnp.mean(y, axis=-1, keepdims=True)                 # per-row mean
    y_ref[...] = y.astype(y_ref.dtype)


# ------------------------------- wrapper -------------------------------------
def tcn_with_scalars_as_bias(x_ts, x_scalars, params, *, block_b=None):
    """x_ts: (B, 1, L) float32, x_scalars: (B, S) float32 -> (B, 1, L) float32."""
    B, c_ts, L = x_ts.shape
    S = x_scalars.shape[1]
    assert c_ts == 1, "kernel implements the default num_input_ts=1 config"
    K = params["w1"].shape[-1]

    # Pack all weights/biases into one flat f32 vector (lives in SMEM).
    names = ["w1", "b1", "wl", "bl", "w2", "b2", "w3", "b3"]
    off, cur, flat = {}, 0, []
    for n in names:
        a = jnp.asarray(params[n], jnp.float32).reshape(-1)
        off[n] = cur
        cur += a.shape[0]
        flat.append(a)
    packed = jnp.concatenate(flat)                              # (P,)

    # Batch tile: multiple of 8 sublanes; >=2 grid steps when B is large enough
    # (keeps both v7x TensorCores busy); capped to keep vreg/VMEM pressure modest.
    def rup(a, m):
        return (a + m - 1) // m * m

    if block_b is None:
        TB = rup(B, 8) if B <= 8 else min(256, rup((B + 1) // 2, 8))
    else:
        TB = rup(block_b, 8)
    Bp = rup(B, TB)
    grid = Bp // TB

    x2 = x_ts.reshape(B, L).astype(jnp.float32)                 # sublane-dense
    xsc = x_scalars.astype(jnp.float32)
    if Bp != B:                                                 # pad batch rows
        x2 = jnp.pad(x2, ((0, Bp - B), (0, 0)))
        xsc = jnp.pad(xsc, ((0, Bp - B), (0, 0)))

    kernel = functools.partial(_tcn_kernel, S=S, K=K, L=L,
                               dilations=(4, 8, 16),            # 2**(i+2)
                               off=off)

    y = pl.pallas_call(
        kernel,
        out_shape=jax.ShapeDtypeStruct((Bp, L), jnp.float32),
        grid_spec=pltpu.PrefetchScalarGridSpec(
            num_scalar_prefetch=0,
            grid=(grid,),
            in_specs=[
                pl.BlockSpec(memory_space=pltpu.MemorySpace.SMEM),  # packed weights
                pl.BlockSpec((TB, L), lambda b: (b, 0)),            # x_ts rows
                pl.BlockSpec((TB, S), lambda b: (b, 0)),            # x_scalars rows
            ],
            out_specs=pl.BlockSpec((TB, L), lambda b: (b, 0)),
        ),
        compiler_params=pltpu.CompilerParams(
            dimension_semantics=("parallel",)),
    )(packed, x2, xsc)

    return y[:B].reshape(B, 1, L)


# -------------------------- pure-JAX reference --------------------------------
def _ref_circ_conv(x, w, b, dilation):
    # x: (B, Ci, L), w: (Co, Ci, K) torch layout, b: (Co,)
    K = w.shape[-1]
    P = (K - 1) // 2 * dilation
    xp = jnp.pad(x, ((0, 0), (0, 0), (P, P)), mode="wrap")      # circular padding
    y = lax.conv_general_dilated(
        xp, w, window_strides=(1,), padding="VALID", rhs_dilation=(dilation,),
        dimension_numbers=("NCH", "OIH", "NCH"),
        precision=lax.Precision.HIGHEST)
    return y + b[None, :, None]


def reference_forward(x_ts, x_scalars, p):
    b_proc = jnp.tanh(_ref_circ_conv(x_ts, p["w1"], p["b1"], 4))
    scalar_proc = jnp.tanh(
        jnp.dot(x_scalars, p["wl"].T, precision=lax.Precision.HIGHEST) + p["bl"])
    S = scalar_proc.shape[1]
    catted = jnp.concatenate(
        [b_proc[:, :-S, :], b_proc[:, -S:, :] + scalar_proc[:, :, None]], axis=1)
    h2 = jnp.tanh(_ref_circ_conv(catted, p["w2"], p["b2"], 8))
    y = _ref_circ_conv(h2, p["w3"], p["b3"], 16)
    y = y + x_ts[:, :1, :]
    y = y - jnp.mean(y, axis=-1, keepdims=True)
    return y


# --------------------------------- main ---------------------------------------
if __name__ == "__main__":
    # num_input_scalars=4, num_input_ts=1; B chosen non-multiple-of-8 to exercise
    # the batch-padding path and give a 2-step grid.
    B, S, L, K = 70, 4, 128, KERNEL_SIZE

    key = jax.random.PRNGKey(0)
    ks = jax.random.split(key, 10)
    nrm = lambda k, s: jax.random.normal(k, s, dtype=jnp.float32)

    params = {
        "w1": 0.01 * nrm(ks[0], (S + 1, 1, K)),   # Conv1d(1 -> S+1)
        "b1": 0.01 * nrm(ks[1], (S + 1,)),
        "wl": nrm(ks[2], (S, S)) / jnp.sqrt(S),   # Linear(S -> S)
        "bl": 0.01 * nrm(ks[3], (S,)),
        "w2": 0.01 * nrm(ks[4], (8, S + 1, K)),   # Conv1d(S+1 -> 8)
        "b2": 0.01 * nrm(ks[5], (8,)),
        "w3": 0.01 * nrm(ks[6], (1, 8, K)),       # Conv1d(8 -> 1)
        "b3": 0.01 * nrm(ks[7], (1,)),
    }

    x_ts = nrm(ks[8], (B, 1, L))       # (#batch, #channels, #length)
    x_scalars = nrm(ks[9], (B, S))     # (#batch, #scalars)

    y = tcn_with_scalars_as_bias(x_ts, x_scalars, params)
    y = jax.block_until_ready(y)

    y_ref = jax.block_until_ready(reference_forward(x_ts, x_scalars, params))
    np.testing.assert_allclose(np.asarray(y), np.asarray(y_ref),
                               rtol=1e-3, atol=1e-3)

    # TODO(synk): Dropout1d is only implemented as the eval-mode no-op (p=0.0 in
    # the default config); weight_norm is folded into plain conv weights.
    print("KERNEL_OK")
</pallas_src>

<mosaic_0001>
module attributes {stable_mosaic.version = 11 : i64} {
  func.func @_tcn_kernel(%arg0: i32, %arg1: memref<511xf32, #tpu.memory_space<smem>>, %arg2: memref<40x128xf32, #tpu.memory_space<vmem>>, %arg3: memref<40x4xf32, #tpu.memory_space<vmem>>, %arg4: memref<40x128xf32, #tpu.memory_space<vmem>>) attributes {dimension_semantics = [#tpu.dimension_semantics<parallel>], iteration_bounds = array<i64: 2>, scalar_prefetch = 0 : i64, scratch_operands = 0 : i64, tpu.core_type = #tpu.core_type<tc>, window_params = [{transform_indices = @transform_0, window_bounds = array<i64: 511>}, {transform_indices = @transform_1, window_bounds = array<i64: 40, 128>}, {transform_indices = @transform_2, window_bounds = array<i64: 40, 4>}, {transform_indices = @transform_3, window_bounds = array<i64: 40, 128>}]} {
    %c0 = arith.constant 0 : index
    %c0_0 = arith.constant 0 : index
    %0 = vector.load %arg2[%c0, %c0_0] : memref<40x128xf32, #tpu.memory_space<vmem>>, vector<40x128xf32>
    %c16_i32 = arith.constant 16 : i32
    %1 = tpu.dynamic_rotate %0 by %c16_i32 dim 1 : vector<40x128xf32>, i32 -> vector<40x128xf32>
    %c0_1 = arith.constant 0 : index
    %2 = memref.load %arg1[%c0_1] : memref<511xf32, #tpu.memory_space<smem>>
    %3 = vector.broadcast %2 : f32 to vector<40x128xf32>
    %4 = arith.mulf %1, %3 : vector<40x128xf32>
    %c9 = arith.constant 9 : index
    %5 = memref.load %arg1[%c9] : memref<511xf32, #tpu.memory_space<smem>>
    %6 = vector.broadcast %5 : f32 to vector<40x128xf32>
    %7 = arith.mulf %1, %6 : vector<40x128xf32>
    %c18 = arith.constant 18 : index
    %8 = memref.load %arg1[%c18] : memref<511xf32, #tpu.memory_space<smem>>
    %9 = vector.broadcast %8 : f32 to vector<40x128xf32>
    %10 = arith.mulf %1, %9 : vector<40x128xf32>
    %c27 = arith.constant 27 : index
    %11 = memref.load %arg1[%c27] : memref<511xf32, #tpu.memory_space<smem>>
    %12 = vector.broadcast %11 : f32 to vector<40x128xf32>
    %13 = arith.mulf %1, %12 : vector<40x128xf32>
    %c36 = arith.constant 36 : index
    %14 = memref.load %arg1[%c36] : memref<511xf32, #tpu.memory_space<smem>>
    %15 = vector.broadcast %14 : f32 to vector<40x128xf32>
    %16 = arith.mulf %1, %15 : vector<40x128xf32>
    %c12_i32 = arith.constant 12 : i32
    %17 = tpu.dynamic_rotate %0 by %c12_i32 dim 1 : vector<40x128xf32>, i32 -> vector<40x128xf32>
    %c1 = arith.constant 1 : index
    %18 = memref.load %arg1[%c1] : memref<511xf32, #tpu.memory_space<smem>>
    %19 = vector.broadcast %18 : f32 to vector<40x128xf32>
    %20 = arith.mulf %17, %19 : vector<40x128xf32>
    %21 = arith.addf %4, %20 : vector<40x128xf32>
    %c10 = arith.constant 10 : index
    %22 = memref.load %arg1[%c10] : memref<511xf32, #tpu.memory_space<smem>>
    %23 = vector.broadcast %22 : f32 to vector<40x128xf32>
    %24 = arith.mulf %17, %23 : vector<40x128xf32>
    %25 = arith.addf %7, %24 : vector<40x128xf32>
    %c19 = arith.constant 19 : index
    %26 = memref.load %arg1[%c19] : memref<511xf32, #tpu.memory_space<smem>>
    %27 = vector.broadcast %26 : f32 to vector<40x128xf32>
    %28 = arith.mulf %17, %27 : vector<40x128xf32>
    %29 = arith.addf %10, %28 : vector<40x128xf32>
    %c28 = arith.constant 28 : index
    %30 = memref.load %arg1[%c28] : memref<511xf32, #tpu.memory_space<smem>>
    %31 = vector.broadcast %30 : f32 to vector<40x128xf32>
    %32 = arith.mulf %17, %31 : vector<40x128xf32>
    %33 = arith.addf %13, %32 : vector<40x128xf32>
    %c37 = arith.constant 37 : index
    %34 = memref.load %arg1[%c37] : memref<511xf32, #tpu.memory_space<smem>>
    %35 = vector.broadcast %34 : f32 to vector<40x128xf32>
    %36 = arith.mulf %17, %35 : vector<40x128xf32>
    %37 = arith.addf %16, %36 : vector<40x128xf32>
    %c8_i32 = arith.constant 8 : i32
    %38 = tpu.dynamic_rotate %0 by %c8_i32 dim 1 : vector<40x128xf32>, i32 -> vector<40x128xf32>
    %c2 = arith.constant 2 : index
    %39 = memref.load %arg1[%c2] : memref<511xf32, #tpu.memory_space<smem>>
    %40 = vector.broadcast %39 : f32 to vector<40x128xf32>
    %41 = arith.mulf %38, %40 : vector<40x128xf32>
    %42 = arith.addf %21, %41 : vector<40x128xf32>
    %c11 = arith.constant 11 : index
    %43 = memref.load %arg1[%c11] : memref<511xf32, #tpu.memory_space<smem>>
    %44 = vector.broadcast %43 : f32 to vector<40x128xf32>
    %45 = arith.mulf %38, %44 : vector<40x128xf32>
    %46 = arith.addf %25, %45 : vector<40x128xf32>
    %c20 = arith.constant 20 : index
    %47 = memref.load %arg1[%c20] : memref<511xf32, #tpu.memory_space<smem>>
    %48 = vector.broadcast %47 : f32 to vector<40x128xf32>
    %49 = arith.mulf %38, %48 : vector<40x128xf32>
    %50 = arith.addf %29, %49 : vector<40x128xf32>
    %c29 = arith.constant 29 : index
    %51 = memref.load %arg1[%c29] : memref<511xf32, #tpu.memory_space<smem>>
    %52 = vector.broadcast %51 : f32 to vector<40x128xf32>
    %53 = arith.mulf %38, %52 : vector<40x128xf32>
    %54 = arith.addf %33, %53 : vector<40x128xf32>
    %c38 = arith.constant 38 : index
    %55 = memref.load %arg1[%c38] : memref<511xf32, #tpu.memory_space<smem>>
    %56 = vector.broadcast %55 : f32 to vector<40x128xf32>
    %57 = arith.mulf %38, %56 : vector<40x128xf32>
    %58 = arith.addf %37, %57 : vector<40x128xf32>
    %c4_i32 = arith.constant 4 : i32
    %59 = tpu.dynamic_rotate %0 by %c4_i32 dim 1 : vector<40x128xf32>, i32 -> vector<40x128xf32>
    %c3 = arith.constant 3 : index
    %60 = memref.load %arg1[%c3] : memref<511xf32, #tpu.memory_space<smem>>
    %61 = vector.broadcast %60 : f32 to vector<40x128xf32>
    %62 = arith.mulf %59, %61 : vector<40x128xf32>
    %63 = arith.addf %42, %62 : vector<40x128xf32>
    %c12 = arith.constant 12 : index
    %64 = memref.load %arg1[%c12] : memref<511xf32, #tpu.memory_space<smem>>
    %65 = vector.broadcast %64 : f32 to vector<40x128xf32>
    %66 = arith.mulf %59, %65 : vector<40x128xf32>
    %67 = arith.addf %46, %66 : vector<40x128xf32>
    %c21 = arith.constant 21 : index
    %68 = memref.load %arg1[%c21] : memref<511xf32, #tpu.memory_space<smem>>
    %69 = vector.broadcast %68 : f32 to vector<40x128xf32>
    %70 = arith.mulf %59, %69 : vector<40x128xf32>
    %71 = arith.addf %50, %70 : vector<40x128xf32>
    %c30 = arith.constant 30 : index
    %72 = memref.load %arg1[%c30] : memref<511xf32, #tpu.memory_space<smem>>
    %73 = vector.broadcast %72 : f32 to vector<40x128xf32>
    %74 = arith.mulf %59, %73 : vector<40x128xf32>
    %75 = arith.addf %54, %74 : vector<40x128xf32>
    %c39 = arith.constant 39 : index
    %76 = memref.load %arg1[%c39] : memref<511xf32, #tpu.memory_space<smem>>
    %77 = vector.broadcast %76 : f32 to vector<40x128xf32>
    %78 = arith.mulf %59, %77 : vector<40x128xf32>
    %79 = arith.addf %58, %78 : vector<40x128xf32>
    %c4 = arith.constant 4 : index
    %80 = memref.load %arg1[%c4] : memref<511xf32, #tpu.memory_space<smem>>
    %81 = vector.broadcast %80 : f32 to vector<40x128xf32>
    %82 = arith.mulf %0, %81 : vector<40x128xf32>
    %83 = arith.addf %63, %82 : vector<40x128xf32>
    %c13 = arith.constant 13 : index
    %84 = memref.load %arg1[%c13] : memref<511xf32, #tpu.memory_space<smem>>
    %85 = vector.broadcast %84 : f32 to vector<40x128xf32>
    %86 = arith.mulf %0, %85 : vector<40x128xf32>
    %87 = arith.addf %67, %86 : vector<40x128xf32>
    %c22 = arith.constant 22 : index
    %88 = memref.load %arg1[%c22] : memref<511xf32, #tpu.memory_space<smem>>
    %89 = vector.broadcast %88 : f32 to vector<40x128xf32>
    %90 = arith.mulf %0, %89 : vector<40x128xf32>
    %91 = arith.addf %71, %90 : vector<40x128xf32>
    %c31 = arith.constant 31 : index
    %92 = memref.load %arg1[%c31] : memref<511xf32, #tpu.memory_space<smem>>
    %93 = vector.broadcast %92 : f32 to vector<40x128xf32>
    %94 = arith.mulf %0, %93 : vector<40x128xf32>
    %95 = arith.addf %75, %94 : vector<40x128xf32>
    %c40 = arith.constant 40 : index
    %96 = memref.load %arg1[%c40] : memref<511xf32, #tpu.memory_space<smem>>
    %97 = vector.broadcast %96 : f32 to vector<40x128xf32>
    %98 = arith.mulf %0, %97 : vector<40x128xf32>
    %99 = arith.addf %79, %98 : vector<40x128xf32>
    %c124_i32 = arith.constant 124 : i32
    %100 = tpu.dynamic_rotate %0 by %c124_i32 dim 1 : vector<40x128xf32>, i32 -> vector<40x128xf32>
    %c5 = arith.constant 5 : index
    %101 = memref.load %arg1[%c5] : memref<511xf32, #tpu.memory_space<smem>>
    %102 = vector.broadcast %101 : f32 to vector<40x128xf32>
    %103 = arith.mulf %100, %102 : vector<40x128xf32>
    %104 = arith.addf %83, %103 : vector<40x128xf32>
    %c14 = arith.constant 14 : index
    %105 = memref.load %arg1[%c14] : memref<511xf32, #tpu.memory_space<smem>>
    %106 = vector.broadcast %105 : f32 to vector<40x128xf32>
    %107 = arith.mulf %100, %106 : vector<40x128xf32>
    %108 = arith.addf %87, %107 : vector<40x128xf32>
    %c23 = arith.constant 23 : index
    %109 = memref.load %arg1[%c23] : memref<511xf32, #tpu.memory_space<smem>>
    %110 = vector.broadcast %109 : f32 to vector<40x128xf32>
    %111 = arith.mulf %100, %110 : vector<40x128xf32>
    %112 = arith.addf %91, %111 : vector<40x128xf32>
    %c32 = arith.constant 32 : index
    %113 = memref.load %arg1[%c32] : memref<511xf32, #tpu.memory_space<smem>>
    %114 = vector.broadcast %113 : f32 to vector<40x128xf32>
    %115 = arith.mulf %100, %114 : vector<40x128xf32>
    %116 = arith.addf %95, %115 : vector<40x128xf32>
    %c41 = arith.constant 41 : index
    %117 = memref.load %arg1[%c41] : memref<511xf32, #tpu.memory_space<smem>>
    %118 = vector.broadcast %117 : f32 to vector<40x128xf32>
    %119 = arith.mulf %100, %118 : vector<40x128xf32>
    %120 = arith.addf %99, %119 : vector<40x128xf32>
    %c120_i32 = arith.constant 120 : i32
    %121 = tpu.dynamic_rotate %0 by %c120_i32 dim 1 : vector<40x128xf32>, i32 -> vector<40x128xf32>
    %c6 = arith.constant 6 : index
    %122 = memref.load %arg1[%c6] : memref<511xf32, #tpu.memory_space<smem>>
    %123 = vector.broadcast %122 : f32 to vector<40x128xf32>
    %124 = arith.mulf %121, %123 : vector<40x128xf32>
    %125 = arith.addf %104, %124 : vector<40x128xf32>
    %c15 = arith.constant 15 : index
    %126 = memref.load %arg1[%c15] : memref<511xf32, #tpu.memory_space<smem>>
    %127 = vector.broadcast %126 : f32 to vector<40x128xf32>
    %128 = arith.mulf %121, %127 : vector<40x128xf32>
    %129 = arith.addf %108, %128 : vector<40x128xf32>
    %c24 = arith.constant 24 : index
    %130 = memref.load %arg1[%c24] : memref<511xf32, #tpu.memory_space<smem>>
    %131 = vector.broadcast %130 : f32 to vector<40x128xf32>
    %132 = arith.mulf %121, %131 : vector<40x128xf32>
    %133 = arith.addf %112, %132 : vector<40x128xf32>
    %c33 = arith.constant 33 : index
    %134 = memref.load %arg1[%c33] : memref<511xf32, #tpu.memory_space<smem>>
    %135 = vector.broadcast %134 : f32 to vector<40x128xf32>
    %136 = arith.mulf %121, %135 : vector<40x128xf32>
    %137 = arith.addf %116, %136 : vector<40x128xf32>
    %c42 = arith.constant 42 : index
    %138 = memref.load %arg1[%c42] : memref<511xf32, #tpu.memory_space<smem>>
    %139 = vector.broadcast %138 : f32 to vector<40x128xf32>
    %140 = arith.mulf %121, %139 : vector<40x128xf32>
    %141 = arith.addf %120, %140 : vector<40x128xf32>
    %c116_i32 = arith.constant 116 : i32
    %142 = tpu.dynamic_rotate %0 by %c116_i32 dim 1 : vector<40x128xf32>, i32 -> vector<40x128xf32>
    %c7 = arith.constant 7 : index
    %143 = memref.load %arg1[%c7] : memref<511xf32, #tpu.memory_space<smem>>
    %144 = vector.broadcast %143 : f32 to vector<40x128xf32>
    %145 = arith.mulf %142, %144 : vector<40x128xf32>
    %146 = arith.addf %125, %145 : vector<40x128xf32>
    %c16 = arith.constant 16 : index
    %147 = memref.load %arg1[%c16] : memref<511xf32, #tpu.memory_space<smem>>
    %148 = vector.broadcast %147 : f32 to vector<40x128xf32>
    %149 = arith.mulf %142, %148 : vector<40x128xf32>
    %150 = arith.addf %129, %149 : vector<40x128xf32>
    %c25 = arith.constant 25 : index
    %151 = memref.load %arg1[%c25] : memref<511xf32, #tpu.memory_space<smem>>
    %152 = vector.broadcast %151 : f32 to vector<40x128xf32>
    %153 = arith.mulf %142, %152 : vector<40x128xf32>
    %154 = arith.addf %133, %153 : vector<40x128xf32>
    %c34 = arith.constant 34 : index
    %155 = memref.load %arg1[%c34] : memref<511xf32, #tpu.memory_space<smem>>
    %156 = vector.broadcast %155 : f32 to vector<40x128xf32>
    %157 = arith.mulf %142, %156 : vector<40x128xf32>
    %158 = arith.addf %137, %157 : vector<40x128xf32>
    %c43 = arith.constant 43 : index
    %159 = memref.load %arg1[%c43] : memref<511xf32, #tpu.memory_space<smem>>
    %160 = vector.broadcast %159 : f32 to vector<40x128xf32>
    %161 = arith.mulf %142, %160 : vector<40x128xf32>
    %162 = arith.addf %141, %161 : vector<40x128xf32>
    %c112_i32 = arith.constant 112 : i32
    %163 = tpu.dynamic_rotate %0 by %c112_i32 dim 1 : vector<40x128xf32>, i32 -> vector<40x128xf32>
    %c8 = arith.constant 8 : index
    %164 = memref.load %arg1[%c8] : memref<511xf32, #tpu.memory_space<smem>>
    %165 = vector.broadcast %164 : f32 to vector<40x128xf32>
    %166 = arith.mulf %163, %165 : vector<40x128xf32>
    %167 = arith.addf %146, %166 : vector<40x128xf32>
    %c17 = arith.constant 17 : index
    %168 = memref.load %arg1[%c17] : memref<511xf32, #tpu.memory_space<smem>>
    %169 = vector.broadcast %168 : f32 to vector<40x128xf32>
    %170 = arith.mulf %163, %169 : vector<40x128xf32>
    %171 = arith.addf %150, %170 : vector<40x128xf32>
    %c26 = arith.constant 26 : index
    %172 = memref.load %arg1[%c26] : memref<511xf32, #tpu.memory_space<smem>>
    %173 = vector.broadcast %172 : f32 to vector<40x128xf32>
    %174 = arith.mulf %163, %173 : vector<40x128xf32>
    %175 = arith.addf %154, %174 : vector<40x128xf32>
    %c35 = arith.constant 35 : index
    %176 = memref.load %arg1[%c35] : memref<511xf32, #tpu.memory_space<smem>>
    %177 = vector.broadcast %176 : f32 to vector<40x128xf32>
    %178 = arith.mulf %163, %177 : vector<40x128xf32>
    %179 = arith.addf %158, %178 : vector<40x128xf32>
    %c44 = arith.constant 44 : index
    %180 = memref.load %arg1[%c44] : memref<511xf32, #tpu.memory_space<smem>>
    %181 = vector.broadcast %180 : f32 to vector<40x128xf32>
    %182 = arith.mulf %163, %181 : vector<40x128xf32>
    %183 = arith.addf %162, %182 : vector<40x128xf32>
    %c45 = arith.constant 45 : index
    %184 = memref.load %arg1[%c45] : memref<511xf32, #tpu.memory_space<smem>>
    %185 = vector.broadcast %184 : f32 to vector<40x128xf32>
    %186 = arith.addf %167, %185 : vector<40x128xf32>
    %187 = math.tanh %186 : vector<40x128xf32>
    %c46 = arith.constant 46 : index
    %188 = memref.load %arg1[%c46] : memref<511xf32, #tpu.memory_space<smem>>
    %189 = vector.broadcast %188 : f32 to vector<40x128xf32>
    %190 = arith.addf %171, %189 : vector<40x128xf32>
    %191 = math.tanh %190 : vector<40x128xf32>
    %c47 = arith.constant 47 : index
    %192 = memref.load %arg1[%c47] : memref<511xf32, #tpu.memory_space<smem>>
    %193 = vector.broadcast %192 : f32 to vector<40x128xf32>
    %194 = arith.addf %175, %193 : vector<40x128xf32>
    %195 = math.tanh %194 : vector<40x128xf32>
    %c48 = arith.constant 48 : index
    %196 = memref.load %arg1[%c48] : memref<511xf32, #tpu.memory_space<smem>>
    %197 = vector.broadcast %196 : f32 to vector<40x128xf32>
    %198 = arith.addf %179, %197 : vector<40x128xf32>
    %199 = math.tanh %198 : vector<40x128xf32>
    %c49 = arith.constant 49 : index
    %200 = memref.load %arg1[%c49] : memref<511xf32, #tpu.memory_space<smem>>
    %201 = vector.broadcast %200 : f32 to vector<40x128xf32>
    %202 = arith.addf %183, %201 : vector<40x128xf32>
    %203 = math.tanh %202 : vector<40x128xf32>
    %c0_2 = arith.constant 0 : index
    %c0_3 = arith.constant 0 : index
    %204 = vector.load %arg3[%c0_2, %c0_3] : memref<40x4xf32, #tpu.memory_space<vmem>>, vector<40x4xf32>
    %205 = vector.extract_strided_slice %204 {offsets = [0, 0], sizes = [40, 1], strides = [1, 1]} : vector<40x4xf32> to vector<40x1xf32>
    %c50 = arith.constant 50 : index
    %206 = memref.load %arg1[%c50] : memref<511xf32, #tpu.memory_space<smem>>
    %207 = vector.broadcast %206 : f32 to vector<40x1xf32>
    %208 = arith.mulf %205, %207 : vector<40x1xf32>
    %209 = vector.extract_strided_slice %204 {offsets = [0, 1], sizes = [40, 1], strides = [1, 1]} : vector<40x4xf32> to vector<40x1xf32>
    %c51 = arith.constant 51 : index
    %210 = memref.load %arg1[%c51] : memref<511xf32, #tpu.memory_space<smem>>
    %211 = vector.broadcast %210 : f32 to vector<40x1xf32>
    %212 = arith.mulf %209, %211 : vector<40x1xf32>
    %213 = arith.addf %208, %212 : vector<40x1xf32>
    %214 = vector.extract_strided_slice %204 {offsets = [0, 2], sizes = [40, 1], strides = [1, 1]} : vector<40x4xf32> to vector<40x1xf32>
    %c52 = arith.constant 52 : index
    %215 = memref.load %arg1[%c52] : memref<511xf32, #tpu.memory_space<smem>>
    %216 = vector.broadcast %215 : f32 to vector<40x1xf32>
    %217 = arith.mulf %214, %216 : vector<40x1xf32>
    %218 = arith.addf %213, %217 : vector<40x1xf32>
    %219 = vector.extract_strided_slice %204 {offsets = [0, 3], sizes = [40, 1], strides = [1, 1]} : vector<40x4xf32> to vector<40x1xf32>
    %c53 = arith.constant 53 : index
    %220 = memref.load %arg1[%c53] : memref<511xf32, #tpu.memory_space<smem>>
    %221 = vector.broadcast %220 : f32 to vector<40x1xf32>
    %222 = arith.mulf %219, %221 : vector<40x1xf32>
    %223 = arith.addf %218, %222 : vector<40x1xf32>
    %c66 = arith.constant 66 : index
    %224 = memref.load %arg1[%c66] : memref<511xf32, #tpu.memory_space<smem>>
    %225 = vector.broadcast %224 : f32 to vector<40x1xf32>
    %226 = arith.addf %223, %225 : vector<40x1xf32>
    %227 = math.tanh %226 : vector<40x1xf32>
    %228 = vector.broadcast %227 : vector<40x1xf32> to vector<40x128xf32>
    %229 = arith.addf %191, %228 : vector<40x128xf32>
    %230 = vector.extract_strided_slice %204 {offsets = [0, 0], sizes = [40, 1], strides = [1, 1]} : vector<40x4xf32> to vector<40x1xf32>
    %c54 = arith.constant 54 : index
    %231 = memref.load %arg1[%c54] : memref<511xf32, #tpu.memory_space<smem>>
    %232 = vector.broadcast %231 : f32 to vector<40x1xf32>
    %233 = arith.mulf %230, %232 : vector<40x1xf32>
    %234 = vector.extract_strided_slice %204 {offsets = [0, 1], sizes = [40, 1], strides = [1, 1]} : vector<40x4xf32> to vector<40x1xf32>
    %c55 = arith.constant 55 : index
    %235 = memref.load %arg1[%c55] : memref<511xf32, #tpu.memory_space<smem>>
    %236 = vector.broadcast %235 : f32 to vector<40x1xf32>
    %237 = arith.mulf %234, %236 : vector<40x1xf32>
    %238 = arith.addf %233, %237 : vector<40x1xf32>
    %239 = vector.extract_strided_slice %204 {offsets = [0, 2], sizes = [40, 1], strides = [1, 1]} : vector<40x4xf32> to vector<40x1xf32>
    %c56 = arith.constant 56 : index
    %240 = memref.load %arg1[%c56] : memref<511xf32, #tpu.memory_space<smem>>
    %241 = vector.broadcast %240 : f32 to vector<40x1xf32>
    %242 = arith.mulf %239, %241 : vector<40x1xf32>
    %243 = arith.addf %238, %242 : vector<40x1xf32>
    %244 = vector.extract_strided_slice %204 {offsets = [0, 3], sizes = [40, 1], strides = [1, 1]} : vector<40x4xf32> to vector<40x1xf32>
    %c57 = arith.constant 57 : index
    %245 = memref.load %arg1[%c57] : memref<511xf32, #tpu.memory_space<smem>>
    %246 = vector.broadcast %245 : f32 to vector<40x1xf32>
    %247 = arith.mulf %244, %246 : vector<40x1xf32>
    %248 = arith.addf %243, %247 : vector<40x1xf32>
    %c67 = arith.constant 67 : index
    %249 = memref.load %arg1[%c67] : memref<511xf32, #tpu.memory_space<smem>>
    %250 = vector.broadcast %249 : f32 to vector<40x1xf32>
    %251 = arith.addf %248, %250 : vector<40x1xf32>
    %252 = math.tanh %251 : vector<40x1xf32>
    %253 = vector.broadcast %252 : vector<40x1xf32> to vector<40x128xf32>
    %254 = arith.addf %195, %253 : vector<40x128xf32>
    %255 = vector.extract_strided_slice %204 {offsets = [0, 0], sizes = [40, 1], strides = [1, 1]} : vector<40x4xf32> to vector<40x1xf32>
    %c58 = arith.constant 58 : index
    %256 = memref.load %arg1[%c58] : memref<511xf32, #tpu.memory_space<smem>>
    %257 = vector.broadcast %256 : f32 to vector<40x1xf32>
    %258 = arith.mulf %255, %257 : vector<40x1xf32>
    %259 = vector.extract_strided_slice %204 {offsets = [0, 1], sizes = [40, 1], strides = [1, 1]} : vector<40x4xf32> to vector<40x1xf32>
    %c59 = arith.constant 59 : index
    %260 = memref.load %arg1[%c59] : memref<511xf32, #tpu.memory_space<smem>>
    %261 = vector.broadcast %260 : f32 to vector<40x1xf32>
    %262 = arith.mulf %259, %261 : vector<40x1xf32>
    %263 = arith.addf %258, %262 : vector<40x1xf32>
    %264 = vector.extract_strided_slice %204 {offsets = [0, 2], sizes = [40, 1], strides = [1, 1]} : vector<40x4xf32> to vector<40x1xf32>
    %c60 = arith.constant 60 : index
    %265 = memref.load %arg1[%c60] : memref<511xf32, #tpu.memory_space<smem>>
    %266 = vector.broadcast %265 : f32 to vector<40x1xf32>
    %267 = arith.mulf %264, %266 : vector<40x1xf32>
    %268 = arith.addf %263, %267 : vector<40x1xf32>
    %269 = vector.extract_strided_slice %204 {offsets = [0, 3], sizes = [40, 1], strides = [1, 1]} : vector<40x4xf32> to vector<40x1xf32>
    %c61 = arith.constant 61 : index
    %270 = memref.load %arg1[%c61] : memref<511xf32, #tpu.memory_space<smem>>
    %271 = vector.broadcast %270 : f32 to vector<40x1xf32>
    %272 = arith.mulf %269, %271 : vector<40x1xf32>
    %273 = arith.addf %268, %272 : vector<40x1xf32>
    %c68 = arith.constant 68 : index
    %274 = memref.load %arg1[%c68] : memref<511xf32, #tpu.memory_space<smem>>
    %275 = vector.broadcast %274 : f32 to vector<40x1xf32>
    %276 = arith.addf %273, %275 : vector<40x1xf32>
    %277 = math.tanh %276 : vector<40x1xf32>
    %278 = vector.broadcast %277 : vector<40x1xf32> to vector<40x128xf32>
    %279 = arith.addf %199, %278 : vector<40x128xf32>
    %280 = vector.extract_strided_slice %204 {offsets = [0, 0], sizes = [40, 1], strides = [1, 1]} : vector<40x4xf32> to vector<40x1xf32>
    %c62 = arith.constant 62 : index
    %281 = memref.load %arg1[%c62] : memref<511xf32, #tpu.memory_space<smem>>
    %282 = vector.broadcast %281 : f32 to vector<40x1xf32>
    %283 = arith.mulf %280, %282 : vector<40x1xf32>
    %284 = vector.extract_strided_slice %204 {offsets = [0, 1], sizes = [40, 1], strides = [1, 1]} : vector<40x4xf32> to vector<40x1xf32>
    %c63 = arith.constant 63 : index
    %285 = memref.load %arg1[%c63] : memref<511xf32, #tpu.memory_space<smem>>
    %286 = vector.broadcast %285 : f32 to vector<40x1xf32>
    %287 = arith.mulf %284, %286 : vector<40x1xf32>
    %288 = arith.addf %283, %287 : vector<40x1xf32>
    %289 = vector.extract_strided_slice %204 {offsets = [0, 2], sizes = [40, 1], strides = [1, 1]} : vector<40x4xf32> to vector<40x1xf32>
    %c64 = arith.constant 64 : index
    %290 = memref.load %arg1[%c64] : memref<511xf32, #tpu.memory_space<smem>>
    %291 = vector.broadcast %290 : f32 to vector<40x1xf32>
    %292 = arith.mulf %289, %291 : vector<40x1xf32>
    %293 = arith.addf %288, %292 : vector<40x1xf32>
    %294 = vector.extract_strided_slice %204 {offsets = [0, 3], sizes = [40, 1], strides = [1, 1]} : vector<40x4xf32> to vector<40x1xf32>
    %c65 = arith.constant 65 : index
    %295 = memref.load %arg1[%c65] : memref<511xf32, #tpu.memory_space<smem>>
    %296 = vector.broadcast %295 : f32 to vector<40x1xf32>
    %297 = arith.mulf %294, %296 : vector<40x1xf32>
    %298 = arith.addf %293, %297 : vector<40x1xf32>
    %c69 = arith.constant 69 : index
    %299 = memref.load %arg1[%c69] : memref<511xf32, #tpu.memory_space<smem>>
    %300 = vector.broadcast %299 : f32 to vector<40x1xf32>
    %301 = arith.addf %298, %300 : vector<40x1xf32>
    %302 = math.tanh %301 : vector<40x1xf32>
    %303 = vector.broadcast %302 : vector<40x1xf32> to vector<40x128xf32>
    %304 = arith.addf %203, %303 : vector<40x128xf32>
    %c32_i32 = arith.constant 32 : i32
    %305 = tpu.dynamic_rotate %187 by %c32_i32 dim 1 : vector<40x128xf32>, i32 -> vector<40x128xf32>
    %c70 = arith.constant 70 : index
    %306 = memref.load %arg1[%c70] : memref<511xf32, #tpu.memory_space<smem>>
    %307 = vector.broadcast %306 : f32 to vector<40x128xf32>
    %308 = arith.mulf %305, %307 : vector<40x128xf32>
    %c115 = arith.constant 115 : index
    %309 = memref.load %arg1[%c115] : memref<511xf32, #tpu.memory_space<smem>>
    %310 = vector.broadcast %309 : f32 to vector<40x128xf32>
    %311 = arith.mulf %305, %310 : vector<40x128xf32>
    %c160 = arith.constant 160 : index
    %312 = memref.load %arg1[%c160] : memref<511xf32, #tpu.memory_space<smem>>
    %313 = vector.broadcast %312 : f32 to vector<40x128xf32>
    %314 = arith.mulf %305, %313 : vector<40x128xf32>
    %c205 = arith.constant 205 : index
    %315 = memref.load %arg1[%c205] : memref<511xf32, #tpu.memory_space<smem>>
    %316 = vector.broadcast %315 : f32 to vector<40x128xf32>
    %317 = arith.mulf %305, %316 : vector<40x128xf32>
    %c250 = arith.constant 250 : index
    %318 = memref.load %arg1[%c250] : memref<511xf32, #tpu.memory_space<smem>>
    %319 = vector.broadcast %318 : f32 to vector<40x128xf32>
    %320 = arith.mulf %305, %319 : vector<40x128xf32>
    %c295 = arith.constant 295 : index
    %321 = memref.load %arg1[%c295] : memref<511xf32, #tpu.memory_space<smem>>
    %322 = vector.broadcast %321 : f32 to vector<40x128xf32>
    %323 = arith.mulf %305, %322 : vector<40x128xf32>
    %c340 = arith.constant 340 : index
    %324 = memref.load %arg1[%c340] : memref<511xf32, #tpu.memory_space<smem>>
    %325 = vector.broadcast %324 : f32 to vector<40x128xf32>
    %326 = arith.mulf %305, %325 : vector<40x128xf32>
    %c385 = arith.constant 385 : index
    %327 = memref.load %arg1[%c385] : memref<511xf32, #tpu.memory_space<smem>>
    %328 = vector.broadcast %327 : f32 to vector<40x128xf32>
    %329 = arith.mulf %305, %328 : vector<40x128xf32>
    %c24_i32 = arith.constant 24 : i32
    %330 = tpu.dynamic_rotate %187 by %c24_i32 dim 1 : vector<40x128xf32>, i32 -> vector<40x128xf32>
    %c71 = arith.constant 71 : index
    %331 = memref.load %arg1[%c71] : memref<511xf32, #tpu.memory_space<smem>>
    %332 = vector.broadcast %331 : f32 to vector<40x128xf32>
    %333 = arith.mulf %330, %332 : vector<40x128xf32>
    %334 = arith.addf %308, %333 : vector<40x128xf32>
    %c116 = arith.constant 116 : index
    %335 = memref.load %arg1[%c116] : memref<511xf32, #tpu.memory_space<smem>>
    %336 = vector.broadcast %335 : f32 to vector<40x128xf32>
    %337 = arith.mulf %330, %336 : vector<40x128xf32>
    %338 = arith.addf %311, %337 : vector<40x128xf32>
    %c161 = arith.constant 161 : index
    %339 = memref.load %arg1[%c161] : memref<511xf32, #tpu.memory_space<smem>>
    %340 = vector.broadcast %339 : f32 to vector<40x128xf32>
    %341 = arith.mulf %330, %340 : vector<40x128xf32>
    %342 = arith.addf %314, %341 : vector<40x128xf32>
    %c206 = arith.constant 206 : index
    %343 = memref.load %arg1[%c206] : memref<511xf32, #tpu.memory_space<smem>>
    %344 = vector.broadcast %343 : f32 to vector<40x128xf32>
    %345 = arith.mulf %330, %344 : vector<40x128xf32>
    %346 = arith.addf %317, %345 : vector<40x128xf32>
    %c251 = arith.constant 251 : index
    %347 = memref.load %arg1[%c251] : memref<511xf32, #tpu.memory_space<smem>>
    %348 = vector.broadcast %347 : f32 to vector<40x128xf32>
    %349 = arith.mulf %330, %348 : vector<40x128xf32>
    %350 = arith.addf %320, %349 : vector<40x128xf32>
    %c296 = arith.constant 296 : index
    %351 = memref.load %arg1[%c296] : memref<511xf32, #tpu.memory_space<smem>>
    %352 = vector.broadcast %351 : f32 to vector<40x128xf32>
    %353 = arith.mulf %330, %352 : vector<40x128xf32>
    %354 = arith.addf %323, %353 : vector<40x128xf32>
    %c341 = arith.constant 341 : index
    %355 = memref.load %arg1[%c341] : memref<511xf32, #tpu.memory_space<smem>>
    %356 = vector.broadcast %355 : f32 to vector<40x128xf32>
    %357 = arith.mulf %330, %356 : vector<40x128xf32>
    %358 = arith.addf %326, %357 : vector<40x128xf32>
    %c386 = arith.constant 386 : index
    %359 = memref.load %arg1[%c386] : memref<511xf32, #tpu.memory_space<smem>>
    %360 = vector.broadcast %359 : f32 to vector<40x128xf32>
    %361 = arith.mulf %330, %360 : vector<40x128xf32>
    %362 = arith.addf %329, %361 : vector<40x128xf32>
    %c16_i32_4 = arith.constant 16 : i32
    %363 = tpu.dynamic_rotate %187 by %c16_i32_4 dim 1 : vector<40x128xf32>, i32 -> vector<40x128xf32>
    %c72 = arith.constant 72 : index
    %364 = memref.load %arg1[%c72] : memref<511xf32, #tpu.memory_space<smem>>
    %365 = vector.broadcast %364 : f32 to vector<40x128xf32>
    %366 = arith.mulf %363, %365 : vector<40x128xf32>
    %367 = arith.addf %334, %366 : vector<40x128xf32>
    %c117 = arith.constant 117 : index
    %368 = memref.load %arg1[%c117] : memref<511xf32, #tpu.memory_space<smem>>
    %369 = vector.broadcast %368 : f32 to vector<40x128xf32>
    %370 = arith.mulf %363, %369 : vector<40x128xf32>
    %371 = arith.addf %338, %370 : vector<40x128xf32>
    %c162 = arith.constant 162 : index
    %372 = memref.load %arg1[%c162] : memref<511xf32, #tpu.memory_space<smem>>
    %373 = vector.broadcast %372 : f32 to vector<40x128xf32>
    %374 = arith.mulf %363, %373 : vector<40x128xf32>
    %375 = arith.addf %342, %374 : vector<40x128xf32>
    %c207 = arith.constant 207 : index
    %376 = memref.load %arg1[%c207] : memref<511xf32, #tpu.memory_space<smem>>
    %377 = vector.broadcast %376 : f32 to vector<40x128xf32>
    %378 = arith.mulf %363, %377 : vector<40x128xf32>
    %379 = arith.addf %346, %378 : vector<40x128xf32>
    %c252 = arith.constant 252 : index
    %380 = memref.load %arg1[%c252] : memref<511xf32, #tpu.memory_space<smem>>
    %381 = vector.broadcast %380 : f32 to vector<40x128xf32>
    %382 = arith.mulf %363, %381 : vector<40x128xf32>
    %383 = arith.addf %350, %382 : vector<40x128xf32>
    %c297 = arith.constant 297 : index
    %384 = memref.load %arg1[%c297] : memref<511xf32, #tpu.memory_space<smem>>
    %385 = vector.broadcast %384 : f32 to vector<40x128xf32>
    %386 = arith.mulf %363, %385 : vector<40x128xf32>
    %387 = arith.addf %354, %386 : vector<40x128xf32>
    %c342 = arith.constant 342 : index
    %388 = memref.load %arg1[%c342] : memref<511xf32, #tpu.memory_space<smem>>
    %389 = vector.broadcast %388 : f32 to vector<40x128xf32>
    %390 = arith.mulf %363, %389 : vector<40x128xf32>
    %391 = arith.addf %358, %390 : vector<40x128xf32>
    %c387 = arith.constant 387 : index
    %392 = memref.load %arg1[%c387] : memref<511xf32, #tpu.memory_space<smem>>
    %393 = vector.broadcast %392 : f32 to vector<40x128xf32>
    %394 = arith.mulf %363, %393 : vector<40x128xf32>
    %395 = arith.addf %362, %394 : vector<40x128xf32>
    %c8_i32_5 = arith.constant 8 : i32
    %396 = tpu.dynamic_rotate %187 by %c8_i32_5 dim 1 : vector<40x128xf32>, i32 -> vector<40x128xf32>
    %c73 = arith.constant 73 : index
    %397 = memref.load %arg1[%c73] : memref<511xf32, #tpu.memory_space<smem>>
    %398 = vector.broadcast %397 : f32 to vector<40x128xf32>
    %399 = arith.mulf %396, %398 : vector<40x128xf32>
    %400 = arith.addf %367, %399 : vector<40x128xf32>
    %c118 = arith.constant 118 : index
    %401 = memref.load %arg1[%c118] : memref<511xf32, #tpu.memory_space<smem>>
    %402 = vector.broadcast %401 : f32 to vector<40x128xf32>
    %403 = arith.mulf %396, %402 : vector<40x128xf32>
    %404 = arith.addf %371, %403 : vector<40x128xf32>
    %c163 = arith.constant 163 : index
    %405 = memref.load %arg1[%c163] : memref<511xf32, #tpu.memory_space<smem>>
    %406 = vector.broadcast %405 : f32 to vector<40x128xf32>
    %407 = arith.mulf %396, %406 : vector<40x128xf32>
    %408 = arith.addf %375, %407 : vector<40x128xf32>
    %c208 = arith.constant 208 : index
    %409 = memref.load %arg1[%c208] : memref<511xf32, #tpu.memory_space<smem>>
    %410 = vector.broadcast %409 : f32 to vector<40x128xf32>
    %411 = arith.mulf %396, %410 : vector<40x128xf32>
    %412 = arith.addf %379, %411 : vector<40x128xf32>
    %c253 = arith.constant 253 : index
    %413 = memref.load %arg1[%c253] : memref<511xf32, #tpu.memory_space<smem>>
    %414 = vector.broadcast %413 : f32 to vector<40x128xf32>
    %415 = arith.mulf %396, %414 : vector<40x128xf32>
    %416 = arith.addf %383, %415 : vector<40x128xf32>
    %c298 = arith.constant 298 : index
    %417 = memref.load %arg1[%c298] : memref<511xf32, #tpu.memory_space<smem>>
    %418 = vector.broadcast %417 : f32 to vector<40x128xf32>
    %419 = arith.mulf %396, %418 : vector<40x128xf32>
    %420 = arith.addf %387, %419 : vector<40x128xf32>
    %c343 = arith.constant 343 : index
    %421 = memref.load %arg1[%c343] : memref<511xf32, #tpu.memory_space<smem>>
    %422 = vector.broadcast %421 : f32 to vector<40x128xf32>
    %423 = arith.mulf %396, %422 : vector<40x128xf32>
    %424 = arith.addf %391, %423 : vector<40x128xf32>
    %c388 = arith.constant 388 : index
    %425 = memref.load %arg1[%c388] : memref<511xf32, #tpu.memory_space<smem>>
    %426 = vector.broadcast %425 : f32 to vector<40x128xf32>
    %427 = arith.mulf %396, %426 : vector<40x128xf32>
    %428 = arith.addf %395, %427 : vector<40x128xf32>
    %c74 = arith.constant 74 : index
    %429 = memref.load %arg1[%c74] : memref<511xf32, #tpu.memory_space<smem>>
    %430 = vector.broadcast %429 : f32 to vector<40x128xf32>
    %431 = arith.mulf %187, %430 : vector<40x128xf32>
    %432 = arith.addf %400, %431 : vector<40x128xf32>
    %c119 = arith.constant 119 : index
    %433 = memref.load %arg1[%c119] : memref<511xf32, #tpu.memory_space<smem>>
    %434 = vector.broadcast %433 : f32 to vector<40x128xf32>
    %435 = arith.mulf %187, %434 : vector<40x128xf32>
    %436 = arith.addf %404, %435 : vector<40x128xf32>
    %c164 = arith.constant 164 : index
    %437 = memref.load %arg1[%c164] : memref<511xf32, #tpu.memory_space<smem>>
    %438 = vector.broadcast %437 : f32 to vector<40x128xf32>
    %439 = arith.mulf %187, %438 : vector<40x128xf32>
    %440 = arith.addf %408, %439 : vector<40x128xf32>
    %c209 = arith.constant 209 : index
    %441 = memref.load %arg1[%c209] : memref<511xf32, #tpu.memory_space<smem>>
    %442 = vector.broadcast %441 : f32 to vector<40x128xf32>
    %443 = arith.mulf %187, %442 : vector<40x128xf32>
    %444 = arith.addf %412, %443 : vector<40x128xf32>
    %c254 = arith.constant 254 : index
    %445 = memref.load %arg1[%c254] : memref<511xf32, #tpu.memory_space<smem>>
    %446 = vector.broadcast %445 : f32 to vector<40x128xf32>
    %447 = arith.mulf %187, %446 : vector<40x128xf32>
    %448 = arith.addf %416, %447 : vector<40x128xf32>
    %c299 = arith.constant 299 : index
    %449 = memref.load %arg1[%c299] : memref<511xf32, #tpu.memory_space<smem>>
    %450 = vector.broadcast %449 : f32 to vector<40x128xf32>
    %451 = arith.mulf %187, %450 : vector<40x128xf32>
    %452 = arith.addf %420, %451 : vector<40x128xf32>
    %c344 = arith.constant 344 : index
    %453 = memref.load %arg1[%c344] : memref<511xf32, #tpu.memory_space<smem>>
    %454 = vector.broadcast %453 : f32 to vector<40x128xf32>
    %455 = arith.mulf %187, %454 : vector<40x128xf32>
    %456 = arith.addf %424, %455 : vector<40x128xf32>
    %c389 = arith.constant 389 : index
    %457 = memref.load %arg1[%c389] : memref<511xf32, #tpu.memory_space<smem>>
    %458 = vector.broadcast %457 : f32 to vector<40x128xf32>
    %459 = arith.mulf %187, %458 : vector<40x128xf32>
    %460 = arith.addf %428, %459 : vector<40x128xf32>
    %c120_i32_6 = arith.constant 120 : i32
    %461 = tpu.dynamic_rotate %187 by %c120_i32_6 dim 1 : vector<40x128xf32>, i32 -> vector<40x128xf32>
    %c75 = arith.constant 75 : index
    %462 = memref.load %arg1[%c75] : memref<511xf32, #tpu.memory_space<smem>>
    %463 = vector.broadcast %462 : f32 to vector<40x128xf32>
    %464 = arith.mulf %461, %463 : vector<40x128xf32>
    %465 = arith.addf %432, %464 : vector<40x128xf32>
    %c120 = arith.constant 120 : index
    %466 = memref.load %arg1[%c120] : memref<511xf32, #tpu.memory_space<smem>>
    %467 = vector.broadcast %466 : f32 to vector<40x128xf32>
    %468 = arith.mulf %461, %467 : vector<40x128xf32>
    %469 = arith.addf %436, %468 : vector<40x128xf32>
    %c165 = arith.constant 165 : index
    %470 = memref.load %arg1[%c165] : memref<511xf32, #tpu.memory_space<smem>>
    %471 = vector.broadcast %470 : f32 to vector<40x128xf32>
    %472 = arith.mulf %461, %471 : vector<40x128xf32>
    %473 = arith.addf %440, %472 : vector<40x128xf32>
    %c210 = arith.constant 210 : index
    %474 = memref.load %arg1[%c210] : memref<511xf32, #tpu.memory_space<smem>>
    %475 = vector.broadcast %474 : f32 to vector<40x128xf32>
    %476 = arith.mulf %461, %475 : vector<40x128xf32>
    %477 = arith.addf %444, %476 : vector<40x128xf32>
    %c255 = arith.constant 255 : index
    %478 = memref.load %arg1[%c255] : memref<511xf32, #tpu.memory_space<smem>>
    %479 = vector.broadcast %478 : f32 to vector<40x128xf32>
    %480 = arith.mulf %461, %479 : vector<40x128xf32>
    %481 = arith.addf %448, %480 : vector<40x128xf32>
    %c300 = arith.constant 300 : index
    %482 = memref.load %arg1[%c300] : memref<511xf32, #tpu.memory_space<smem>>
    %483 = vector.broadcast %482 : f32 to vector<40x128xf32>
    %484 = arith.mulf %461, %483 : vector<40x128xf32>
    %485 = arith.addf %452, %484 : vector<40x128xf32>
    %c345 = arith.constant 345 : index
    %486 = memref.load %arg1[%c345] : memref<511xf32, #tpu.memory_space<smem>>
    %487 = vector.broadcast %486 : f32 to vector<40x128xf32>
    %488 = arith.mulf %461, %487 : vector<40x128xf32>
    %489 = arith.addf %456, %488 : vector<40x128xf32>
    %c390 = arith.constant 390 : index
    %490 = memref.load %arg1[%c390] : memref<511xf32, #tpu.memory_space<smem>>
    %491 = vector.broadcast %490 : f32 to vector<40x128xf32>
    %492 = arith.mulf %461, %491 : vector<40x128xf32>
    %493 = arith.addf %460, %492 : vector<40x128xf32>
    %c112_i32_7 = arith.constant 112 : i32
    %494 = tpu.dynamic_rotate %187 by %c112_i32_7 dim 1 : vector<40x128xf32>, i32 -> vector<40x128xf32>
    %c76 = arith.constant 76 : index
    %495 = memref.load %arg1[%c76] : memref<511xf32, #tpu.memory_space<smem>>
    %496 = vector.broadcast %495 : f32 to vector<40x128xf32>
    %497 = arith.mulf %494, %496 : vector<40x128xf32>
    %498 = arith.addf %465, %497 : vector<40x128xf32>
    %c121 = arith.constant 121 : index
    %499 = memref.load %arg1[%c121] : memref<511xf32, #tpu.memory_space<smem>>
    %500 = vector.broadcast %499 : f32 to vector<40x128xf32>
    %501 = arith.mulf %494, %500 : vector<40x128xf32>
    %502 = arith.addf %469, %501 : vector<40x128xf32>
    %c166 = arith.constant 166 : index
    %503 = memref.load %arg1[%c166] : memref<511xf32, #tpu.memory_space<smem>>
    %504 = vector.broadcast %503 : f32 to vector<40x128xf32>
    %505 = arith.mulf %494, %504 : vector<40x128xf32>
    %506 = arith.addf %473, %505 : vector<40x128xf32>
    %c211 = arith.constant 211 : index
    %507 = memref.load %arg1[%c211] : memref<511xf32, #tpu.memory_space<smem>>
    %508 = vector.broadcast %507 : f32 to vector<40x128xf32>
    %509 = arith.mulf %494, %508 : vector<40x128xf32>
    %510 = arith.addf %477, %509 : vector<40x128xf32>
    %c256 = arith.constant 256 : index
    %511 = memref.load %arg1[%c256] : memref<511xf32, #tpu.memory_space<smem>>
    %512 = vector.broadcast %511 : f32 to vector<40x128xf32>
    %513 = arith.mulf %494, %512 : vector<40x128xf32>
    %514 = arith.addf %481, %513 : vector<40x128xf32>
    %c301 = arith.constant 301 : index
    %515 = memref.load %arg1[%c301] : memref<511xf32, #tpu.memory_space<smem>>
    %516 = vector.broadcast %515 : f32 to vector<40x128xf32>
    %517 = arith.mulf %494, %516 : vector<40x128xf32>
    %518 = arith.addf %485, %517 : vector<40x128xf32>
    %c346 = arith.constant 346 : index
    %519 = memref.load %arg1[%c346] : memref<511xf32, #tpu.memory_space<smem>>
    %520 = vector.broadcast %519 : f32 to vector<40x128xf32>
    %521 = arith.mulf %494, %520 : vector<40x128xf32>
    %522 = arith.addf %489, %521 : vector<40x128xf32>
    %c391 = arith.constant 391 : index
    %523 = memref.load %arg1[%c391] : memref<511xf32, #tpu.memory_space<smem>>
    %524 = vector.broadcast %523 : f32 to vector<40x128xf32>
    %525 = arith.mulf %494, %524 : vector<40x128xf32>
    %526 = arith.addf %493, %525 : vector<40x128xf32>
    %c104_i32 = arith.constant 104 : i32
    %527 = tpu.dynamic_rotate %187 by %c104_i32 dim 1 : vector<40x128xf32>, i32 -> vector<40x128xf32>
    %c77 = arith.constant 77 : index
    %528 = memref.load %arg1[%c77] : memref<511xf32, #tpu.memory_space<smem>>
    %529 = vector.broadcast %528 : f32 to vector<40x128xf32>
    %530 = arith.mulf %527, %529 : vector<40x128xf32>
    %531 = arith.addf %498, %530 : vector<40x128xf32>
    %c122 = arith.constant 122 : index
    %532 = memref.load %arg1[%c122] : memref<511xf32, #tpu.memory_space<smem>>
    %533 = vector.broadcast %532 : f32 to vector<40x128xf32>
    %534 = arith.mulf %527, %533 : vector<40x128xf32>
    %535 = arith.addf %502, %534 : vector<40x128xf32>
    %c167 = arith.constant 167 : index
    %536 = memref.load %arg1[%c167] : memref<511xf32, #tpu.memory_space<smem>>
    %537 = vector.broadcast %536 : f32 to vector<40x128xf32>
    %538 = arith.mulf %527, %537 : vector<40x128xf32>
    %539 = arith.addf %506, %538 : vector<40x128xf32>
    %c212 = arith.constant 212 : index
    %540 = memref.load %arg1[%c212] : memref<511xf32, #tpu.memory_space<smem>>
    %541 = vector.broadcast %540 : f32 to vector<40x128xf32>
    %542 = arith.mulf %527, %541 : vector<40x128xf32>
    %543 = arith.addf %510, %542 : vector<40x128xf32>
    %c257 = arith.constant 257 : index
    %544 = memref.load %arg1[%c257] : memref<511xf32, #tpu.memory_space<smem>>
    %545 = vector.broadcast %544 : f32 to vector<40x128xf32>
    %546 = arith.mulf %527, %545 : vector<40x128xf32>
    %547 = arith.addf %514, %546 : vector<40x128xf32>
    %c302 = arith.constant 302 : index
    %548 = memref.load %arg1[%c302] : memref<511xf32, #tpu.memory_space<smem>>
    %549 = vector.broadcast %548 : f32 to vector<40x128xf32>
    %550 = arith.mulf %527, %549 : vector<40x128xf32>
    %551 = arith.addf %518, %550 : vector<40x128xf32>
    %c347 = arith.constant 347 : index
    %552 = memref.load %arg1[%c347] : memref<511xf32, #tpu.memory_space<smem>>
    %553 = vector.broadcast %552 : f32 to vector<40x128xf32>
    %554 = arith.mulf %527, %553 : vector<40x128xf32>
    %555 = arith.addf %522, %554 : vector<40x128xf32>
    %c392 = arith.constant 392 : index
    %556 = memref.load %arg1[%c392] : memref<511xf32, #tpu.memory_space<smem>>
    %557 = vector.broadcast %556 : f32 to vector<40x128xf32>
    %558 = arith.mulf %527, %557 : vector<40x128xf32>
    %559 = arith.addf %526, %558 : vector<40x128xf32>
    %c96_i32 = arith.constant 96 : i32
    %560 = tpu.dynamic_rotate %187 by %c96_i32 dim 1 : vector<40x128xf32>, i32 -> vector<40x128xf32>
    %c78 = arith.constant 78 : index
    %561 = memref.load %arg1[%c78] : memref<511xf32, #tpu.memory_space<smem>>
    %562 = vector.broadcast %561 : f32 to vector<40x128xf32>
    %563 = arith.mulf %560, %562 : vector<40x128xf32>
    %564 = arith.addf %531, %563 : vector<40x128xf32>
    %c123 = arith.constant 123 : index
    %565 = memref.load %arg1[%c123] : memref<511xf32, #tpu.memory_space<smem>>
    %566 = vector.broadcast %565 : f32 to vector<40x128xf32>
    %567 = arith.mulf %560, %566 : vector<40x128xf32>
    %568 = arith.addf %535, %567 : vector<40x128xf32>
    %c168 = arith.constant 168 : index
    %569 = memref.load %arg1[%c168] : memref<511xf32, #tpu.memory_space<smem>>
    %570 = vector.broadcast %569 : f32 to vector<40x128xf32>
    %571 = arith.mulf %560, %570 : vector<40x128xf32>
    %572 = arith.addf %539, %571 : vector<40x128xf32>
    %c213 = arith.constant 213 : index
    %573 = memref.load %arg1[%c213] : memref<511xf32, #tpu.memory_space<smem>>
    %574 = vector.broadcast %573 : f32 to vector<40x128xf32>
    %575 = arith.mulf %560, %574 : vector<40x128xf32>
    %576 = arith.addf %543, %575 : vector<40x128xf32>
    %c258 = arith.constant 258 : index
    %577 = memref.load %arg1[%c258] : memref<511xf32, #tpu.memory_space<smem>>
    %578 = vector.broadcast %577 : f32 to vector<40x128xf32>
    %579 = arith.mulf %560, %578 : vector<40x128xf32>
    %580 = arith.addf %547, %579 : vector<40x128xf32>
    %c303 = arith.constant 303 : index
    %581 = memref.load %arg1[%c303] : memref<511xf32, #tpu.memory_space<smem>>
    %582 = vector.broadcast %581 : f32 to vector<40x128xf32>
    %583 = arith.mulf %560, %582 : vector<40x128xf32>
    %584 = arith.addf %551, %583 : vector<40x128xf32>
    %c348 = arith.constant 348 : index
    %585 = memref.load %arg1[%c348] : memref<511xf32, #tpu.memory_space<smem>>
    %586 = vector.broadcast %585 : f32 to vector<40x128xf32>
    %587 = arith.mulf %560, %586 : vector<40x128xf32>
    %588 = arith.addf %555, %587 : vector<40x128xf32>
    %c393 = arith.constant 393 : index
    %589 = memref.load %arg1[%c393] : memref<511xf32, #tpu.memory_space<smem>>
    %590 = vector.broadcast %589 : f32 to vector<40x128xf32>
    %591 = arith.mulf %560, %590 : vector<40x128xf32>
    %592 = arith.addf %559, %591 : vector<40x128xf32>
    %c32_i32_8 = arith.constant 32 : i32
    %593 = tpu.dynamic_rotate %229 by %c32_i32_8 dim 1 : vector<40x128xf32>, i32 -> vector<40x128xf32>
    %c79 = arith.constant 79 : index
    %594 = memref.load %arg1[%c79] : memref<511xf32, #tpu.memory_space<smem>>
    %595 = vector.broadcast %594 : f32 to vector<40x128xf32>
    %596 = arith.mulf %593, %595 : vector<40x128xf32>
    %597 = arith.addf %564, %596 : vector<40x128xf32>
    %c124 = arith.constant 124 : index
    %598 = memref.load %arg1[%c124] : memref<511xf32, #tpu.memory_space<smem>>
    %599 = vector.broadcast %598 : f32 to vector<40x128xf32>
    %600 = arith.mulf %593, %599 : vector<40x128xf32>
    %601 = arith.addf %568, %600 : vector<40x128xf32>
    %c169 = arith.constant 169 : index
    %602 = memref.load %arg1[%c169] : memref<511xf32, #tpu.memory_space<smem>>
    %603 = vector.broadcast %602 : f32 to vector<40x128xf32>
    %604 = arith.mulf %593, %603 : vector<40x128xf32>
    %605 = arith.addf %572, %604 : vector<40x128xf32>
    %c214 = arith.constant 214 : index
    %606 = memref.load %arg1[%c214] : memref<511xf32, #tpu.memory_space<smem>>
    %607 = vector.broadcast %606 : f32 to vector<40x128xf32>
    %608 = arith.mulf %593, %607 : vector<40x128xf32>
    %609 = arith.addf %576, %608 : vector<40x128xf32>
    %c259 = arith.constant 259 : index
    %610 = memref.load %arg1[%c259] : memref<511xf32, #tpu.memory_space<smem>>
    %611 = vector.broadcast %610 : f32 to vector<40x128xf32>
    %612 = arith.mulf %593, %611 : vector<40x128xf32>
    %613 = arith.addf %580, %612 : vector<40x128xf32>
    %c304 = arith.constant 304 : index
    %614 = memref.load %arg1[%c304] : memref<511xf32, #tpu.memory_space<smem>>
    %615 = vector.broadcast %614 : f32 to vector<40x128xf32>
    %616 = arith.mulf %593, %615 : vector<40x128xf32>
    %617 = arith.addf %584, %616 : vector<40x128xf32>
    %c349 = arith.constant 349 : index
    %618 = memref.load %arg1[%c349] : memref<511xf32, #tpu.memory_space<smem>>
    %619 = vector.broadcast %618 : f32 to vector<40x128xf32>
    %620 = arith.mulf %593, %619 : vector<40x128xf32>
    %621 = arith.addf %588, %620 : vector<40x128xf32>
    %c394 = arith.constant 394 : index
    %622 = memref.load %arg1[%c394] : memref<511xf32, #tpu.memory_space<smem>>
    %623 = vector.broadcast %622 : f32 to vector<40x128xf32>
    %624 = arith.mulf %593, %623 : vector<40x128xf32>
    %625 = arith.addf %592, %624 : vector<40x128xf32>
    %c24_i32_9 = arith.constant 24 : i32
    %626 = tpu.dynamic_rotate %229 by %c24_i32_9 dim 1 : vector<40x128xf32>, i32 -> vector<40x128xf32>
    %c80 = arith.constant 80 : index
    %627 = memref.load %arg1[%c80] : memref<511xf32, #tpu.memory_space<smem>>
    %628 = vector.broadcast %627 : f32 to vector<40x128xf32>
    %629 = arith.mulf %626, %628 : vector<40x128xf32>
    %630 = arith.addf %597, %629 : vector<40x128xf32>
    %c125 = arith.constant 125 : index
    %631 = memref.load %arg1[%c125] : memref<511xf32, #tpu.memory_space<smem>>
    %632 = vector.broadcast %631 : f32 to vector<40x128xf32>
    %633 = arith.mulf %626, %632 : vector<40x128xf32>
    %634 = arith.addf %601, %633 : vector<40x128xf32>
    %c170 = arith.constant 170 : index
    %635 = memref.load %arg1[%c170] : memref<511xf32, #tpu.memory_space<smem>>
    %636 = vector.broadcast %635 : f32 to vector<40x128xf32>
    %637 = arith.mulf %626, %636 : vector<40x128xf32>
    %638 = arith.addf %605, %637 : vector<40x128xf32>
    %c215 = arith.constant 215 : index
    %639 = memref.load %arg1[%c215] : memref<511xf32, #tpu.memory_space<smem>>
    %640 = vector.broadcast %639 : f32 to vector<40x128xf32>
    %641 = arith.mulf %626, %640 : vector<40x128xf32>
    %642 = arith.addf %609, %641 : vector<40x128xf32>
    %c260 = arith.constant 260 : index
    %643 = memref.load %arg1[%c260] : memref<511xf32, #tpu.memory_space<smem>>
    %644 = vector.broadcast %643 : f32 to vector<40x128xf32>
    %645 = arith.mulf %626, %644 : vector<40x128xf32>
    %646 = arith.addf %613, %645 : vector<40x128xf32>
    %c305 = arith.constant 305 : index
    %647 = memref.load %arg1[%c305] : memref<511xf32, #tpu.memory_space<smem>>
    %648 = vector.broadcast %647 : f32 to vector<40x128xf32>
    %649 = arith.mulf %626, %648 : vector<40x128xf32>
    %650 = arith.addf %617, %649 : vector<40x128xf32>
    %c350 = arith.constant 350 : index
    %651 = memref.load %arg1[%c350] : memref<511xf32, #tpu.memory_space<smem>>
    %652 = vector.broadcast %651 : f32 to vector<40x128xf32>
    %653 = arith.mulf %626, %652 : vector<40x128xf32>
    %654 = arith.addf %621, %653 : vector<40x128xf32>
    %c395 = arith.constant 395 : index
    %655 = memref.load %arg1[%c395] : memref<511xf32, #tpu.memory_space<smem>>
    %656 = vector.broadcast %655 : f32 to vector<40x128xf32>
    %657 = arith.mulf %626, %656 : vector<40x128xf32>
    %658 = arith.addf %625, %657 : vector<40x128xf32>
    %c16_i32_10 = arith.constant 16 : i32
    %659 = tpu.dynamic_rotate %229 by %c16_i32_10 dim 1 : vector<40x128xf32>, i32 -> vector<40x128xf32>
    %c81 = arith.constant 81 : index
    %660 = memref.load %arg1[%c81] : memref<511xf32, #tpu.memory_space<smem>>
    %661 = vector.broadcast %660 : f32 to vector<40x128xf32>
    %662 = arith.mulf %659, %661 : vector<40x128xf32>
    %663 = arith.addf %630, %662 : vector<40x128xf32>
    %c126 = arith.constant 126 : index
    %664 = memref.load %arg1[%c126] : memref<511xf32, #tpu.memory_space<smem>>
    %665 = vector.broadcast %664 : f32 to vector<40x128xf32>
    %666 = arith.mulf %659, %665 : vector<40x128xf32>
    %667 = arith.addf %634, %666 : vector<40x128xf32>
    %c171 = arith.constant 171 : index
    %668 = memref.load %arg1[%c171] : memref<511xf32, #tpu.memory_space<smem>>
    %669 = vector.broadcast %668 : f32 to vector<40x128xf32>
    %670 = arith.mulf %659, %669 : vector<40x128xf32>
    %671 = arith.addf %638, %670 : vector<40x128xf32>
    %c216 = arith.constant 216 : index
    %672 = memref.load %arg1[%c216] : memref<511xf32, #tpu.memory_space<smem>>
    %673 = vector.broadcast %672 : f32 to vector<40x128xf32>
    %674 = arith.mulf %659, %673 : vector<40x128xf32>
    %675 = arith.addf %642, %674 : vector<40x128xf32>
    %c261 = arith.constant 261 : index
    %676 = memref.load %arg1[%c261] : memref<511xf32, #tpu.memory_space<smem>>
    %677 = vector.broadcast %676 : f32 to vector<40x128xf32>
    %678 = arith.mulf %659, %677 : vector<40x128xf32>
    %679 = arith.addf %646, %678 : vector<40x128xf32>
    %c306 = arith.constant 306 : index
    %680 = memref.load %arg1[%c306] : memref<511xf32, #tpu.memory_space<smem>>
    %681 = vector.broadcast %680 : f32 to vector<40x128xf32>
    %682 = arith.mulf %659, %681 : vector<40x128xf32>
    %683 = arith.addf %650, %682 : vector<40x128xf32>
    %c351 = arith.constant 351 : index
    %684 = memref.load %arg1[%c351] : memref<511xf32, #tpu.memory_space<smem>>
    %685 = vector.broadcast %684 : f32 to vector<40x128xf32>
    %686 = arith.mulf %659, %685 : vector<40x128xf32>
    %687 = arith.addf %654, %686 : vector<40x128xf32>
    %c396 = arith.constant 396 : index
    %688 = memref.load %arg1[%c396] : memref<511xf32, #tpu.memory_space<smem>>
    %689 = vector.broadcast %688 : f32 to vector<40x128xf32>
    %690 = arith.mulf %659, %689 : vector<40x128xf32>
    %691 = arith.addf %658, %690 : vector<40x128xf32>
    %c8_i32_11 = arith.constant 8 : i32
    %692 = tpu.dynamic_rotate %229 by %c8_i32_11 dim 1 : vector<40x128xf32>, i32 -> vector<40x128xf32>
    %c82 = arith.constant 82 : index
    %693 = memref.load %arg1[%c82] : memref<511xf32, #tpu.memory_space<smem>>
    %694 = vector.broadcast %693 : f32 to vector<40x128xf32>
    %695 = arith.mulf %692, %694 : vector<40x128xf32>
    %696 = arith.addf %663, %695 : vector<40x128xf32>
    %c127 = arith.constant 127 : index
    %697 = memref.load %arg1[%c127] : memref<511xf32, #tpu.memory_space<smem>>
    %698 = vector.broadcast %697 : f32 to vector<40x128xf32>
    %699 = arith.mulf %692, %698 : vector<40x128xf32>
    %700 = arith.addf %667, %699 : vector<40x128xf32>
    %c172 = arith.constant 172 : index
    %701 = memref.load %arg1[%c172] : memref<511xf32, #tpu.memory_space<smem>>
    %702 = vector.broadcast %701 : f32 to vector<40x128xf32>
    %703 = arith.mulf %692, %702 : vector<40x128xf32>
    %704 = arith.addf %671, %703 : vector<40x128xf32>
    %c217 = arith.constant 217 : index
    %705 = memref.load %arg1[%c217] : memref<511xf32, #tpu.memory_space<smem>>
    %706 = vector.broadcast %705 : f32 to vector<40x128xf32>
    %707 = arith.mulf %692, %706 : vector<40x128xf32>
    %708 = arith.addf %675, %707 : vector<40x128xf32>
    %c262 = arith.constant 262 : index
    %709 = memref.load %arg1[%c262] : memref<511xf32, #tpu.memory_space<smem>>
    %710 = vector.broadcast %709 : f32 to vector<40x128xf32>
    %711 = arith.mulf %692, %710 : vector<40x128xf32>
    %712 = arith.addf %679, %711 : vector<40x128xf32>
    %c307 = arith.constant 307 : index
    %713 = memref.load %arg1[%c307] : memref<511xf32, #tpu.memory_space<smem>>
    %714 = vector.broadcast %713 : f32 to vector<40x128xf32>
    %715 = arith.mulf %692, %714 : vector<40x128xf32>
    %716 = arith.addf %683, %715 : vector<40x128xf32>
    %c352 = arith.constant 352 : index
    %717 = memref.load %arg1[%c352] : memref<511xf32, #tpu.memory_space<smem>>
    %718 = vector.broadcast %717 : f32 to vector<40x128xf32>
    %719 = arith.mulf %692, %718 : vector<40x128xf32>
    %720 = arith.addf %687, %719 : vector<40x128xf32>
    %c397 = arith.constant 397 : index
    %721 = memref.load %arg1[%c397] : memref<511xf32, #tpu.memory_space<smem>>
    %722 = vector.broadcast %721 : f32 to vector<40x128xf32>
    %723 = arith.mulf %692, %722 : vector<40x128xf32>
    %724 = arith.addf %691, %723 : vector<40x128xf32>
    %c83 = arith.constant 83 : index
    %725 = memref.load %arg1[%c83] : memref<511xf32, #tpu.memory_space<smem>>
    %726 = vector.broadcast %725 : f32 to vector<40x128xf32>
    %727 = arith.mulf %229, %726 : vector<40x128xf32>
    %728 = arith.addf %696, %727 : vector<40x128xf32>
    %c128 = arith.constant 128 : index
    %729 = memref.load %arg1[%c128] : memref<511xf32, #tpu.memory_space<smem>>
    %730 = vector.broadcast %729 : f32 to vector<40x128xf32>
    %731 = arith.mulf %229, %730 : vector<40x128xf32>
    %732 = arith.addf %700, %731 : vector<40x128xf32>
    %c173 = arith.constant 173 : index
    %733 = memref.load %arg1[%c173] : memref<511xf32, #tpu.memory_space<smem>>
    %734 = vector.broadcast %733 : f32 to vector<40x128xf32>
    %735 = arith.mulf %229, %734 : vector<40x128xf32>
    %736 = arith.addf %704, %735 : vector<40x128xf32>
    %c218 = arith.constant 218 : index
    %737 = memref.load %arg1[%c218] : memref<511xf32, #tpu.memory_space<smem>>
    %738 = vector.broadcast %737 : f32 to vector<40x128xf32>
    %739 = arith.mulf %229, %738 : vector<40x128xf32>
    %740 = arith.addf %708, %739 : vector<40x128xf32>
    %c263 = arith.constant 263 : index
    %741 = memref.load %arg1[%c263] : memref<511xf32, #tpu.memory_space<smem>>
    %742 = vector.broadcast %741 : f32 to vector<40x128xf32>
    %743 = arith.mulf %229, %742 : vector<40x128xf32>
    %744 = arith.addf %712, %743 : vector<40x128xf32>
    %c308 = arith.constant 308 : index
    %745 = memref.load %arg1[%c308] : memref<511xf32, #tpu.memory_space<smem>>
    %746 = vector.broadcast %745 : f32 to vector<40x128xf32>
    %747 = arith.mulf %229, %746 : vector<40x128xf32>
    %748 = arith.addf %716, %747 : vector<40x128xf32>
    %c353 = arith.constant 353 : index
    %749 = memref.load %arg1[%c353] : memref<511xf32, #tpu.memory_space<smem>>
    %750 = vector.broadcast %749 : f32 to vector<40x128xf32>
    %751 = arith.mulf %229, %750 : vector<40x128xf32>
    %752 = arith.addf %720, %751 : vector<40x128xf32>
    %c398 = arith.constant 398 : index
    %753 = memref.load %arg1[%c398] : memref<511xf32, #tpu.memory_space<smem>>
    %754 = vector.broadcast %753 : f32 to vector<40x128xf32>
    %755 = arith.mulf %229, %754 : vector<40x128xf32>
    %756 = arith.addf %724, %755 : vector<40x128xf32>
    %c120_i32_12 = arith.constant 120 : i32
    %757 = tpu.dynamic_rotate %229 by %c120_i32_12 dim 1 : vector<40x128xf32>, i32 -> vector<40x128xf32>
    %c84 = arith.constant 84 : index
    %758 = memref.load %arg1[%c84] : memref<511xf32, #tpu.memory_space<smem>>
    %759 = vector.broadcast %758 : f32 to vector<40x128xf32>
    %760 = arith.mulf %757, %759 : vector<40x128xf32>
    %761 = arith.addf %728, %760 : vector<40x128xf32>
    %c129 = arith.constant 129 : index
    %762 = memref.load %arg1[%c129] : memref<511xf32, #tpu.memory_space<smem>>
    %763 = vector.broadcast %762 : f32 to vector<40x128xf32>
    %764 = arith.mulf %757, %763 : vector<40x128xf32>
    %765 = arith.addf %732, %764 : vector<40x128xf32>
    %c174 = arith.constant 174 : index
    %766 = memref.load %arg1[%c174] : memref<511xf32, #tpu.memory_space<smem>>
    %767 = vector.broadcast %766 : f32 to vector<40x128xf32>
    %768 = arith.mulf %757, %767 : vector<40x128xf32>
    %769 = arith.addf %736, %768 : vector<40x128xf32>
    %c219 = arith.constant 219 : index
    %770 = memref.load %arg1[%c219] : memref<511xf32, #tpu.memory_space<smem>>
    %771 = vector.broadcast %770 : f32 to vector<40x128xf32>
    %772 = arith.mulf %757, %771 : vector<40x128xf32>
    %773 = arith.addf %740, %772 : vector<40x128xf32>
    %c264 = arith.constant 264 : index
    %774 = memref.load %arg1[%c264] : memref<511xf32, #tpu.memory_space<smem>>
    %775 = vector.broadcast %774 : f32 to vector<40x128xf32>
    %776 = arith.mulf %757, %775 : vector<40x128xf32>
    %777 = arith.addf %744, %776 : vector<40x128xf32>
    %c309 = arith.constant 309 : index
    %778 = memref.load %arg1[%c309] : memref<511xf32, #tpu.memory_space<smem>>
    %779 = vector.broadcast %778 : f32 to vector<40x128xf32>
    %780 = arith.mulf %757, %779 : vector<40x128xf32>
    %781 = arith.addf %748, %780 : vector<40x128xf32>
    %c354 = arith.constant 354 : index
    %782 = memref.load %arg1[%c354] : memref<511xf32, #tpu.memory_space<smem>>
    %783 = vector.broadcast %782 : f32 to vector<40x128xf32>
    %784 = arith.mulf %757, %783 : vector<40x128xf32>
    %785 = arith.addf %752, %784 : vector<40x128xf32>
    %c399 = arith.constant 399 : index
    %786 = memref.load %arg1[%c399] : memref<511xf32, #tpu.memory_space<smem>>
    %787 = vector.broadcast %786 : f32 to vector<40x128xf32>
    %788 = arith.mulf %757, %787 : vector<40x128xf32>
    %789 = arith.addf %756, %788 : vector<40x128xf32>
    %c112_i32_13 = arith.constant 112 : i32
    %790 = tpu.dynamic_rotate %229 by %c112_i32_13 dim 1 : vector<40x128xf32>, i32 -> vector<40x128xf32>
    %c85 = arith.constant 85 : index
    %791 = memref.load %arg1[%c85] : memref<511xf32, #tpu.memory_space<smem>>
    %792 = vector.broadcast %791 : f32 to vector<40x128xf32>
    %793 = arith.mulf %790, %792 : vector<40x128xf32>
    %794 = arith.addf %761, %793 : vector<40x128xf32>
    %c130 = arith.constant 130 : index
    %795 = memref.load %arg1[%c130] : memref<511xf32, #tpu.memory_space<smem>>
    %796 = vector.broadcast %795 : f32 to vector<40x128xf32>
    %797 = arith.mulf %790, %796 : vector<40x128xf32>
    %798 = arith.addf %765, %797 : vector<40x128xf32>
    %c175 = arith.constant 175 : index
    %799 = memref.load %arg1[%c175] : memref<511xf32, #tpu.memory_space<smem>>
    %800 = vector.broadcast %799 : f32 to vector<40x128xf32>
    %801 = arith.mulf %790, %800 : vector<40x128xf32>
    %802 = arith.addf %769, %801 : vector<40x128xf32>
    %c220 = arith.constant 220 : index
    %803 = memref.load %arg1[%c220] : memref<511xf32, #tpu.memory_space<smem>>
    %804 = vector.broadcast %803 : f32 to vector<40x128xf32>
    %805 = arith.mulf %790, %804 : vector<40x128xf32>
    %806 = arith.addf %773, %805 : vector<40x128xf32>
    %c265 = arith.constant 265 : index
    %807 = memref.load %arg1[%c265] : memref<511xf32, #tpu.memory_space<smem>>
    %808 = vector.broadcast %807 : f32 to vector<40x128xf32>
    %809 = arith.mulf %790, %808 : vector<40x128xf32>
    %810 = arith.addf %777, %809 : vector<40x128xf32>
    %c310 = arith.constant 310 : index
    %811 = memref.load %arg1[%c310] : memref<511xf32, #tpu.memory_space<smem>>
    %812 = vector.broadcast %811 : f32 to vector<40x128xf32>
    %813 = arith.mulf %790, %812 : vector<40x128xf32>
    %814 = arith.addf %781, %813 : vector<40x128xf32>
    %c355 = arith.constant 355 : index
    %815 = memref.load %arg1[%c355] : memref<511xf32, #tpu.memory_space<smem>>
    %816 = vector.broadcast %815 : f32 to vector<40x128xf32>
    %817 = arith.mulf %790, %816 : vector<40x128xf32>
    %818 = arith.addf %785, %817 : vector<40x128xf32>
    %c400 = arith.constant 400 : index
    %819 = memref.load %arg1[%c400] : memref<511xf32, #tpu.memory_space<smem>>
    %820 = vector.broadcast %819 : f32 to vector<40x128xf32>
    %821 = arith.mulf %790, %820 : vector<40x128xf32>
    %822 = arith.addf %789, %821 : vector<40x128xf32>
    %c104_i32_14 = arith.constant 104 : i32
    %823 = tpu.dynamic_rotate %229 by %c104_i32_14 dim 1 : vector<40x128xf32>, i32 -> vector<40x128xf32>
    %c86 = arith.constant 86 : index
    %824 = memref.load %arg1[%c86] : memref<511xf32, #tpu.memory_space<smem>>
    %825 = vector.broadcast %824 : f32 to vector<40x128xf32>
    %826 = arith.mulf %823, %825 : vector<40x128xf32>
    %827 = arith.addf %794, %826 : vector<40x128xf32>
    %c131 = arith.constant 131 : index
    %828 = memref.load %arg1[%c131] : memref<511xf32, #tpu.memory_space<smem>>
    %829 = vector.broadcast %828 : f32 to vector<40x128xf32>
    %830 = arith.mulf %823, %829 : vector<40x128xf32>
    %831 = arith.addf %798, %830 : vector<40x128xf32>
    %c176 = arith.constant 176 : index
    %832 = memref.load %arg1[%c176] : memref<511xf32, #tpu.memory_space<smem>>
    %833 = vector.broadcast %832 : f32 to vector<40x128xf32>
    %834 = arith.mulf %823, %833 : vector<40x128xf32>
    %835 = arith.addf %802, %834 : vector<40x128xf32>
    %c221 = arith.constant 221 : index
    %836 = memref.load %arg1[%c221] : memref<511xf32, #tpu.memory_space<smem>>
    %837 = vector.broadcast %836 : f32 to vector<40x128xf32>
    %838 = arith.mulf %823, %837 : vector<40x128xf32>
    %839 = arith.addf %806, %838 : vector<40x128xf32>
    %c266 = arith.constant 266 : index
    %840 = memref.load %arg1[%c266] : memref<511xf32, #tpu.memory_space<smem>>
    %841 = vector.broadcast %840 : f32 to vector<40x128xf32>
    %842 = arith.mulf %823, %841 : vector<40x128xf32>
    %843 = arith.addf %810, %842 : vector<40x128xf32>
    %c311 = arith.constant 311 : index
    %844 = memref.load %arg1[%c311] : memref<511xf32, #tpu.memory_space<smem>>
    %845 = vector.broadcast %844 : f32 to vector<40x128xf32>
    %846 = arith.mulf %823, %845 : vector<40x128xf32>
    %847 = arith.addf %814, %846 : vector<40x128xf32>
    %c356 = arith.constant 356 : index
    %848 = memref.load %arg1[%c356] : memref<511xf32, #tpu.memory_space<smem>>
    %849 = vector.broadcast %848 : f32 to vector<40x128xf32>
    %850 = arith.mulf %823, %849 : vector<40x128xf32>
    %851 = arith.addf %818, %850 : vector<40x128xf32>
    %c401 = arith.constant 401 : index
    %852 = memref.load %arg1[%c401] : memref<511xf32, #tpu.memory_space<smem>>
    %853 = vector.broadcast %852 : f32 to vector<40x128xf32>
    %854 = arith.mulf %823, %853 : vector<40x128xf32>
    %855 = arith.addf %822, %854 : vector<40x128xf32>
    %c96_i32_15 = arith.constant 96 : i32
    %856 = tpu.dynamic_rotate %229 by %c96_i32_15 dim 1 : vector<40x128xf32>, i32 -> vector<40x128xf32>
    %c87 = arith.constant 87 : index
    %857 = memref.load %arg1[%c87] : memref<511xf32, #tpu.memory_space<smem>>
    %858 = vector.broadcast %857 : f32 to vector<40x128xf32>
    %859 = arith.mulf %856, %858 : vector<40x128xf32>
    %860 = arith.addf %827, %859 : vector<40x128xf32>
    %c132 = arith.constant 132 : index
    %861 = memref.load %arg1[%c132] : memref<511xf32, #tpu.memory_space<smem>>
    %862 = vector.broadcast %861 : f32 to vector<40x128xf32>
    %863 = arith.mulf %856, %862 : vector<40x128xf32>
    %864 = arith.addf %831, %863 : vector<40x128xf32>
    %c177 = arith.constant 177 : index
    %865 = memref.load %arg1[%c177] : memref<511xf32, #tpu.memory_space<smem>>
    %866 = vector.broadcast %865 : f32 to vector<40x128xf32>
    %867 = arith.mulf %856, %866 : vector<40x128xf32>
    %868 = arith.addf %835, %867 : vector<40x128xf32>
    %c222 = arith.constant 222 : index
    %869 = memref.load %arg1[%c222] : memref<511xf32, #tpu.memory_space<smem>>
    %870 = vector.broadcast %869 : f32 to vector<40x128xf32>
    %871 = arith.mulf %856, %870 : vector<40x128xf32>
    %872 = arith.addf %839, %871 : vector<40x128xf32>
    %c267 = arith.constant 267 : index
    %873 = memref.load %arg1[%c267] : memref<511xf32, #tpu.memory_space<smem>>
    %874 = vector.broadcast %873 : f32 to vector<40x128xf32>
    %875 = arith.mulf %856, %874 : vector<40x128xf32>
    %876 = arith.addf %843, %875 : vector<40x128xf32>
    %c312 = arith.constant 312 : index
    %877 = memref.load %arg1[%c312] : memref<511xf32, #tpu.memory_space<smem>>
    %878 = vector.broadcast %877 : f32 to vector<40x128xf32>
    %879 = arith.mulf %856, %878 : vector<40x128xf32>
    %880 = arith.addf %847, %879 : vector<40x128xf32>
    %c357 = arith.constant 357 : index
    %881 = memref.load %arg1[%c357] : memref<511xf32, #tpu.memory_space<smem>>
    %882 = vector.broadcast %881 : f32 to vector<40x128xf32>
    %883 = arith.mulf %856, %882 : vector<40x128xf32>
    %884 = arith.addf %851, %883 : vector<40x128xf32>
    %c402 = arith.constant 402 : index
    %885 = memref.load %arg1[%c402] : memref<511xf32, #tpu.memory_space<smem>>
    %886 = vector.broadcast %885 : f32 to vector<40x128xf32>
    %887 = arith.mulf %856, %886 : vector<40x128xf32>
    %888 = arith.addf %855, %887 : vector<40x128xf32>
    %c32_i32_16 = arith.constant 32 : i32
    %889 = tpu.dynamic_rotate %254 by %c32_i32_16 dim 1 : vector<40x128xf32>, i32 -> vector<40x128xf32>
    %c88 = arith.constant 88 : index
    %890 = memref.load %arg1[%c88] : memref<511xf32, #tpu.memory_space<smem>>
    %891 = vector.broadcast %890 : f32 to vector<40x128xf32>
    %892 = arith.mulf %889, %891 : vector<40x128xf32>
    %893 = arith.addf %860, %892 : vector<40x128xf32>
    %c133 = arith.constant 133 : index
    %894 = memref.load %arg1[%c133] : memref<511xf32, #tpu.memory_space<smem>>
    %895 = vector.broadcast %894 : f32 to vector<40x128xf32>
    %896 = arith.mulf %889, %895 : vector<40x128xf32>
    %897 = arith.addf %864, %896 : vector<40x128xf32>
    %c178 = arith.constant 178 : index
    %898 = memref.load %arg1[%c178] : memref<511xf32, #tpu.memory_space<smem>>
    %899 = vector.broadcast %898 : f32 to vector<40x128xf32>
    %900 = arith.mulf %889, %899 : vector<40x128xf32>
    %901 = arith.addf %868, %900 : vector<40x128xf32>
    %c223 = arith.constant 223 : index
    %902 = memref.load %arg1[%c223] : memref<511xf32, #tpu.memory_space<smem>>
    %903 = vector.broadcast %902 : f32 to vector<40x128xf32>
    %904 = arith.mulf %889, %903 : vector<40x128xf32>
    %905 = arith.addf %872, %904 : vector<40x128xf32>
    %c268 = arith.constant 268 : index
    %906 = memref.load %arg1[%c268] : memref<511xf32, #tpu.memory_space<smem>>
    %907 = vector.broadcast %906 : f32 to vector<40x128xf32>
    %908 = arith.mulf %889, %907 : vector<40x128xf32>
    %909 = arith.addf %876, %908 : vector<40x128xf32>
    %c313 = arith.constant 313 : index
    %910 = memref.load %arg1[%c313] : memref<511xf32, #tpu.memory_space<smem>>
    %911 = vector.broadcast %910 : f32 to vector<40x128xf32>
    %912 = arith.mulf %889, %911 : vector<40x128xf32>
    %913 = arith.addf %880, %912 : vector<40x128xf32>
    %c358 = arith.constant 358 : index
    %914 = memref.load %arg1[%c358] : memref<511xf32, #tpu.memory_space<smem>>
    %915 = vector.broadcast %914 : f32 to vector<40x128xf32>
    %916 = arith.mulf %889, %915 : vector<40x128xf32>
    %917 = arith.addf %884, %916 : vector<40x128xf32>
    %c403 = arith.constant 403 : index
    %918 = memref.load %arg1[%c403] : memref<511xf32, #tpu.memory_space<smem>>
    %919 = vector.broadcast %918 : f32 to vector<40x128xf32>
    %920 = arith.mulf %889, %919 : vector<40x128xf32>
    %921 = arith.addf %888, %920 : vector<40x128xf32>
    %c24_i32_17 = arith.constant 24 : i32
    %922 = tpu.dynamic_rotate %254 by %c24_i32_17 dim 1 : vector<40x128xf32>, i32 -> vector<40x128xf32>
    %c89 = arith.constant 89 : index
    %923 = memref.load %arg1[%c89] : memref<511xf32, #tpu.memory_space<smem>>
    %924 = vector.broadcast %923 : f32 to vector<40x128xf32>
    %925 = arith.mulf %922, %924 : vector<40x128xf32>
    %926 = arith.addf %893, %925 : vector<40x128xf32>
    %c134 = arith.constant 134 : index
    %927 = memref.load %arg1[%c134] : memref<511xf32, #tpu.memory_space<smem>>
    %928 = vector.broadcast %927 : f32 to vector<40x128xf32>
    %929 = arith.mulf %922, %928 : vector<40x128xf32>
    %930 = arith.addf %897, %929 : vector<40x128xf32>
    %c179 = arith.constant 179 : index
    %931 = memref.load %arg1[%c179] : memref<511xf32, #tpu.memory_space<smem>>
    %932 = vector.broadcast %931 : f32 to vector<40x128xf32>
    %933 = arith.mulf %922, %932 : vector<40x128xf32>
    %934 = arith.addf %901, %933 : vector<40x128xf32>
    %c224 = arith.constant 224 : index
    %935 = memref.load %arg1[%c224] : memref<511xf32, #tpu.memory_space<smem>>
    %936 = vector.broadcast %935 : f32 to vector<40x128xf32>
    %937 = arith.mulf %922, %936 : vector<40x128xf32>
    %938 = arith.addf %905, %937 : vector<40x128xf32>
    %c269 = arith.constant 269 : index
    %939 = memref.load %arg1[%c269] : memref<511xf32, #tpu.memory_space<smem>>
    %940 = vector.broadcast %939 : f32 to vector<40x128xf32>
    %941 = arith.mulf %922, %940 : vector<40x128xf32>
    %942 = arith.addf %909, %941 : vector<40x128xf32>
    %c314 = arith.constant 314 : index
    %943 = memref.load %arg1[%c314] : memref<511xf32, #tpu.memory_space<smem>>
    %944 = vector.broadcast %943 : f32 to vector<40x128xf32>
    %945 = arith.mulf %922, %944 : vector<40x128xf32>
    %946 = arith.addf %913, %945 : vector<40x128xf32>
    %c359 = arith.constant 359 : index
    %947 = memref.load %arg1[%c359] : memref<511xf32, #tpu.memory_space<smem>>
    %948 = vector.broadcast %947 : f32 to vector<40x128xf32>
    %949 = arith.mulf %922, %948 : vector<40x128xf32>
    %950 = arith.addf %917, %949 : vector<40x128xf32>
    %c404 = arith.constant 404 : index
    %951 = memref.load %arg1[%c404] : memref<511xf32, #tpu.memory_space<smem>>
    %952 = vector.broadcast %951 : f32 to vector<40x128xf32>
    %953 = arith.mulf %922, %952 : vector<40x128xf32>
    %954 = arith.addf %921, %953 : vector<40x128xf32>
    %c16_i32_18 = arith.constant 16 : i32
    %955 = tpu.dynamic_rotate %254 by %c16_i32_18 dim 1 : vector<40x128xf32>, i32 -> vector<40x128xf32>
    %c90 = arith.constant 90 : index
    %956 = memref.load %arg1[%c90] : memref<511xf32, #tpu.memory_space<smem>>
    %957 = vector.broadcast %956 : f32 to vector<40x128xf32>
    %958 = arith.mulf %955, %957 : vector<40x128xf32>
    %959 = arith.addf %926, %958 : vector<40x128xf32>
    %c135 = arith.constant 135 : index
    %960 = memref.load %arg1[%c135] : memref<511xf32, #tpu.memory_space<smem>>
    %961 = vector.broadcast %960 : f32 to vector<40x128xf32>
    %962 = arith.mulf %955, %961 : vector<40x128xf32>
    %963 = arith.addf %930, %962 : vector<40x128xf32>
    %c180 = arith.constant 180 : index
    %964 = memref.load %arg1[%c180] : memref<511xf32, #tpu.memory_space<smem>>
    %965 = vector.broadcast %964 : f32 to vector<40x128xf32>
    %966 = arith.mulf %955, %965 : vector<40x128xf32>
    %967 = arith.addf %934, %966 : vector<40x128xf32>
    %c225 = arith.constant 225 : index
    %968 = memref.load %arg1[%c225] : memref<511xf32, #tpu.memory_space<smem>>
    %969 = vector.broadcast %968 : f32 to vector<40x128xf32>
    %970 = arith.mulf %955, %969 : vector<40x128xf32>
    %971 = arith.addf %938, %970 : vector<40x128xf32>
    %c270 = arith.constant 270 : index
    %972 = memref.load %arg1[%c270] : memref<511xf32, #tpu.memory_space<smem>>
    %973 = vector.broadcast %972 : f32 to vector<40x128xf32>
    %974 = arith.mulf %955, %973 : vector<40x128xf32>
    %975 = arith.addf %942, %974 : vector<40x128xf32>
    %c315 = arith.constant 315 : index
    %976 = memref.load %arg1[%c315] : memref<511xf32, #tpu.memory_space<smem>>
    %977 = vector.broadcast %976 : f32 to vector<40x128xf32>
    %978 = arith.mulf %955, %977 : vector<40x128xf32>
    %979 = arith.addf %946, %978 : vector<40x128xf32>
    %c360 = arith.constant 360 : index
    %980 = memref.load %arg1[%c360] : memref<511xf32, #tpu.memory_space<smem>>
    %981 = vector.broadcast %980 : f32 to vector<40x128xf32>
    %982 = arith.mulf %955, %981 : vector<40x128xf32>
    %983 = arith.addf %950, %982 : vector<40x128xf32>
    %c405 = arith.constant 405 : index
    %984 = memref.load %arg1[%c405] : memref<511xf32, #tpu.memory_space<smem>>
    %985 = vector.broadcast %984 : f32 to vector<40x128xf32>
    %986 = arith.mulf %955, %985 : vector<40x128xf32>
    %987 = arith.addf %954, %986 : vector<40x128xf32>
    %c8_i32_19 = arith.constant 8 : i32
    %988 = tpu.dynamic_rotate %254 by %c8_i32_19 dim 1 : vector<40x128xf32>, i32 -> vector<40x128xf32>
    %c91 = arith.constant 91 : index
    %989 = memref.load %arg1[%c91] : memref<511xf32, #tpu.memory_space<smem>>
    %990 = vector.broadcast %989 : f32 to vector<40x128xf32>
    %991 = arith.mulf %988, %990 : vector<40x128xf32>
    %992 = arith.addf %959, %991 : vector<40x128xf32>
    %c136 = arith.constant 136 : index
    %993 = memref.load %arg1[%c136] : memref<511xf32, #tpu.memory_space<smem>>
    %994 = vector.broadcast %993 : f32 to vector<40x128xf32>
    %995 = arith.mulf %988, %994 : vector<40x128xf32>
    %996 = arith.addf %963, %995 : vector<40x128xf32>
    %c181 = arith.constant 181 : index
    %997 = memref.load %arg1[%c181] : memref<511xf32, #tpu.memory_space<smem>>
    %998 = vector.broadcast %997 : f32 to vector<40x128xf32>
    %999 = arith.mulf %988, %998 : vector<40x128xf32>
    %1000 = arith.addf %967, %999 : vector<40x128xf32>
    %c226 = arith.constant 226 : index
    %1001 = memref.load %arg1[%c226] : memref<511xf32, #tpu.memory_space<smem>>
    %1002 = vector.broadcast %1001 : f32 to vector<40x128xf32>
    %1003 = arith.mulf %988, %1002 : vector<40x128xf32>
    %1004 = arith.addf %971, %1003 : vector<40x128xf32>
    %c271 = arith.constant 271 : index
    %1005 = memref.load %arg1[%c271] : memref<511xf32, #tpu.memory_space<smem>>
    %1006 = vector.broadcast %1005 : f32 to vector<40x128xf32>
    %1007 = arith.mulf %988, %1006 : vector<40x128xf32>
    %1008 = arith.addf %975, %1007 : vector<40x128xf32>
    %c316 = arith.constant 316 : index
    %1009 = memref.load %arg1[%c316] : memref<511xf32, #tpu.memory_space<smem>>
    %1010 = vector.broadcast %1009 : f32 to vector<40x128xf32>
    %1011 = arith.mulf %988, %1010 : vector<40x128xf32>
    %1012 = arith.addf %979, %1011 : vector<40x128xf32>
    %c361 = arith.constant 361 : index
    %1013 = memref.load %arg1[%c361] : memref<511xf32, #tpu.memory_space<smem>>
    %1014 = vector.broadcast %1013 : f32 to vector<40x128xf32>
    %1015 = arith.mulf %988, %1014 : vector<40x128xf32>
    %1016 = arith.addf %983, %1015 : vector<40x128xf32>
    %c406 = arith.constant 406 : index
    %1017 = memref.load %arg1[%c406] : memref<511xf32, #tpu.memory_space<smem>>
    %1018 = vector.broadcast %1017 : f32 to vector<40x128xf32>
    %1019 = arith.mulf %988, %1018 : vector<40x128xf32>
    %1020 = arith.addf %987, %1019 : vector<40x128xf32>
    %c92 = arith.constant 92 : index
    %1021 = memref.load %arg1[%c92] : memref<511xf32, #tpu.memory_space<smem>>
    %1022 = vector.broadcast %1021 : f32 to vector<40x128xf32>
    %1023 = arith.mulf %254, %1022 : vector<40x128xf32>
    %1024 = arith.addf %992, %1023 : vector<40x128xf32>
    %c137 = arith.constant 137 : index
    %1025 = memref.load %arg1[%c137] : memref<511xf32, #tpu.memory_space<smem>>
    %1026 = vector.broadcast %1025 : f32 to vector<40x128xf32>
    %1027 = arith.mulf %254, %1026 : vector<40x128xf32>
    %1028 = arith.addf %996, %1027 : vector<40x128xf32>
    %c182 = arith.constant 182 : index
    %1029 = memref.load %arg1[%c182] : memref<511xf32, #tpu.memory_space<smem>>
    %1030 = vector.broadcast %1029 : f32 to vector<40x128xf32>
    %1031 = arith.mulf %254, %1030 : vector<40x128xf32>
    %1032 = arith.addf %1000, %1031 : vector<40x128xf32>
    %c227 = arith.constant 227 : index
    %1033 = memref.load %arg1[%c227] : memref<511xf32, #tpu.memory_space<smem>>
    %1034 = vector.broadcast %1033 : f32 to vector<40x128xf32>
    %1035 = arith.mulf %254, %1034 : vector<40x128xf32>
    %1036 = arith.addf %1004, %1035 : vector<40x128xf32>
    %c272 = arith.constant 272 : index
    %1037 = memref.load %arg1[%c272] : memref<511xf32, #tpu.memory_space<smem>>
    %1038 = vector.broadcast %1037 : f32 to vector<40x128xf32>
    %1039 = arith.mulf %254, %1038 : vector<40x128xf32>
    %1040 = arith.addf %1008, %1039 : vector<40x128xf32>
    %c317 = arith.constant 317 : index
    %1041 = memref.load %arg1[%c317] : memref<511xf32, #tpu.memory_space<smem>>
    %1042 = vector.broadcast %1041 : f32 to vector<40x128xf32>
    %1043 = arith.mulf %254, %1042 : vector<40x128xf32>
    %1044 = arith.addf %1012, %1043 : vector<40x128xf32>
    %c362 = arith.constant 362 : index
    %1045 = memref.load %arg1[%c362] : memref<511xf32, #tpu.memory_space<smem>>
    %1046 = vector.broadcast %1045 : f32 to vector<40x128xf32>
    %1047 = arith.mulf %254, %1046 : vector<40x128xf32>
    %1048 = arith.addf %1016, %1047 : vector<40x128xf32>
    %c407 = arith.constant 407 : index
    %1049 = memref.load %arg1[%c407] : memref<511xf32, #tpu.memory_space<smem>>
    %1050 = vector.broadcast %1049 : f32 to vector<40x128xf32>
    %1051 = arith.mulf %254, %1050 : vector<40x128xf32>
    %1052 = arith.addf %1020, %1051 : vector<40x128xf32>
    %c120_i32_20 = arith.constant 120 : i32
    %1053 = tpu.dynamic_rotate %254 by %c120_i32_20 dim 1 : vector<40x128xf32>, i32 -> vector<40x128xf32>
    %c93 = arith.constant 93 : index
    %1054 = memref.load %arg1[%c93] : memref<511xf32, #tpu.memory_space<smem>>
    %1055 = vector.broadcast %1054 : f32 to vector<40x128xf32>
    %1056 = arith.mulf %1053, %1055 : vector<40x128xf32>
    %1057 = arith.addf %1024, %1056 : vector<40x128xf32>
    %c138 = arith.constant 138 : index
    %1058 = memref.load %arg1[%c138] : memref<511xf32, #tpu.memory_space<smem>>
    %1059 = vector.broadcast %1058 : f32 to vector<40x128xf32>
    %1060 = arith.mulf %1053, %1059 : vector<40x128xf32>
    %1061 = arith.addf %1028, %1060 : vector<40x128xf32>
    %c183 = arith.constant 183 : index
    %1062 = memref.load %arg1[%c183] : memref<511xf32, #tpu.memory_space<smem>>
    %1063 = vector.broadcast %1062 : f32 to vector<40x128xf32>
    %1064 = arith.mulf %1053, %1063 : vector<40x128xf32>
    %1065 = arith.addf %1032, %1064 : vector<40x128xf32>
    %c228 = arith.constant 228 : index
    %1066 = memref.load %arg1[%c228] : memref<511xf32, #tpu.memory_space<smem>>
    %1067 = vector.broadcast %1066 : f32 to vector<40x128xf32>
    %1068 = arith.mulf %1053, %1067 : vector<40x128xf32>
    %1069 = arith.addf %1036, %1068 : vector<40x128xf32>
    %c273 = arith.constant 273 : index
    %1070 = memref.load %arg1[%c273] : memref<511xf32, #tpu.memory_space<smem>>
    %1071 = vector.broadcast %1070 : f32 to vector<40x128xf32>
    %1072 = arith.mulf %1053, %1071 : vector<40x128xf32>
    %1073 = arith.addf %1040, %1072 : vector<40x128xf32>
    %c318 = arith.constant 318 : index
    %1074 = memref.load %arg1[%c318] : memref<511xf32, #tpu.memory_space<smem>>
    %1075 = vector.broadcast %1074 : f32 to vector<40x128xf32>
    %1076 = arith.mulf %1053, %1075 : vector<40x128xf32>
    %1077 = arith.addf %1044, %1076 : vector<40x128xf32>
    %c363 = arith.constant 363 : index
    %1078 = memref.load %arg1[%c363] : memref<511xf32, #tpu.memory_space<smem>>
    %1079 = vector.broadcast %1078 : f32 to vector<40x128xf32>
    %1080 = arith.mulf %1053, %1079 : vector<40x128xf32>
    %1081 = arith.addf %1048, %1080 : vector<40x128xf32>
    %c408 = arith.constant 408 : index
    %1082 = memref.load %arg1[%c408] : memref<511xf32, #tpu.memory_space<smem>>
    %1083 = vector.broadcast %1082 : f32 to vector<40x128xf32>
    %1084 = arith.mulf %1053, %1083 : vector<40x128xf32>
    %1085 = arith.addf %1052, %1084 : vector<40x128xf32>
    %c112_i32_21 = arith.constant 112 : i32
    %1086 = tpu.dynamic_rotate %254 by %c112_i32_21 dim 1 : vector<40x128xf32>, i32 -> vector<40x128xf32>
    %c94 = arith.constant 94 : index
    %1087 = memref.load %arg1[%c94] : memref<511xf32, #tpu.memory_space<smem>>
    %1088 = vector.broadcast %1087 : f32 to vector<40x128xf32>
    %1089 = arith.mulf %1086, %1088 : vector<40x128xf32>
    %1090 = arith.addf %1057, %1089 : vector<40x128xf32>
    %c139 = arith.constant 139 : index
    %1091 = memref.load %arg1[%c139] : memref<511xf32, #tpu.memory_space<smem>>
    %1092 = vector.broadcast %1091 : f32 to vector<40x128xf32>
    %1093 = arith.mulf %1086, %1092 : vector<40x128xf32>
    %1094 = arith.addf %1061, %1093 : vector<40x128xf32>
    %c184 = arith.constant 184 : index
    %1095 = memref.load %arg1[%c184] : memref<511xf32, #tpu.memory_space<smem>>
    %1096 = vector.broadcast %1095 : f32 to vector<40x128xf32>
    %1097 = arith.mulf %1086, %1096 : vector<40x128xf32>
    %1098 = arith.addf %1065, %1097 : vector<40x128xf32>
    %c229 = arith.constant 229 : index
    %1099 = memref.load %arg1[%c229] : memref<511xf32, #tpu.memory_space<smem>>
    %1100 = vector.broadcast %1099 : f32 to vector<40x128xf32>
    %1101 = arith.mulf %1086, %1100 : vector<40x128xf32>
    %1102 = arith.addf %1069, %1101 : vector<40x128xf32>
    %c274 = arith.constant 274 : index
    %1103 = memref.load %arg1[%c274] : memref<511xf32, #tpu.memory_space<smem>>
    %1104 = vector.broadcast %1103 : f32 to vector<40x128xf32>
    %1105 = arith.mulf %1086, %1104 : vector<40x128xf32>
    %1106 = arith.addf %1073, %1105 : vector<40x128xf32>
    %c319 = arith.constant 319 : index
    %1107 = memref.load %arg1[%c319] : memref<511xf32, #tpu.memory_space<smem>>
    %1108 = vector.broadcast %1107 : f32 to vector<40x128xf32>
    %1109 = arith.mulf %1086, %1108 : vector<40x128xf32>
    %1110 = arith.addf %1077, %1109 : vector<40x128xf32>
    %c364 = arith.constant 364 : index
    %1111 = memref.load %arg1[%c364] : memref<511xf32, #tpu.memory_space<smem>>
    %1112 = vector.broadcast %1111 : f32 to vector<40x128xf32>
    %1113 = arith.mulf %1086, %1112 : vector<40x128xf32>
    %1114 = arith.addf %1081, %1113 : vector<40x128xf32>
    %c409 = arith.constant 409 : index
    %1115 = memref.load %arg1[%c409] : memref<511xf32, #tpu.memory_space<smem>>
    %1116 = vector.broadcast %1115 : f32 to vector<40x128xf32>
    %1117 = arith.mulf %1086, %1116 : vector<40x128xf32>
    %1118 = arith.addf %1085, %1117 : vector<40x128xf32>
    %c104_i32_22 = arith.constant 104 : i32
    %1119 = tpu.dynamic_rotate %254 by %c104_i32_22 dim 1 : vector<40x128xf32>, i32 -> vector<40x128xf32>
    %c95 = arith.constant 95 : index
    %1120 = memref.load %arg1[%c95] : memref<511xf32, #tpu.memory_space<smem>>
    %1121 = vector.broadcast %1120 : f32 to vector<40x128xf32>
    %1122 = arith.mulf %1119, %1121 : vector<40x128xf32>
    %1123 = arith.addf %1090, %1122 : vector<40x128xf32>
    %c140 = arith.constant 140 : index
    %1124 = memref.load %arg1[%c140] : memref<511xf32, #tpu.memory_space<smem>>
    %1125 = vector.broadcast %1124 : f32 to vector<40x128xf32>
    %1126 = arith.mulf %1119, %1125 : vector<40x128xf32>
    %1127 = arith.addf %1094, %1126 : vector<40x128xf32>
    %c185 = arith.constant 185 : index
    %1128 = memref.load %arg1[%c185] : memref<511xf32, #tpu.memory_space<smem>>
    %1129 = vector.broadcast %1128 : f32 to vector<40x128xf32>
    %1130 = arith.mulf %1119, %1129 : vector<40x128xf32>
    %1131 = arith.addf %1098, %1130 : vector<40x128xf32>
    %c230 = arith.constant 230 : index
    %1132 = memref.load %arg1[%c230] : memref<511xf32, #tpu.memory_space<smem>>
    %1133 = vector.broadcast %1132 : f32 to vector<40x128xf32>
    %1134 = arith.mulf %1119, %1133 : vector<40x128xf32>
    %1135 = arith.addf %1102, %1134 : vector<40x128xf32>
    %c275 = arith.constant 275 : index
    %1136 = memref.load %arg1[%c275] : memref<511xf32, #tpu.memory_space<smem>>
    %1137 = vector.broadcast %1136 : f32 to vector<40x128xf32>
    %1138 = arith.mulf %1119, %1137 : vector<40x128xf32>
    %1139 = arith.addf %1106, %1138 : vector<40x128xf32>
    %c320 = arith.constant 320 : index
    %1140 = memref.load %arg1[%c320] : memref<511xf32, #tpu.memory_space<smem>>
    %1141 = vector.broadcast %1140 : f32 to vector<40x128xf32>
    %1142 = arith.mulf %1119, %1141 : vector<40x128xf32>
    %1143 = arith.addf %1110, %1142 : vector<40x128xf32>
    %c365 = arith.constant 365 : index
    %1144 = memref.load %arg1[%c365] : memref<511xf32, #tpu.memory_space<smem>>
    %1145 = vector.broadcast %1144 : f32 to vector<40x128xf32>
    %1146 = arith.mulf %1119, %1145 : vector<40x128xf32>
    %1147 = arith.addf %1114, %1146 : vector<40x128xf32>
    %c410 = arith.constant 410 : index
    %1148 = memref.load %arg1[%c410] : memref<511xf32, #tpu.memory_space<smem>>
    %1149 = vector.broadcast %1148 : f32 to vector<40x128xf32>
    %1150 = arith.mulf %1119, %1149 : vector<40x128xf32>
    %1151 = arith.addf %1118, %1150 : vector<40x128xf32>
    %c96_i32_23 = arith.constant 96 : i32
    %1152 = tpu.dynamic_rotate %254 by %c96_i32_23 dim 1 : vector<40x128xf32>, i32 -> vector<40x128xf32>
    %c96 = arith.constant 96 : index
    %1153 = memref.load %arg1[%c96] : memref<511xf32, #tpu.memory_space<smem>>
    %1154 = vector.broadcast %1153 : f32 to vector<40x128xf32>
    %1155 = arith.mulf %1152, %1154 : vector<40x128xf32>
    %1156 = arith.addf %1123, %1155 : vector<40x128xf32>
    %c141 = arith.constant 141 : index
    %1157 = memref.load %arg1[%c141] : memref<511xf32, #tpu.memory_space<smem>>
    %1158 = vector.broadcast %1157 : f32 to vector<40x128xf32>
    %1159 = arith.mulf %1152, %1158 : vector<40x128xf32>
    %1160 = arith.addf %1127, %1159 : vector<40x128xf32>
    %c186 = arith.constant 186 : index
    %1161 = memref.load %arg1[%c186] : memref<511xf32, #tpu.memory_space<smem>>
    %1162 = vector.broadcast %1161 : f32 to vector<40x128xf32>
    %1163 = arith.mulf %1152, %1162 : vector<40x128xf32>
    %1164 = arith.addf %1131, %1163 : vector<40x128xf32>
    %c231 = arith.constant 231 : index
    %1165 = memref.load %arg1[%c231] : memref<511xf32, #tpu.memory_space<smem>>
    %1166 = vector.broadcast %1165 : f32 to vector<40x128xf32>
    %1167 = arith.mulf %1152, %1166 : vector<40x128xf32>
    %1168 = arith.addf %1135, %1167 : vector<40x128xf32>
    %c276 = arith.constant 276 : index
    %1169 = memref.load %arg1[%c276] : memref<511xf32, #tpu.memory_space<smem>>
    %1170 = vector.broadcast %1169 : f32 to vector<40x128xf32>
    %1171 = arith.mulf %1152, %1170 : vector<40x128xf32>
    %1172 = arith.addf %1139, %1171 : vector<40x128xf32>
    %c321 = arith.constant 321 : index
    %1173 = memref.load %arg1[%c321] : memref<511xf32, #tpu.memory_space<smem>>
    %1174 = vector.broadcast %1173 : f32 to vector<40x128xf32>
    %1175 = arith.mulf %1152, %1174 : vector<40x128xf32>
    %1176 = arith.addf %1143, %1175 : vector<40x128xf32>
    %c366 = arith.constant 366 : index
    %1177 = memref.load %arg1[%c366] : memref<511xf32, #tpu.memory_space<smem>>
    %1178 = vector.broadcast %1177 : f32 to vector<40x128xf32>
    %1179 = arith.mulf %1152, %1178 : vector<40x128xf32>
    %1180 = arith.addf %1147, %1179 : vector<40x128xf32>
    %c411 = arith.constant 411 : index
    %1181 = memref.load %arg1[%c411] : memref<511xf32, #tpu.memory_space<smem>>
    %1182 = vector.broadcast %1181 : f32 to vector<40x128xf32>
    %1183 = arith.mulf %1152, %1182 : vector<40x128xf32>
    %1184 = arith.addf %1151, %1183 : vector<40x128xf32>
    %c32_i32_24 = arith.constant 32 : i32
    %1185 = tpu.dynamic_rotate %279 by %c32_i32_24 dim 1 : vector<40x128xf32>, i32 -> vector<40x128xf32>
    %c97 = arith.constant 97 : index
    %1186 = memref.load %arg1[%c97] : memref<511xf32, #tpu.memory_space<smem>>
    %1187 = vector.broadcast %1186 : f32 to vector<40x128xf32>
    %1188 = arith.mulf %1185, %1187 : vector<40x128xf32>
    %1189 = arith.addf %1156, %1188 : vector<40x128xf32>
    %c142 = arith.constant 142 : index
    %1190 = memref.load %arg1[%c142] : memref<511xf32, #tpu.memory_space<smem>>
    %1191 = vector.broadcast %1190 : f32 to vector<40x128xf32>
    %1192 = arith.mulf %1185, %1191 : vector<40x128xf32>
    %1193 = arith.addf %1160, %1192 : vector<40x128xf32>
    %c187 = arith.constant 187 : index
    %1194 = memref.load %arg1[%c187] : memref<511xf32, #tpu.memory_space<smem>>
    %1195 = vector.broadcast %1194 : f32 to vector<40x128xf32>
    %1196 = arith.mulf %1185, %1195 : vector<40x128xf32>
    %1197 = arith.addf %1164, %1196 : vector<40x128xf32>
    %c232 = arith.constant 232 : index
    %1198 = memref.load %arg1[%c232] : memref<511xf32, #tpu.memory_space<smem>>
    %1199 = vector.broadcast %1198 : f32 to vector<40x128xf32>
    %1200 = arith.mulf %1185, %1199 : vector<40x128xf32>
    %1201 = arith.addf %1168, %1200 : vector<40x128xf32>
    %c277 = arith.constant 277 : index
    %1202 = memref.load %arg1[%c277] : memref<511xf32, #tpu.memory_space<smem>>
    %1203 = vector.broadcast %1202 : f32 to vector<40x128xf32>
    %1204 = arith.mulf %1185, %1203 : vector<40x128xf32>
    %1205 = arith.addf %1172, %1204 : vector<40x128xf32>
    %c322 = arith.constant 322 : index
    %1206 = memref.load %arg1[%c322] : memref<511xf32, #tpu.memory_space<smem>>
    %1207 = vector.broadcast %1206 : f32 to vector<40x128xf32>
    %1208 = arith.mulf %1185, %1207 : vector<40x128xf32>
    %1209 = arith.addf %1176, %1208 : vector<40x128xf32>
    %c367 = arith.constant 367 : index
    %1210 = memref.load %arg1[%c367] : memref<511xf32, #tpu.memory_space<smem>>
    %1211 = vector.broadcast %1210 : f32 to vector<40x128xf32>
    %1212 = arith.mulf %1185, %1211 : vector<40x128xf32>
    %1213 = arith.addf %1180, %1212 : vector<40x128xf32>
    %c412 = arith.constant 412 : index
    %1214 = memref.load %arg1[%c412] : memref<511xf32, #tpu.memory_space<smem>>
    %1215 = vector.broadcast %1214 : f32 to vector<40x128xf32>
    %1216 = arith.mulf %1185, %1215 : vector<40x128xf32>
    %1217 = arith.addf %1184, %1216 : vector<40x128xf32>
    %c24_i32_25 = arith.constant 24 : i32
    %1218 = tpu.dynamic_rotate %279 by %c24_i32_25 dim 1 : vector<40x128xf32>, i32 -> vector<40x128xf32>
    %c98 = arith.constant 98 : index
    %1219 = memref.load %arg1[%c98] : memref<511xf32, #tpu.memory_space<smem>>
    %1220 = vector.broadcast %1219 : f32 to vector<40x128xf32>
    %1221 = arith.mulf %1218, %1220 : vector<40x128xf32>
    %1222 = arith.addf %1189, %1221 : vector<40x128xf32>
    %c143 = arith.constant 143 : index
    %1223 = memref.load %arg1[%c143] : memref<511xf32, #tpu.memory_space<smem>>
    %1224 = vector.broadcast %1223 : f32 to vector<40x128xf32>
    %1225 = arith.mulf %1218, %1224 : vector<40x128xf32>
    %1226 = arith.addf %1193, %1225 : vector<40x128xf32>
    %c188 = arith.constant 188 : index
    %1227 = memref.load %arg1[%c188] : memref<511xf32, #tpu.memory_space<smem>>
    %1228 = vector.broadcast %1227 : f32 to vector<40x128xf32>
    %1229 = arith.mulf %1218, %1228 : vector<40x128xf32>
    %1230 = arith.addf %1197, %1229 : vector<40x128xf32>
    %c233 = arith.constant 233 : index
    %1231 = memref.load %arg1[%c233] : memref<511xf32, #tpu.memory_space<smem>>
    %1232 = vector.broadcast %1231 : f32 to vector<40x128xf32>
    %1233 = arith.mulf %1218, %1232 : vector<40x128xf32>
    %1234 = arith.addf %1201, %1233 : vector<40x128xf32>
    %c278 = arith.constant 278 : index
    %1235 = memref.load %arg1[%c278] : memref<511xf32, #tpu.memory_space<smem>>
    %1236 = vector.broadcast %1235 : f32 to vector<40x128xf32>
    %1237 = arith.mulf %1218, %1236 : vector<40x128xf32>
    %1238 = arith.addf %1205, %1237 : vector<40x128xf32>
    %c323 = arith.constant 323 : index
    %1239 = memref.load %arg1[%c323] : memref<511xf32, #tpu.memory_space<smem>>
    %1240 = vector.broadcast %1239 : f32 to vector<40x128xf32>
    %1241 = arith.mulf %1218, %1240 : vector<40x128xf32>
    %1242 = arith.addf %1209, %1241 : vector<40x128xf32>
    %c368 = arith.constant 368 : index
    %1243 = memref.load %arg1[%c368] : memref<511xf32, #tpu.memory_space<smem>>
    %1244 = vector.broadcast %1243 : f32 to vector<40x128xf32>
    %1245 = arith.mulf %1218, %1244 : vector<40x128xf32>
    %1246 = arith.addf %1213, %1245 : vector<40x128xf32>
    %c413 = arith.constant 413 : index
    %1247 = memref.load %arg1[%c413] : memref<511xf32, #tpu.memory_space<smem>>
    %1248 = vector.broadcast %1247 : f32 to vector<40x128xf32>
    %1249 = arith.mulf %1218, %1248 : vector<40x128xf32>
    %1250 = arith.addf %1217, %1249 : vector<40x128xf32>
    %c16_i32_26 = arith.constant 16 : i32
    %1251 = tpu.dynamic_rotate %279 by %c16_i32_26 dim 1 : vector<40x128xf32>, i32 -> vector<40x128xf32>
    %c99 = arith.constant 99 : index
    %1252 = memref.load %arg1[%c99] : memref<511xf32, #tpu.memory_space<smem>>
    %1253 = vector.broadcast %1252 : f32 to vector<40x128xf32>
    %1254 = arith.mulf %1251, %1253 : vector<40x128xf32>
    %1255 = arith.addf %1222, %1254 : vector<40x128xf32>
    %c144 = arith.constant 144 : index
    %1256 = memref.load %arg1[%c144] : memref<511xf32, #tpu.memory_space<smem>>
    %1257 = vector.broadcast %1256 : f32 to vector<40x128xf32>
    %1258 = arith.mulf %1251, %1257 : vector<40x128xf32>
    %1259 = arith.addf %1226, %1258 : vector<40x128xf32>
    %c189 = arith.constant 189 : index
    %1260 = memref.load %arg1[%c189] : memref<511xf32, #tpu.memory_space<smem>>
    %1261 = vector.broadcast %1260 : f32 to vector<40x128xf32>
    %1262 = arith.mulf %1251, %1261 : vector<40x128xf32>
    %1263 = arith.addf %1230, %1262 : vector<40x128xf32>
    %c234 = arith.constant 234 : index
    %1264 = memref.load %arg1[%c234] : memref<511xf32, #tpu.memory_space<smem>>
    %1265 = vector.broadcast %1264 : f32 to vector<40x128xf32>
    %1266 = arith.mulf %1251, %1265 : vector<40x128xf32>
    %1267 = arith.addf %1234, %1266 : vector<40x128xf32>
    %c279 = arith.constant 279 : index
    %1268 = memref.load %arg1[%c279] : memref<511xf32, #tpu.memory_space<smem>>
    %1269 = vector.broadcast %1268 : f32 to vector<40x128xf32>
    %1270 = arith.mulf %1251, %1269 : vector<40x128xf32>
    %1271 = arith.addf %1238, %1270 : vector<40x128xf32>
    %c324 = arith.constant 324 : index
    %1272 = memref.load %arg1[%c324] : memref<511xf32, #tpu.memory_space<smem>>
    %1273 = vector.broadcast %1272 : f32 to vector<40x128xf32>
    %1274 = arith.mulf %1251, %1273 : vector<40x128xf32>
    %1275 = arith.addf %1242, %1274 : vector<40x128xf32>
    %c369 = arith.constant 369 : index
    %1276 = memref.load %arg1[%c369] : memref<511xf32, #tpu.memory_space<smem>>
    %1277 = vector.broadcast %1276 : f32 to vector<40x128xf32>
    %1278 = arith.mulf %1251, %1277 : vector<40x128xf32>
    %1279 = arith.addf %1246, %1278 : vector<40x128xf32>
    %c414 = arith.constant 414 : index
    %1280 = memref.load %arg1[%c414] : memref<511xf32, #tpu.memory_space<smem>>
    %1281 = vector.broadcast %1280 : f32 to vector<40x128xf32>
    %1282 = arith.mulf %1251, %1281 : vector<40x128xf32>
    %1283 = arith.addf %1250, %1282 : vector<40x128xf32>
    %c8_i32_27 = arith.constant 8 : i32
    %1284 = tpu.dynamic_rotate %279 by %c8_i32_27 dim 1 : vector<40x128xf32>, i32 -> vector<40x128xf32>
    %c100 = arith.constant 100 : index
    %1285 = memref.load %arg1[%c100] : memref<511xf32, #tpu.memory_space<smem>>
    %1286 = vector.broadcast %1285 : f32 to vector<40x128xf32>
    %1287 = arith.mulf %1284, %1286 : vector<40x128xf32>
    %1288 = arith.addf %1255, %1287 : vector<40x128xf32>
    %c145 = arith.constant 145 : index
    %1289 = memref.load %arg1[%c145] : memref<511xf32, #tpu.memory_space<smem>>
    %1290 = vector.broadcast %1289 : f32 to vector<40x128xf32>
    %1291 = arith.mulf %1284, %1290 : vector<40x128xf32>
    %1292 = arith.addf %1259, %1291 : vector<40x128xf32>
    %c190 = arith.constant 190 : index
    %1293 = memref.load %arg1[%c190] : memref<511xf32, #tpu.memory_space<smem>>
    %1294 = vector.broadcast %1293 : f32 to vector<40x128xf32>
    %1295 = arith.mulf %1284, %1294 : vector<40x128xf32>
    %1296 = arith.addf %1263, %1295 : vector<40x128xf32>
    %c235 = arith.constant 235 : index
    %1297 = memref.load %arg1[%c235] : memref<511xf32, #tpu.memory_space<smem>>
    %1298 = vector.broadcast %1297 : f32 to vector<40x128xf32>
    %1299 = arith.mulf %1284, %1298 : vector<40x128xf32>
    %1300 = arith.addf %1267, %1299 : vector<40x128xf32>
    %c280 = arith.constant 280 : index
    %1301 = memref.load %arg1[%c280] : memref<511xf32, #tpu.memory_space<smem>>
    %1302 = vector.broadcast %1301 : f32 to vector<40x128xf32>
    %1303 = arith.mulf %1284, %1302 : vector<40x128xf32>
    %1304 = arith.addf %1271, %1303 : vector<40x128xf32>
    %c325 = arith.constant 325 : index
    %1305 = memref.load %arg1[%c325] : memref<511xf32, #tpu.memory_space<smem>>
    %1306 = vector.broadcast %1305 : f32 to vector<40x128xf32>
    %1307 = arith.mulf %1284, %1306 : vector<40x128xf32>
    %1308 = arith.addf %1275, %1307 : vector<40x128xf32>
    %c370 = arith.constant 370 : index
    %1309 = memref.load %arg1[%c370] : memref<511xf32, #tpu.memory_space<smem>>
    %1310 = vector.broadcast %1309 : f32 to vector<40x128xf32>
    %1311 = arith.mulf %1284, %1310 : vector<40x128xf32>
    %1312 = arith.addf %1279, %1311 : vector<40x128xf32>
    %c415 = arith.constant 415 : index
    %1313 = memref.load %arg1[%c415] : memref<511xf32, #tpu.memory_space<smem>>
    %1314 = vector.broadcast %1313 : f32 to vector<40x128xf32>
    %1315 = arith.mulf %1284, %1314 : vector<40x128xf32>
    %1316 = arith.addf %1283, %1315 : vector<40x128xf32>
    %c101 = arith.constant 101 : index
    %1317 = memref.load %arg1[%c101] : memref<511xf32, #tpu.memory_space<smem>>
    %1318 = vector.broadcast %1317 : f32 to vector<40x128xf32>
    %1319 = arith.mulf %279, %1318 : vector<40x128xf32>
    %1320 = arith.addf %1288, %1319 : vector<40x128xf32>
    %c146 = arith.constant 146 : index
    %1321 = memref.load %arg1[%c146] : memref<511xf32, #tpu.memory_space<smem>>
    %1322 = vector.broadcast %1321 : f32 to vector<40x128xf32>
    %1323 = arith.mulf %279, %1322 : vector<40x128xf32>
    %1324 = arith.addf %1292, %1323 : vector<40x128xf32>
    %c191 = arith.constant 191 : index
    %1325 = memref.load %arg1[%c191] : memref<511xf32, #tpu.memory_space<smem>>
    %1326 = vector.broadcast %1325 : f32 to vector<40x128xf32>
    %1327 = arith.mulf %279, %1326 : vector<40x128xf32>
    %1328 = arith.addf %1296, %1327 : vector<40x128xf32>
    %c236 = arith.constant 236 : index
    %1329 = memref.load %arg1[%c236] : memref<511xf32, #tpu.memory_space<smem>>
    %1330 = vector.broadcast %1329 : f32 to vector<40x128xf32>
    %1331 = arith.mulf %279, %1330 : vector<40x128xf32>
    %1332 = arith.addf %1300, %1331 : vector<40x128xf32>
    %c281 = arith.constant 281 : index
    %1333 = memref.load %arg1[%c281] : memref<511xf32, #tpu.memory_space<smem>>
    %1334 = vector.broadcast %1333 : f32 to vector<40x128xf32>
    %1335 = arith.mulf %279, %1334 : vector<40x128xf32>
    %1336 = arith.addf %1304, %1335 : vector<40x128xf32>
    %c326 = arith.constant 326 : index
    %1337 = memref.load %arg1[%c326] : memref<511xf32, #tpu.memory_space<smem>>
    %1338 = vector.broadcast %1337 : f32 to vector<40x128xf32>
    %1339 = arith.mulf %279, %1338 : vector<40x128xf32>
    %1340 = arith.addf %1308, %1339 : vector<40x128xf32>
    %c371 = arith.constant 371 : index
    %1341 = memref.load %arg1[%c371] : memref<511xf32, #tpu.memory_space<smem>>
    %1342 = vector.broadcast %1341 : f32 to vector<40x128xf32>
    %1343 = arith.mulf %279, %1342 : vector<40x128xf32>
    %1344 = arith.addf %1312, %1343 : vector<40x128xf32>
    %c416 = arith.constant 416 : index
    %1345 = memref.load %arg1[%c416] : memref<511xf32, #tpu.memory_space<smem>>
    %1346 = vector.broadcast %1345 : f32 to vector<40x128xf32>
    %1347 = arith.mulf %279, %1346 : vector<40x128xf32>
    %1348 = arith.addf %1316, %1347 : vector<40x128xf32>
    %c120_i32_28 = arith.constant 120 : i32
    %1349 = tpu.dynamic_rotate %279 by %c120_i32_28 dim 1 : vector<40x128xf32>, i32 -> vector<40x128xf32>
    %c102 = arith.constant 102 : index
    %1350 = memref.load %arg1[%c102] : memref<511xf32, #tpu.memory_space<smem>>
    %1351 = vector.broadcast %1350 : f32 to vector<40x128xf32>
    %1352 = arith.mulf %1349, %1351 : vector<40x128xf32>
    %1353 = arith.addf %1320, %1352 : vector<40x128xf32>
    %c147 = arith.constant 147 : index
    %1354 = memref.load %arg1[%c147] : memref<511xf32, #tpu.memory_space<smem>>
    %1355 = vector.broadcast %1354 : f32 to vector<40x128xf32>
    %1356 = arith.mulf %1349, %1355 : vector<40x128xf32>
    %1357 = arith.addf %1324, %1356 : vector<40x128xf32>
    %c192 = arith.constant 192 : index
    %1358 = memref.load %arg1[%c192] : memref<511xf32, #tpu.memory_space<smem>>
    %1359 = vector.broadcast %1358 : f32 to vector<40x128xf32>
    %1360 = arith.mulf %1349, %1359 : vector<40x128xf32>
    %1361 = arith.addf %1328, %1360 : vector<40x128xf32>
    %c237 = arith.constant 237 : index
    %1362 = memref.load %arg1[%c237] : memref<511xf32, #tpu.memory_space<smem>>
    %1363 = vector.broadcast %1362 : f32 to vector<40x128xf32>
    %1364 = arith.mulf %1349, %1363 : vector<40x128xf32>
    %1365 = arith.addf %1332, %1364 : vector<40x128xf32>
    %c282 = arith.constant 282 : index
    %1366 = memref.load %arg1[%c282] : memref<511xf32, #tpu.memory_space<smem>>
    %1367 = vector.broadcast %1366 : f32 to vector<40x128xf32>
    %1368 = arith.mulf %1349, %1367 : vector<40x128xf32>
    %1369 = arith.addf %1336, %1368 : vector<40x128xf32>
    %c327 = arith.constant 327 : index
    %1370 = memref.load %arg1[%c327] : memref<511xf32, #tpu.memory_space<smem>>
    %1371 = vector.broadcast %1370 : f32 to vector<40x128xf32>
    %1372 = arith.mulf %1349, %1371 : vector<40x128xf32>
    %1373 = arith.addf %1340, %1372 : vector<40x128xf32>
    %c372 = arith.constant 372 : index
    %1374 = memref.load %arg1[%c372] : memref<511xf32, #tpu.memory_space<smem>>
    %1375 = vector.broadcast %1374 : f32 to vector<40x128xf32>
    %1376 = arith.mulf %1349, %1375 : vector<40x128xf32>
    %1377 = arith.addf %1344, %1376 : vector<40x128xf32>
    %c417 = arith.constant 417 : index
    %1378 = memref.load %arg1[%c417] : memref<511xf32, #tpu.memory_space<smem>>
    %1379 = vector.broadcast %1378 : f32 to vector<40x128xf32>
    %1380 = arith.mulf %1349, %1379 : vector<40x128xf32>
    %1381 = arith.addf %1348, %1380 : vector<40x128xf32>
    %c112_i32_29 = arith.constant 112 : i32
    %1382 = tpu.dynamic_rotate %279 by %c112_i32_29 dim 1 : vector<40x128xf32>, i32 -> vector<40x128xf32>
    %c103 = arith.constant 103 : index
    %1383 = memref.load %arg1[%c103] : memref<511xf32, #tpu.memory_space<smem>>
    %1384 = vector.broadcast %1383 : f32 to vector<40x128xf32>
    %1385 = arith.mulf %1382, %1384 : vector<40x128xf32>
    %1386 = arith.addf %1353, %1385 : vector<40x128xf32>
    %c148 = arith.constant 148 : index
    %1387 = memref.load %arg1[%c148] : memref<511xf32, #tpu.memory_space<smem>>
    %1388 = vector.broadcast %1387 : f32 to vector<40x128xf32>
    %1389 = arith.mulf %1382, %1388 : vector<40x128xf32>
    %1390 = arith.addf %1357, %1389 : vector<40x128xf32>
    %c193 = arith.constant 193 : index
    %1391 = memref.load %arg1[%c193] : memref<511xf32, #tpu.memory_space<smem>>
    %1392 = vector.broadcast %1391 : f32 to vector<40x128xf32>
    %1393 = arith.mulf %1382, %1392 : vector<40x128xf32>
    %1394 = arith.addf %1361, %1393 : vector<40x128xf32>
    %c238 = arith.constant 238 : index
    %1395 = memref.load %arg1[%c238] : memref<511xf32, #tpu.memory_space<smem>>
    %1396 = vector.broadcast %1395 : f32 to vector<40x128xf32>
    %1397 = arith.mulf %1382, %1396 : vector<40x128xf32>
    %1398 = arith.addf %1365, %1397 : vector<40x128xf32>
    %c283 = arith.constant 283 : index
    %1399 = memref.load %arg1[%c283] : memref<511xf32, #tpu.memory_space<smem>>
    %1400 = vector.broadcast %1399 : f32 to vector<40x128xf32>
    %1401 = arith.mulf %1382, %1400 : vector<40x128xf32>
    %1402 = arith.addf %1369, %1401 : vector<40x128xf32>
    %c328 = arith.constant 328 : index
    %1403 = memref.load %arg1[%c328] : memref<511xf32, #tpu.memory_space<smem>>
    %1404 = vector.broadcast %1403 : f32 to vector<40x128xf32>
    %1405 = arith.mulf %1382, %1404 : vector<40x128xf32>
    %1406 = arith.addf %1373, %1405 : vector<40x128xf32>
    %c373 = arith.constant 373 : index
    %1407 = memref.load %arg1[%c373] : memref<511xf32, #tpu.memory_space<smem>>
    %1408 = vector.broadcast %1407 : f32 to vector<40x128xf32>
    %1409 = arith.mulf %1382, %1408 : vector<40x128xf32>
    %1410 = arith.addf %1377, %1409 : vector<40x128xf32>
    %c418 = arith.constant 418 : index
    %1411 = memref.load %arg1[%c418] : memref<511xf32, #tpu.memory_space<smem>>
    %1412 = vector.broadcast %1411 : f32 to vector<40x128xf32>
    %1413 = arith.mulf %1382, %1412 : vector<40x128xf32>
    %1414 = arith.addf %1381, %1413 : vector<40x128xf32>
    %c104_i32_30 = arith.constant 104 : i32
    %1415 = tpu.dynamic_rotate %279 by %c104_i32_30 dim 1 : vector<40x128xf32>, i32 -> vector<40x128xf32>
    %c104 = arith.constant 104 : index
    %1416 = memref.load %arg1[%c104] : memref<511xf32, #tpu.memory_space<smem>>
    %1417 = vector.broadcast %1416 : f32 to vector<40x128xf32>
    %1418 = arith.mulf %1415, %1417 : vector<40x128xf32>
    %1419 = arith.addf %1386, %1418 : vector<40x128xf32>
    %c149 = arith.constant 149 : index
    %1420 = memref.load %arg1[%c149] : memref<511xf32, #tpu.memory_space<smem>>
    %1421 = vector.broadcast %1420 : f32 to vector<40x128xf32>
    %1422 = arith.mulf %1415, %1421 : vector<40x128xf32>
    %1423 = arith.addf %1390, %1422 : vector<40x128xf32>
    %c194 = arith.constant 194 : index
    %1424 = memref.load %arg1[%c194] : memref<511xf32, #tpu.memory_space<smem>>
    %1425 = vector.broadcast %1424 : f32 to vector<40x128xf32>
    %1426 = arith.mulf %1415, %1425 : vector<40x128xf32>
    %1427 = arith.addf %1394, %1426 : vector<40x128xf32>
    %c239 = arith.constant 239 : index
    %1428 = memref.load %arg1[%c239] : memref<511xf32, #tpu.memory_space<smem>>
    %1429 = vector.broadcast %1428 : f32 to vector<40x128xf32>
    %1430 = arith.mulf %1415, %1429 : vector<40x128xf32>
    %1431 = arith.addf %1398, %1430 : vector<40x128xf32>
    %c284 = arith.constant 284 : index
    %1432 = memref.load %arg1[%c284] : memref<511xf32, #tpu.memory_space<smem>>
    %1433 = vector.broadcast %1432 : f32 to vector<40x128xf32>
    %1434 = arith.mulf %1415, %1433 : vector<40x128xf32>
    %1435 = arith.addf %1402, %1434 : vector<40x128xf32>
    %c329 = arith.constant 329 : index
    %1436 = memref.load %arg1[%c329] : memref<511xf32, #tpu.memory_space<smem>>
    %1437 = vector.broadcast %1436 : f32 to vector<40x128xf32>
    %1438 = arith.mulf %1415, %1437 : vector<40x128xf32>
    %1439 = arith.addf %1406, %1438 : vector<40x128xf32>
    %c374 = arith.constant 374 : index
    %1440 = memref.load %arg1[%c374] : memref<511xf32, #tpu.memory_space<smem>>
    %1441 = vector.broadcast %1440 : f32 to vector<40x128xf32>
    %1442 = arith.mulf %1415, %1441 : vector<40x128xf32>
    %1443 = arith.addf %1410, %1442 : vector<40x128xf32>
    %c419 = arith.constant 419 : index
    %1444 = memref.load %arg1[%c419] : memref<511xf32, #tpu.memory_space<smem>>
    %1445 = vector.broadcast %1444 : f32 to vector<40x128xf32>
    %1446 = arith.mulf %1415, %1445 : vector<40x128xf32>
    %1447 = arith.addf %1414, %1446 : vector<40x128xf32>
    %c96_i32_31 = arith.constant 96 : i32
    %1448 = tpu.dynamic_rotate %279 by %c96_i32_31 dim 1 : vector<40x128xf32>, i32 -> vector<40x128xf32>
    %c105 = arith.constant 105 : index
    %1449 = memref.load %arg1[%c105] : memref<511xf32, #tpu.memory_space<smem>>
    %1450 = vector.broadcast %1449 : f32 to vector<40x128xf32>
    %1451 = arith.mulf %1448, %1450 : vector<40x128xf32>
    %1452 = arith.addf %1419, %1451 : vector<40x128xf32>
    %c150 = arith.constant 150 : index
    %1453 = memref.load %arg1[%c150] : memref<511xf32, #tpu.memory_space<smem>>
    %1454 = vector.broadcast %1453 : f32 to vector<40x128xf32>
    %1455 = arith.mulf %1448, %1454 : vector<40x128xf32>
    %1456 = arith.addf %1423, %1455 : vector<40x128xf32>
    %c195 = arith.constant 195 : index
    %1457 = memref.load %arg1[%c195] : memref<511xf32, #tpu.memory_space<smem>>
    %1458 = vector.broadcast %1457 : f32 to vector<40x128xf32>
    %1459 = arith.mulf %1448, %1458 : vector<40x128xf32>
    %1460 = arith.addf %1427, %1459 : vector<40x128xf32>
    %c240 = arith.constant 240 : index
    %1461 = memref.load %arg1[%c240] : memref<511xf32, #tpu.memory_space<smem>>
    %1462 = vector.broadcast %1461 : f32 to vector<40x128xf32>
    %1463 = arith.mulf %1448, %1462 : vector<40x128xf32>
    %1464 = arith.addf %1431, %1463 : vector<40x128xf32>
    %c285 = arith.constant 285 : index
    %1465 = memref.load %arg1[%c285] : memref<511xf32, #tpu.memory_space<smem>>
    %1466 = vector.broadcast %1465 : f32 to vector<40x128xf32>
    %1467 = arith.mulf %1448, %1466 : vector<40x128xf32>
    %1468 = arith.addf %1435, %1467 : vector<40x128xf32>
    %c330 = arith.constant 330 : index
    %1469 = memref.load %arg1[%c330] : memref<511xf32, #tpu.memory_space<smem>>
    %1470 = vector.broadcast %1469 : f32 to vector<40x128xf32>
    %1471 = arith.mulf %1448, %1470 : vector<40x128xf32>
    %1472 = arith.addf %1439, %1471 : vector<40x128xf32>
    %c375 = arith.constant 375 : index
    %1473 = memref.load %arg1[%c375] : memref<511xf32, #tpu.memory_space<smem>>
    %1474 = vector.broadcast %1473 : f32 to vector<40x128xf32>
    %1475 = arith.mulf %1448, %1474 : vector<40x128xf32>
    %1476 = arith.addf %1443, %1475 : vector<40x128xf32>
    %c420 = arith.constant 420 : index
    %1477 = memref.load %arg1[%c420] : memref<511xf32, #tpu.memory_space<smem>>
    %1478 = vector.broadcast %1477 : f32 to vector<40x128xf32>
    %1479 = arith.mulf %1448, %1478 : vector<40x128xf32>
    %1480 = arith.addf %1447, %1479 : vector<40x128xf32>
    %c32_i32_32 = arith.constant 32 : i32
    %1481 = tpu.dynamic_rotate %304 by %c32_i32_32 dim 1 : vector<40x128xf32>, i32 -> vector<40x128xf32>
    %c106 = arith.constant 106 : index
    %1482 = memref.load %arg1[%c106] : memref<511xf32, #tpu.memory_space<smem>>
    %1483 = vector.broadcast %1482 : f32 to vector<40x128xf32>
    %1484 = arith.mulf %1481, %1483 : vector<40x128xf32>
    %1485 = arith.addf %1452, %1484 : vector<40x128xf32>
    %c151 = arith.constant 151 : index
    %1486 = memref.load %arg1[%c151] : memref<511xf32, #tpu.memory_space<smem>>
    %1487 = vector.broadcast %1486 : f32 to vector<40x128xf32>
    %1488 = arith.mulf %1481, %1487 : vector<40x128xf32>
    %1489 = arith.addf %1456, %1488 : vector<40x128xf32>
    %c196 = arith.constant 196 : index
    %1490 = memref.load %arg1[%c196] : memref<511xf32, #tpu.memory_space<smem>>
    %1491 = vector.broadcast %1490 : f32 to vector<40x128xf32>
    %1492 = arith.mulf %1481, %1491 : vector<40x128xf32>
    %1493 = arith.addf %1460, %1492 : vector<40x128xf32>
    %c241 = arith.constant 241 : index
    %1494 = memref.load %arg1[%c241] : memref<511xf32, #tpu.memory_space<smem>>
    %1495 = vector.broadcast %1494 : f32 to vector<40x128xf32>
    %1496 = arith.mulf %1481, %1495 : vector<40x128xf32>
    %1497 = arith.addf %1464, %1496 : vector<40x128xf32>
    %c286 = arith.constant 286 : index
    %1498 = memref.load %arg1[%c286] : memref<511xf32, #tpu.memory_space<smem>>
    %1499 = vector.broadcast %1498 : f32 to vector<40x128xf32>
    %1500 = arith.mulf %1481, %1499 : vector<40x128xf32>
    %1501 = arith.addf %1468, %1500 : vector<40x128xf32>
    %c331 = arith.constant 331 : index
    %1502 = memref.load %arg1[%c331] : memref<511xf32, #tpu.memory_space<smem>>
    %1503 = vector.broadcast %1502 : f32 to vector<40x128xf32>
    %1504 = arith.mulf %1481, %1503 : vector<40x128xf32>
    %1505 = arith.addf %1472, %1504 : vector<40x128xf32>
    %c376 = arith.constant 376 : index
    %1506 = memref.load %arg1[%c376] : memref<511xf32, #tpu.memory_space<smem>>
    %1507 = vector.broadcast %1506 : f32 to vector<40x128xf32>
    %1508 = arith.mulf %1481, %1507 : vector<40x128xf32>
    %1509 = arith.addf %1476, %1508 : vector<40x128xf32>
    %c421 = arith.constant 421 : index
    %1510 = memref.load %arg1[%c421] : memref<511xf32, #tpu.memory_space<smem>>
    %1511 = vector.broadcast %1510 : f32 to vector<40x128xf32>
    %1512 = arith.mulf %1481, %1511 : vector<40x128xf32>
    %1513 = arith.addf %1480, %1512 : vector<40x128xf32>
    %c24_i32_33 = arith.constant 24 : i32
    %1514 = tpu.dynamic_rotate %304 by %c24_i32_33 dim 1 : vector<40x128xf32>, i32 -> vector<40x128xf32>
    %c107 = arith.constant 107 : index
    %1515 = memref.load %arg1[%c107] : memref<511xf32, #tpu.memory_space<smem>>
    %1516 = vector.broadcast %1515 : f32 to vector<40x128xf32>
    %1517 = arith.mulf %1514, %1516 : vector<40x128xf32>
    %1518 = arith.addf %1485, %1517 : vector<40x128xf32>
    %c152 = arith.constant 152 : index
    %1519 = memref.load %arg1[%c152] : memref<511xf32, #tpu.memory_space<smem>>
    %1520 = vector.broadcast %1519 : f32 to vector<40x128xf32>
    %1521 = arith.mulf %1514, %1520 : vector<40x128xf32>
    %1522 = arith.addf %1489, %1521 : vector<40x128xf32>
    %c197 = arith.constant 197 : index
    %1523 = memref.load %arg1[%c197] : memref<511xf32, #tpu.memory_space<smem>>
    %1524 = vector.broadcast %1523 : f32 to vector<40x128xf32>
    %1525 = arith.mulf %1514, %1524 : vector<40x128xf32>
    %1526 = arith.addf %1493, %1525 : vector<40x128xf32>
    %c242 = arith.constant 242 : index
    %1527 = memref.load %arg1[%c242] : memref<511xf32, #tpu.memory_space<smem>>
    %1528 = vector.broadcast %1527 : f32 to vector<40x128xf32>
    %1529 = arith.mulf %1514, %1528 : vector<40x128xf32>
    %1530 = arith.addf %1497, %1529 : vector<40x128xf32>
    %c287 = arith.constant 287 : index
    %1531 = memref.load %arg1[%c287] : memref<511xf32, #tpu.memory_space<smem>>
    %1532 = vector.broadcast %1531 : f32 to vector<40x128xf32>
    %1533 = arith.mulf %1514, %1532 : vector<40x128xf32>
    %1534 = arith.addf %1501, %1533 : vector<40x128xf32>
    %c332 = arith.constant 332 : index
    %1535 = memref.load %arg1[%c332] : memref<511xf32, #tpu.memory_space<smem>>
    %1536 = vector.broadcast %1535 : f32 to vector<40x128xf32>
    %1537 = arith.mulf %1514, %1536 : vector<40x128xf32>
    %1538 = arith.addf %1505, %1537 : vector<40x128xf32>
    %c377 = arith.constant 377 : index
    %1539 = memref.load %arg1[%c377] : memref<511xf32, #tpu.memory_space<smem>>
    %1540 = vector.broadcast %1539 : f32 to vector<40x128xf32>
    %1541 = arith.mulf %1514, %1540 : vector<40x128xf32>
    %1542 = arith.addf %1509, %1541 : vector<40x128xf32>
    %c422 = arith.constant 422 : index
    %1543 = memref.load %arg1[%c422] : memref<511xf32, #tpu.memory_space<smem>>
    %1544 = vector.broadcast %1543 : f32 to vector<40x128xf32>
    %1545 = arith.mulf %1514, %1544 : vector<40x128xf32>
    %1546 = arith.addf %1513, %1545 : vector<40x128xf32>
    %c16_i32_34 = arith.constant 16 : i32
    %1547 = tpu.dynamic_rotate %304 by %c16_i32_34 dim 1 : vector<40x128xf32>, i32 -> vector<40x128xf32>
    %c108 = arith.constant 108 : index
    %1548 = memref.load %arg1[%c108] : memref<511xf32, #tpu.memory_space<smem>>
    %1549 = vector.broadcast %1548 : f32 to vector<40x128xf32>
    %1550 = arith.mulf %1547, %1549 : vector<40x128xf32>
    %1551 = arith.addf %1518, %1550 : vector<40x128xf32>
    %c153 = arith.constant 153 : index
    %1552 = memref.load %arg1[%c153] : memref<511xf32, #tpu.memory_space<smem>>
    %1553 = vector.broadcast %1552 : f32 to vector<40x128xf32>
    %1554 = arith.mulf %1547, %1553 : vector<40x128xf32>
    %1555 = arith.addf %1522, %1554 : vector<40x128xf32>
    %c198 = arith.constant 198 : index
    %1556 = memref.load %arg1[%c198] : memref<511xf32, #tpu.memory_space<smem>>
    %1557 = vector.broadcast %1556 : f32 to vector<40x128xf32>
    %1558 = arith.mulf %1547, %1557 : vector<40x128xf32>
    %1559 = arith.addf %1526, %1558 : vector<40x128xf32>
    %c243 = arith.constant 243 : index
    %1560 = memref.load %arg1[%c243] : memref<511xf32, #tpu.memory_space<smem>>
    %1561 = vector.broadcast %1560 : f32 to vector<40x128xf32>
    %1562 = arith.mulf %1547, %1561 : vector<40x128xf32>
    %1563 = arith.addf %1530, %1562 : vector<40x128xf32>
    %c288 = arith.constant 288 : index
    %1564 = memref.load %arg1[%c288] : memref<511xf32, #tpu.memory_space<smem>>
    %1565 = vector.broadcast %1564 : f32 to vector<40x128xf32>
    %1566 = arith.mulf %1547, %1565 : vector<40x128xf32>
    %1567 = arith.addf %1534, %1566 : vector<40x128xf32>
    %c333 = arith.constant 333 : index
    %1568 = memref.load %arg1[%c333] : memref<511xf32, #tpu.memory_space<smem>>
    %1569 = vector.broadcast %1568 : f32 to vector<40x128xf32>
    %1570 = arith.mulf %1547, %1569 : vector<40x128xf32>
    %1571 = arith.addf %1538, %1570 : vector<40x128xf32>
    %c378 = arith.constant 378 : index
    %1572 = memref.load %arg1[%c378] : memref<511xf32, #tpu.memory_space<smem>>
    %1573 = vector.broadcast %1572 : f32 to vector<40x128xf32>
    %1574 = arith.mulf %1547, %1573 : vector<40x128xf32>
    %1575 = arith.addf %1542, %1574 : vector<40x128xf32>
    %c423 = arith.constant 423 : index
    %1576 = memref.load %arg1[%c423] : memref<511xf32, #tpu.memory_space<smem>>
    %1577 = vector.broadcast %1576 : f32 to vector<40x128xf32>
    %1578 = arith.mulf %1547, %1577 : vector<40x128xf32>
    %1579 = arith.addf %1546, %1578 : vector<40x128xf32>
    %c8_i32_35 = arith.constant 8 : i32
    %1580 = tpu.dynamic_rotate %304 by %c8_i32_35 dim 1 : vector<40x128xf32>, i32 -> vector<40x128xf32>
    %c109 = arith.constant 109 : index
    %1581 = memref.load %arg1[%c109] : memref<511xf32, #tpu.memory_space<smem>>
    %1582 = vector.broadcast %1581 : f32 to vector<40x128xf32>
    %1583 = arith.mulf %1580, %1582 : vector<40x128xf32>
    %1584 = arith.addf %1551, %1583 : vector<40x128xf32>
    %c154 = arith.constant 154 : index
    %1585 = memref.load %arg1[%c154] : memref<511xf32, #tpu.memory_space<smem>>
    %1586 = vector.broadcast %1585 : f32 to vector<40x128xf32>
    %1587 = arith.mulf %1580, %1586 : vector<40x128xf32>
    %1588 = arith.addf %1555, %1587 : vector<40x128xf32>
    %c199 = arith.constant 199 : index
    %1589 = memref.load %arg1[%c199] : memref<511xf32, #tpu.memory_space<smem>>
    %1590 = vector.broadcast %1589 : f32 to vector<40x128xf32>
    %1591 = arith.mulf %1580, %1590 : vector<40x128xf32>
    %1592 = arith.addf %1559, %1591 : vector<40x128xf32>
    %c244 = arith.constant 244 : index
    %1593 = memref.load %arg1[%c244] : memref<511xf32, #tpu.memory_space<smem>>
    %1594 = vector.broadcast %1593 : f32 to vector<40x128xf32>
    %1595 = arith.mulf %1580, %1594 : vector<40x128xf32>
    %1596 = arith.addf %1563, %1595 : vector<40x128xf32>
    %c289 = arith.constant 289 : index
    %1597 = memref.load %arg1[%c289] : memref<511xf32, #tpu.memory_space<smem>>
    %1598 = vector.broadcast %1597 : f32 to vector<40x128xf32>
    %1599 = arith.mulf %1580, %1598 : vector<40x128xf32>
    %1600 = arith.addf %1567, %1599 : vector<40x128xf32>
    %c334 = arith.constant 334 : index
    %1601 = memref.load %arg1[%c334] : memref<511xf32, #tpu.memory_space<smem>>
    %1602 = vector.broadcast %1601 : f32 to vector<40x128xf32>
    %1603 = arith.mulf %1580, %1602 : vector<40x128xf32>
    %1604 = arith.addf %1571, %1603 : vector<40x128xf32>
    %c379 = arith.constant 379 : index
    %1605 = memref.load %arg1[%c379] : memref<511xf32, #tpu.memory_space<smem>>
    %1606 = vector.broadcast %1605 : f32 to vector<40x128xf32>
    %1607 = arith.mulf %1580, %1606 : vector<40x128xf32>
    %1608 = arith.addf %1575, %1607 : vector<40x128xf32>
    %c424 = arith.constant 424 : index
    %1609 = memref.load %arg1[%c424] : memref<511xf32, #tpu.memory_space<smem>>
    %1610 = vector.broadcast %1609 : f32 to vector<40x128xf32>
    %1611 = arith.mulf %1580, %1610 : vector<40x128xf32>
    %1612 = arith.addf %1579, %1611 : vector<40x128xf32>
    %c110 = arith.constant 110 : index
    %1613 = memref.load %arg1[%c110] : memref<511xf32, #tpu.memory_space<smem>>
    %1614 = vector.broadcast %1613 : f32 to vector<40x128xf32>
    %1615 = arith.mulf %304, %1614 : vector<40x128xf32>
    %1616 = arith.addf %1584, %1615 : vector<40x128xf32>
    %c155 = arith.constant 155 : index
    %1617 = memref.load %arg1[%c155] : memref<511xf32, #tpu.memory_space<smem>>
    %1618 = vector.broadcast %1617 : f32 to vector<40x128xf32>
    %1619 = arith.mulf %304, %1618 : vector<40x128xf32>
    %1620 = arith.addf %1588, %1619 : vector<40x128xf32>
    %c200 = arith.constant 200 : index
    %1621 = memref.load %arg1[%c200] : memref<511xf32, #tpu.memory_space<smem>>
    %1622 = vector.broadcast %1621 : f32 to vector<40x128xf32>
    %1623 = arith.mulf %304, %1622 : vector<40x128xf32>
    %1624 = arith.addf %1592, %1623 : vector<40x128xf32>
    %c245 = arith.constant 245 : index
    %1625 = memref.load %arg1[%c245] : memref<511xf32, #tpu.memory_space<smem>>
    %1626 = vector.broadcast %1625 : f32 to vector<40x128xf32>
    %1627 = arith.mulf %304, %1626 : vector<40x128xf32>
    %1628 = arith.addf %1596, %1627 : vector<40x128xf32>
    %c290 = arith.constant 290 : index
    %1629 = memref.load %arg1[%c290] : memref<511xf32, #tpu.memory_space<smem>>
    %1630 = vector.broadcast %1629 : f32 to vector<40x128xf32>
    %1631 = arith.mulf %304, %1630 : vector<40x128xf32>
    %1632 = arith.addf %1600, %1631 : vector<40x128xf32>
    %c335 = arith.constant 335 : index
    %1633 = memref.load %arg1[%c335] : memref<511xf32, #tpu.memory_space<smem>>
    %1634 = vector.broadcast %1633 : f32 to vector<40x128xf32>
    %1635 = arith.mulf %304, %1634 : vector<40x128xf32>
    %1636 = arith.addf %1604, %1635 : vector<40x128xf32>
    %c380 = arith.constant 380 : index
    %1637 = memref.load %arg1[%c380] : memref<511xf32, #tpu.memory_space<smem>>
    %1638 = vector.broadcast %1637 : f32 to vector<40x128xf32>
    %1639 = arith.mulf %304, %1638 : vector<40x128xf32>
    %1640 = arith.addf %1608, %1639 : vector<40x128xf32>
    %c425 = arith.constant 425 : index
    %1641 = memref.load %arg1[%c425] : memref<511xf32, #tpu.memory_space<smem>>
    %1642 = vector.broadcast %1641 : f32 to vector<40x128xf32>
    %1643 = arith.mulf %304, %1642 : vector<40x128xf32>
    %1644 = arith.addf %1612, %1643 : vector<40x128xf32>
    %c120_i32_36 = arith.constant 120 : i32
    %1645 = tpu.dynamic_rotate %304 by %c120_i32_36 dim 1 : vector<40x128xf32>, i32 -> vector<40x128xf32>
    %c111 = arith.constant 111 : index
    %1646 = memref.load %arg1[%c111] : memref<511xf32, #tpu.memory_space<smem>>
    %1647 = vector.broadcast %1646 : f32 to vector<40x128xf32>
    %1648 = arith.mulf %1645, %1647 : vector<40x128xf32>
    %1649 = arith.addf %1616, %1648 : vector<40x128xf32>
    %c156 = arith.constant 156 : index
    %1650 = memref.load %arg1[%c156] : memref<511xf32, #tpu.memory_space<smem>>
    %1651 = vector.broadcast %1650 : f32 to vector<40x128xf32>
    %1652 = arith.mulf %1645, %1651 : vector<40x128xf32>
    %1653 = arith.addf %1620, %1652 : vector<40x128xf32>
    %c201 = arith.constant 201 : index
    %1654 = memref.load %arg1[%c201] : memref<511xf32, #tpu.memory_space<smem>>
    %1655 = vector.broadcast %1654 : f32 to vector<40x128xf32>
    %1656 = arith.mulf %1645, %1655 : vector<40x128xf32>
    %1657 = arith.addf %1624, %1656 : vector<40x128xf32>
    %c246 = arith.constant 246 : index
    %1658 = memref.load %arg1[%c246] : memref<511xf32, #tpu.memory_space<smem>>
    %1659 = vector.broadcast %1658 : f32 to vector<40x128xf32>
    %1660 = arith.mulf %1645, %1659 : vector<40x128xf32>
    %1661 = arith.addf %1628, %1660 : vector<40x128xf32>
    %c291 = arith.constant 291 : index
    %1662 = memref.load %arg1[%c291] : memref<511xf32, #tpu.memory_space<smem>>
    %1663 = vector.broadcast %1662 : f32 to vector<40x128xf32>
    %1664 = arith.mulf %1645, %1663 : vector<40x128xf32>
    %1665 = arith.addf %1632, %1664 : vector<40x128xf32>
    %c336 = arith.constant 336 : index
    %1666 = memref.load %arg1[%c336] : memref<511xf32, #tpu.memory_space<smem>>
    %1667 = vector.broadcast %1666 : f32 to vector<40x128xf32>
    %1668 = arith.mulf %1645, %1667 : vector<40x128xf32>
    %1669 = arith.addf %1636, %1668 : vector<40x128xf32>
    %c381 = arith.constant 381 : index
    %1670 = memref.load %arg1[%c381] : memref<511xf32, #tpu.memory_space<smem>>
    %1671 = vector.broadcast %1670 : f32 to vector<40x128xf32>
    %1672 = arith.mulf %1645, %1671 : vector<40x128xf32>
    %1673 = arith.addf %1640, %1672 : vector<40x128xf32>
    %c426 = arith.constant 426 : index
    %1674 = memref.load %arg1[%c426] : memref<511xf32, #tpu.memory_space<smem>>
    %1675 = vector.broadcast %1674 : f32 to vector<40x128xf32>
    %1676 = arith.mulf %1645, %1675 : vector<40x128xf32>
    %1677 = arith.addf %1644, %1676 : vector<40x128xf32>
    %c112_i32_37 = arith.constant 112 : i32
    %1678 = tpu.dynamic_rotate %304 by %c112_i32_37 dim 1 : vector<40x128xf32>, i32 -> vector<40x128xf32>
    %c112 = arith.constant 112 : index
    %1679 = memref.load %arg1[%c112] : memref<511xf32, #tpu.memory_space<smem>>
    %1680 = vector.broadcast %1679 : f32 to vector<40x128xf32>
    %1681 = arith.mulf %1678, %1680 : vector<40x128xf32>
    %1682 = arith.addf %1649, %1681 : vector<40x128xf32>
    %c157 = arith.constant 157 : index
    %1683 = memref.load %arg1[%c157] : memref<511xf32, #tpu.memory_space<smem>>
    %1684 = vector.broadcast %1683 : f32 to vector<40x128xf32>
    %1685 = arith.mulf %1678, %1684 : vector<40x128xf32>
    %1686 = arith.addf %1653, %1685 : vector<40x128xf32>
    %c202 = arith.constant 202 : index
    %1687 = memref.load %arg1[%c202] : memref<511xf32, #tpu.memory_space<smem>>
    %1688 = vector.broadcast %1687 : f32 to vector<40x128xf32>
    %1689 = arith.mulf %1678, %1688 : vector<40x128xf32>
    %1690 = arith.addf %1657, %1689 : vector<40x128xf32>
    %c247 = arith.constant 247 : index
    %1691 = memref.load %arg1[%c247] : memref<511xf32, #tpu.memory_space<smem>>
    %1692 = vector.broadcast %1691 : f32 to vector<40x128xf32>
    %1693 = arith.mulf %1678, %1692 : vector<40x128xf32>
    %1694 = arith.addf %1661, %1693 : vector<40x128xf32>
    %c292 = arith.constant 292 : index
    %1695 = memref.load %arg1[%c292] : memref<511xf32, #tpu.memory_space<smem>>
    %1696 = vector.broadcast %1695 : f32 to vector<40x128xf32>
    %1697 = arith.mulf %1678, %1696 : vector<40x128xf32>
    %1698 = arith.addf %1665, %1697 : vector<40x128xf32>
    %c337 = arith.constant 337 : index
    %1699 = memref.load %arg1[%c337] : memref<511xf32, #tpu.memory_space<smem>>
    %1700 = vector.broadcast %1699 : f32 to vector<40x128xf32>
    %1701 = arith.mulf %1678, %1700 : vector<40x128xf32>
    %1702 = arith.addf %1669, %1701 : vector<40x128xf32>
    %c382 = arith.constant 382 : index
    %1703 = memref.load %arg1[%c382] : memref<511xf32, #tpu.memory_space<smem>>
    %1704 = vector.broadcast %1703 : f32 to vector<40x128xf32>
    %1705 = arith.mulf %1678, %1704 : vector<40x128xf32>
    %1706 = arith.addf %1673, %1705 : vector<40x128xf32>
    %c427 = arith.constant 427 : index
    %1707 = memref.load %arg1[%c427] : memref<511xf32, #tpu.memory_space<smem>>
    %1708 = vector.broadcast %1707 : f32 to vector<40x128xf32>
    %1709 = arith.mulf %1678, %1708 : vector<40x128xf32>
    %1710 = arith.addf %1677, %1709 : vector<40x128xf32>
    %c104_i32_38 = arith.constant 104 : i32
    %1711 = tpu.dynamic_rotate %304 by %c104_i32_38 dim 1 : vector<40x128xf32>, i32 -> vector<40x128xf32>
    %c113 = arith.constant 113 : index
    %1712 = memref.load %arg1[%c113] : memref<511xf32, #tpu.memory_space<smem>>
    %1713 = vector.broadcast %1712 : f32 to vector<40x128xf32>
    %1714 = arith.mulf %1711, %1713 : vector<40x128xf32>
    %1715 = arith.addf %1682, %1714 : vector<40x128xf32>
    %c158 = arith.constant 158 : index
    %1716 = memref.load %arg1[%c158] : memref<511xf32, #tpu.memory_space<smem>>
    %1717 = vector.broadcast %1716 : f32 to vector<40x128xf32>
    %1718 = arith.mulf %1711, %1717 : vector<40x128xf32>
    %1719 = arith.addf %1686, %1718 : vector<40x128xf32>
    %c203 = arith.constant 203 : index
    %1720 = memref.load %arg1[%c203] : memref<511xf32, #tpu.memory_space<smem>>
    %1721 = vector.broadcast %1720 : f32 to vector<40x128xf32>
    %1722 = arith.mulf %1711, %1721 : vector<40x128xf32>
    %1723 = arith.addf %1690, %1722 : vector<40x128xf32>
    %c248 = arith.constant 248 : index
    %1724 = memref.load %arg1[%c248] : memref<511xf32, #tpu.memory_space<smem>>
    %1725 = vector.broadcast %1724 : f32 to vector<40x128xf32>
    %1726 = arith.mulf %1711, %1725 : vector<40x128xf32>
    %1727 = arith.addf %1694, %1726 : vector<40x128xf32>
    %c293 = arith.constant 293 : index
    %1728 = memref.load %arg1[%c293] : memref<511xf32, #tpu.memory_space<smem>>
    %1729 = vector.broadcast %1728 : f32 to vector<40x128xf32>
    %1730 = arith.mulf %1711, %1729 : vector<40x128xf32>
    %1731 = arith.addf %1698, %1730 : vector<40x128xf32>
    %c338 = arith.constant 338 : index
    %1732 = memref.load %arg1[%c338] : memref<511xf32, #tpu.memory_space<smem>>
    %1733 = vector.broadcast %1732 : f32 to vector<40x128xf32>
    %1734 = arith.mulf %1711, %1733 : vector<40x128xf32>
    %1735 = arith.addf %1702, %1734 : vector<40x128xf32>
    %c383 = arith.constant 383 : index
    %1736 = memref.load %arg1[%c383] : memref<511xf32, #tpu.memory_space<smem>>
    %1737 = vector.broadcast %1736 : f32 to vector<40x128xf32>
    %1738 = arith.mulf %1711, %1737 : vector<40x128xf32>
    %1739 = arith.addf %1706, %1738 : vector<40x128xf32>
    %c428 = arith.constant 428 : index
    %1740 = memref.load %arg1[%c428] : memref<511xf32, #tpu.memory_space<smem>>
    %1741 = vector.broadcast %1740 : f32 to vector<40x128xf32>
    %1742 = arith.mulf %1711, %1741 : vector<40x128xf32>
    %1743 = arith.addf %1710, %1742 : vector<40x128xf32>
    %c96_i32_39 = arith.constant 96 : i32
    %1744 = tpu.dynamic_rotate %304 by %c96_i32_39 dim 1 : vector<40x128xf32>, i32 -> vector<40x128xf32>
    %c114 = arith.constant 114 : index
    %1745 = memref.load %arg1[%c114] : memref<511xf32, #tpu.memory_space<smem>>
    %1746 = vector.broadcast %1745 : f32 to vector<40x128xf32>
    %1747 = arith.mulf %1744, %1746 : vector<40x128xf32>
    %1748 = arith.addf %1715, %1747 : vector<40x128xf32>
    %c159 = arith.constant 159 : index
    %1749 = memref.load %arg1[%c159] : memref<511xf32, #tpu.memory_space<smem>>
    %1750 = vector.broadcast %1749 : f32 to vector<40x128xf32>
    %1751 = arith.mulf %1744, %1750 : vector<40x128xf32>
    %1752 = arith.addf %1719, %1751 : vector<40x128xf32>
    %c204 = arith.constant 204 : index
    %1753 = memref.load %arg1[%c204] : memref<511xf32, #tpu.memory_space<smem>>
    %1754 = vector.broadcast %1753 : f32 to vector<40x128xf32>
    %1755 = arith.mulf %1744, %1754 : vector<40x128xf32>
    %1756 = arith.addf %1723, %1755 : vector<40x128xf32>
    %c249 = arith.constant 249 : index
    %1757 = memref.load %arg1[%c249] : memref<511xf32, #tpu.memory_space<smem>>
    %1758 = vector.broadcast %1757 : f32 to vector<40x128xf32>
    %1759 = arith.mulf %1744, %1758 : vector<40x128xf32>
    %1760 = arith.addf %1727, %1759 : vector<40x128xf32>
    %c294 = arith.constant 294 : index
    %1761 = memref.load %arg1[%c294] : memref<511xf32, #tpu.memory_space<smem>>
    %1762 = vector.broadcast %1761 : f32 to vector<40x128xf32>
    %1763 = arith.mulf %1744, %1762 : vector<40x128xf32>
    %1764 = arith.addf %1731, %1763 : vector<40x128xf32>
    %c339 = arith.constant 339 : index
    %1765 = memref.load %arg1[%c339] : memref<511xf32, #tpu.memory_space<smem>>
    %1766 = vector.broadcast %1765 : f32 to vector<40x128xf32>
    %1767 = arith.mulf %1744, %1766 : vector<40x128xf32>
    %1768 = arith.addf %1735, %1767 : vector<40x128xf32>
    %c384 = arith.constant 384 : index
    %1769 = memref.load %arg1[%c384] : memref<511xf32, #tpu.memory_space<smem>>
    %1770 = vector.broadcast %1769 : f32 to vector<40x128xf32>
    %1771 = arith.mulf %1744, %1770 : vector<40x128xf32>
    %1772 = arith.addf %1739, %1771 : vector<40x128xf32>
    %c429 = arith.constant 429 : index
    %1773 = memref.load %arg1[%c429] : memref<511xf32, #tpu.memory_space<smem>>
    %1774 = vector.broadcast %1773 : f32 to vector<40x128xf32>
    %1775 = arith.mulf %1744, %1774 : vector<40x128xf32>
    %1776 = arith.addf %1743, %1775 : vector<40x128xf32>
    %c430 = arith.constant 430 : index
    %1777 = memref.load %arg1[%c430] : memref<511xf32, #tpu.memory_space<smem>>
    %1778 = vector.broadcast %1777 : f32 to vector<40x128xf32>
    %1779 = arith.addf %1748, %1778 : vector<40x128xf32>
    %1780 = math.tanh %1779 : vector<40x128xf32>
    %c431 = arith.constant 431 : index
    %1781 = memref.load %arg1[%c431] : memref<511xf32, #tpu.memory_space<smem>>
    %1782 = vector.broadcast %1781 : f32 to vector<40x128xf32>
    %1783 = arith.addf %1752, %1782 : vector<40x128xf32>
    %1784 = math.tanh %1783 : vector<40x128xf32>
    %c432 = arith.constant 432 : index
    %1785 = memref.load %arg1[%c432] : memref<511xf32, #tpu.memory_space<smem>>
    %1786 = vector.broadcast %1785 : f32 to vector<40x128xf32>
    %1787 = arith.addf %1756, %1786 : vector<40x128xf32>
    %1788 = math.tanh %1787 : vector<40x128xf32>
    %c433 = arith.constant 433 : index
    %1789 = memref.load %arg1[%c433] : memref<511xf32, #tpu.memory_space<smem>>
    %1790 = vector.broadcast %1789 : f32 to vector<40x128xf32>
    %1791 = arith.addf %1760, %1790 : vector<40x128xf32>
    %1792 = math.tanh %1791 : vector<40x128xf32>
    %c434 = arith.constant 434 : index
    %1793 = memref.load %arg1[%c434] : memref<511xf32, #tpu.memory_space<smem>>
    %1794 = vector.broadcast %1793 : f32 to vector<40x128xf32>
    %1795 = arith.addf %1764, %1794 : vector<40x128xf32>
    %1796 = math.tanh %1795 : vector<40x128xf32>
    %c435 = arith.constant 435 : index
    %1797 = memref.load %arg1[%c435] : memref<511xf32, #tpu.memory_space<smem>>
    %1798 = vector.broadcast %1797 : f32 to vector<40x128xf32>
    %1799 = arith.addf %1768, %1798 : vector<40x128xf32>
    %1800 = math.tanh %1799 : vector<40x128xf32>
    %c436 = arith.constant 436 : index
    %1801 = memref.load %arg1[%c436] : memref<511xf32, #tpu.memory_space<smem>>
    %1802 = vector.broadcast %1801 : f32 to vector<40x128xf32>
    %1803 = arith.addf %1772, %1802 : vector<40x128xf32>
    %1804 = math.tanh %1803 : vector<40x128xf32>
    %c437 = arith.constant 437 : index
    %1805 = memref.load %arg1[%c437] : memref<511xf32, #tpu.memory_space<smem>>
    %1806 = vector.broadcast %1805 : f32 to vector<40x128xf32>
    %1807 = arith.addf %1776, %1806 : vector<40x128xf32>
    %1808 = math.tanh %1807 : vector<40x128xf32>
    %c64_i32 = arith.constant 64 : i32
    %1809 = tpu.dynamic_rotate %1780 by %c64_i32 dim 1 : vector<40x128xf32>, i32 -> vector<40x128xf32>
    %c438 = arith.constant 438 : index
    %1810 = memref.load %arg1[%c438] : memref<511xf32, #tpu.memory_space<smem>>
    %1811 = vector.broadcast %1810 : f32 to vector<40x128xf32>
    %1812 = arith.mulf %1809, %1811 : vector<40x128xf32>
    %c48_i32 = arith.constant 48 : i32
    %1813 = tpu.dynamic_rotate %1780 by %c48_i32 dim 1 : vector<40x128xf32>, i32 -> vector<40x128xf32>
    %c439 = arith.constant 439 : index
    %1814 = memref.load %arg1[%c439] : memref<511xf32, #tpu.memory_space<smem>>
    %1815 = vector.broadcast %1814 : f32 to vector<40x128xf32>
    %1816 = arith.mulf %1813, %1815 : vector<40x128xf32>
    %1817 = arith.addf %1812, %1816 : vector<40x128xf32>
    %c32_i32_40 = arith.constant 32 : i32
    %1818 = tpu.dynamic_rotate %1780 by %c32_i32_40 dim 1 : vector<40x128xf32>, i32 -> vector<40x128xf32>
    %c440 = arith.constant 440 : index
    %1819 = memref.load %arg1[%c440] : memref<511xf32, #tpu.memory_space<smem>>
    %1820 = vector.broadcast %1819 : f32 to vector<40x128xf32>
    %1821 = arith.mulf %1818, %1820 : vector<40x128xf32>
    %1822 = arith.addf %1817, %1821 : vector<40x128xf32>
    %c16_i32_41 = arith.constant 16 : i32
    %1823 = tpu.dynamic_rotate %1780 by %c16_i32_41 dim 1 : vector<40x128xf32>, i32 -> vector<40x128xf32>
    %c441 = arith.constant 441 : index
    %1824 = memref.load %arg1[%c441] : memref<511xf32, #tpu.memory_space<smem>>
    %1825 = vector.broadcast %1824 : f32 to vector<40x128xf32>
    %1826 = arith.mulf %1823, %1825 : vector<40x128xf32>
    %1827 = arith.addf %1822, %1826 : vector<40x128xf32>
    %c442 = arith.constant 442 : index
    %1828 = memref.load %arg1[%c442] : memref<511xf32, #tpu.memory_space<smem>>
    %1829 = vector.broadcast %1828 : f32 to vector<40x128xf32>
    %1830 = arith.mulf %1780, %1829 : vector<40x128xf32>
    %1831 = arith.addf %1827, %1830 : vector<40x128xf32>
    %c112_i32_42 = arith.constant 112 : i32
    %1832 = tpu.dynamic_rotate %1780 by %c112_i32_42 dim 1 : vector<40x128xf32>, i32 -> vector<40x128xf32>
    %c443 = arith.constant 443 : index
    %1833 = memref.load %arg1[%c443] : memref<511xf32, #tpu.memory_space<smem>>
    %1834 = vector.broadcast %1833 : f32 to vector<40x128xf32>
    %1835 = arith.mulf %1832, %1834 : vector<40x128xf32>
    %1836 = arith.addf %1831, %1835 : vector<40x128xf32>
    %c96_i32_43 = arith.constant 96 : i32
    %1837 = tpu.dynamic_rotate %1780 by %c96_i32_43 dim 1 : vector<40x128xf32>, i32 -> vector<40x128xf32>
    %c444 = arith.constant 444 : index
    %1838 = memref.load %arg1[%c444] : memref<511xf32, #tpu.memory_space<smem>>
    %1839 = vector.broadcast %1838 : f32 to vector<40x128xf32>
    %1840 = arith.mulf %1837, %1839 : vector<40x128xf32>
    %1841 = arith.addf %1836, %1840 : vector<40x128xf32>
    %c80_i32 = arith.constant 80 : i32
    %1842 = tpu.dynamic_rotate %1780 by %c80_i32 dim 1 : vector<40x128xf32>, i32 -> vector<40x128xf32>
    %c445 = arith.constant 445 : index
    %1843 = memref.load %arg1[%c445] : memref<511xf32, #tpu.memory_space<smem>>
    %1844 = vector.broadcast %1843 : f32 to vector<40x128xf32>
    %1845 = arith.mulf %1842, %1844 : vector<40x128xf32>
    %1846 = arith.addf %1841, %1845 : vector<40x128xf32>
    %c64_i32_44 = arith.constant 64 : i32
    %1847 = tpu.dynamic_rotate %1780 by %c64_i32_44 dim 1 : vector<40x128xf32>, i32 -> vector<40x128xf32>
    %c446 = arith.constant 446 : index
    %1848 = memref.load %arg1[%c446] : memref<511xf32, #tpu.memory_space<smem>>
    %1849 = vector.broadcast %1848 : f32 to vector<40x128xf32>
    %1850 = arith.mulf %1847, %1849 : vector<40x128xf32>
    %1851 = arith.addf %1846, %1850 : vector<40x128xf32>
    %c64_i32_45 = arith.constant 64 : i32
    %1852 = tpu.dynamic_rotate %1784 by %c64_i32_45 dim 1 : vector<40x128xf32>, i32 -> vector<40x128xf32>
    %c447 = arith.constant 447 : index
    %1853 = memref.load %arg1[%c447] : memref<511xf32, #tpu.memory_space<smem>>
    %1854 = vector.broadcast %1853 : f32 to vector<40x128xf32>
    %1855 = arith.mulf %1852, %1854 : vector<40x128xf32>
    %1856 = arith.addf %1851, %1855 : vector<40x128xf32>
    %c48_i32_46 = arith.constant 48 : i32
    %1857 = tpu.dynamic_rotate %1784 by %c48_i32_46 dim 1 : vector<40x128xf32>, i32 -> vector<40x128xf32>
    %c448 = arith.constant 448 : index
    %1858 = memref.load %arg1[%c448] : memref<511xf32, #tpu.memory_space<smem>>
    %1859 = vector.broadcast %1858 : f32 to vector<40x128xf32>
    %1860 = arith.mulf %1857, %1859 : vector<40x128xf32>
    %1861 = arith.addf %1856, %1860 : vector<40x128xf32>
    %c32_i32_47 = arith.constant 32 : i32
    %1862 = tpu.dynamic_rotate %1784 by %c32_i32_47 dim 1 : vector<40x128xf32>, i32 -> vector<40x128xf32>
    %c449 = arith.constant 449 : index
    %1863 = memref.load %arg1[%c449] : memref<511xf32, #tpu.memory_space<smem>>
    %1864 = vector.broadcast %1863 : f32 to vector<40x128xf32>
    %1865 = arith.mulf %1862, %1864 : vector<40x128xf32>
    %1866 = arith.addf %1861, %1865 : vector<40x128xf32>
    %c16_i32_48 = arith.constant 16 : i32
    %1867 = tpu.dynamic_rotate %1784 by %c16_i32_48 dim 1 : vector<40x128xf32>, i32 -> vector<40x128xf32>
    %c450 = arith.constant 450 : index
    %1868 = memref.load %arg1[%c450] : memref<511xf32, #tpu.memory_space<smem>>
    %1869 = vector.broadcast %1868 : f32 to vector<40x128xf32>
    %1870 = arith.mulf %1867, %1869 : vector<40x128xf32>
    %1871 = arith.addf %1866, %1870 : vector<40x128xf32>
    %c451 = arith.constant 451 : index
    %1872 = memref.load %arg1[%c451] : memref<511xf32, #tpu.memory_space<smem>>
    %1873 = vector.broadcast %1872 : f32 to vector<40x128xf32>
    %1874 = arith.mulf %1784, %1873 : vector<40x128xf32>
    %1875 = arith.addf %1871, %1874 : vector<40x128xf32>
    %c112_i32_49 = arith.constant 112 : i32
    %1876 = tpu.dynamic_rotate %1784 by %c112_i32_49 dim 1 : vector<40x128xf32>, i32 -> vector<40x128xf32>
    %c452 = arith.constant 452 : index
    %1877 = memref.load %arg1[%c452] : memref<511xf32, #tpu.memory_space<smem>>
    %1878 = vector.broadcast %1877 : f32 to vector<40x128xf32>
    %1879 = arith.mulf %1876, %1878 : vector<40x128xf32>
    %1880 = arith.addf %1875, %1879 : vector<40x128xf32>
    %c96_i32_50 = arith.constant 96 : i32
    %1881 = tpu.dynamic_rotate %1784 by %c96_i32_50 dim 1 : vector<40x128xf32>, i32 -> vector<40x128xf32>
    %c453 = arith.constant 453 : index
    %1882 = memref.load %arg1[%c453] : memref<511xf32, #tpu.memory_space<smem>>
    %1883 = vector.broadcast %1882 : f32 to vector<40x128xf32>
    %1884 = arith.mulf %1881, %1883 : vector<40x128xf32>
    %1885 = arith.addf %1880, %1884 : vector<40x128xf32>
    %c80_i32_51 = arith.constant 80 : i32
    %1886 = tpu.dynamic_rotate %1784 by %c80_i32_51 dim 1 : vector<40x128xf32>, i32 -> vector<40x128xf32>
    %c454 = arith.constant 454 : index
    %1887 = memref.load %arg1[%c454] : memref<511xf32, #tpu.memory_space<smem>>
    %1888 = vector.broadcast %1887 : f32 to vector<40x128xf32>
    %1889 = arith.mulf %1886, %1888 : vector<40x128xf32>
    %1890 = arith.addf %1885, %1889 : vector<40x128xf32>
    %c64_i32_52 = arith.constant 64 : i32
    %1891 = tpu.dynamic_rotate %1784 by %c64_i32_52 dim 1 : vector<40x128xf32>, i32 -> vector<40x128xf32>
    %c455 = arith.constant 455 : index
    %1892 = memref.load %arg1[%c455] : memref<511xf32, #tpu.memory_space<smem>>
    %1893 = vector.broadcast %1892 : f32 to vector<40x128xf32>
    %1894 = arith.mulf %1891, %1893 : vector<40x128xf32>
    %1895 = arith.addf %1890, %1894 : vector<40x128xf32>
    %c64_i32_53 = arith.constant 64 : i32
    %1896 = tpu.dynamic_rotate %1788 by %c64_i32_53 dim 1 : vector<40x128xf32>, i32 -> vector<40x128xf32>
    %c456 = arith.constant 456 : index
    %1897 = memref.load %arg1[%c456] : memref<511xf32, #tpu.memory_space<smem>>
    %1898 = vector.broadcast %1897 : f32 to vector<40x128xf32>
    %1899 = arith.mulf %1896, %1898 : vector<40x128xf32>
    %1900 = arith.addf %1895, %1899 : vector<40x128xf32>
    %c48_i32_54 = arith.constant 48 : i32
    %1901 = tpu.dynamic_rotate %1788 by %c48_i32_54 dim 1 : vector<40x128xf32>, i32 -> vector<40x128xf32>
    %c457 = arith.constant 457 : index
    %1902 = memref.load %arg1[%c457] : memref<511xf32, #tpu.memory_space<smem>>
    %1903 = vector.broadcast %1902 : f32 to vector<40x128xf32>
    %1904 = arith.mulf %1901, %1903 : vector<40x128xf32>
    %1905 = arith.addf %1900, %1904 : vector<40x128xf32>
    %c32_i32_55 = arith.constant 32 : i32
    %1906 = tpu.dynamic_rotate %1788 by %c32_i32_55 dim 1 : vector<40x128xf32>, i32 -> vector<40x128xf32>
    %c458 = arith.constant 458 : index
    %1907 = memref.load %arg1[%c458] : memref<511xf32, #tpu.memory_space<smem>>
    %1908 = vector.broadcast %1907 : f32 to vector<40x128xf32>
    %1909 = arith.mulf %1906, %1908 : vector<40x128xf32>
    %1910 = arith.addf %1905, %1909 : vector<40x128xf32>
    %c16_i32_56 = arith.constant 16 : i32
    %1911 = tpu.dynamic_rotate %1788 by %c16_i32_56 dim 1 : vector<40x128xf32>, i32 -> vector<40x128xf32>
    %c459 = arith.constant 459 : index
    %1912 = memref.load %arg1[%c459] : memref<511xf32, #tpu.memory_space<smem>>
    %1913 = vector.broadcast %1912 : f32 to vector<40x128xf32>
    %1914 = arith.mulf %1911, %1913 : vector<40x128xf32>
    %1915 = arith.addf %1910, %1914 : vector<40x128xf32>
    %c460 = arith.constant 460 : index
    %1916 = memref.load %arg1[%c460] : memref<511xf32, #tpu.memory_space<smem>>
    %1917 = vector.broadcast %1916 : f32 to vector<40x128xf32>
    %1918 = arith.mulf %1788, %1917 : vector<40x128xf32>
    %1919 = arith.addf %1915, %1918 : vector<40x128xf32>
    %c112_i32_57 = arith.constant 112 : i32
    %1920 = tpu.dynamic_rotate %1788 by %c112_i32_57 dim 1 : vector<40x128xf32>, i32 -> vector<40x128xf32>
    %c461 = arith.constant 461 : index
    %1921 = memref.load %arg1[%c461] : memref<511xf32, #tpu.memory_space<smem>>
    %1922 = vector.broadcast %1921 : f32 to vector<40x128xf32>
    %1923 = arith.mulf %1920, %1922 : vector<40x128xf32>
    %1924 = arith.addf %1919, %1923 : vector<40x128xf32>
    %c96_i32_58 = arith.constant 96 : i32
    %1925 = tpu.dynamic_rotate %1788 by %c96_i32_58 dim 1 : vector<40x128xf32>, i32 -> vector<40x128xf32>
    %c462 = arith.constant 462 : index
    %1926 = memref.load %arg1[%c462] : memref<511xf32, #tpu.memory_space<smem>>
    %1927 = vector.broadcast %1926 : f32 to vector<40x128xf32>
    %1928 = arith.mulf %1925, %1927 : vector<40x128xf32>
    %1929 = arith.addf %1924, %1928 : vector<40x128xf32>
    %c80_i32_59 = arith.constant 80 : i32
    %1930 = tpu.dynamic_rotate %1788 by %c80_i32_59 dim 1 : vector<40x128xf32>, i32 -> vector<40x128xf32>
    %c463 = arith.constant 463 : index
    %1931 = memref.load %arg1[%c463] : memref<511xf32, #tpu.memory_space<smem>>
    %1932 = vector.broadcast %1931 : f32 to vector<40x128xf32>
    %1933 = arith.mulf %1930, %1932 : vector<40x128xf32>
    %1934 = arith.addf %1929, %1933 : vector<40x128xf32>
    %c64_i32_60 = arith.constant 64 : i32
    %1935 = tpu.dynamic_rotate %1788 by %c64_i32_60 dim 1 : vector<40x128xf32>, i32 -> vector<40x128xf32>
    %c464 = arith.constant 464 : index
    %1936 = memref.load %arg1[%c464] : memref<511xf32, #tpu.memory_space<smem>>
    %1937 = vector.broadcast %1936 : f32 to vector<40x128xf32>
    %1938 = arith.mulf %1935, %1937 : vector<40x128xf32>
    %1939 = arith.addf %1934, %1938 : vector<40x128xf32>
    %c64_i32_61 = arith.constant 64 : i32
    %1940 = tpu.dynamic_rotate %1792 by %c64_i32_61 dim 1 : vector<40x128xf32>, i32 -> vector<40x128xf32>
    %c465 = arith.constant 465 : index
    %1941 = memref.load %arg1[%c465] : memref<511xf32, #tpu.memory_space<smem>>
    %1942 = vector.broadcast %1941 : f32 to vector<40x128xf32>
    %1943 = arith.mulf %1940, %1942 : vector<40x128xf32>
    %1944 = arith.addf %1939, %1943 : vector<40x128xf32>
    %c48_i32_62 = arith.constant 48 : i32
    %1945 = tpu.dynamic_rotate %1792 by %c48_i32_62 dim 1 : vector<40x128xf32>, i32 -> vector<40x128xf32>
    %c466 = arith.constant 466 : index
    %1946 = memref.load %arg1[%c466] : memref<511xf32, #tpu.memory_space<smem>>
    %1947 = vector.broadcast %1946 : f32 to vector<40x128xf32>
    %1948 = arith.mulf %1945, %1947 : vector<40x128xf32>
    %1949 = arith.addf %1944, %1948 : vector<40x128xf32>
    %c32_i32_63 = arith.constant 32 : i32
    %1950 = tpu.dynamic_rotate %1792 by %c32_i32_63 dim 1 : vector<40x128xf32>, i32 -> vector<40x128xf32>
    %c467 = arith.constant 467 : index
    %1951 = memref.load %arg1[%c467] : memref<511xf32, #tpu.memory_space<smem>>
    %1952 = vector.broadcast %1951 : f32 to vector<40x128xf32>
    %1953 = arith.mulf %1950, %1952 : vector<40x128xf32>
    %1954 = arith.addf %1949, %1953 : vector<40x128xf32>
    %c16_i32_64 = arith.constant 16 : i32
    %1955 = tpu.dynamic_rotate %1792 by %c16_i32_64 dim 1 : vector<40x128xf32>, i32 -> vector<40x128xf32>
    %c468 = arith.constant 468 : index
    %1956 = memref.load %arg1[%c468] : memref<511xf32, #tpu.memory_space<smem>>
    %1957 = vector.broadcast %1956 : f32 to vector<40x128xf32>
    %1958 = arith.mulf %1955, %1957 : vector<40x128xf32>
    %1959 = arith.addf %1954, %1958 : vector<40x128xf32>
    %c469 = arith.constant 469 : index
    %1960 = memref.load %arg1[%c469] : memref<511xf32, #tpu.memory_space<smem>>
    %1961 = vector.broadcast %1960 : f32 to vector<40x128xf32>
    %1962 = arith.mulf %1792, %1961 : vector<40x128xf32>
    %1963 = arith.addf %1959, %1962 : vector<40x128xf32>
    %c112_i32_65 = arith.constant 112 : i32
    %1964 = tpu.dynamic_rotate %1792 by %c112_i32_65 dim 1 : vector<40x128xf32>, i32 -> vector<40x128xf32>
    %c470 = arith.constant 470 : index
    %1965 = memref.load %arg1[%c470] : memref<511xf32, #tpu.memory_space<smem>>
    %1966 = vector.broadcast %1965 : f32 to vector<40x128xf32>
    %1967 = arith.mulf %1964, %1966 : vector<40x128xf32>
    %1968 = arith.addf %1963, %1967 : vector<40x128xf32>
    %c96_i32_66 = arith.constant 96 : i32
    %1969 = tpu.dynamic_rotate %1792 by %c96_i32_66 dim 1 : vector<40x128xf32>, i32 -> vector<40x128xf32>
    %c471 = arith.constant 471 : index
    %1970 = memref.load %arg1[%c471] : memref<511xf32, #tpu.memory_space<smem>>
    %1971 = vector.broadcast %1970 : f32 to vector<40x128xf32>
    %1972 = arith.mulf %1969, %1971 : vector<40x128xf32>
    %1973 = arith.addf %1968, %1972 : vector<40x128xf32>
    %c80_i32_67 = arith.constant 80 : i32
    %1974 = tpu.dynamic_rotate %1792 by %c80_i32_67 dim 1 : vector<40x128xf32>, i32 -> vector<40x128xf32>
    %c472 = arith.constant 472 : index
    %1975 = memref.load %arg1[%c472] : memref<511xf32, #tpu.memory_space<smem>>
    %1976 = vector.broadcast %1975 : f32 to vector<40x128xf32>
    %1977 = arith.mulf %1974, %1976 : vector<40x128xf32>
    %1978 = arith.addf %1973, %1977 : vector<40x128xf32>
    %c64_i32_68 = arith.constant 64 : i32
    %1979 = tpu.dynamic_rotate %1792 by %c64_i32_68 dim 1 : vector<40x128xf32>, i32 -> vector<40x128xf32>
    %c473 = arith.constant 473 : index
    %1980 = memref.load %arg1[%c473] : memref<511xf32, #tpu.memory_space<smem>>
    %1981 = vector.broadcast %1980 : f32 to vector<40x128xf32>
    %1982 = arith.mulf %1979, %1981 : vector<40x128xf32>
    %1983 = arith.addf %1978, %1982 : vector<40x128xf32>
    %c64_i32_69 = arith.constant 64 : i32
    %1984 = tpu.dynamic_rotate %1796 by %c64_i32_69 dim 1 : vector<40x128xf32>, i32 -> vector<40x128xf32>
    %c474 = arith.constant 474 : index
    %1985 = memref.load %arg1[%c474] : memref<511xf32, #tpu.memory_space<smem>>
    %1986 = vector.broadcast %1985 : f32 to vector<40x128xf32>
    %1987 = arith.mulf %1984, %1986 : vector<40x128xf32>
    %1988 = arith.addf %1983, %1987 : vector<40x128xf32>
    %c48_i32_70 = arith.constant 48 : i32
    %1989 = tpu.dynamic_rotate %1796 by %c48_i32_70 dim 1 : vector<40x128xf32>, i32 -> vector<40x128xf32>
    %c475 = arith.constant 475 : index
    %1990 = memref.load %arg1[%c475] : memref<511xf32, #tpu.memory_space<smem>>
    %1991 = vector.broadcast %1990 : f32 to vector<40x128xf32>
    %1992 = arith.mulf %1989, %1991 : vector<40x128xf32>
    %1993 = arith.addf %1988, %1992 : vector<40x128xf32>
    %c32_i32_71 = arith.constant 32 : i32
    %1994 = tpu.dynamic_rotate %1796 by %c32_i32_71 dim 1 : vector<40x128xf32>, i32 -> vector<40x128xf32>
    %c476 = arith.constant 476 : index
    %1995 = memref.load %arg1[%c476] : memref<511xf32, #tpu.memory_space<smem>>
    %1996 = vector.broadcast %1995 : f32 to vector<40x128xf32>
    %1997 = arith.mulf %1994, %1996 : vector<40x128xf32>
    %1998 = arith.addf %1993, %1997 : vector<40x128xf32>
    %c16_i32_72 = arith.constant 16 : i32
    %1999 = tpu.dynamic_rotate %1796 by %c16_i32_72 dim 1 : vector<40x128xf32>, i32 -> vector<40x128xf32>
    %c477 = arith.constant 477 : index
    %2000 = memref.load %arg1[%c477] : memref<511xf32, #tpu.memory_space<smem>>
    %2001 = vector.broadcast %2000 : f32 to vector<40x128xf32>
    %2002 = arith.mulf %1999, %2001 : vector<40x128xf32>
    %2003 = arith.addf %1998, %2002 : vector<40x128xf32>
    %c478 = arith.constant 478 : index
    %2004 = memref.load %arg1[%c478] : memref<511xf32, #tpu.memory_space<smem>>
    %2005 = vector.broadcast %2004 : f32 to vector<40x128xf32>
    %2006 = arith.mulf %1796, %2005 : vector<40x128xf32>
    %2007 = arith.addf %2003, %2006 : vector<40x128xf32>
    %c112_i32_73 = arith.constant 112 : i32
    %2008 = tpu.dynamic_rotate %1796 by %c112_i32_73 dim 1 : vector<40x128xf32>, i32 -> vector<40x128xf32>
    %c479 = arith.constant 479 : index
    %2009 = memref.load %arg1[%c479] : memref<511xf32, #tpu.memory_space<smem>>
    %2010 = vector.broadcast %2009 : f32 to vector<40x128xf32>
    %2011 = arith.mulf %2008, %2010 : vector<40x128xf32>
    %2012 = arith.addf %2007, %2011 : vector<40x128xf32>
    %c96_i32_74 = arith.constant 96 : i32
    %2013 = tpu.dynamic_rotate %1796 by %c96_i32_74 dim 1 : vector<40x128xf32>, i32 -> vector<40x128xf32>
    %c480 = arith.constant 480 : index
    %2014 = memref.load %arg1[%c480] : memref<511xf32, #tpu.memory_space<smem>>
    %2015 = vector.broadcast %2014 : f32 to vector<40x128xf32>
    %2016 = arith.mulf %2013, %2015 : vector<40x128xf32>
    %2017 = arith.addf %2012, %2016 : vector<40x128xf32>
    %c80_i32_75 = arith.constant 80 : i32
    %2018 = tpu.dynamic_rotate %1796 by %c80_i32_75 dim 1 : vector<40x128xf32>, i32 -> vector<40x128xf32>
    %c481 = arith.constant 481 : index
    %2019 = memref.load %arg1[%c481] : memref<511xf32, #tpu.memory_space<smem>>
    %2020 = vector.broadcast %2019 : f32 to vector<40x128xf32>
    %2021 = arith.mulf %2018, %2020 : vector<40x128xf32>
    %2022 = arith.addf %2017, %2021 : vector<40x128xf32>
    %c64_i32_76 = arith.constant 64 : i32
    %2023 = tpu.dynamic_rotate %1796 by %c64_i32_76 dim 1 : vector<40x128xf32>, i32 -> vector<40x128xf32>
    %c482 = arith.constant 482 : index
    %2024 = memref.load %arg1[%c482] : memref<511xf32, #tpu.memory_space<smem>>
    %2025 = vector.broadcast %2024 : f32 to vector<40x128xf32>
    %2026 = arith.mulf %2023, %2025 : vector<40x128xf32>
    %2027 = arith.addf %2022, %2026 : vector<40x128xf32>
    %c64_i32_77 = arith.constant 64 : i32
    %2028 = tpu.dynamic_rotate %1800 by %c64_i32_77 dim 1 : vector<40x128xf32>, i32 -> vector<40x128xf32>
    %c483 = arith.constant 483 : index
    %2029 = memref.load %arg1[%c483] : memref<511xf32, #tpu.memory_space<smem>>
    %2030 = vector.broadcast %2029 : f32 to vector<40x128xf32>
    %2031 = arith.mulf %2028, %2030 : vector<40x128xf32>
    %2032 = arith.addf %2027, %2031 : vector<40x128xf32>
    %c48_i32_78 = arith.constant 48 : i32
    %2033 = tpu.dynamic_rotate %1800 by %c48_i32_78 dim 1 : vector<40x128xf32>, i32 -> vector<40x128xf32>
    %c484 = arith.constant 484 : index
    %2034 = memref.load %arg1[%c484] : memref<511xf32, #tpu.memory_space<smem>>
    %2035 = vector.broadcast %2034 : f32 to vector<40x128xf32>
    %2036 = arith.mulf %2033, %2035 : vector<40x128xf32>
    %2037 = arith.addf %2032, %2036 : vector<40x128xf32>
    %c32_i32_79 = arith.constant 32 : i32
    %2038 = tpu.dynamic_rotate %1800 by %c32_i32_79 dim 1 : vector<40x128xf32>, i32 -> vector<40x128xf32>
    %c485 = arith.constant 485 : index
    %2039 = memref.load %arg1[%c485] : memref<511xf32, #tpu.memory_space<smem>>
    %2040 = vector.broadcast %2039 : f32 to vector<40x128xf32>
    %2041 = arith.mulf %2038, %2040 : vector<40x128xf32>
    %2042 = arith.addf %2037, %2041 : vector<40x128xf32>
    %c16_i32_80 = arith.constant 16 : i32
    %2043 = tpu.dynamic_rotate %1800 by %c16_i32_80 dim 1 : vector<40x128xf32>, i32 -> vector<40x128xf32>
    %c486 = arith.constant 486 : index
    %2044 = memref.load %arg1[%c486] : memref<511xf32, #tpu.memory_space<smem>>
    %2045 = vector.broadcast %2044 : f32 to vector<40x128xf32>
    %2046 = arith.mulf %2043, %2045 : vector<40x128xf32>
    %2047 = arith.addf %2042, %2046 : vector<40x128xf32>
    %c487 = arith.constant 487 : index
    %2048 = memref.load %arg1[%c487] : memref<511xf32, #tpu.memory_space<smem>>
    %2049 = vector.broadcast %2048 : f32 to vector<40x128xf32>
    %2050 = arith.mulf %1800, %2049 : vector<40x128xf32>
    %2051 = arith.addf %2047, %2050 : vector<40x128xf32>
    %c112_i32_81 = arith.constant 112 : i32
    %2052 = tpu.dynamic_rotate %1800 by %c112_i32_81 dim 1 : vector<40x128xf32>, i32 -> vector<40x128xf32>
    %c488 = arith.constant 488 : index
    %2053 = memref.load %arg1[%c488] : memref<511xf32, #tpu.memory_space<smem>>
    %2054 = vector.broadcast %2053 : f32 to vector<40x128xf32>
    %2055 = arith.mulf %2052, %2054 : vector<40x128xf32>
    %2056 = arith.addf %2051, %2055 : vector<40x128xf32>
    %c96_i32_82 = arith.constant 96 : i32
    %2057 = tpu.dynamic_rotate %1800 by %c96_i32_82 dim 1 : vector<40x128xf32>, i32 -> vector<40x128xf32>
    %c489 = arith.constant 489 : index
    %2058 = memref.load %arg1[%c489] : memref<511xf32, #tpu.memory_space<smem>>
    %2059 = vector.broadcast %2058 : f32 to vector<40x128xf32>
    %2060 = arith.mulf %2057, %2059 : vector<40x128xf32>
    %2061 = arith.addf %2056, %2060 : vector<40x128xf32>
    %c80_i32_83 = arith.constant 80 : i32
    %2062 = tpu.dynamic_rotate %1800 by %c80_i32_83 dim 1 : vector<40x128xf32>, i32 -> vector<40x128xf32>
    %c490 = arith.constant 490 : index
    %2063 = memref.load %arg1[%c490] : memref<511xf32, #tpu.memory_space<smem>>
    %2064 = vector.broadcast %2063 : f32 to vector<40x128xf32>
    %2065 = arith.mulf %2062, %2064 : vector<40x128xf32>
    %2066 = arith.addf %2061, %2065 : vector<40x128xf32>
    %c64_i32_84 = arith.constant 64 : i32
    %2067 = tpu.dynamic_rotate %1800 by %c64_i32_84 dim 1 : vector<40x128xf32>, i32 -> vector<40x128xf32>
    %c491 = arith.constant 491 : index
    %2068 = memref.load %arg1[%c491] : memref<511xf32, #tpu.memory_space<smem>>
    %2069 = vector.broadcast %2068 : f32 to vector<40x128xf32>
    %2070 = arith.mulf %2067, %2069 : vector<40x128xf32>
    %2071 = arith.addf %2066, %2070 : vector<40x128xf32>
    %c64_i32_85 = arith.constant 64 : i32
    %2072 = tpu.dynamic_rotate %1804 by %c64_i32_85 dim 1 : vector<40x128xf32>, i32 -> vector<40x128xf32>
    %c492 = arith.constant 492 : index
    %2073 = memref.load %arg1[%c492] : memref<511xf32, #tpu.memory_space<smem>>
    %2074 = vector.broadcast %2073 : f32 to vector<40x128xf32>
    %2075 = arith.mulf %2072, %2074 : vector<40x128xf32>
    %2076 = arith.addf %2071, %2075 : vector<40x128xf32>
    %c48_i32_86 = arith.constant 48 : i32
    %2077 = tpu.dynamic_rotate %1804 by %c48_i32_86 dim 1 : vector<40x128xf32>, i32 -> vector<40x128xf32>
    %c493 = arith.constant 493 : index
    %2078 = memref.load %arg1[%c493] : memref<511xf32, #tpu.memory_space<smem>>
    %2079 = vector.broadcast %2078 : f32 to vector<40x128xf32>
    %2080 = arith.mulf %2077, %2079 : vector<40x128xf32>
    %2081 = arith.addf %2076, %2080 : vector<40x128xf32>
    %c32_i32_87 = arith.constant 32 : i32
    %2082 = tpu.dynamic_rotate %1804 by %c32_i32_87 dim 1 : vector<40x128xf32>, i32 -> vector<40x128xf32>
    %c494 = arith.constant 494 : index
    %2083 = memref.load %arg1[%c494] : memref<511xf32, #tpu.memory_space<smem>>
    %2084 = vector.broadcast %2083 : f32 to vector<40x128xf32>
    %2085 = arith.mulf %2082, %2084 : vector<40x128xf32>
    %2086 = arith.addf %2081, %2085 : vector<40x128xf32>
    %c16_i32_88 = arith.constant 16 : i32
    %2087 = tpu.dynamic_rotate %1804 by %c16_i32_88 dim 1 : vector<40x128xf32>, i32 -> vector<40x128xf32>
    %c495 = arith.constant 495 : index
    %2088 = memref.load %arg1[%c495] : memref<511xf32, #tpu.memory_space<smem>>
    %2089 = vector.broadcast %2088 : f32 to vector<40x128xf32>
    %2090 = arith.mulf %2087, %2089 : vector<40x128xf32>
    %2091 = arith.addf %2086, %2090 : vector<40x128xf32>
    %c496 = arith.constant 496 : index
    %2092 = memref.load %arg1[%c496] : memref<511xf32, #tpu.memory_space<smem>>
    %2093 = vector.broadcast %2092 : f32 to vector<40x128xf32>
    %2094 = arith.mulf %1804, %2093 : vector<40x128xf32>
    %2095 = arith.addf %2091, %2094 : vector<40x128xf32>
    %c112_i32_89 = arith.constant 112 : i32
    %2096 = tpu.dynamic_rotate %1804 by %c112_i32_89 dim 1 : vector<40x128xf32>, i32 -> vector<40x128xf32>
    %c497 = arith.constant 497 : index
    %2097 = memref.load %arg1[%c497] : memref<511xf32, #tpu.memory_space<smem>>
    %2098 = vector.broadcast %2097 : f32 to vector<40x128xf32>
    %2099 = arith.mulf %2096, %2098 : vector<40x128xf32>
    %2100 = arith.addf %2095, %2099 : vector<40x128xf32>
    %c96_i32_90 = arith.constant 96 : i32
    %2101 = tpu.dynamic_rotate %1804 by %c96_i32_90 dim 1 : vector<40x128xf32>, i32 -> vector<40x128xf32>
    %c498 = arith.constant 498 : index
    %2102 = memref.load %arg1[%c498] : memref<511xf32, #tpu.memory_space<smem>>
    %2103 = vector.broadcast %2102 : f32 to vector<40x128xf32>
    %2104 = arith.mulf %2101, %2103 : vector<40x128xf32>
    %2105 = arith.addf %2100, %2104 : vector<40x128xf32>
    %c80_i32_91 = arith.constant 80 : i32
    %2106 = tpu.dynamic_rotate %1804 by %c80_i32_91 dim 1 : vector<40x128xf32>, i32 -> vector<40x128xf32>
    %c499 = arith.constant 499 : index
    %2107 = memref.load %arg1[%c499] : memref<511xf32, #tpu.memory_space<smem>>
    %2108 = vector.broadcast %2107 : f32 to vector<40x128xf32>
    %2109 = arith.mulf %2106, %2108 : vector<40x128xf32>
    %2110 = arith.addf %2105, %2109 : vector<40x128xf32>
    %c64_i32_92 = arith.constant 64 : i32
    %2111 = tpu.dynamic_rotate %1804 by %c64_i32_92 dim 1 : vector<40x128xf32>, i32 -> vector<40x128xf32>
    %c500 = arith.constant 500 : index
    %2112 = memref.load %arg1[%c500] : memref<511xf32, #tpu.memory_space<smem>>
    %2113 = vector.broadcast %2112 : f32 to vector<40x128xf32>
    %2114 = arith.mulf %2111, %2113 : vector<40x128xf32>
    %2115 = arith.addf %2110, %2114 : vector<40x128xf32>
    %c64_i32_93 = arith.constant 64 : i32
    %2116 = tpu.dynamic_rotate %1808 by %c64_i32_93 dim 1 : vector<40x128xf32>, i32 -> vector<40x128xf32>
    %c501 = arith.constant 501 : index
    %2117 = memref.load %arg1[%c501] : memref<511xf32, #tpu.memory_space<smem>>
    %2118 = vector.broadcast %2117 : f32 to vector<40x128xf32>
    %2119 = arith.mulf %2116, %2118 : vector<40x128xf32>
    %2120 = arith.addf %2115, %2119 : vector<40x128xf32>
    %c48_i32_94 = arith.constant 48 : i32
    %2121 = tpu.dynamic_rotate %1808 by %c48_i32_94 dim 1 : vector<40x128xf32>, i32 -> vector<40x128xf32>
    %c502 = arith.constant 502 : index
    %2122 = memref.load %arg1[%c502] : memref<511xf32, #tpu.memory_space<smem>>
    %2123 = vector.broadcast %2122 : f32 to vector<40x128xf32>
    %2124 = arith.mulf %2121, %2123 : vector<40x128xf32>
    %2125 = arith.addf %2120, %2124 : vector<40x128xf32>
    %c32_i32_95 = arith.constant 32 : i32
    %2126 = tpu.dynamic_rotate %1808 by %c32_i32_95 dim 1 : vector<40x128xf32>, i32 -> vector<40x128xf32>
    %c503 = arith.constant 503 : index
    %2127 = memref.load %arg1[%c503] : memref<511xf32, #tpu.memory_space<smem>>
    %2128 = vector.broadcast %2127 : f32 to vector<40x128xf32>
    %2129 = arith.mulf %2126, %2128 : vector<40x128xf32>
    %2130 = arith.addf %2125, %2129 : vector<40x128xf32>
    %c16_i32_96 = arith.constant 16 : i32
    %2131 = tpu.dynamic_rotate %1808 by %c16_i32_96 dim 1 : vector<40x128xf32>, i32 -> vector<40x128xf32>
    %c504 = arith.constant 504 : index
    %2132 = memref.load %arg1[%c504] : memref<511xf32, #tpu.memory_space<smem>>
    %2133 = vector.broadcast %2132 : f32 to vector<40x128xf32>
    %2134 = arith.mulf %2131, %2133 : vector<40x128xf32>
    %2135 = arith.addf %2130, %2134 : vector<40x128xf32>
    %c505 = arith.constant 505 : index
    %2136 = memref.load %arg1[%c505] : memref<511xf32, #tpu.memory_space<smem>>
    %2137 = vector.broadcast %2136 : f32 to vector<40x128xf32>
    %2138 = arith.mulf %1808, %2137 : vector<40x128xf32>
    %2139 = arith.addf %2135, %2138 : vector<40x128xf32>
    %c112_i32_97 = arith.constant 112 : i32
    %2140 = tpu.dynamic_rotate %1808 by %c112_i32_97 dim 1 : vector<40x128xf32>, i32 -> vector<40x128xf32>
    %c506 = arith.constant 506 : index
    %2141 = memref.load %arg1[%c506] : memref<511xf32, #tpu.memory_space<smem>>
    %2142 = vector.broadcast %2141 : f32 to vector<40x128xf32>
    %2143 = arith.mulf %2140, %2142 : vector<40x128xf32>
    %2144 = arith.addf %2139, %2143 : vector<40x128xf32>
    %c96_i32_98 = arith.constant 96 : i32
    %2145 = tpu.dynamic_rotate %1808 by %c96_i32_98 dim 1 : vector<40x128xf32>, i32 -> vector<40x128xf32>
    %c507 = arith.constant 507 : index
    %2146 = memref.load %arg1[%c507] : memref<511xf32, #tpu.memory_space<smem>>
    %2147 = vector.broadcast %2146 : f32 to vector<40x128xf32>
    %2148 = arith.mulf %2145, %2147 : vector<40x128xf32>
    %2149 = arith.addf %2144, %2148 : vector<40x128xf32>
    %c80_i32_99 = arith.constant 80 : i32
    %2150 = tpu.dynamic_rotate %1808 by %c80_i32_99 dim 1 : vector<40x128xf32>, i32 -> vector<40x128xf32>
    %c508 = arith.constant 508 : index
    %2151 = memref.load %arg1[%c508] : memref<511xf32, #tpu.memory_space<smem>>
    %2152 = vector.broadcast %2151 : f32 to vector<40x128xf32>
    %2153 = arith.mulf %2150, %2152 : vector<40x128xf32>
    %2154 = arith.addf %2149, %2153 : vector<40x128xf32>
    %c64_i32_100 = arith.constant 64 : i32
    %2155 = tpu.dynamic_rotate %1808 by %c64_i32_100 dim 1 : vector<40x128xf32>, i32 -> vector<40x128xf32>
    %c509 = arith.constant 509 : index
    %2156 = memref.load %arg1[%c509] : memref<511xf32, #tpu.memory_space<smem>>
    %2157 = vector.broadcast %2156 : f32 to vector<40x128xf32>
    %2158 = arith.mulf %2155, %2157 : vector<40x128xf32>
    %2159 = arith.addf %2154, %2158 : vector<40x128xf32>
    %c510 = arith.constant 510 : index
    %2160 = memref.load %arg1[%c510] : memref<511xf32, #tpu.memory_space<smem>>
    %2161 = vector.broadcast %2160 : f32 to vector<40x128xf32>
    %2162 = arith.addf %2159, %2161 : vector<40x128xf32>
    %2163 = arith.addf %2162, %0 : vector<40x128xf32>
    %cst = arith.constant dense<0.000000e+00> : vector<40xf32>
    %2164 = vector.multi_reduction <add>, %2163, %cst [1] : vector<40x128xf32> to vector<40xf32>
    %2165 = vector.shape_cast %2164 : vector<40xf32> to vector<40x1xf32>
    %cst_101 = arith.constant 1.280000e+02 : f32
    %2166 = vector.broadcast %cst_101 : f32 to vector<40x1xf32>
    %2167 = arith.divf %2165, %2166 : vector<40x1xf32>
    %2168 = vector.broadcast %2167 : vector<40x1xf32> to vector<40x128xf32>
    %2169 = arith.subf %2163, %2168 : vector<40x128xf32>
    %c0_102 = arith.constant 0 : index
    %c0_103 = arith.constant 0 : index
    %2170 = vector.load %arg4[%c0_102, %c0_103] : memref<40x128xf32, #tpu.memory_space<vmem>>, vector<40x128xf32>
    tpu.vector_store %arg4[%c0_102, %c0_103], %2169 {strides = array<i32>} : memref<40x128xf32, #tpu.memory_space<vmem>>, vector<40x128xf32>,
    return
  }
  func.func @transform_0(%arg0: i32) -> i32 {
    %c0_i32 = arith.constant 0 : i32
    %c0_i32_0 = arith.constant 0 : i32
    return %c0_i32 : i32
  }
  func.func @transform_1(%arg0: i32) -> (i32, i32) {
    %c0_i32 = arith.constant 0 : i32
    %c0_i32_0 = arith.constant 0 : i32
    return %arg0, %c0_i32 : i32, i32
  }
  func.func @transform_2(%arg0: i32) -> (i32, i32) {
    %c0_i32 = arith.constant 0 : i32
    %c0_i32_0 = arith.constant 0 : i32
    return %arg0, %c0_i32 : i32, i32
  }
  func.func @transform_3(%arg0: i32) -> (i32, i32) {
    %c0_i32 = arith.constant 0 : i32
    %c0_i32_0 = arith.constant 0 : i32
    return %arg0, %c0_i32 : i32, i32
  }
}

</mosaic_0001>

<llo_original>
// kernel: tpu_custom_call.1
$region0: #{tpu_custom_call.1}
  #allocation0 [shape = 'u32[]', space=smem, size = 0x4, offset = 0x4, fixed_abs, tag = 'smem constant byte address 0x4 - core index']
  #allocation1 [shape = 'u32[144,128]{1,0:T(1,128)}', space=vmem, size = 0x12000, scoped, tag = 'internal scratch']
  %s0 = inlined_call_operand.vmem [shape: f32[511], index: 0, kind: input, shape index: {}]
  %s1 = inlined_call_operand.vmem [shape: f32[80,128], index: 1, kind: input, shape index: {}]
  %s2 = inlined_call_operand.vmem [shape: f32[80,4], index: 2, kind: input, shape index: {}]
  %s3 = inlined_call_operand.hbm [shape: f32[80,128], index: 3, kind: output, shape index: {}]
  %s4 = sld [smem:[#allocation0]]
  $region49: #{tpu_custom_call.1} parent=0
    _
  %s6 = ssub.s32 1, %s4
  %s7 = scalar_select 0, %s6, %s4
  $region1: #{tpu_custom_call.1} parent=0
    #allocation2 [shape = 'u8[2048]{0}', space=smem, size = 0x800, scoped, tag = 'input window, operand 0, single buffered']
    #allocation3 [shape = 's32[2]{0}', space=sflag, size = 0x8, scoped, tag = 'scoped memory for tpu_custom_call.1']
    #allocation4 [shape = 's32[2]{0}', space=sflag, size = 0x8, scoped, tag = 'scoped memory for tpu_custom_call.1']
    #allocation5 [shape = 'u8[40960]{0}', space=vmem, size = 0xa000, scoped, tag = 'output window, operand 0']
    %8 = vsyncpa [#allocation4], 0
    %9 = vsyncpa [#allocation3], 0
    %s10 = scalar_lea.sflag [#allocation3], 1
    %11 = vsyncpa %s10, 0
    loop: start=0, step=1, limit=4
    $region2: #{tpu_custom_call.1} parent=1 // loop_pre_header
      _
    $region3: #{tpu_custom_call.1} parent=1 // loop_header
      %s13 = sphi 0, %s17
      %p14 = scmp.ge.s32.totalorder %s13, 4
      %s21 = sphi 0, %s21
      %s23 = sphi 0, %s21
      %s24 = sphi 0, %s23
      %s38 = sphi 0, %s24
      %s44 = sphi 0, %s46
      %s47 = sphi 0, %s44
      %s48 = sphi 0, %s47
      %s64 = sphi 0, %s48
      %s70 = sphi 0, %s72
      %s73 = sphi 0, %s70
      %s74 = sphi 0, %s73
      %s90 = sphi 0, %s74
      %s96 = sphi 0, %s98
      %s99 = sphi 0, %s96
      %s100 = sphi 0, %s99
      %s116 = sphi 0, %s100
    $region4: #{tpu_custom_call.1} parent=1 // loop_header_branch
      %16 = sbr.rel (%p14) target = $region8
    $region5: #{tpu_custom_call.1} parent=1 // loop_body
      %s18 = ssub.s32 %s13, 1
      %s19 = ssub.s32 %s13, 2
      %s20 = sadd.s32 %s13, 1
      %s22 = sadd.s32 %s21, 1
      %p25 = scmp.eq.s32.totalorder %s13, 1
      %p26 = scmp.ne.s32.totalorder %s21, %s23
      %p27 = scmp.eq.s32.totalorder %s13, 0
      %p28 = por %p26, %p27
      %p29 = scmp.ne.s32.totalorder %s21, %s23
      %p30 = scmp.eq.s32.totalorder %s18, 1
      %p31 = por %p29, %p30
      %p32 = scmp.ne.s32.totalorder %s23, %s24
      %p33 = scmp.eq.s32.totalorder %s18, 0
      %p34 = por %p32, %p33
      %p35 = scmp.ne.s32.totalorder %s23, %s24
      %p36 = scmp.eq.s32.totalorder %s19, 1
      %p37 = por %p35, %p36
      %p39 = scmp.ne.s32.totalorder %s24, %s38
      %p40 = scmp.eq.s32.totalorder %s19, 0
      %p41 = por %p39, %p40
      %s42 = ssub.s32 %s13, %s20
      %p43 = scmp.eq.s32.totalorder %s42, 0
      %s45 = sadd.s32 %s44, 1
      %s46 = scalar_select %p43, %s44, %s45
      %p49 = pneg %p43
      %p50 = scmp.eq.s32.totalorder %s13, 1
      %p51 = por %p49, %p50
      %p52 = scmp.ne.s32.totalorder %s44, %s47
      %p53 = scmp.eq.s32.totalorder %s13, 0
      %p54 = por %p52, %p53
      %p55 = scmp.ne.s32.totalorder %s44, %s47
      %p56 = scmp.eq.s32.totalorder %s18, 1
      %p57 = por %p55, %p56
      %p58 = scmp.ne.s32.totalorder %s47, %s48
      %p59 = scmp.eq.s32.totalorder %s18, 0
      %p60 = por %p58, %p59
      %p61 = scmp.ne.s32.totalorder %s47, %s48
      %p62 = scmp.eq.s32.totalorder %s19, 1
      %p63 = por %p61, %p62
      %p65 = scmp.ne.s32.totalorder %s48, %s64
      %p66 = scmp.eq.s32.totalorder %s19, 0
      %p67 = por %p65, %p66
      %s68 = ssub.s32 %s13, %s20
      %p69 = scmp.eq.s32.totalorder %s68, 0
      %s71 = sadd.s32 %s70, 1
      %s72 = scalar_select %p69, %s70, %s71
      %p75 = pneg %p69
      %p76 = scmp.eq.s32.totalorder %s13, 1
      %p77 = por %p75, %p76
      %p78 = scmp.ne.s32.totalorder %s70, %s73
      %p79 = scmp.eq.s32.totalorder %s13, 0
      %p80 = por %p78, %p79
      %p81 = scmp.ne.s32.totalorder %s70, %s73
      %p82 = scmp.eq.s32.totalorder %s18, 1
      %p83 = por %p81, %p82
      %p84 = scmp.ne.s32.totalorder %s73, %s74
      %p85 = scmp.eq.s32.totalorder %s18, 0
      %p86 = por %p84, %p85
      %p87 = scmp.ne.s32.totalorder %s73, %s74
      %p88 = scmp.eq.s32.totalorder %s19, 1
      %p89 = por %p87, %p88
      %p91 = scmp.ne.s32.totalorder %s74, %s90
      %p92 = scmp.eq.s32.totalorder %s19, 0
      %p93 = por %p91, %p92
      %s94 = ssub.s32 %s13, %s20
      %p95 = scmp.eq.s32.totalorder %s94, 0
      %s97 = sadd.s32 %s96, 1
      %s98 = scalar_select %p95, %s96, %s97
      %p101 = pneg %p95
      %p102 = scmp.eq.s32.totalorder %s13, 1
      %p103 = por %p101, %p102
      %p104 = scmp.ne.s32.totalorder %s96, %s99
      %p105 = scmp.eq.s32.totalorder %s13, 0
      %p106 = por %p104, %p105
      %p107 = scmp.ne.s32.totalorder %s96, %s99
      %p108 = scmp.eq.s32.totalorder %s18, 1
      %p109 = por %p107, %p108
      %p110 = scmp.ne.s32.totalorder %s99, %s100
      %p111 = scmp.eq.s32.totalorder %s18, 0
      %p112 = por %p110, %p111
      %p113 = scmp.ne.s32.totalorder %s99, %s100
      %p114 = scmp.eq.s32.totalorder %s19, 1
      %p115 = por %p113, %p114
      %p117 = scmp.ne.s32.totalorder %s100, %s116
      %p118 = scmp.eq.s32.totalorder %s19, 0
      %p119 = por %p117, %p118
      %p120 = scmp.le.s32.totalorder 1, %s13
      %p121 = scmp.lt.s32.totalorder %s13, 3
      %p122 = pnand %p120, %p121
      %p123 = pneg %p122
      // Predicated region
      $region9: #{tpu_custom_call.1} parent=5 // pred_check
        _
      $region10: #{tpu_custom_call.1} parent=5 // pred_check_branch
        %125 = sbr.rel (%p122) target = $region12
      $region11: #{tpu_custom_call.1} parent=5 // pred_region
        %s126 = ssub.s32 %s13, 1
        // Predicated region
        $region13: #{tpu_custom_call.1} parent=11 // pred_check
          %p127 = pneg %p34
        $region14: #{tpu_custom_call.1} parent=11 // pred_check_branch
          %129 = sbr.rel (%p127) target = $region16
        $region15: #{tpu_custom_call.1} parent=11 // pred_region
          %s131 = ssub.s32 64, 64
          %132 = vsyncadd [#allocation4], %s131
          %s134 = sshll.u32 %s0, 4
          %s135 = int_to_ptr.vmem [resolvable:$true] %s134
          %137 = dma.vmem_to_smem %s135, 64, [#allocation2], [#allocation4]
        $region16: #{tpu_custom_call.1} parent=11 // pred_fallthru
          _
      $region12: #{tpu_custom_call.1} parent=5 // pred_fallthru
        _
      %p138 = scmp.lt.s32.totalorder %s13, 2
      // Predicated region
      $region17: #{tpu_custom_call.1} parent=5 // pred_check
        %p139 = pneg %p138
      $region18: #{tpu_custom_call.1} parent=5 // pred_check_branch
        %141 = sbr.rel (%p139) target = $region20
      $region19: #{tpu_custom_call.1} parent=5 // pred_region
        // Predicated region
        $region21: #{tpu_custom_call.1} parent=19 // pred_check
          %p142 = pneg %p54
        $region22: #{tpu_custom_call.1} parent=19 // pred_check_branch
          %144 = sbr.rel (%p142) target = $region24
        $region23: #{tpu_custom_call.1} parent=19 // pred_region
          %s145 = smul.u32 5, %s13
          %p146 = scmp.lt.s32.totalorder %s145, 9
          %s147 = scalar_select %p146, %s145, 9
          %s148 = smul.addr %s147, 8
          %s149 = scalar_lea.vmem %s1, %s148
          %s150 = smul.u32 5, %s13
        $region24: #{tpu_custom_call.1} parent=19 // pred_fallthru
          _
        // Predicated region
        $region25: #{tpu_custom_call.1} parent=19 // pred_check
          %p151 = pneg %p80
        $region26: #{tpu_custom_call.1} parent=19 // pred_check_branch
          %153 = sbr.rel (%p151) target = $region28
        $region27: #{tpu_custom_call.1} parent=19 // pred_region
          %s154 = smul.u32 5, %s13
          %p155 = scmp.lt.s32.totalorder %s154, 9
          %s156 = scalar_select %p155, %s154, 9
          %s157 = smul.addr %s156, 8
          %s158 = scalar_lea.vmem %s2, %s157
          %s159 = smul.u32 5, %s13
        $region28: #{tpu_custom_call.1} parent=19 // pred_fallthru
          _
      $region20: #{tpu_custom_call.1} parent=5 // pred_fallthru
        _
      %p160 = scmp.le.s32.totalorder 1, %s13
      %p161 = scmp.lt.s32.totalorder %s13, 3
      %p162 = pnand %p160, %p161
      %p163 = pneg %p162
      // Predicated region
      $region29: #{tpu_custom_call.1} parent=5 // pred_check
        _
      $region30: #{tpu_custom_call.1} parent=5 // pred_check_branch
        %165 = sbr.rel (%p162) target = $region32
      $region31: #{tpu_custom_call.1} parent=5 // pred_region
        %s166 = ssub.s32 %s13, 1
        // Predicated region
        $region33: #{tpu_custom_call.1} parent=31 // pred_check
          %p167 = pneg %p34
        $region34: #{tpu_custom_call.1} parent=31 // pred_check_branch
          %169 = sbr.rel (%p167) target = $region36
        $region35: #{tpu_custom_call.1} parent=31 // pred_region
          %170 = dma.done [#allocation4], 64
        $region36: #{tpu_custom_call.1} parent=31 // pred_fallthru
          _
        %171 = sfence
        %p172 = pneg %p34
        %p173 = pneg %p31
        %s174 = smul.u32 5, %s18
        %p175 = scmp.lt.s32.totalorder %s174, 9
        %s176 = scalar_select %p175, %s174, 9
        %s177 = smul.addr %s176, 8
        %s178 = scalar_lea.vmem %s1, %s177
        %p179 = pneg %p60
        %p180 = pneg %p57
        %s181 = smul.u32 5, %s18
        %p182 = scmp.lt.s32.totalorder %s181, 9
        %s183 = scalar_select %p182, %s181, 9
        %s184 = smul.addr %s183, 8
        %s185 = scalar_lea.vmem %s2, %s184
        %p186 = pneg %p86
        %p187 = pneg %p83
        %p188 = pneg %p112
        %p189 = pneg %p109
        %s190 = sand.u32 %s99, 1
        %s191 = scalar_lea.sflag [#allocation3], %s190
        %s192 = sand.u32 %s99, 1
        %s193 = smul.addr %s192, 40
        %s194 = scalar_lea.vmem [#allocation5], %s193
        %s195 = smul.u32 5, %s18
        %p196 = scmp.lt.s32.totalorder %s195, 9
        %s197 = scalar_select %p196, %s195, 9
        %s198 = smul.addr %s197, 8
        %s199 = scalar_lea.vmem %s1, %s198
        %s200 = smul.u32 5, %s18
        %s201 = smul.u32 5, %s18
        %p202 = scmp.lt.s32.totalorder %s201, 9
        %s203 = scalar_select %p202, %s201, 9
        %s204 = smul.addr %s203, 8
        %s205 = scalar_lea.vmem %s2, %s204
        %s206 = smul.u32 5, %s18
        %s207 = smul.u32 5, %s18
        %v208 = vld [vmem:[%s199] sm:$0xff]
        %v209 = vld [vmem:[%s199 + $0x8] sm:$0xff]
        %v210 = vld [vmem:[%s199 + $0x10] sm:$0xff]
        %v211 = vld [vmem:[%s199 + $0x18] sm:$0xff]
        %v212 = vld [vmem:[%s199 + $0x20] sm:$0xff]
        %213 = vrot.lane.b32.xlu0 %v208, 16
        %v214 = vpop.permute.xlu0 %213
        %215 = vrot.lane.b32.xlu0 %v209, 16
        %v216 = vpop.permute.xlu0 %215
        %217 = vrot.lane.b32.xlu0 %v210, 16
        %v218 = vpop.permute.xlu0 %217
        %219 = vrot.lane.b32.xlu0 %v211, 16
        %v220 = vpop.permute.xlu0 %219
        %221 = vrot.lane.b32.xlu0 %v212, 16
        %v222 = vpop.permute.xlu0 %221
        %s223 = sld [smem:[#allocation2]]
        %v224 = vstv %s223
        %v225 = vmul.f32 %v214, %v224
        %v226 = vmul.f32 %v216, %v224
        %v227 = vmul.f32 %v218, %v224
        %v228 = vmul.f32 %v220, %v224
        %v229 = vmul.f32 %v222, %v224
        %s230 = sld [smem:[#allocation2 + $0x9]]
        %v231 = vstv %s230
        %v232 = vmul.f32 %v214, %v231
        %v233 = vmul.f32 %v216, %v231
        %v234 = vmul.f32 %v218, %v231
        %v235 = vmul.f32 %v220, %v231
        %v236 = vmul.f32 %v222, %v231
        %s237 = sld [smem:[#allocation2 + $0x12]]
        %v238 = vstv %s237
        %v239 = vmul.f32 %v214, %v238
        %v240 = vmul.f32 %v216, %v238
        %v241 = vmul.f32 %v218, %v238
        %v242 = vmul.f32 %v220, %v238
        %v243 = vmul.f32 %v222, %v238
        %s244 = sld [smem:[#allocation2 + $0x1b]]
        %v245 = vstv %s244
        %v246 = vmul.f32 %v214, %v245
        %v247 = vmul.f32 %v216, %v245
        %v248 = vmul.f32 %v218, %v245
        %v249 = vmul.f32 %v220, %v245
        %v250 = vmul.f32 %v222, %v245
        %s251 = sld [smem:[#allocation2 + $0x24]]
        %v252 = vstv %s251
        %v253 = vmul.f32 %v214, %v252
        %v254 = vmul.f32 %v216, %v252
        %v255 = vmul.f32 %v218, %v252
        %v256 = vmul.f32 %v220, %v252
        %v257 = vmul.f32 %v222, %v252
        %258 = vrot.lane.b32.xlu0 %v208, 12
        %v259 = vpop.permute.xlu0 %258
        %260 = vrot.lane.b32.xlu0 %v209, 12
        %v261 = vpop.permute.xlu0 %260
        %262 = vrot.lane.b32.xlu0 %v210, 12
        %v263 = vpop.permute.xlu0 %262
        %264 = vrot.lane.b32.xlu0 %v211, 12
        %v265 = vpop.permute.xlu0 %264
        %266 = vrot.lane.b32.xlu0 %v212, 12
        %v267 = vpop.permute.xlu0 %266
        %s268 = sld [smem:[#allocation2 + $0x1]]
        %v269 = vstv %s268
        %v270 = vmul.f32 %v259, %v269
        %v271 = vmul.f32 %v261, %v269
        %v272 = vmul.f32 %v263, %v269
        %v273 = vmul.f32 %v265, %v269
        %v274 = vmul.f32 %v267, %v269
        %v275 = vadd.f32 %v225, %v270
        %v276 = vadd.f32 %v226, %v271
        %v277 = vadd.f32 %v227, %v272
        %v278 = vadd.f32 %v228, %v273
        %v279 = vadd.f32 %v229, %v274
        %s280 = sld [smem:[#allocation2 + $0xa]]
        %v281 = vstv %s280
        %v282 = vmul.f32 %v259, %v281
        %v283 = vmul.f32 %v261, %v281
        %v284 = vmul.f32 %v263, %v281
        %v285 = vmul.f32 %v265, %v281
        %v286 = vmul.f32 %v267, %v281
        %v287 = vadd.f32 %v232, %v282
        %v288 = vadd.f32 %v233, %v283
        %v289 = vadd.f32 %v234, %v284
        %v290 = vadd.f32 %v235, %v285
        %v291 = vadd.f32 %v236, %v286
        %s292 = sld [smem:[#allocation2 + $0x13]]
        %v293 = vstv %s292
        %v294 = vmul.f32 %v259, %v293
        %v295 = vmul.f32 %v261, %v293
        %v296 = vmul.f32 %v263, %v293
        %v297 = vmul.f32 %v265, %v293
        %v298 = vmul.f32 %v267, %v293
        %v299 = vadd.f32 %v239, %v294
        %v300 = vadd.f32 %v240, %v295
        %v301 = vadd.f32 %v241, %v296
        %v302 = vadd.f32 %v242, %v297
        %v303 = vadd.f32 %v243, %v298
        %s304 = sld [smem:[#allocation2 + $0x1c]]
        %v305 = vstv %s304
        %v306 = vmul.f32 %v259, %v305
        %v307 = vmul.f32 %v261, %v305
        %v308 = vmul.f32 %v263, %v305
        %v309 = vmul.f32 %v265, %v305
        %v310 = vmul.f32 %v267, %v305
        %v311 = vadd.f32 %v246, %v306
        %v312 = vadd.f32 %v247, %v307
        %v313 = vadd.f32 %v248, %v308
        %v314 = vadd.f32 %v249, %v309
        %v315 = vadd.f32 %v250, %v310
        %s316 = sld [smem:[#allocation2 + $0x25]]
        %v317 = vstv %s316
        %v318 = vmul.f32 %v259, %v317
        %v319 = vmul.f32 %v261, %v317
        %v320 = vmul.f32 %v263, %v317
        %v321 = vmul.f32 %v265, %v317
        %v322 = vmul.f32 %v267, %v317
        %v323 = vadd.f32 %v253, %v318
        %v324 = vadd.f32 %v254, %v319
        %v325 = vadd.f32 %v255, %v320
        %v326 = vadd.f32 %v256, %v321
        %v327 = vadd.f32 %v257, %v322
        %328 = vrot.lane.b32.xlu0 %v208, 8
        %v329 = vpop.permute.xlu0 %328
        %330 = vrot.lane.b32.xlu0 %v209, 8
        %v331 = vpop.permute.xlu0 %330
        %332 = vrot.lane.b32.xlu0 %v210, 8
        %v333 = vpop.permute.xlu0 %332
        %334 = vrot.lane.b32.xlu0 %v211, 8
        %v335 = vpop.permute.xlu0 %334
        %336 = vrot.lane.b32.xlu0 %v212, 8
        %v337 = vpop.permute.xlu0 %336
        %s338 = sld [smem:[#allocation2 + $0x2]]
        %v339 = vstv %s338
        %v340 = vmul.f32 %v329, %v339
        %v341 = vmul.f32 %v331, %v339
        %v342 = vmul.f32 %v333, %v339
        %v343 = vmul.f32 %v335, %v339
        %v344 = vmul.f32 %v337, %v339
        %v345 = vadd.f32 %v275, %v340
        %v346 = vadd.f32 %v276, %v341
        %v347 = vadd.f32 %v277, %v342
        %v348 = vadd.f32 %v278, %v343
        %v349 = vadd.f32 %v279, %v344
        %s350 = sld [smem:[#allocation2 + $0xb]]
        %v351 = vstv %s350
        %v352 = vmul.f32 %v329, %v351
        %v353 = vmul.f32 %v331, %v351
        %v354 = vmul.f32 %v333, %v351
        %v355 = vmul.f32 %v335, %v351
        %v356 = vmul.f32 %v337, %v351
        %v357 = vadd.f32 %v287, %v352
        %v358 = vadd.f32 %v288, %v353
        %v359 = vadd.f32 %v289, %v354
        %v360 = vadd.f32 %v290, %v355
        %v361 = vadd.f32 %v291, %v356
        %s362 = sld [smem:[#allocation2 + $0x14]]
        %v363 = vstv %s362
        %v364 = vmul.f32 %v329, %v363
        %v365 = vmul.f32 %v331, %v363
        %v366 = vmul.f32 %v333, %v363
        %v367 = vmul.f32 %v335, %v363
        %v368 = vmul.f32 %v337, %v363
        %v369 = vadd.f32 %v299, %v364
        %v370 = vadd.f32 %v300, %v365
        %v371 = vadd.f32 %v301, %v366
        %v372 = vadd.f32 %v302, %v367
        %v373 = vadd.f32 %v303, %v368
        %s374 = sld [smem:[#allocation2 + $0x1d]]
        %v375 = vstv %s374
        %v376 = vmul.f32 %v329, %v375
        %v377 = vmul.f32 %v331, %v375
        %v378 = vmul.f32 %v333, %v375
        %v379 = vmul.f32 %v335, %v375
        %v380 = vmul.f32 %v337, %v375
        %v381 = vadd.f32 %v311, %v376
        %v382 = vadd.f32 %v312, %v377
        %v383 = vadd.f32 %v313, %v378
        %v384 = vadd.f32 %v314, %v379
        %v385 = vadd.f32 %v315, %v380
        %s386 = sld [smem:[#allocation2 + $0x26]]
        %v387 = vstv %s386
        %v388 = vmul.f32 %v329, %v387
        %v389 = vmul.f32 %v331, %v387
        %v390 = vmul.f32 %v333, %v387
        %v391 = vmul.f32 %v335, %v387
        %v392 = vmul.f32 %v337, %v387
        %v393 = vadd.f32 %v323, %v388
        %v394 = vadd.f32 %v324, %v389
        %v395 = vadd.f32 %v325, %v390
        %v396 = vadd.f32 %v326, %v391
        %v397 = vadd.f32 %v327, %v392
        %398 = vrot.lane.b32.xlu0 %v208, 4
        %v399 = vpop.permute.xlu0 %398
        %400 = vrot.lane.b32.xlu0 %v209, 4
        %v401 = vpop.permute.xlu0 %400
        %402 = vrot.lane.b32.xlu0 %v210, 4
        %v403 = vpop.permute.xlu0 %402
        %404 = vrot.lane.b32.xlu0 %v211, 4
        %v405 = vpop.permute.xlu0 %404
        %406 = vrot.lane.b32.xlu0 %v212, 4
        %v407 = vpop.permute.xlu0 %406
        %s408 = sld [smem:[#allocation2 + $0x3]]
        %v409 = vstv %s408
        %v410 = vmul.f32 %v399, %v409
        %v411 = vmul.f32 %v401, %v409
        %v412 = vmul.f32 %v403, %v409
        %v413 = vmul.f32 %v405, %v409
        %v414 = vmul.f32 %v407, %v409
        %v415 = vadd.f32 %v345, %v410
        %v416 = vadd.f32 %v346, %v411
        %v417 = vadd.f32 %v347, %v412
        %v418 = vadd.f32 %v348, %v413
        %v419 = vadd.f32 %v349, %v414
        %s420 = sld [smem:[#allocation2 + $0xc]]
        %v421 = vstv %s420
        %v422 = vmul.f32 %v399, %v421
        %v423 = vmul.f32 %v401, %v421
        %v424 = vmul.f32 %v403, %v421
        %v425 = vmul.f32 %v405, %v421
        %v426 = vmul.f32 %v407, %v421
        %v427 = vadd.f32 %v357, %v422
        %v428 = vadd.f32 %v358, %v423
        %v429 = vadd.f32 %v359, %v424
        %v430 = vadd.f32 %v360, %v425
        %v431 = vadd.f32 %v361, %v426
        %s432 = sld [smem:[#allocation2 + $0x15]]
        %v433 = vstv %s432
        %v434 = vmul.f32 %v399, %v433
        %v435 = vmul.f32 %v401, %v433
        %v436 = vmul.f32 %v403, %v433
        %v437 = vmul.f32 %v405, %v433
        %v438 = vmul.f32 %v407, %v433
        %v439 = vadd.f32 %v369, %v434
        %v440 = vadd.f32 %v370, %v435
        %v441 = vadd.f32 %v371, %v436
        %v442 = vadd.f32 %v372, %v437
        %v443 = vadd.f32 %v373, %v438
        %s444 = sld [smem:[#allocation2 + $0x1e]]
        %v445 = vstv %s444
        %v446 = vmul.f32 %v399, %v445
        %v447 = vmul.f32 %v401, %v445
        %v448 = vmul.f32 %v403, %v445
        %v449 = vmul.f32 %v405, %v445
        %v450 = vmul.f32 %v407, %v445
        %v451 = vadd.f32 %v381, %v446
        %v452 = vadd.f32 %v382, %v447
        %v453 = vadd.f32 %v383, %v448
        %v454 = vadd.f32 %v384, %v449
        %v455 = vadd.f32 %v385, %v450
        %s456 = sld [smem:[#allocation2 + $0x27]]
        %v457 = vstv %s456
        %v458 = vmul.f32 %v399, %v457
        %v459 = vmul.f32 %v401, %v457
        %v460 = vmul.f32 %v403, %v457
        %v461 = vmul.f32 %v405, %v457
        %v462 = vmul.f32 %v407, %v457
        %v463 = vadd.f32 %v393, %v458
        %v464 = vadd.f32 %v394, %v459
        %v465 = vadd.f32 %v395, %v460
        %v466 = vadd.f32 %v396, %v461
        %v467 = vadd.f32 %v397, %v462
        %s468 = sld [smem:[#allocation2 + $0x4]]
        %v469 = vstv %s468
        %v470 = vmul.f32 %v208, %v469
        %v471 = vmul.f32 %v209, %v469
        %v472 = vmul.f32 %v210, %v469
        %v473 = vmul.f32 %v211, %v469
        %v474 = vmul.f32 %v212, %v469
        %v475 = vadd.f32 %v415, %v470
        %v476 = vadd.f32 %v416, %v471
        %v477 = vadd.f32 %v417, %v472
        %v478 = vadd.f32 %v418, %v473
        %v479 = vadd.f32 %v419, %v474
        %s480 = sld [smem:[#allocation2 + $0xd]]
        %v481 = vstv %s480
        %v482 = vmul.f32 %v208, %v481
        %v483 = vmul.f32 %v209, %v481
        %v484 = vmul.f32 %v210, %v481
        %v485 = vmul.f32 %v211, %v481
        %v486 = vmul.f32 %v212, %v481
        %v487 = vadd.f32 %v427, %v482
        %v488 = vadd.f32 %v428, %v483
        %v489 = vadd.f32 %v429, %v484
        %v490 = vadd.f32 %v430, %v485
        %v491 = vadd.f32 %v431, %v486
        %s492 = sld [smem:[#allocation2 + $0x16]]
        %v493 = vstv %s492
        %v494 = vmul.f32 %v208, %v493
        %v495 = vmul.f32 %v209, %v493
        %v496 = vmul.f32 %v210, %v493
        %v497 = vmul.f32 %v211, %v493
        %v498 = vmul.f32 %v212, %v493
        %v499 = vadd.f32 %v439, %v494
        %v500 = vadd.f32 %v440, %v495
        %v501 = vadd.f32 %v441, %v496
        %v502 = vadd.f32 %v442, %v497
        %v503 = vadd.f32 %v443, %v498
        %s504 = sld [smem:[#allocation2 + $0x1f]]
        %v505 = vstv %s504
        %v506 = vmul.f32 %v208, %v505
        %v507 = vmul.f32 %v209, %v505
        %v508 = vmul.f32 %v210, %v505
        %v509 = vmul.f32 %v211, %v505
        %v510 = vmul.f32 %v212, %v505
        %v511 = vadd.f32 %v451, %v506
        %v512 = vadd.f32 %v452, %v507
        %v513 = vadd.f32 %v453, %v508
        %v514 = vadd.f32 %v454, %v509
        %v515 = vadd.f32 %v455, %v510
        %s516 = sld [smem:[#allocation2 + $0x28]]
        %v517 = vstv %s516
        %v518 = vmul.f32 %v208, %v517
        %v519 = vmul.f32 %v209, %v517
        %v520 = vmul.f32 %v210, %v517
        %v521 = vmul.f32 %v211, %v517
        %v522 = vmul.f32 %v212, %v517
        %v523 = vadd.f32 %v463, %v518
        %v524 = vadd.f32 %v464, %v519
        %v525 = vadd.f32 %v465, %v520
        %v526 = vadd.f32 %v466, %v521
        %v527 = vadd.f32 %v467, %v522
        %528 = vrot.lane.b32.xlu0 %v208, 124
        %v529 = vpop.permute.xlu0 %528
        %530 = vrot.lane.b32.xlu0 %v209, 124
        %v531 = vpop.permute.xlu0 %530
        %532 = vrot.lane.b32.xlu0 %v210, 124
        %v533 = vpop.permute.xlu0 %532
        %534 = vrot.lane.b32.xlu0 %v211, 124
        %v535 = vpop.permute.xlu0 %534
        %536 = vrot.lane.b32.xlu0 %v212, 124
        %v537 = vpop.permute.xlu0 %536
        %s538 = sld [smem:[#allocation2 + $0x5]]
        %v539 = vstv %s538
        %v540 = vmul.f32 %v529, %v539
        %v541 = vmul.f32 %v531, %v539
        %v542 = vmul.f32 %v533, %v539
        %v543 = vmul.f32 %v535, %v539
        %v544 = vmul.f32 %v537, %v539
        %v545 = vadd.f32 %v475, %v540
        %v546 = vadd.f32 %v476, %v541
        %v547 = vadd.f32 %v477, %v542
        %v548 = vadd.f32 %v478, %v543
        %v549 = vadd.f32 %v479, %v544
        %s550 = sld [smem:[#allocation2 + $0xe]]
        %v551 = vstv %s550
        %v552 = vmul.f32 %v529, %v551
        %v553 = vmul.f32 %v531, %v551
        %v554 = vmul.f32 %v533, %v551
        %v555 = vmul.f32 %v535, %v551
        %v556 = vmul.f32 %v537, %v551
        %v557 = vadd.f32 %v487, %v552
        %v558 = vadd.f32 %v488, %v553
        %v559 = vadd.f32 %v489, %v554
        %v560 = vadd.f32 %v490, %v555
        %v561 = vadd.f32 %v491, %v556
        %s562 = sld [smem:[#allocation2 + $0x17]]
        %v563 = vstv %s562
        %v564 = vmul.f32 %v529, %v563
        %v565 = vmul.f32 %v531, %v563
        %v566 = vmul.f32 %v533, %v563
        %v567 = vmul.f32 %v535, %v563
        %v568 = vmul.f32 %v537, %v563
        %v569 = vadd.f32 %v499, %v564
        %v570 = vadd.f32 %v500, %v565
        %v571 = vadd.f32 %v501, %v566
        %v572 = vadd.f32 %v502, %v567
        %v573 = vadd.f32 %v503, %v568
        %s574 = sld [smem:[#allocation2 + $0x20]]
        %v575 = vstv %s574
        %v576 = vmul.f32 %v529, %v575
        %v577 = vmul.f32 %v531, %v575
        %v578 = vmul.f32 %v533, %v575
        %v579 = vmul.f32 %v535, %v575
        %v580 = vmul.f32 %v537, %v575
        %v581 = vadd.f32 %v511, %v576
        %v582 = vadd.f32 %v512, %v577
        %v583 = vadd.f32 %v513, %v578
        %v584 = vadd.f32 %v514, %v579
        %v585 = vadd.f32 %v515, %v580
        %s586 = sld [smem:[#allocation2 + $0x29]]
        %v587 = vstv %s586
        %v588 = vmul.f32 %v529, %v587
        %v589 = vmul.f32 %v531, %v587
        %v590 = vmul.f32 %v533, %v587
        %v591 = vmul.f32 %v535, %v587
        %v592 = vmul.f32 %v537, %v587
        %v593 = vadd.f32 %v523, %v588
        %v594 = vadd.f32 %v524, %v589
        %v595 = vadd.f32 %v525, %v590
        %v596 = vadd.f32 %v526, %v591
        %v597 = vadd.f32 %v527, %v592
        %598 = vrot.lane.b32.xlu0 %v208, 120
        %v599 = vpop.permute.xlu0 %598
        %600 = vrot.lane.b32.xlu0 %v209, 120
        %v601 = vpop.permute.xlu0 %600
        %602 = vrot.lane.b32.xlu0 %v210, 120
        %v603 = vpop.permute.xlu0 %602
        %604 = vrot.lane.b32.xlu0 %v211, 120
        %v605 = vpop.permute.xlu0 %604
        %606 = vrot.lane.b32.xlu0 %v212, 120
        %v607 = vpop.permute.xlu0 %606
        %s608 = sld [smem:[#allocation2 + $0x6]]
        %v609 = vstv %s608
        %v610 = vmul.f32 %v599, %v609
        %v611 = vmul.f32 %v601, %v609
        %v612 = vmul.f32 %v603, %v609
        %v613 = vmul.f32 %v605, %v609
        %v614 = vmul.f32 %v607, %v609
        %v615 = vadd.f32 %v545, %v610
        %v616 = vadd.f32 %v546, %v611
        %v617 = vadd.f32 %v547, %v612
        %v618 = vadd.f32 %v548, %v613
        %v619 = vadd.f32 %v549, %v614
        %s620 = sld [smem:[#allocation2 + $0xf]]
        %v621 = vstv %s620
        %v622 = vmul.f32 %v599, %v621
        %v623 = vmul.f32 %v601, %v621
        %v624 = vmul.f32 %v603, %v621
        %v625 = vmul.f32 %v605, %v621
        %v626 = vmul.f32 %v607, %v621
        %v627 = vadd.f32 %v557, %v622
        %v628 = vadd.f32 %v558, %v623
        %v629 = vadd.f32 %v559, %v624
        %v630 = vadd.f32 %v560, %v625
        %v631 = vadd.f32 %v561, %v626
        %s632 = sld [smem:[#allocation2 + $0x18]]
        %v633 = vstv %s632
        %v634 = vmul.f32 %v599, %v633
        %v635 = vmul.f32 %v601, %v633
        %v636 = vmul.f32 %v603, %v633
        %v637 = vmul.f32 %v605, %v633
        %v638 = vmul.f32 %v607, %v633
        %v639 = vadd.f32 %v569, %v634
        %v640 = vadd.f32 %v570, %v635
        %v641 = vadd.f32 %v571, %v636
        %v642 = vadd.f32 %v572, %v637
        %v643 = vadd.f32 %v573, %v638
        %s644 = sld [smem:[#allocation2 + $0x21]]
        %v645 = vstv %s644
        %v646 = vmul.f32 %v599, %v645
        %v647 = vmul.f32 %v601, %v645
        %v648 = vmul.f32 %v603, %v645
        %v649 = vmul.f32 %v605, %v645
        %v650 = vmul.f32 %v607, %v645
        %v651 = vadd.f32 %v581, %v646
        %v652 = vadd.f32 %v582, %v647
        %v653 = vadd.f32 %v583, %v648
        %v654 = vadd.f32 %v584, %v649
        %v655 = vadd.f32 %v585, %v650
        %s656 = sld [smem:[#allocation2 + $0x2a]]
        %v657 = vstv %s656
        %v658 = vmul.f32 %v599, %v657
        %v659 = vmul.f32 %v601, %v657
        %v660 = vmul.f32 %v603, %v657
        %v661 = vmul.f32 %v605, %v657
        %v662 = vmul.f32 %v607, %v657
        %v663 = vadd.f32 %v593, %v658
        %v664 = vadd.f32 %v594, %v659
        %v665 = vadd.f32 %v595, %v660
        %v666 = vadd.f32 %v596, %v661
        %v667 = vadd.f32 %v597, %v662
        %668 = vrot.lane.b32.xlu0 %v208, 116
        %v669 = vpop.permute.xlu0 %668
        %670 = vrot.lane.b32.xlu0 %v209, 116
        %v671 = vpop.permute.xlu0 %670
        %672 = vrot.lane.b32.xlu0 %v210, 116
        %v673 = vpop.permute.xlu0 %672
        %674 = vrot.lane.b32.xlu0 %v211, 116
        %v675 = vpop.permute.xlu0 %674
        %676 = vrot.lane.b32.xlu0 %v212, 116
        %v677 = vpop.permute.xlu0 %676
        %s678 = sld [smem:[#allocation2 + $0x7]]
        %v679 = vstv %s678
        %v680 = vmul.f32 %v669, %v679
        %v681 = vmul.f32 %v671, %v679
        %v682 = vmul.f32 %v673, %v679
        %v683 = vmul.f32 %v675, %v679
        %v684 = vmul.f32 %v677, %v679
        %v685 = vadd.f32 %v615, %v680
        %v686 = vadd.f32 %v616, %v681
        %v687 = vadd.f32 %v617, %v682
        %v688 = vadd.f32 %v618, %v683
        %v689 = vadd.f32 %v619, %v684
        %s690 = sld [smem:[#allocation2 + $0x10]]
        %v691 = vstv %s690
        %v692 = vmul.f32 %v669, %v691
        %v693 = vmul.f32 %v671, %v691
        %v694 = vmul.f32 %v673, %v691
        %v695 = vmul.f32 %v675, %v691
        %v696 = vmul.f32 %v677, %v691
        %v697 = vadd.f32 %v627, %v692
        %v698 = vadd.f32 %v628, %v693
        %v699 = vadd.f32 %v629, %v694
        %v700 = vadd.f32 %v630, %v695
        %v701 = vadd.f32 %v631, %v696
        %s702 = sld [smem:[#allocation2 + $0x19]]
        %v703 = vstv %s702
        %v704 = vmul.f32 %v669, %v703
        %v705 = vmul.f32 %v671, %v703
        %v706 = vmul.f32 %v673, %v703
        %v707 = vmul.f32 %v675, %v703
        %v708 = vmul.f32 %v677, %v703
        %v709 = vadd.f32 %v639, %v704
        %v710 = vadd.f32 %v640, %v705
        %v711 = vadd.f32 %v641, %v706
        %v712 = vadd.f32 %v642, %v707
        %v713 = vadd.f32 %v643, %v708
        %s714 = sld [smem:[#allocation2 + $0x22]]
        %v715 = vstv %s714
        %v716 = vmul.f32 %v669, %v715
        %v717 = vmul.f32 %v671, %v715
        %v718 = vmul.f32 %v673, %v715
        %v719 = vmul.f32 %v675, %v715
        %v720 = vmul.f32 %v677, %v715
        %v721 = vadd.f32 %v651, %v716
        %v722 = vadd.f32 %v652, %v717
        %v723 = vadd.f32 %v653, %v718
        %v724 = vadd.f32 %v654, %v719
        %v725 = vadd.f32 %v655, %v720
        %s726 = sld [smem:[#allocation2 + $0x2b]]
        %v727 = vstv %s726
        %v728 = vmul.f32 %v669, %v727
        %v729 = vmul.f32 %v671, %v727
        %v730 = vmul.f32 %v673, %v727
        %v731 = vmul.f32 %v675, %v727
        %v732 = vmul.f32 %v677, %v727
        %v733 = vadd.f32 %v663, %v728
        %v734 = vadd.f32 %v664, %v729
        %v735 = vadd.f32 %v665, %v730
        %v736 = vadd.f32 %v666, %v731
        %v737 = vadd.f32 %v667, %v732
        %738 = vrot.lane.b32.xlu0 %v208, 112
        %v739 = vpop.permute.xlu0 %738
        %740 = vrot.lane.b32.xlu0 %v209, 112
        %v741 = vpop.permute.xlu0 %740
        %742 = vrot.lane.b32.xlu0 %v210, 112
        %v743 = vpop.permute.xlu0 %742
        %744 = vrot.lane.b32.xlu0 %v211, 112
        %v745 = vpop.permute.xlu0 %744
        %746 = vrot.lane.b32.xlu0 %v212, 112
        %v747 = vpop.permute.xlu0 %746
        %s748 = sld [smem:[#allocation2 + $0x8]]
        %v749 = vstv %s748
        %v750 = vmul.f32 %v739, %v749
        %v751 = vmul.f32 %v741, %v749
        %v752 = vmul.f32 %v743, %v749
        %v753 = vmul.f32 %v745, %v749
        %v754 = vmul.f32 %v747, %v749
        %v755 = vadd.f32 %v685, %v750
        %v756 = vadd.f32 %v686, %v751
        %v757 = vadd.f32 %v687, %v752
        %v758 = vadd.f32 %v688, %v753
        %v759 = vadd.f32 %v689, %v754
        %s760 = sld [smem:[#allocation2 + $0x11]]
        %v761 = vstv %s760
        %v762 = vmul.f32 %v739, %v761
        %v763 = vmul.f32 %v741, %v761
        %v764 = vmul.f32 %v743, %v761
        %v765 = vmul.f32 %v745, %v761
        %v766 = vmul.f32 %v747, %v761
        %v767 = vadd.f32 %v697, %v762
        %v768 = vadd.f32 %v698, %v763
        %v769 = vadd.f32 %v699, %v764
        %v770 = vadd.f32 %v700, %v765
        %v771 = vadd.f32 %v701, %v766
        %s772 = sld [smem:[#allocation2 + $0x1a]]
        %v773 = vstv %s772
        %v774 = vmul.f32 %v739, %v773
        %v775 = vmul.f32 %v741, %v773
        %v776 = vmul.f32 %v743, %v773
        %v777 = vmul.f32 %v745, %v773
        %v778 = vmul.f32 %v747, %v773
        %v779 = vadd.f32 %v709, %v774
        %v780 = vadd.f32 %v710, %v775
        %v781 = vadd.f32 %v711, %v776
        %v782 = vadd.f32 %v712, %v777
        %v783 = vadd.f32 %v713, %v778
        %s784 = sld [smem:[#allocation2 + $0x23]]
        %v785 = vstv %s784
        %v786 = vmul.f32 %v739, %v785
        %v787 = vmul.f32 %v741, %v785
        %v788 = vmul.f32 %v743, %v785
        %v789 = vmul.f32 %v745, %v785
        %v790 = vmul.f32 %v747, %v785
        %v791 = vadd.f32 %v721, %v786
        %v792 = vadd.f32 %v722, %v787
        %v793 = vadd.f32 %v723, %v788
        %v794 = vadd.f32 %v724, %v789
        %v795 = vadd.f32 %v725, %v790
        %s796 = sld [smem:[#allocation2 + $0x2c]]
        %v797 = vstv %s796
        %v798 = vmul.f32 %v739, %v797
        %v799 = vmul.f32 %v741, %v797
        %v800 = vmul.f32 %v743, %v797
        %v801 = vmul.f32 %v745, %v797
        %v802 = vmul.f32 %v747, %v797
        %v803 = vadd.f32 %v733, %v798
        %v804 = vadd.f32 %v734, %v799
        %v805 = vadd.f32 %v735, %v800
        %v806 = vadd.f32 %v736, %v801
        %v807 = vadd.f32 %v737, %v802
        %s808 = sld [smem:[#allocation2 + $0x2d]]
        %v809 = vstv %s808
        %v810 = vadd.f32 %v755, %v809
        %v811 = vadd.f32 %v756, %v809
        %v812 = vadd.f32 %v757, %v809
        %v813 = vadd.f32 %v758, %v809
        %v814 = vadd.f32 %v759, %v809
        %v815 = vtanh.pop %v810
        %v816 = vtanh.pop %v811
        %v817 = vtanh.pop %v812
        %v818 = vtanh.pop %v813
        %v819 = vtanh.pop %v814
        %s820 = sld [smem:[#allocation2 + $0x2e]]
        %v821 = vstv %s820
        %v822 = vadd.f32 %v767, %v821
        %v823 = vadd.f32 %v768, %v821
        %v824 = vadd.f32 %v769, %v821
        %v825 = vadd.f32 %v770, %v821
        %v826 = vadd.f32 %v771, %v821
        %v827 = vtanh.pop %v822
        %v828 = vtanh.pop %v823
        %v829 = vtanh.pop %v824
        %v830 = vtanh.pop %v825
        %v831 = vtanh.pop %v826
        %s832 = sld [smem:[#allocation2 + $0x2f]]
        %v833 = vstv %s832
        %v834 = vadd.f32 %v779, %v833
        %v835 = vadd.f32 %v780, %v833
        %v836 = vadd.f32 %v781, %v833
        %v837 = vadd.f32 %v782, %v833
        %v838 = vadd.f32 %v783, %v833
        %v839 = vtanh.pop %v834
        %v840 = vtanh.pop %v835
        %v841 = vtanh.pop %v836
        %v842 = vtanh.pop %v837
        %v843 = vtanh.pop %v838
        %s844 = sld [smem:[#allocation2 + $0x30]]
        %v845 = vstv %s844
        %v846 = vadd.f32 %v791, %v845
        %v847 = vadd.f32 %v792, %v845
        %v848 = vadd.f32 %v793, %v845
        %v849 = vadd.f32 %v794, %v845
        %v850 = vadd.f32 %v795, %v845
        %v851 = vtanh.pop %v846
        %v852 = vtanh.pop %v847
        %v853 = vtanh.pop %v848
        %v854 = vtanh.pop %v849
        %v855 = vtanh.pop %v850
        %s856 = sld [smem:[#allocation2 + $0x31]]
        %v857 = vstv %s856
        %v858 = vadd.f32 %v803, %v857
        %v859 = vadd.f32 %v804, %v857
        %v860 = vadd.f32 %v805, %v857
        %v861 = vadd.f32 %v806, %v857
        %v862 = vadd.f32 %v807, %v857
        %v863 = vtanh.pop %v858
        %v864 = vtanh.pop %v859
        %v865 = vtanh.pop %v860
        %v866 = vtanh.pop %v861
        %v867 = vtanh.pop %v862
        %v868 = vld [vmem:[%s205] sm:$0xff]
        %v869 = vld [vmem:[%s205 + $0x8] sm:$0xff]
        %v870 = vld [vmem:[%s205 + $0x10] sm:$0xff]
        %v871 = vld [vmem:[%s205 + $0x18] sm:$0xff]
        %v872 = vld [vmem:[%s205 + $0x20] sm:$0xff]
        %s873 = sld [smem:[#allocation2 + $0x32]]
        %v874 = vstv %s873
        %v875 = vmul.f32 %v868, %v874
        %v876 = vmul.f32 %v869, %v874
        %v877 = vmul.f32 %v870, %v874
        %v878 = vmul.f32 %v871, %v874
        %v879 = vmul.f32 %v872, %v874
        %s880 = sld [smem:[#allocation2 + $0x33]]
        %v881 = vstv %s880
        %v882 = vmul.f32 %v868, %v881
        %v883 = vmul.f32 %v869, %v881
        %v884 = vmul.f32 %v870, %v881
        %v885 = vmul.f32 %v871, %v881
        %v886 = vmul.f32 %v872, %v881
        %892 = vrot.lane.b32.xlu0 %v882, 127
        %v893 = vpop.permute.xlu0 %892
        %894 = vrot.lane.b32.xlu0 %v883, 127
        %v895 = vpop.permute.xlu0 %894
        %896 = vrot.lane.b32.xlu0 %v884, 127
        %v897 = vpop.permute.xlu0 %896
        %898 = vrot.lane.b32.xlu0 %v885, 127
        %v899 = vpop.permute.xlu0 %898
        %900 = vrot.lane.b32.xlu0 %v886, 127
        %v901 = vpop.permute.xlu0 %900
        %v907 = vadd.f32 %v875, %v893
        %v908 = vadd.f32 %v876, %v895
        %v909 = vadd.f32 %v877, %v897
        %v910 = vadd.f32 %v878, %v899
        %v911 = vadd.f32 %v879, %v901
        %s912 = sld [smem:[#allocation2 + $0x34]]
        %v913 = vstv %s912
        %v914 = vmul.f32 %v868, %v913
        %v915 = vmul.f32 %v869, %v913
        %v916 = vmul.f32 %v870, %v913
        %v917 = vmul.f32 %v871, %v913
        %v918 = vmul.f32 %v872, %v913
        %924 = vrot.lane.b32.xlu0 %v914, 126
        %v925 = vpop.permute.xlu0 %924
        %926 = vrot.lane.b32.xlu0 %v915, 126
        %v927 = vpop.permute.xlu0 %926
        %928 = vrot.lane.b32.xlu0 %v916, 126
        %v929 = vpop.permute.xlu0 %928
        %930 = vrot.lane.b32.xlu0 %v917, 126
        %v931 = vpop.permute.xlu0 %930
        %932 = vrot.lane.b32.xlu0 %v918, 126
        %v933 = vpop.permute.xlu0 %932
        %v939 = vadd.f32 %v907, %v925
        %v940 = vadd.f32 %v908, %v927
        %v941 = vadd.f32 %v909, %v929
        %v942 = vadd.f32 %v910, %v931
        %v943 = vadd.f32 %v911, %v933
        %s944 = sld [smem:[#allocation2 + $0x35]]
        %v945 = vstv %s944
        %v946 = vmul.f32 %v868, %v945
        %v947 = vmul.f32 %v869, %v945
        %v948 = vmul.f32 %v870, %v945
        %v949 = vmul.f32 %v871, %v945
        %v950 = vmul.f32 %v872, %v945
        %956 = vrot.lane.b32.xlu0 %v946, 125
        %v957 = vpop.permute.xlu0 %956
        %958 = vrot.lane.b32.xlu0 %v947, 125
        %v959 = vpop.permute.xlu0 %958
        %960 = vrot.lane.b32.xlu0 %v948, 125
        %v961 = vpop.permute.xlu0 %960
        %962 = vrot.lane.b32.xlu0 %v949, 125
        %v963 = vpop.permute.xlu0 %962
        %964 = vrot.lane.b32.xlu0 %v950, 125
        %v965 = vpop.permute.xlu0 %964
        %v971 = vadd.f32 %v939, %v957
        %v972 = vadd.f32 %v940, %v959
        %v973 = vadd.f32 %v941, %v961
        %v974 = vadd.f32 %v942, %v963
        %v975 = vadd.f32 %v943, %v965
        %s976 = sld [smem:[#allocation2 + $0x42]]
        %v977 = vstv %s976
        %v978 = vadd.f32 %v971, %v977
        %v979 = vadd.f32 %v972, %v977
        %v980 = vadd.f32 %v973, %v977
        %v981 = vadd.f32 %v974, %v977
        %v982 = vadd.f32 %v975, %v977
        %v983 = vtanh.pop %v978
        %v984 = vtanh.pop %v979
        %v985 = vtanh.pop %v980
        %v986 = vtanh.pop %v981
        %v987 = vtanh.pop %v982
        %989 = vset.pattern.permute.xlu0 0
        %990 = vperm.xlu0 %989, %v983
        %v991 = vpop.permute.xlu0 %990
        %994 = vset.pattern.permute.xlu0 0
        %995 = vperm.xlu0 %994, %v984
        %v996 = vpop.permute.xlu0 %995
        %999 = vset.pattern.permute.xlu0 0
        %1000 = vperm.xlu0 %999, %v985
        %v1001 = vpop.permute.xlu0 %1000
        %1004 = vset.pattern.permute.xlu0 0
        %1005 = vperm.xlu0 %1004, %v986
        %v1006 = vpop.permute.xlu0 %1005
        %1009 = vset.pattern.permute.xlu0 0
        %1010 = vperm.xlu0 %1009, %v987
        %v1011 = vpop.permute.xlu0 %1010
        %v1013 = vadd.f32 %v827, %v991
        %v1014 = vadd.f32 %v828, %v996
        %v1015 = vadd.f32 %v829, %v1001
        %v1016 = vadd.f32 %v830, %v1006
        %v1017 = vadd.f32 %v831, %v1011
        %s1018 = sld [smem:[#allocation2 + $0x36]]
        %v1019 = vstv %s1018
        %v1020 = vmul.f32 %v868, %v1019
        %v1021 = vmul.f32 %v869, %v1019
        %v1022 = vmul.f32 %v870, %v1019
        %v1023 = vmul.f32 %v871, %v1019
        %v1024 = vmul.f32 %v872, %v1019
        %s1025 = sld [smem:[#allocation2 + $0x37]]
        %v1026 = vstv %s1025
        %v1027 = vmul.f32 %v868, %v1026
        %v1028 = vmul.f32 %v869, %v1026
        %v1029 = vmul.f32 %v870, %v1026
        %v1030 = vmul.f32 %v871, %v1026
        %v1031 = vmul.f32 %v872, %v1026
        %1037 = vrot.lane.b32.xlu0 %v1027, 127
        %v1038 = vpop.permute.xlu0 %1037
        %1039 = vrot.lane.b32.xlu0 %v1028, 127
        %v1040 = vpop.permute.xlu0 %1039
        %1041 = vrot.lane.b32.xlu0 %v1029, 127
        %v1042 = vpop.permute.xlu0 %1041
        %1043 = vrot.lane.b32.xlu0 %v1030, 127
        %v1044 = vpop.permute.xlu0 %1043
        %1045 = vrot.lane.b32.xlu0 %v1031, 127
        %v1046 = vpop.permute.xlu0 %1045
        %v1052 = vadd.f32 %v1020, %v1038
        %v1053 = vadd.f32 %v1021, %v1040
        %v1054 = vadd.f32 %v1022, %v1042
        %v1055 = vadd.f32 %v1023, %v1044
        %v1056 = vadd.f32 %v1024, %v1046
        %s1057 = sld [smem:[#allocation2 + $0x38]]
        %v1058 = vstv %s1057
        %v1059 = vmul.f32 %v868, %v1058
        %v1060 = vmul.f32 %v869, %v1058
        %v1061 = vmul.f32 %v870, %v1058
        %v1062 = vmul.f32 %v871, %v1058
        %v1063 = vmul.f32 %v872, %v1058
        %1069 = vrot.lane.b32.xlu0 %v1059, 126
        %v1070 = vpop.permute.xlu0 %1069
        %1071 = vrot.lane.b32.xlu0 %v1060, 126
        %v1072 = vpop.permute.xlu0 %1071
        %1073 = vrot.lane.b32.xlu0 %v1061, 126
        %v1074 = vpop.permute.xlu0 %1073
        %1075 = vrot.lane.b32.xlu0 %v1062, 126
        %v1076 = vpop.permute.xlu0 %1075
        %1077 = vrot.lane.b32.xlu0 %v1063, 126
        %v1078 = vpop.permute.xlu0 %1077
        %v1084 = vadd.f32 %v1052, %v1070
        %v1085 = vadd.f32 %v1053, %v1072
        %v1086 = vadd.f32 %v1054, %v1074
        %v1087 = vadd.f32 %v1055, %v1076
        %v1088 = vadd.f32 %v1056, %v1078
        %s1089 = sld [smem:[#allocation2 + $0x39]]
        %v1090 = vstv %s1089
        %v1091 = vmul.f32 %v868, %v1090
        %v1092 = vmul.f32 %v869, %v1090
        %v1093 = vmul.f32 %v870, %v1090
        %v1094 = vmul.f32 %v871, %v1090
        %v1095 = vmul.f32 %v872, %v1090
        %1101 = vrot.lane.b32.xlu0 %v1091, 125
        %v1102 = vpop.permute.xlu0 %1101
        %1103 = vrot.lane.b32.xlu0 %v1092, 125
        %v1104 = vpop.permute.xlu0 %1103
        %1105 = vrot.lane.b32.xlu0 %v1093, 125
        %v1106 = vpop.permute.xlu0 %1105
        %1107 = vrot.lane.b32.xlu0 %v1094, 125
        %v1108 = vpop.permute.xlu0 %1107
        %1109 = vrot.lane.b32.xlu0 %v1095, 125
        %v1110 = vpop.permute.xlu0 %1109
        %v1116 = vadd.f32 %v1084, %v1102
        %v1117 = vadd.f32 %v1085, %v1104
        %v1118 = vadd.f32 %v1086, %v1106
        %v1119 = vadd.f32 %v1087, %v1108
        %v1120 = vadd.f32 %v1088, %v1110
        %s1121 = sld [smem:[#allocation2 + $0x43]]
        %v1122 = vstv %s1121
        %v1123 = vadd.f32 %v1116, %v1122
        %v1124 = vadd.f32 %v1117, %v1122
        %v1125 = vadd.f32 %v1118, %v1122
        %v1126 = vadd.f32 %v1119, %v1122
        %v1127 = vadd.f32 %v1120, %v1122
        %v1128 = vtanh.pop %v1123
        %v1129 = vtanh.pop %v1124
        %v1130 = vtanh.pop %v1125
        %v1131 = vtanh.pop %v1126
        %v1132 = vtanh.pop %v1127
        %1134 = vset.pattern.permute.xlu0 0
        %1135 = vperm.xlu0 %1134, %v1128
        %v1136 = vpop.permute.xlu0 %1135
        %1139 = vset.pattern.permute.xlu0 0
        %1140 = vperm.xlu0 %1139, %v1129
        %v1141 = vpop.permute.xlu0 %1140
        %1144 = vset.pattern.permute.xlu0 0
        %1145 = vperm.xlu0 %1144, %v1130
        %v1146 = vpop.permute.xlu0 %1145
        %1149 = vset.pattern.permute.xlu0 0
        %1150 = vperm.xlu0 %1149, %v1131
        %v1151 = vpop.permute.xlu0 %1150
        %1154 = vset.pattern.permute.xlu0 0
        %1155 = vperm.xlu0 %1154, %v1132
        %v1156 = vpop.permute.xlu0 %1155
        %v1158 = vadd.f32 %v839, %v1136
        %v1159 = vadd.f32 %v840, %v1141
        %v1160 = vadd.f32 %v841, %v1146
        %v1161 = vadd.f32 %v842, %v1151
        %v1162 = vadd.f32 %v843, %v1156
        %s1163 = sld [smem:[#allocation2 + $0x3a]]
        %v1164 = vstv %s1163
        %v1165 = vmul.f32 %v868, %v1164
        %v1166 = vmul.f32 %v869, %v1164
        %v1167 = vmul.f32 %v870, %v1164
        %v1168 = vmul.f32 %v871, %v1164
        %v1169 = vmul.f32 %v872, %v1164
        %s1170 = sld [smem:[#allocation2 + $0x3b]]
        %v1171 = vstv %s1170
        %v1172 = vmul.f32 %v868, %v1171
        %v1173 = vmul.f32 %v869, %v1171
        %v1174 = vmul.f32 %v870, %v1171
        %v1175 = vmul.f32 %v871, %v1171
        %v1176 = vmul.f32 %v872, %v1171
        %1182 = vrot.lane.b32.xlu0 %v1172, 127
        %v1183 = vpop.permute.xlu0 %1182
        %1184 = vrot.lane.b32.xlu0 %v1173, 127
        %v1185 = vpop.permute.xlu0 %1184
        %1186 = vrot.lane.b32.xlu0 %v1174, 127
        %v1187 = vpop.permute.xlu0 %1186
        %1188 = vrot.lane.b32.xlu0 %v1175, 127
        %v1189 = vpop.permute.xlu0 %1188
        %1190 = vrot.lane.b32.xlu0 %v1176, 127
        %v1191 = vpop.permute.xlu0 %1190
        %v1197 = vadd.f32 %v1165, %v1183
        %v1198 = vadd.f32 %v1166, %v1185
        %v1199 = vadd.f32 %v1167, %v1187
        %v1200 = vadd.f32 %v1168, %v1189
        %v1201 = vadd.f32 %v1169, %v1191
        %s1202 = sld [smem:[#allocation2 + $0x3c]]
        %v1203 = vstv %s1202
        %v1204 = vmul.f32 %v868, %v1203
        %v1205 = vmul.f32 %v869, %v1203
        %v1206 = vmul.f32 %v870, %v1203
        %v1207 = vmul.f32 %v871, %v1203
        %v1208 = vmul.f32 %v872, %v1203
        %1214 = vrot.lane.b32.xlu0 %v1204, 126
        %v1215 = vpop.permute.xlu0 %1214
        %1216 = vrot.lane.b32.xlu0 %v1205, 126
        %v1217 = vpop.permute.xlu0 %1216
        %1218 = vrot.lane.b32.xlu0 %v1206, 126
        %v1219 = vpop.permute.xlu0 %1218
        %1220 = vrot.lane.b32.xlu0 %v1207, 126
        %v1221 = vpop.permute.xlu0 %1220
        %1222 = vrot.lane.b32.xlu0 %v1208, 126
        %v1223 = vpop.permute.xlu0 %1222
        %v1229 = vadd.f32 %v1197, %v1215
        %v1230 = vadd.f32 %v1198, %v1217
        %v1231 = vadd.f32 %v1199, %v1219
        %v1232 = vadd.f32 %v1200, %v1221
        %v1233 = vadd.f32 %v1201, %v1223
        %s1234 = sld [smem:[#allocation2 + $0x3d]]
        %v1235 = vstv %s1234
        %v1236 = vmul.f32 %v868, %v1235
        %v1237 = vmul.f32 %v869, %v1235
        %v1238 = vmul.f32 %v870, %v1235
        %v1239 = vmul.f32 %v871, %v1235
        %v1240 = vmul.f32 %v872, %v1235
        %1246 = vrot.lane.b32.xlu0 %v1236, 125
        %v1247 = vpop.permute.xlu0 %1246
        %1248 = vrot.lane.b32.xlu0 %v1237, 125
        %v1249 = vpop.permute.xlu0 %1248
        %1250 = vrot.lane.b32.xlu0 %v1238, 125
        %v1251 = vpop.permute.xlu0 %1250
        %1252 = vrot.lane.b32.xlu0 %v1239, 125
        %v1253 = vpop.permute.xlu0 %1252
        %1254 = vrot.lane.b32.xlu0 %v1240, 125
        %v1255 = vpop.permute.xlu0 %1254
        %v1261 = vadd.f32 %v1229, %v1247
        %v1262 = vadd.f32 %v1230, %v1249
        %v1263 = vadd.f32 %v1231, %v1251
        %v1264 = vadd.f32 %v1232, %v1253
        %v1265 = vadd.f32 %v1233, %v1255
        %s1266 = sld [smem:[#allocation2 + $0x44]]
        %v1267 = vstv %s1266
        %v1268 = vadd.f32 %v1261, %v1267
        %v1269 = vadd.f32 %v1262, %v1267
        %v1270 = vadd.f32 %v1263, %v1267
        %v1271 = vadd.f32 %v1264, %v1267
        %v1272 = vadd.f32 %v1265, %v1267
        %v1273 = vtanh.pop %v1268
        %v1274 = vtanh.pop %v1269
        %v1275 = vtanh.pop %v1270
        %v1276 = vtanh.pop %v1271
        %v1277 = vtanh.pop %v1272
        %1279 = vset.pattern.permute.xlu0 0
        %1280 = vperm.xlu0 %1279, %v1273
        %v1281 = vpop.permute.xlu0 %1280
        %1284 = vset.pattern.permute.xlu0 0
        %1285 = vperm.xlu0 %1284, %v1274
        %v1286 = vpop.permute.xlu0 %1285
        %1289 = vset.pattern.permute.xlu0 0
        %1290 = vperm.xlu0 %1289, %v1275
        %v1291 = vpop.permute.xlu0 %1290
        %1294 = vset.pattern.permute.xlu0 0
        %1295 = vperm.xlu0 %1294, %v1276
        %v1296 = vpop.permute.xlu0 %1295
        %1299 = vset.pattern.permute.xlu0 0
        %1300 = vperm.xlu0 %1299, %v1277
        %v1301 = vpop.permute.xlu0 %1300
        %v1303 = vadd.f32 %v851, %v1281
        %v1304 = vadd.f32 %v852, %v1286
        %v1305 = vadd.f32 %v853, %v1291
        %v1306 = vadd.f32 %v854, %v1296
        %v1307 = vadd.f32 %v855, %v1301
        %s1308 = sld [smem:[#allocation2 + $0x3e]]
        %v1309 = vstv %s1308
        %v1310 = vmul.f32 %v868, %v1309
        %v1311 = vmul.f32 %v869, %v1309
        %v1312 = vmul.f32 %v870, %v1309
        %v1313 = vmul.f32 %v871, %v1309
        %v1314 = vmul.f32 %v872, %v1309
        %s1315 = sld [smem:[#allocation2 + $0x3f]]
        %v1316 = vstv %s1315
        %v1317 = vmul.f32 %v868, %v1316
        %v1318 = vmul.f32 %v869, %v1316
        %v1319 = vmul.f32 %v870, %v1316
        %v1320 = vmul.f32 %v871, %v1316
        %v1321 = vmul.f32 %v872, %v1316
        %1327 = vrot.lane.b32.xlu0 %v1317, 127
        %v1328 = vpop.permute.xlu0 %1327
        %1329 = vrot.lane.b32.xlu0 %v1318, 127
        %v1330 = vpop.permute.xlu0 %1329
        %1331 = vrot.lane.b32.xlu0 %v1319, 127
        %v1332 = vpop.permute.xlu0 %1331
        %1333 = vrot.lane.b32.xlu0 %v1320, 127
        %v1334 = vpop.permute.xlu0 %1333
        %1335 = vrot.lane.b32.xlu0 %v1321, 127
        %v1336 = vpop.permute.xlu0 %1335
        %v1342 = vadd.f32 %v1310, %v1328
        %v1343 = vadd.f32 %v1311, %v1330
        %v1344 = vadd.f32 %v1312, %v1332
        %v1345 = vadd.f32 %v1313, %v1334
        %v1346 = vadd.f32 %v1314, %v1336
        %s1347 = sld [smem:[#allocation2 + $0x40]]
        %v1348 = vstv %s1347
        %v1349 = vmul.f32 %v868, %v1348
        %v1350 = vmul.f32 %v869, %v1348
        %v1351 = vmul.f32 %v870, %v1348
        %v1352 = vmul.f32 %v871, %v1348
        %v1353 = vmul.f32 %v872, %v1348
        %1359 = vrot.lane.b32.xlu0 %v1349, 126
        %v1360 = vpop.permute.xlu0 %1359
        %1361 = vrot.lane.b32.xlu0 %v1350, 126
        %v1362 = vpop.permute.xlu0 %1361
        %1363 = vrot.lane.b32.xlu0 %v1351, 126
        %v1364 = vpop.permute.xlu0 %1363
        %1365 = vrot.lane.b32.xlu0 %v1352, 126
        %v1366 = vpop.permute.xlu0 %1365
        %1367 = vrot.lane.b32.xlu0 %v1353, 126
        %v1368 = vpop.permute.xlu0 %1367
        %v1374 = vadd.f32 %v1342, %v1360
        %v1375 = vadd.f32 %v1343, %v1362
        %v1376 = vadd.f32 %v1344, %v1364
        %v1377 = vadd.f32 %v1345, %v1366
        %v1378 = vadd.f32 %v1346, %v1368
        %s1379 = sld [smem:[#allocation2 + $0x41]]
        %v1380 = vstv %s1379
        %v1381 = vmul.f32 %v868, %v1380
        %v1382 = vmul.f32 %v869, %v1380
        %v1383 = vmul.f32 %v870, %v1380
        %v1384 = vmul.f32 %v871, %v1380
        %v1385 = vmul.f32 %v872, %v1380
        %1391 = vrot.lane.b32.xlu0 %v1381, 125
        %v1392 = vpop.permute.xlu0 %1391
        %1393 = vrot.lane.b32.xlu0 %v1382, 125
        %v1394 = vpop.permute.xlu0 %1393
        %1395 = vrot.lane.b32.xlu0 %v1383, 125
        %v1396 = vpop.permute.xlu0 %1395
        %1397 = vrot.lane.b32.xlu0 %v1384, 125
        %v1398 = vpop.permute.xlu0 %1397
        %1399 = vrot.lane.b32.xlu0 %v1385, 125
        %v1400 = vpop.permute.xlu0 %1399
        %v1406 = vadd.f32 %v1374, %v1392
        %v1407 = vadd.f32 %v1375, %v1394
        %v1408 = vadd.f32 %v1376, %v1396
        %v1409 = vadd.f32 %v1377, %v1398
        %v1410 = vadd.f32 %v1378, %v1400
        %s1411 = sld [smem:[#allocation2 + $0x45]]
        %v1412 = vstv %s1411
        %v1413 = vadd.f32 %v1406, %v1412
        %v1414 = vadd.f32 %v1407, %v1412
        %v1415 = vadd.f32 %v1408, %v1412
        %v1416 = vadd.f32 %v1409, %v1412
        %v1417 = vadd.f32 %v1410, %v1412
        %v1418 = vtanh.pop %v1413
        %v1419 = vtanh.pop %v1414
        %v1420 = vtanh.pop %v1415
        %v1421 = vtanh.pop %v1416
        %v1422 = vtanh.pop %v1417
        %1424 = vset.pattern.permute.xlu0 0
        %1425 = vperm.xlu0 %1424, %v1418
        %v1426 = vpop.permute.xlu0 %1425
        %1429 = vset.pattern.permute.xlu0 0
        %1430 = vperm.xlu0 %1429, %v1419
        %v1431 = vpop.permute.xlu0 %1430
        %1434 = vset.pattern.permute.xlu0 0
        %1435 = vperm.xlu0 %1434, %v1420
        %v1436 = vpop.permute.xlu0 %1435
        %1439 = vset.pattern.permute.xlu0 0
        %1440 = vperm.xlu0 %1439, %v1421
        %v1441 = vpop.permute.xlu0 %1440
        %1444 = vset.pattern.permute.xlu0 0
        %1445 = vperm.xlu0 %1444, %v1422
        %v1446 = vpop.permute.xlu0 %1445
        %v1448 = vadd.f32 %v863, %v1426
        %v1449 = vadd.f32 %v864, %v1431
        %v1450 = vadd.f32 %v865, %v1436
        %v1451 = vadd.f32 %v866, %v1441
        %v1452 = vadd.f32 %v867, %v1446
        %1453 = vrot.lane.b32.xlu0 %v815, 32
        %v1454 = vpop.permute.xlu0 %1453
        %1455 = vrot.lane.b32.xlu0 %v816, 32
        %v1456 = vpop.permute.xlu0 %1455
        %1457 = vrot.lane.b32.xlu0 %v817, 32
        %v1458 = vpop.permute.xlu0 %1457
        %1459 = vrot.lane.b32.xlu0 %v818, 32
        %v1460 = vpop.permute.xlu0 %1459
        %1461 = vrot.lane.b32.xlu0 %v819, 32
        %v1462 = vpop.permute.xlu0 %1461
        %s1463 = sld [smem:[#allocation2 + $0x46]]
        %v1464 = vstv %s1463
        %v1465 = vmul.f32 %v1454, %v1464
        %v1466 = vmul.f32 %v1456, %v1464
        %v1467 = vmul.f32 %v1458, %v1464
        %v1468 = vmul.f32 %v1460, %v1464
        %v1469 = vmul.f32 %v1462, %v1464
        %s1470 = sld [smem:[#allocation2 + $0x73]]
        %v1471 = vstv %s1470
        %v1472 = vmul.f32 %v1454, %v1471
        %v1473 = vmul.f32 %v1456, %v1471
        %v1474 = vmul.f32 %v1458, %v1471
        %v1475 = vmul.f32 %v1460, %v1471
        %v1476 = vmul.f32 %v1462, %v1471
        %s1477 = sld [smem:[#allocation2 + $0xa0]]
        %v1478 = vstv %s1477
        %v1479 = vmul.f32 %v1454, %v1478
        %v1480 = vmul.f32 %v1456, %v1478
        %v1481 = vmul.f32 %v1458, %v1478
        %v1482 = vmul.f32 %v1460, %v1478
        %v1483 = vmul.f32 %v1462, %v1478
        %s1484 = sld [smem:[#allocation2 + $0xcd]]
        %v1485 = vstv %s1484
        %v1486 = vmul.f32 %v1454, %v1485
        %v1487 = vmul.f32 %v1456, %v1485
        %v1488 = vmul.f32 %v1458, %v1485
        %v1489 = vmul.f32 %v1460, %v1485
        %v1490 = vmul.f32 %v1462, %v1485
        %s1491 = sld [smem:[#allocation2 + $0xfa]]
        %v1492 = vstv %s1491
        %v1493 = vmul.f32 %v1454, %v1492
        %v1494 = vmul.f32 %v1456, %v1492
        %v1495 = vmul.f32 %v1458, %v1492
        %v1496 = vmul.f32 %v1460, %v1492
        %v1497 = vmul.f32 %v1462, %v1492
        %s1498 = sld [smem:[#allocation2 + $0x127]]
        %v1499 = vstv %s1498
        %v1500 = vmul.f32 %v1454, %v1499
        %v1501 = vmul.f32 %v1456, %v1499
        %v1502 = vmul.f32 %v1458, %v1499
        %v1503 = vmul.f32 %v1460, %v1499
        %v1504 = vmul.f32 %v1462, %v1499
        %s1505 = sld [smem:[#allocation2 + $0x154]]
        %v1506 = vstv %s1505
        %v1507 = vmul.f32 %v1454, %v1506
        %v1508 = vmul.f32 %v1456, %v1506
        %v1509 = vmul.f32 %v1458, %v1506
        %v1510 = vmul.f32 %v1460, %v1506
        %v1511 = vmul.f32 %v1462, %v1506
        %s1512 = sld [smem:[#allocation2 + $0x181]]
        %v1513 = vstv %s1512
        %v1514 = vmul.f32 %v1454, %v1513
        %v1515 = vmul.f32 %v1456, %v1513
        %v1516 = vmul.f32 %v1458, %v1513
        %v1517 = vmul.f32 %v1460, %v1513
        %v1518 = vmul.f32 %v1462, %v1513
        %1519 = vrot.lane.b32.xlu0 %v815, 24
        %v1520 = vpop.permute.xlu0 %1519
        %1521 = vrot.lane.b32.xlu0 %v816, 24
        %v1522 = vpop.permute.xlu0 %1521
        %1523 = vrot.lane.b32.xlu0 %v817, 24
        %v1524 = vpop.permute.xlu0 %1523
        %1525 = vrot.lane.b32.xlu0 %v818, 24
        %v1526 = vpop.permute.xlu0 %1525
        %1527 = vrot.lane.b32.xlu0 %v819, 24
        %v1528 = vpop.permute.xlu0 %1527
        %s1529 = sld [smem:[#allocation2 + $0x47]]
        %v1530 = vstv %s1529
        %v1531 = vmul.f32 %v1520, %v1530
        %v1532 = vmul.f32 %v1522, %v1530
        %v1533 = vmul.f32 %v1524, %v1530
        %v1534 = vmul.f32 %v1526, %v1530
        %v1535 = vmul.f32 %v1528, %v1530
        %v1536 = vadd.f32 %v1465, %v1531
        %v1537 = vadd.f32 %v1466, %v1532
        %v1538 = vadd.f32 %v1467, %v1533
        %v1539 = vadd.f32 %v1468, %v1534
        %v1540 = vadd.f32 %v1469, %v1535
        %s1541 = sld [smem:[#allocation2 + $0x74]]
        %v1542 = vstv %s1541
        %v1543 = vmul.f32 %v1520, %v1542
        %v1544 = vmul.f32 %v1522, %v1542
        %v1545 = vmul.f32 %v1524, %v1542
        %v1546 = vmul.f32 %v1526, %v1542
        %v1547 = vmul.f32 %v1528, %v1542
        %v1548 = vadd.f32 %v1472, %v1543
        %v1549 = vadd.f32 %v1473, %v1544
        %v1550 = vadd.f32 %v1474, %v1545
        %v1551 = vadd.f32 %v1475, %v1546
        %v1552 = vadd.f32 %v1476, %v1547
        %s1553 = sld [smem:[#allocation2 + $0xa1]]
        %v1554 = vstv %s1553
        %v1555 = vmul.f32 %v1520, %v1554
        %v1556 = vmul.f32 %v1522, %v1554
        %v1557 = vmul.f32 %v1524, %v1554
        %v1558 = vmul.f32 %v1526, %v1554
        %v1559 = vmul.f32 %v1528, %v1554
        %v1560 = vadd.f32 %v1479, %v1555
        %v1561 = vadd.f32 %v1480, %v1556
        %v1562 = vadd.f32 %v1481, %v1557
        %v1563 = vadd.f32 %v1482, %v1558
        %v1564 = vadd.f32 %v1483, %v1559
        %s1565 = sld [smem:[#allocation2 + $0xce]]
        %v1566 = vstv %s1565
        %v1567 = vmul.f32 %v1520, %v1566
        %v1568 = vmul.f32 %v1522, %v1566
        %v1569 = vmul.f32 %v1524, %v1566
        %v1570 = vmul.f32 %v1526, %v1566
        %v1571 = vmul.f32 %v1528, %v1566
        %v1572 = vadd.f32 %v1486, %v1567
        %v1573 = vadd.f32 %v1487, %v1568
        %v1574 = vadd.f32 %v1488, %v1569
        %v1575 = vadd.f32 %v1489, %v1570
        %v1576 = vadd.f32 %v1490, %v1571
        %s1577 = sld [smem:[#allocation2 + $0xfb]]
        %v1578 = vstv %s1577
        %v1579 = vmul.f32 %v1520, %v1578
        %v1580 = vmul.f32 %v1522, %v1578
        %v1581 = vmul.f32 %v1524, %v1578
        %v1582 = vmul.f32 %v1526, %v1578
        %v1583 = vmul.f32 %v1528, %v1578
        %v1584 = vadd.f32 %v1493, %v1579
        %v1585 = vadd.f32 %v1494, %v1580
        %v1586 = vadd.f32 %v1495, %v1581
        %v1587 = vadd.f32 %v1496, %v1582
        %v1588 = vadd.f32 %v1497, %v1583
        %s1589 = sld [smem:[#allocation2 + $0x128]]
        %v1590 = vstv %s1589
        %v1591 = vmul.f32 %v1520, %v1590
        %v1592 = vmul.f32 %v1522, %v1590
        %v1593 = vmul.f32 %v1524, %v1590
        %v1594 = vmul.f32 %v1526, %v1590
        %v1595 = vmul.f32 %v1528, %v1590
        %v1596 = vadd.f32 %v1500, %v1591
        %v1597 = vadd.f32 %v1501, %v1592
        %v1598 = vadd.f32 %v1502, %v1593
        %v1599 = vadd.f32 %v1503, %v1594
        %v1600 = vadd.f32 %v1504, %v1595
        %s1601 = sld [smem:[#allocation2 + $0x155]]
        %v1602 = vstv %s1601
        %v1603 = vmul.f32 %v1520, %v1602
        %v1604 = vmul.f32 %v1522, %v1602
        %v1605 = vmul.f32 %v1524, %v1602
        %v1606 = vmul.f32 %v1526, %v1602
        %v1607 = vmul.f32 %v1528, %v1602
        %v1608 = vadd.f32 %v1507, %v1603
        %v1609 = vadd.f32 %v1508, %v1604
        %v1610 = vadd.f32 %v1509, %v1605
        %v1611 = vadd.f32 %v1510, %v1606
        %v1612 = vadd.f32 %v1511, %v1607
        %s1613 = sld [smem:[#allocation2 + $0x182]]
        %v1614 = vstv %s1613
        %v1615 = vmul.f32 %v1520, %v1614
        %v1616 = vmul.f32 %v1522, %v1614
        %v1617 = vmul.f32 %v1524, %v1614
        %v1618 = vmul.f32 %v1526, %v1614
        %v1619 = vmul.f32 %v1528, %v1614
        %v1620 = vadd.f32 %v1514, %v1615
        %v1621 = vadd.f32 %v1515, %v1616
        %v1622 = vadd.f32 %v1516, %v1617
        %v1623 = vadd.f32 %v1517, %v1618
        %v1624 = vadd.f32 %v1518, %v1619
        %1625 = vrot.lane.b32.xlu0 %v815, 16
        %v1626 = vpop.permute.xlu0 %1625
        %1627 = vrot.lane.b32.xlu0 %v816, 16
        %v1628 = vpop.permute.xlu0 %1627
        %1629 = vrot.lane.b32.xlu0 %v817, 16
        %v1630 = vpop.permute.xlu0 %1629
        %1631 = vrot.lane.b32.xlu0 %v818, 16
        %v1632 = vpop.permute.xlu0 %1631
        %1633 = vrot.lane.b32.xlu0 %v819, 16
        %v1634 = vpop.permute.xlu0 %1633
        %s1635 = sld [smem:[#allocation2 + $0x48]]
        %v1636 = vstv %s1635
        %v1637 = vmul.f32 %v1626, %v1636
        %v1638 = vmul.f32 %v1628, %v1636
        %v1639 = vmul.f32 %v1630, %v1636
        %v1640 = vmul.f32 %v1632, %v1636
        %v1641 = vmul.f32 %v1634, %v1636
        %v1642 = vadd.f32 %v1536, %v1637
        %v1643 = vadd.f32 %v1537, %v1638
        %v1644 = vadd.f32 %v1538, %v1639
        %v1645 = vadd.f32 %v1539, %v1640
        %v1646 = vadd.f32 %v1540, %v1641
        %s1647 = sld [smem:[#allocation2 + $0x75]]
        %v1648 = vstv %s1647
        %v1649 = vmul.f32 %v1626, %v1648
        %v1650 = vmul.f32 %v1628, %v1648
        %v1651 = vmul.f32 %v1630, %v1648
        %v1652 = vmul.f32 %v1632, %v1648
        %v1653 = vmul.f32 %v1634, %v1648
        %v1654 = vadd.f32 %v1548, %v1649
        %v1655 = vadd.f32 %v1549, %v1650
        %v1656 = vadd.f32 %v1550, %v1651
        %v1657 = vadd.f32 %v1551, %v1652
        %v1658 = vadd.f32 %v1552, %v1653
        %s1659 = sld [smem:[#allocation2 + $0xa2]]
        %v1660 = vstv %s1659
        %v1661 = vmul.f32 %v1626, %v1660
        %v1662 = vmul.f32 %v1628, %v1660
        %v1663 = vmul.f32 %v1630, %v1660
        %v1664 = vmul.f32 %v1632, %v1660
        %v1665 = vmul.f32 %v1634, %v1660
        %v1666 = vadd.f32 %v1560, %v1661
        %v1667 = vadd.f32 %v1561, %v1662
        %v1668 = vadd.f32 %v1562, %v1663
        %v1669 = vadd.f32 %v1563, %v1664
        %v1670 = vadd.f32 %v1564, %v1665
        %s1671 = sld [smem:[#allocation2 + $0xcf]]
        %v1672 = vstv %s1671
        %v1673 = vmul.f32 %v1626, %v1672
        %v1674 = vmul.f32 %v1628, %v1672
        %v1675 = vmul.f32 %v1630, %v1672
        %v1676 = vmul.f32 %v1632, %v1672
        %v1677 = vmul.f32 %v1634, %v1672
        %v1678 = vadd.f32 %v1572, %v1673
        %v1679 = vadd.f32 %v1573, %v1674
        %v1680 = vadd.f32 %v1574, %v1675
        %v1681 = vadd.f32 %v1575, %v1676
        %v1682 = vadd.f32 %v1576, %v1677
        %s1683 = sld [smem:[#allocation2 + $0xfc]]
        %v1684 = vstv %s1683
        %v1685 = vmul.f32 %v1626, %v1684
        %v1686 = vmul.f32 %v1628, %v1684
        %v1687 = vmul.f32 %v1630, %v1684
        %v1688 = vmul.f32 %v1632, %v1684
        %v1689 = vmul.f32 %v1634, %v1684
        %v1690 = vadd.f32 %v1584, %v1685
        %v1691 = vadd.f32 %v1585, %v1686
        %v1692 = vadd.f32 %v1586, %v1687
        %v1693 = vadd.f32 %v1587, %v1688
        %v1694 = vadd.f32 %v1588, %v1689
        %s1695 = sld [smem:[#allocation2 + $0x129]]
        %v1696 = vstv %s1695
        %v1697 = vmul.f32 %v1626, %v1696
        %v1698 = vmul.f32 %v1628, %v1696
        %v1699 = vmul.f32 %v1630, %v1696
        %v1700 = vmul.f32 %v1632, %v1696
        %v1701 = vmul.f32 %v1634, %v1696
        %v1702 = vadd.f32 %v1596, %v1697
        %v1703 = vadd.f32 %v1597, %v1698
        %v1704 = vadd.f32 %v1598, %v1699
        %v1705 = vadd.f32 %v1599, %v1700
        %v1706 = vadd.f32 %v1600, %v1701
        %s1707 = sld [smem:[#allocation2 + $0x156]]
        %v1708 = vstv %s1707
        %v1709 = vmul.f32 %v1626, %v1708
        %v1710 = vmul.f32 %v1628, %v1708
        %v1711 = vmul.f32 %v1630, %v1708
        %v1712 = vmul.f32 %v1632, %v1708
        %v1713 = vmul.f32 %v1634, %v1708
        %v1714 = vadd.f32 %v1608, %v1709
        %v1715 = vadd.f32 %v1609, %v1710
        %v1716 = vadd.f32 %v1610, %v1711
        %v1717 = vadd.f32 %v1611, %v1712
        %v1718 = vadd.f32 %v1612, %v1713
        %s1719 = sld [smem:[#allocation2 + $0x183]]
        %v1720 = vstv %s1719
        %v1721 = vmul.f32 %v1626, %v1720
        %v1722 = vmul.f32 %v1628, %v1720
        %v1723 = vmul.f32 %v1630, %v1720
        %v1724 = vmul.f32 %v1632, %v1720
        %v1725 = vmul.f32 %v1634, %v1720
        %v1726 = vadd.f32 %v1620, %v1721
        %v1727 = vadd.f32 %v1621, %v1722
        %v1728 = vadd.f32 %v1622, %v1723
        %v1729 = vadd.f32 %v1623, %v1724
        %v1730 = vadd.f32 %v1624, %v1725
        %1731 = vrot.lane.b32.xlu0 %v815, 8
        %v1732 = vpop.permute.xlu0 %1731
        %1733 = vrot.lane.b32.xlu0 %v816, 8
        %v1734 = vpop.permute.xlu0 %1733
        %1735 = vrot.lane.b32.xlu0 %v817, 8
        %v1736 = vpop.permute.xlu0 %1735
        %1737 = vrot.lane.b32.xlu0 %v818, 8
        %v1738 = vpop.permute.xlu0 %1737
        %1739 = vrot.lane.b32.xlu0 %v819, 8
        %v1740 = vpop.permute.xlu0 %1739
        %s1741 = sld [smem:[#allocation2 + $0x49]]
        %v1742 = vstv %s1741
        %v1743 = vmul.f32 %v1732, %v1742
        %v1744 = vmul.f32 %v1734, %v1742
        %v1745 = vmul.f32 %v1736, %v1742
        %v1746 = vmul.f32 %v1738, %v1742
        %v1747 = vmul.f32 %v1740, %v1742
        %v1748 = vadd.f32 %v1642, %v1743
        %v1749 = vadd.f32 %v1643, %v1744
        %v1750 = vadd.f32 %v1644, %v1745
        %v1751 = vadd.f32 %v1645, %v1746
        %v1752 = vadd.f32 %v1646, %v1747
        %s1753 = sld [smem:[#allocation2 + $0x76]]
        %v1754 = vstv %s1753
        %v1755 = vmul.f32 %v1732, %v1754
        %v1756 = vmul.f32 %v1734, %v1754
        %v1757 = vmul.f32 %v1736, %v1754
        %v1758 = vmul.f32 %v1738, %v1754
        %v1759 = vmul.f32 %v1740, %v1754
        %v1760 = vadd.f32 %v1654, %v1755
        %v1761 = vadd.f32 %v1655, %v1756
        %v1762 = vadd.f32 %v1656, %v1757
        %v1763 = vadd.f32 %v1657, %v1758
        %v1764 = vadd.f32 %v1658, %v1759
        %s1765 = sld [smem:[#allocation2 + $0xa3]]
        %v1766 = vstv %s1765
        %v1767 = vmul.f32 %v1732, %v1766
        %v1768 = vmul.f32 %v1734, %v1766
        %v1769 = vmul.f32 %v1736, %v1766
        %v1770 = vmul.f32 %v1738, %v1766
        %v1771 = vmul.f32 %v1740, %v1766
        %v1772 = vadd.f32 %v1666, %v1767
        %v1773 = vadd.f32 %v1667, %v1768
        %v1774 = vadd.f32 %v1668, %v1769
        %v1775 = vadd.f32 %v1669, %v1770
        %v1776 = vadd.f32 %v1670, %v1771
        %s1777 = sld [smem:[#allocation2 + $0xd0]]
        %v1778 = vstv %s1777
        %v1779 = vmul.f32 %v1732, %v1778
        %v1780 = vmul.f32 %v1734, %v1778
        %v1781 = vmul.f32 %v1736, %v1778
        %v1782 = vmul.f32 %v1738, %v1778
        %v1783 = vmul.f32 %v1740, %v1778
        %v1784 = vadd.f32 %v1678, %v1779
        %v1785 = vadd.f32 %v1679, %v1780
        %v1786 = vadd.f32 %v1680, %v1781
        %v1787 = vadd.f32 %v1681, %v1782
        %v1788 = vadd.f32 %v1682, %v1783
        %s1789 = sld [smem:[#allocation2 + $0xfd]]
        %v1790 = vstv %s1789
        %v1791 = vmul.f32 %v1732, %v1790
        %v1792 = vmul.f32 %v1734, %v1790
        %v1793 = vmul.f32 %v1736, %v1790
        %v1794 = vmul.f32 %v1738, %v1790
        %v1795 = vmul.f32 %v1740, %v1790
        %v1796 = vadd.f32 %v1690, %v1791
        %v1797 = vadd.f32 %v1691, %v1792
        %v1798 = vadd.f32 %v1692, %v1793
        %v1799 = vadd.f32 %v1693, %v1794
        %v1800 = vadd.f32 %v1694, %v1795
        %s1801 = sld [smem:[#allocation2 + $0x12a]]
        %v1802 = vstv %s1801
        %v1803 = vmul.f32 %v1732, %v1802
        %v1804 = vmul.f32 %v1734, %v1802
        %v1805 = vmul.f32 %v1736, %v1802
        %v1806 = vmul.f32 %v1738, %v1802
        %v1807 = vmul.f32 %v1740, %v1802
        %v1808 = vadd.f32 %v1702, %v1803
        %v1809 = vadd.f32 %v1703, %v1804
        %v1810 = vadd.f32 %v1704, %v1805
        %v1811 = vadd.f32 %v1705, %v1806
        %v1812 = vadd.f32 %v1706, %v1807
        %s1813 = sld [smem:[#allocation2 + $0x157]]
        %v1814 = vstv %s1813
        %v1815 = vmul.f32 %v1732, %v1814
        %v1816 = vmul.f32 %v1734, %v1814
        %v1817 = vmul.f32 %v1736, %v1814
        %v1818 = vmul.f32 %v1738, %v1814
        %v1819 = vmul.f32 %v1740, %v1814
        %v1820 = vadd.f32 %v1714, %v1815
        %v1821 = vadd.f32 %v1715, %v1816
        %v1822 = vadd.f32 %v1716, %v1817
        %v1823 = vadd.f32 %v1717, %v1818
        %v1824 = vadd.f32 %v1718, %v1819
        %s1825 = sld [smem:[#allocation2 + $0x184]]
        %v1826 = vstv %s1825
        %v1827 = vmul.f32 %v1732, %v1826
        %v1828 = vmul.f32 %v1734, %v1826
        %v1829 = vmul.f32 %v1736, %v1826
        %v1830 = vmul.f32 %v1738, %v1826
        %v1831 = vmul.f32 %v1740, %v1826
        %v1832 = vadd.f32 %v1726, %v1827
        %v1833 = vadd.f32 %v1727, %v1828
        %v1834 = vadd.f32 %v1728, %v1829
        %v1835 = vadd.f32 %v1729, %v1830
        %v1836 = vadd.f32 %v1730, %v1831
        %s1837 = sld [smem:[#allocation2 + $0x4a]]
        %v1838 = vstv %s1837
        %v1839 = vmul.f32 %v815, %v1838
        %v1840 = vmul.f32 %v816, %v1838
        %v1841 = vmul.f32 %v817, %v1838
        %v1842 = vmul.f32 %v818, %v1838
        %v1843 = vmul.f32 %v819, %v1838
        %v1844 = vadd.f32 %v1748, %v1839
        %v1845 = vadd.f32 %v1749, %v1840
        %v1846 = vadd.f32 %v1750, %v1841
        %v1847 = vadd.f32 %v1751, %v1842
        %v1848 = vadd.f32 %v1752, %v1843
        %s1849 = sld [smem:[#allocation2 + $0x77]]
        %v1850 = vstv %s1849
        %v1851 = vmul.f32 %v815, %v1850
        %v1852 = vmul.f32 %v816, %v1850
        %v1853 = vmul.f32 %v817, %v1850
        %v1854 = vmul.f32 %v818, %v1850
        %v1855 = vmul.f32 %v819, %v1850
        %v1856 = vadd.f32 %v1760, %v1851
        %v1857 = vadd.f32 %v1761, %v1852
        %v1858 = vadd.f32 %v1762, %v1853
        %v1859 = vadd.f32 %v1763, %v1854
        %v1860 = vadd.f32 %v1764, %v1855
        %s1861 = sld [smem:[#allocation2 + $0xa4]]
        %v1862 = vstv %s1861
        %v1863 = vmul.f32 %v815, %v1862
        %v1864 = vmul.f32 %v816, %v1862
        %v1865 = vmul.f32 %v817, %v1862
        %v1866 = vmul.f32 %v818, %v1862
        %v1867 = vmul.f32 %v819, %v1862
        %v1868 = vadd.f32 %v1772, %v1863
        %v1869 = vadd.f32 %v1773, %v1864
        %v1870 = vadd.f32 %v1774, %v1865
        %v1871 = vadd.f32 %v1775, %v1866
        %v1872 = vadd.f32 %v1776, %v1867
        %s1873 = sld [smem:[#allocation2 + $0xd1]]
        %v1874 = vstv %s1873
        %v1875 = vmul.f32 %v815, %v1874
        %v1876 = vmul.f32 %v816, %v1874
        %v1877 = vmul.f32 %v817, %v1874
        %v1878 = vmul.f32 %v818, %v1874
        %v1879 = vmul.f32 %v819, %v1874
        %v1880 = vadd.f32 %v1784, %v1875
        %v1881 = vadd.f32 %v1785, %v1876
        %v1882 = vadd.f32 %v1786, %v1877
        %v1883 = vadd.f32 %v1787, %v1878
        %v1884 = vadd.f32 %v1788, %v1879
        %s1885 = sld [smem:[#allocation2 + $0xfe]]
        %v1886 = vstv %s1885
        %v1887 = vmul.f32 %v815, %v1886
        %v1888 = vmul.f32 %v816, %v1886
        %v1889 = vmul.f32 %v817, %v1886
        %v1890 = vmul.f32 %v818, %v1886
        %v1891 = vmul.f32 %v819, %v1886
        %v1892 = vadd.f32 %v1796, %v1887
        %v1893 = vadd.f32 %v1797, %v1888
        %v1894 = vadd.f32 %v1798, %v1889
        %v1895 = vadd.f32 %v1799, %v1890
        %v1896 = vadd.f32 %v1800, %v1891
        %s1897 = sld [smem:[#allocation2 + $0x12b]]
        %v1898 = vstv %s1897
        %v1899 = vmul.f32 %v815, %v1898
        %v1900 = vmul.f32 %v816, %v1898
        %v1901 = vmul.f32 %v817, %v1898
        %v1902 = vmul.f32 %v818, %v1898
        %v1903 = vmul.f32 %v819, %v1898
        %v1904 = vadd.f32 %v1808, %v1899
        %v1905 = vadd.f32 %v1809, %v1900
        %v1906 = vadd.f32 %v1810, %v1901
        %v1907 = vadd.f32 %v1811, %v1902
        %v1908 = vadd.f32 %v1812, %v1903
        %s1909 = sld [smem:[#allocation2 + $0x158]]
        %v1910 = vstv %s1909
        %v1911 = vmul.f32 %v815, %v1910
        %v1912 = vmul.f32 %v816, %v1910
        %v1913 = vmul.f32 %v817, %v1910
        %v1914 = vmul.f32 %v818, %v1910
        %v1915 = vmul.f32 %v819, %v1910
        %v1916 = vadd.f32 %v1820, %v1911
        %v1917 = vadd.f32 %v1821, %v1912
        %v1918 = vadd.f32 %v1822, %v1913
        %v1919 = vadd.f32 %v1823, %v1914
        %v1920 = vadd.f32 %v1824, %v1915
        %s1921 = sld [smem:[#allocation2 + $0x185]]
        %v1922 = vstv %s1921
        %v1923 = vmul.f32 %v815, %v1922
        %v1924 = vmul.f32 %v816, %v1922
        %v1925 = vmul.f32 %v817, %v1922
        %v1926 = vmul.f32 %v818, %v1922
        %v1927 = vmul.f32 %v819, %v1922
        %v1928 = vadd.f32 %v1832, %v1923
        %v1929 = vadd.f32 %v1833, %v1924
        %v1930 = vadd.f32 %v1834, %v1925
        %v1931 = vadd.f32 %v1835, %v1926
        %v1932 = vadd.f32 %v1836, %v1927
        %1933 = vrot.lane.b32.xlu0 %v815, 120
        %v1934 = vpop.permute.xlu0 %1933
        %1935 = vrot.lane.b32.xlu0 %v816, 120
        %v1936 = vpop.permute.xlu0 %1935
        %1937 = vrot.lane.b32.xlu0 %v817, 120
        %v1938 = vpop.permute.xlu0 %1937
        %1939 = vrot.lane.b32.xlu0 %v818, 120
        %v1940 = vpop.permute.xlu0 %1939
        %1941 = vrot.lane.b32.xlu0 %v819, 120
        %v1942 = vpop.permute.xlu0 %1941
        %s1943 = sld [smem:[#allocation2 + $0x4b]]
        %v1944 = vstv %s1943
        %v1945 = vmul.f32 %v1934, %v1944
        %v1946 = vmul.f32 %v1936, %v1944
        %v1947 = vmul.f32 %v1938, %v1944
        %v1948 = vmul.f32 %v1940, %v1944
        %v1949 = vmul.f32 %v1942, %v1944
        %v1950 = vadd.f32 %v1844, %v1945
        %v1951 = vadd.f32 %v1845, %v1946
        %v1952 = vadd.f32 %v1846, %v1947
        %v1953 = vadd.f32 %v1847, %v1948
        %v1954 = vadd.f32 %v1848, %v1949
        %s1955 = sld [smem:[#allocation2 + $0x78]]
        %v1956 = vstv %s1955
        %v1957 = vmul.f32 %v1934, %v1956
        %v1958 = vmul.f32 %v1936, %v1956
        %v1959 = vmul.f32 %v1938, %v1956
        %v1960 = vmul.f32 %v1940, %v1956
        %v1961 = vmul.f32 %v1942, %v1956
        %v1962 = vadd.f32 %v1856, %v1957
        %v1963 = vadd.f32 %v1857, %v1958
        %v1964 = vadd.f32 %v1858, %v1959
        %v1965 = vadd.f32 %v1859, %v1960
        %v1966 = vadd.f32 %v1860, %v1961
        %s1967 = sld [smem:[#allocation2 + $0xa5]]
        %v1968 = vstv %s1967
        %v1969 = vmul.f32 %v1934, %v1968
        %v1970 = vmul.f32 %v1936, %v1968
        %v1971 = vmul.f32 %v1938, %v1968
        %v1972 = vmul.f32 %v1940, %v1968
        %v1973 = vmul.f32 %v1942, %v1968
        %v1974 = vadd.f32 %v1868, %v1969
        %v1975 = vadd.f32 %v1869, %v1970
        %v1976 = vadd.f32 %v1870, %v1971
        %v1977 = vadd.f32 %v1871, %v1972
        %v1978 = vadd.f32 %v1872, %v1973
        %s1979 = sld [smem:[#allocation2 + $0xd2]]
        %v1980 = vstv %s1979
        %v1981 = vmul.f32 %v1934, %v1980
        %v1982 = vmul.f32 %v1936, %v1980
        %v1983 = vmul.f32 %v1938, %v1980
        %v1984 = vmul.f32 %v1940, %v1980
        %v1985 = vmul.f32 %v1942, %v1980
        %v1986 = vadd.f32 %v1880, %v1981
        %v1987 = vadd.f32 %v1881, %v1982
        %v1988 = vadd.f32 %v1882, %v1983
        %v1989 = vadd.f32 %v1883, %v1984
        %v1990 = vadd.f32 %v1884, %v1985
        %s1991 = sld [smem:[#allocation2 + $0xff]]
        %v1992 = vstv %s1991
        %v1993 = vmul.f32 %v1934, %v1992
        %v1994 = vmul.f32 %v1936, %v1992
        %v1995 = vmul.f32 %v1938, %v1992
        %v1996 = vmul.f32 %v1940, %v1992
        %v1997 = vmul.f32 %v1942, %v1992
        %v1998 = vadd.f32 %v1892, %v1993
        %v1999 = vadd.f32 %v1893, %v1994
        %v2000 = vadd.f32 %v1894, %v1995
        %v2001 = vadd.f32 %v1895, %v1996
        %v2002 = vadd.f32 %v1896, %v1997
        %s2003 = sld [smem:[#allocation2 + $0x12c]]
        %v2004 = vstv %s2003
        %v2005 = vmul.f32 %v1934, %v2004
        %v2006 = vmul.f32 %v1936, %v2004
        %v2007 = vmul.f32 %v1938, %v2004
        %v2008 = vmul.f32 %v1940, %v2004
        %v2009 = vmul.f32 %v1942, %v2004
        %v2010 = vadd.f32 %v1904, %v2005
        %v2011 = vadd.f32 %v1905, %v2006
        %v2012 = vadd.f32 %v1906, %v2007
        %v2013 = vadd.f32 %v1907, %v2008
        %v2014 = vadd.f32 %v1908, %v2009
        %s2015 = sld [smem:[#allocation2 + $0x159]]
        %v2016 = vstv %s2015
        %v2017 = vmul.f32 %v1934, %v2016
        %v2018 = vmul.f32 %v1936, %v2016
        %v2019 = vmul.f32 %v1938, %v2016
        %v2020 = vmul.f32 %v1940, %v2016
        %v2021 = vmul.f32 %v1942, %v2016
        %v2022 = vadd.f32 %v1916, %v2017
        %v2023 = vadd.f32 %v1917, %v2018
        %v2024 = vadd.f32 %v1918, %v2019
        %v2025 = vadd.f32 %v1919, %v2020
        %v2026 = vadd.f32 %v1920, %v2021
        %s2027 = sld [smem:[#allocation2 + $0x186]]
        %v2028 = vstv %s2027
        %v2029 = vmul.f32 %v1934, %v2028
        %v2030 = vmul.f32 %v1936, %v2028
        %v2031 = vmul.f32 %v1938, %v2028
        %v2032 = vmul.f32 %v1940, %v2028
        %v2033 = vmul.f32 %v1942, %v2028
        %v2034 = vadd.f32 %v1928, %v2029
        %v2035 = vadd.f32 %v1929, %v2030
        %v2036 = vadd.f32 %v1930, %v2031
        %v2037 = vadd.f32 %v1931, %v2032
        %v2038 = vadd.f32 %v1932, %v2033
        %2039 = vrot.lane.b32.xlu0 %v815, 112
        %v2040 = vpop.permute.xlu0 %2039
        %2041 = vrot.lane.b32.xlu0 %v816, 112
        %v2042 = vpop.permute.xlu0 %2041
        %2043 = vrot.lane.b32.xlu0 %v817, 112
        %v2044 = vpop.permute.xlu0 %2043
        %2045 = vrot.lane.b32.xlu0 %v818, 112
        %v2046 = vpop.permute.xlu0 %2045
        %2047 = vrot.lane.b32.xlu0 %v819, 112
        %v2048 = vpop.permute.xlu0 %2047
        %s2049 = sld [smem:[#allocation2 + $0x4c]]
        %v2050 = vstv %s2049
        %v2051 = vmul.f32 %v2040, %v2050
        %v2052 = vmul.f32 %v2042, %v2050
        %v2053 = vmul.f32 %v2044, %v2050
        %v2054 = vmul.f32 %v2046, %v2050
        %v2055 = vmul.f32 %v2048, %v2050
        %v2056 = vadd.f32 %v1950, %v2051
        %v2057 = vadd.f32 %v1951, %v2052
        %v2058 = vadd.f32 %v1952, %v2053
        %v2059 = vadd.f32 %v1953, %v2054
        %v2060 = vadd.f32 %v1954, %v2055
        %s2061 = sld [smem:[#allocation2 + $0x79]]
        %v2062 = vstv %s2061
        %v2063 = vmul.f32 %v2040, %v2062
        %v2064 = vmul.f32 %v2042, %v2062
        %v2065 = vmul.f32 %v2044, %v2062
        %v2066 = vmul.f32 %v2046, %v2062
        %v2067 = vmul.f32 %v2048, %v2062
        %v2068 = vadd.f32 %v1962, %v2063
        %v2069 = vadd.f32 %v1963, %v2064
        %v2070 = vadd.f32 %v1964, %v2065
        %v2071 = vadd.f32 %v1965, %v2066
        %v2072 = vadd.f32 %v1966, %v2067
        %s2073 = sld [smem:[#allocation2 + $0xa6]]
        %v2074 = vstv %s2073
        %v2075 = vmul.f32 %v2040, %v2074
        %v2076 = vmul.f32 %v2042, %v2074
        %v2077 = vmul.f32 %v2044, %v2074
        %v2078 = vmul.f32 %v2046, %v2074
        %v2079 = vmul.f32 %v2048, %v2074
        %v2080 = vadd.f32 %v1974, %v2075
        %v2081 = vadd.f32 %v1975, %v2076
        %v2082 = vadd.f32 %v1976, %v2077
        %v2083 = vadd.f32 %v1977, %v2078
        %v2084 = vadd.f32 %v1978, %v2079
        %s2085 = sld [smem:[#allocation2 + $0xd3]]
        %v2086 = vstv %s2085
        %v2087 = vmul.f32 %v2040, %v2086
        %v2088 = vmul.f32 %v2042, %v2086
        %v2089 = vmul.f32 %v2044, %v2086
        %v2090 = vmul.f32 %v2046, %v2086
        %v2091 = vmul.f32 %v2048, %v2086
        %v2092 = vadd.f32 %v1986, %v2087
        %v2093 = vadd.f32 %v1987, %v2088
        %v2094 = vadd.f32 %v1988, %v2089
        %v2095 = vadd.f32 %v1989, %v2090
        %v2096 = vadd.f32 %v1990, %v2091
        %s2097 = sld [smem:[#allocation2 + $0x100]]
        %v2098 = vstv %s2097
        %v2099 = vmul.f32 %v2040, %v2098
        %v2100 = vmul.f32 %v2042, %v2098
        %v2101 = vmul.f32 %v2044, %v2098
        %v2102 = vmul.f32 %v2046, %v2098
        %v2103 = vmul.f32 %v2048, %v2098
        %v2104 = vadd.f32 %v1998, %v2099
        %v2105 = vadd.f32 %v1999, %v2100
        %v2106 = vadd.f32 %v2000, %v2101
        %v2107 = vadd.f32 %v2001, %v2102
        %v2108 = vadd.f32 %v2002, %v2103
        %s2109 = sld [smem:[#allocation2 + $0x12d]]
        %v2110 = vstv %s2109
        %v2111 = vmul.f32 %v2040, %v2110
        %v2112 = vmul.f32 %v2042, %v2110
        %v2113 = vmul.f32 %v2044, %v2110
        %v2114 = vmul.f32 %v2046, %v2110
        %v2115 = vmul.f32 %v2048, %v2110
        %v2116 = vadd.f32 %v2010, %v2111
        %v2117 = vadd.f32 %v2011, %v2112
        %v2118 = vadd.f32 %v2012, %v2113
        %v2119 = vadd.f32 %v2013, %v2114
        %v2120 = vadd.f32 %v2014, %v2115
        %s2121 = sld [smem:[#allocation2 + $0x15a]]
        %v2122 = vstv %s2121
        %v2123 = vmul.f32 %v2040, %v2122
        %v2124 = vmul.f32 %v2042, %v2122
        %v2125 = vmul.f32 %v2044, %v2122
        %v2126 = vmul.f32 %v2046, %v2122
        %v2127 = vmul.f32 %v2048, %v2122
        %v2128 = vadd.f32 %v2022, %v2123
        %v2129 = vadd.f32 %v2023, %v2124
        %v2130 = vadd.f32 %v2024, %v2125
        %v2131 = vadd.f32 %v2025, %v2126
        %v2132 = vadd.f32 %v2026, %v2127
        %s2133 = sld [smem:[#allocation2 + $0x187]]
        %v2134 = vstv %s2133
        %v2135 = vmul.f32 %v2040, %v2134
        %v2136 = vmul.f32 %v2042, %v2134
        %v2137 = vmul.f32 %v2044, %v2134
        %v2138 = vmul.f32 %v2046, %v2134
        %v2139 = vmul.f32 %v2048, %v2134
        %v2140 = vadd.f32 %v2034, %v2135
        %v2141 = vadd.f32 %v2035, %v2136
        %v2142 = vadd.f32 %v2036, %v2137
        %v2143 = vadd.f32 %v2037, %v2138
        %v2144 = vadd.f32 %v2038, %v2139
        %2145 = vrot.lane.b32.xlu0 %v815, 104
        %v2146 = vpop.permute.xlu0 %2145
        %2147 = vrot.lane.b32.xlu0 %v816, 104
        %v2148 = vpop.permute.xlu0 %2147
        %2149 = vrot.lane.b32.xlu0 %v817, 104
        %v2150 = vpop.permute.xlu0 %2149
        %2151 = vrot.lane.b32.xlu0 %v818, 104
        %v2152 = vpop.permute.xlu0 %2151
        %2153 = vrot.lane.b32.xlu0 %v819, 104
        %v2154 = vpop.permute.xlu0 %2153
        %s2155 = sld [smem:[#allocation2 + $0x4d]]
        %v2156 = vstv %s2155
        %v2157 = vmul.f32 %v2146, %v2156
        %v2158 = vmul.f32 %v2148, %v2156
        %v2159 = vmul.f32 %v2150, %v2156
        %v2160 = vmul.f32 %v2152, %v2156
        %v2161 = vmul.f32 %v2154, %v2156
        %v2162 = vadd.f32 %v2056, %v2157
        %v2163 = vadd.f32 %v2057, %v2158
        %v2164 = vadd.f32 %v2058, %v2159
        %v2165 = vadd.f32 %v2059, %v2160
        %v2166 = vadd.f32 %v2060, %v2161
        %s2167 = sld [smem:[#allocation2 + $0x7a]]
        %v2168 = vstv %s2167
        %v2169 = vmul.f32 %v2146, %v2168
        %v2170 = vmul.f32 %v2148, %v2168
        %v2171 = vmul.f32 %v2150, %v2168
        %v2172 = vmul.f32 %v2152, %v2168
        %v2173 = vmul.f32 %v2154, %v2168
        %v2174 = vadd.f32 %v2068, %v2169
        %v2175 = vadd.f32 %v2069, %v2170
        %v2176 = vadd.f32 %v2070, %v2171
        %v2177 = vadd.f32 %v2071, %v2172
        %v2178 = vadd.f32 %v2072, %v2173
        %s2179 = sld [smem:[#allocation2 + $0xa7]]
        %v2180 = vstv %s2179
        %v2181 = vmul.f32 %v2146, %v2180
        %v2182 = vmul.f32 %v2148, %v2180
        %v2183 = vmul.f32 %v2150, %v2180
        %v2184 = vmul.f32 %v2152, %v2180
        %v2185 = vmul.f32 %v2154, %v2180
        %v2186 = vadd.f32 %v2080, %v2181
        %v2187 = vadd.f32 %v2081, %v2182
        %v2188 = vadd.f32 %v2082, %v2183
        %v2189 = vadd.f32 %v2083, %v2184
        %v2190 = vadd.f32 %v2084, %v2185
        %s2191 = sld [smem:[#allocation2 + $0xd4]]
        %v2192 = vstv %s2191
        %v2193 = vmul.f32 %v2146, %v2192
        %v2194 = vmul.f32 %v2148, %v2192
        %v2195 = vmul.f32 %v2150, %v2192
        %v2196 = vmul.f32 %v2152, %v2192
        %v2197 = vmul.f32 %v2154, %v2192
        %v2198 = vadd.f32 %v2092, %v2193
        %v2199 = vadd.f32 %v2093, %v2194
        %v2200 = vadd.f32 %v2094, %v2195
        %v2201 = vadd.f32 %v2095, %v2196
        %v2202 = vadd.f32 %v2096, %v2197
        %s2203 = sld [smem:[#allocation2 + $0x101]]
        %v2204 = vstv %s2203
        %v2205 = vmul.f32 %v2146, %v2204
        %v2206 = vmul.f32 %v2148, %v2204
        %v2207 = vmul.f32 %v2150, %v2204
        %v2208 = vmul.f32 %v2152, %v2204
        %v2209 = vmul.f32 %v2154, %v2204
        %v2210 = vadd.f32 %v2104, %v2205
        %v2211 = vadd.f32 %v2105, %v2206
        %v2212 = vadd.f32 %v2106, %v2207
        %v2213 = vadd.f32 %v2107, %v2208
        %v2214 = vadd.f32 %v2108, %v2209
        %s2215 = sld [smem:[#allocation2 + $0x12e]]
        %v2216 = vstv %s2215
        %v2217 = vmul.f32 %v2146, %v2216
        %v2218 = vmul.f32 %v2148, %v2216
        %v2219 = vmul.f32 %v2150, %v2216
        %v2220 = vmul.f32 %v2152, %v2216
        %v2221 = vmul.f32 %v2154, %v2216
        %v2222 = vadd.f32 %v2116, %v2217
        %v2223 = vadd.f32 %v2117, %v2218
        %v2224 = vadd.f32 %v2118, %v2219
        %v2225 = vadd.f32 %v2119, %v2220
        %v2226 = vadd.f32 %v2120, %v2221
        %s2227 = sld [smem:[#allocation2 + $0x15b]]
        %v2228 = vstv %s2227
        %v2229 = vmul.f32 %v2146, %v2228
        %v2230 = vmul.f32 %v2148, %v2228
        %v2231 = vmul.f32 %v2150, %v2228
        %v2232 = vmul.f32 %v2152, %v2228
        %v2233 = vmul.f32 %v2154, %v2228
        %v2234 = vadd.f32 %v2128, %v2229
        %v2235 = vadd.f32 %v2129, %v2230
        %v2236 = vadd.f32 %v2130, %v2231
        %v2237 = vadd.f32 %v2131, %v2232
        %v2238 = vadd.f32 %v2132, %v2233
        %s2239 = sld [smem:[#allocation2 + $0x188]]
        %v2240 = vstv %s2239
        %v2241 = vmul.f32 %v2146, %v2240
        %v2242 = vmul.f32 %v2148, %v2240
        %v2243 = vmul.f32 %v2150, %v2240
        %v2244 = vmul.f32 %v2152, %v2240
        %v2245 = vmul.f32 %v2154, %v2240
        %v2246 = vadd.f32 %v2140, %v2241
        %v2247 = vadd.f32 %v2141, %v2242
        %v2248 = vadd.f32 %v2142, %v2243
        %v2249 = vadd.f32 %v2143, %v2244
        %v2250 = vadd.f32 %v2144, %v2245
        %2251 = vrot.lane.b32.xlu0 %v815, 96
        %v2252 = vpop.permute.xlu0 %2251
        %2253 = vrot.lane.b32.xlu0 %v816, 96
        %v2254 = vpop.permute.xlu0 %2253
        %2255 = vrot.lane.b32.xlu0 %v817, 96
        %v2256 = vpop.permute.xlu0 %2255
        %2257 = vrot.lane.b32.xlu0 %v818, 96
        %v2258 = vpop.permute.xlu0 %2257
        %2259 = vrot.lane.b32.xlu0 %v819, 96
        %v2260 = vpop.permute.xlu0 %2259
        %s2261 = sld [smem:[#allocation2 + $0x4e]]
        %v2262 = vstv %s2261
        %v2263 = vmul.f32 %v2252, %v2262
        %v2264 = vmul.f32 %v2254, %v2262
        %v2265 = vmul.f32 %v2256, %v2262
        %v2266 = vmul.f32 %v2258, %v2262
        %v2267 = vmul.f32 %v2260, %v2262
        %v2268 = vadd.f32 %v2162, %v2263
        %v2269 = vadd.f32 %v2163, %v2264
        %v2270 = vadd.f32 %v2164, %v2265
        %v2271 = vadd.f32 %v2165, %v2266
        %v2272 = vadd.f32 %v2166, %v2267
        %s2273 = sld [smem:[#allocation2 + $0x7b]]
        %v2274 = vstv %s2273
        %v2275 = vmul.f32 %v2252, %v2274
        %v2276 = vmul.f32 %v2254, %v2274
        %v2277 = vmul.f32 %v2256, %v2274
        %v2278 = vmul.f32 %v2258, %v2274
        %v2279 = vmul.f32 %v2260, %v2274
        %v2280 = vadd.f32 %v2174, %v2275
        %v2281 = vadd.f32 %v2175, %v2276
        %v2282 = vadd.f32 %v2176, %v2277
        %v2283 = vadd.f32 %v2177, %v2278
        %v2284 = vadd.f32 %v2178, %v2279
        %s2285 = sld [smem:[#allocation2 + $0xa8]]
        %v2286 = vstv %s2285
        %v2287 = vmul.f32 %v2252, %v2286
        %v2288 = vmul.f32 %v2254, %v2286
        %v2289 = vmul.f32 %v2256, %v2286
        %v2290 = vmul.f32 %v2258, %v2286
        %v2291 = vmul.f32 %v2260, %v2286
        %v2292 = vadd.f32 %v2186, %v2287
        %v2293 = vadd.f32 %v2187, %v2288
        %v2294 = vadd.f32 %v2188, %v2289
        %v2295 = vadd.f32 %v2189, %v2290
        %v2296 = vadd.f32 %v2190, %v2291
        %s2297 = sld [smem:[#allocation2 + $0xd5]]
        %v2298 = vstv %s2297
        %v2299 = vmul.f32 %v2252, %v2298
        %v2300 = vmul.f32 %v2254, %v2298
        %v2301 = vmul.f32 %v2256, %v2298
        %v2302 = vmul.f32 %v2258, %v2298
        %v2303 = vmul.f32 %v2260, %v2298
        %v2304 = vadd.f32 %v2198, %v2299
        %v2305 = vadd.f32 %v2199, %v2300
        %v2306 = vadd.f32 %v2200, %v2301
        %v2307 = vadd.f32 %v2201, %v2302
        %v2308 = vadd.f32 %v2202, %v2303
        %s2309 = sld [smem:[#allocation2 + $0x102]]
        %v2310 = vstv %s2309
        %v2311 = vmul.f32 %v2252, %v2310
        %v2312 = vmul.f32 %v2254, %v2310
        %v2313 = vmul.f32 %v2256, %v2310
        %v2314 = vmul.f32 %v2258, %v2310
        %v2315 = vmul.f32 %v2260, %v2310
        %v2316 = vadd.f32 %v2210, %v2311
        %v2317 = vadd.f32 %v2211, %v2312
        %v2318 = vadd.f32 %v2212, %v2313
        %v2319 = vadd.f32 %v2213, %v2314
        %v2320 = vadd.f32 %v2214, %v2315
        %s2321 = sld [smem:[#allocation2 + $0x12f]]
        %v2322 = vstv %s2321
        %v2323 = vmul.f32 %v2252, %v2322
        %v2324 = vmul.f32 %v2254, %v2322
        %v2325 = vmul.f32 %v2256, %v2322
        %v2326 = vmul.f32 %v2258, %v2322
        %v2327 = vmul.f32 %v2260, %v2322
        %v2328 = vadd.f32 %v2222, %v2323
        %v2329 = vadd.f32 %v2223, %v2324
        %v2330 = vadd.f32 %v2224, %v2325
        %v2331 = vadd.f32 %v2225, %v2326
        %v2332 = vadd.f32 %v2226, %v2327
        %s2333 = sld [smem:[#allocation2 + $0x15c]]
        %v2334 = vstv %s2333
        %v2335 = vmul.f32 %v2252, %v2334
        %v2336 = vmul.f32 %v2254, %v2334
        %v2337 = vmul.f32 %v2256, %v2334
        %v2338 = vmul.f32 %v2258, %v2334
        %v2339 = vmul.f32 %v2260, %v2334
        %v2340 = vadd.f32 %v2234, %v2335
        %v2341 = vadd.f32 %v2235, %v2336
        %v2342 = vadd.f32 %v2236, %v2337
        %v2343 = vadd.f32 %v2237, %v2338
        %v2344 = vadd.f32 %v2238, %v2339
        %s2345 = sld [smem:[#allocation2 + $0x189]]
        %v2346 = vstv %s2345
        %v2347 = vmul.f32 %v2252, %v2346
        %v2348 = vmul.f32 %v2254, %v2346
        %v2349 = vmul.f32 %v2256, %v2346
        %v2350 = vmul.f32 %v2258, %v2346
        %v2351 = vmul.f32 %v2260, %v2346
        %v2352 = vadd.f32 %v2246, %v2347
        %v2353 = vadd.f32 %v2247, %v2348
        %v2354 = vadd.f32 %v2248, %v2349
        %v2355 = vadd.f32 %v2249, %v2350
        %v2356 = vadd.f32 %v2250, %v2351
        %2357 = vrot.lane.b32.xlu0 %v1013, 32
        %v2358 = vpop.permute.xlu0 %2357
        %2359 = vrot.lane.b32.xlu0 %v1014, 32
        %v2360 = vpop.permute.xlu0 %2359
        %2361 = vrot.lane.b32.xlu0 %v1015, 32
        %v2362 = vpop.permute.xlu0 %2361
        %2363 = vrot.lane.b32.xlu0 %v1016, 32
        %v2364 = vpop.permute.xlu0 %2363
        %2365 = vrot.lane.b32.xlu0 %v1017, 32
        %v2366 = vpop.permute.xlu0 %2365
        %s2367 = sld [smem:[#allocation2 + $0x4f]]
        %v2368 = vstv %s2367
        %v2369 = vmul.f32 %v2358, %v2368
        %v2370 = vmul.f32 %v2360, %v2368
        %v2371 = vmul.f32 %v2362, %v2368
        %v2372 = vmul.f32 %v2364, %v2368
        %v2373 = vmul.f32 %v2366, %v2368
        %v2374 = vadd.f32 %v2268, %v2369
        %v2375 = vadd.f32 %v2269, %v2370
        %v2376 = vadd.f32 %v2270, %v2371
        %v2377 = vadd.f32 %v2271, %v2372
        %v2378 = vadd.f32 %v2272, %v2373
        %s2379 = sld [smem:[#allocation2 + $0x7c]]
        %v2380 = vstv %s2379
        %v2381 = vmul.f32 %v2358, %v2380
        %v2382 = vmul.f32 %v2360, %v2380
        %v2383 = vmul.f32 %v2362, %v2380
        %v2384 = vmul.f32 %v2364, %v2380
        %v2385 = vmul.f32 %v2366, %v2380
        %v2386 = vadd.f32 %v2280, %v2381
        %v2387 = vadd.f32 %v2281, %v2382
        %v2388 = vadd.f32 %v2282, %v2383
        %v2389 = vadd.f32 %v2283, %v2384
        %v2390 = vadd.f32 %v2284, %v2385
        %s2391 = sld [smem:[#allocation2 + $0xa9]]
        %v2392 = vstv %s2391
        %v2393 = vmul.f32 %v2358, %v2392
        %v2394 = vmul.f32 %v2360, %v2392
        %v2395 = vmul.f32 %v2362, %v2392
        %v2396 = vmul.f32 %v2364, %v2392
        %v2397 = vmul.f32 %v2366, %v2392
        %v2398 = vadd.f32 %v2292, %v2393
        %v2399 = vadd.f32 %v2293, %v2394
        %v2400 = vadd.f32 %v2294, %v2395
        %v2401 = vadd.f32 %v2295, %v2396
        %v2402 = vadd.f32 %v2296, %v2397
        %s2403 = sld [smem:[#allocation2 + $0xd6]]
        %v2404 = vstv %s2403
        %v2405 = vmul.f32 %v2358, %v2404
        %v2406 = vmul.f32 %v2360, %v2404
        %v2407 = vmul.f32 %v2362, %v2404
        %v2408 = vmul.f32 %v2364, %v2404
        %v2409 = vmul.f32 %v2366, %v2404
        %v2410 = vadd.f32 %v2304, %v2405
        %v2411 = vadd.f32 %v2305, %v2406
        %v2412 = vadd.f32 %v2306, %v2407
        %v2413 = vadd.f32 %v2307, %v2408
        %v2414 = vadd.f32 %v2308, %v2409
        %s2415 = sld [smem:[#allocation2 + $0x103]]
        %v2416 = vstv %s2415
        %v2417 = vmul.f32 %v2358, %v2416
        %v2418 = vmul.f32 %v2360, %v2416
        %v2419 = vmul.f32 %v2362, %v2416
        %v2420 = vmul.f32 %v2364, %v2416
        %v2421 = vmul.f32 %v2366, %v2416
        %v2422 = vadd.f32 %v2316, %v2417
        %v2423 = vadd.f32 %v2317, %v2418
        %v2424 = vadd.f32 %v2318, %v2419
        %v2425 = vadd.f32 %v2319, %v2420
        %v2426 = vadd.f32 %v2320, %v2421
        %s2427 = sld [smem:[#allocation2 + $0x130]]
        %v2428 = vstv %s2427
        %v2429 = vmul.f32 %v2358, %v2428
        %v2430 = vmul.f32 %v2360, %v2428
        %v2431 = vmul.f32 %v2362, %v2428
        %v2432 = vmul.f32 %v2364, %v2428
        %v2433 = vmul.f32 %v2366, %v2428
        %v2434 = vadd.f32 %v2328, %v2429
        %v2435 = vadd.f32 %v2329, %v2430
        %v2436 = vadd.f32 %v2330, %v2431
        %v2437 = vadd.f32 %v2331, %v2432
        %v2438 = vadd.f32 %v2332, %v2433
        %s2439 = sld [smem:[#allocation2 + $0x15d]]
        %v2440 = vstv %s2439
        %v2441 = vmul.f32 %v2358, %v2440
        %v2442 = vmul.f32 %v2360, %v2440
        %v2443 = vmul.f32 %v2362, %v2440
        %v2444 = vmul.f32 %v2364, %v2440
        %v2445 = vmul.f32 %v2366, %v2440
        %v2446 = vadd.f32 %v2340, %v2441
        %v2447 = vadd.f32 %v2341, %v2442
        %v2448 = vadd.f32 %v2342, %v2443
        %v2449 = vadd.f32 %v2343, %v2444
        %v2450 = vadd.f32 %v2344, %v2445
        %s2451 = sld [smem:[#allocation2 + $0x18a]]
        %v2452 = vstv %s2451
        %v2453 = vmul.f32 %v2358, %v2452
        %v2454 = vmul.f32 %v2360, %v2452
        %v2455 = vmul.f32 %v2362, %v2452
        %v2456 = vmul.f32 %v2364, %v2452
        %v2457 = vmul.f32 %v2366, %v2452
        %v2458 = vadd.f32 %v2352, %v2453
        %v2459 = vadd.f32 %v2353, %v2454
        %v2460 = vadd.f32 %v2354, %v2455
        %v2461 = vadd.f32 %v2355, %v2456
        %v2462 = vadd.f32 %v2356, %v2457
        %2463 = vrot.lane.b32.xlu0 %v1013, 24
        %v2464 = vpop.permute.xlu0 %2463
        %2465 = vrot.lane.b32.xlu0 %v1014, 24
        %v2466 = vpop.permute.xlu0 %2465
        %2467 = vrot.lane.b32.xlu0 %v1015, 24
        %v2468 = vpop.permute.xlu0 %2467
        %2469 = vrot.lane.b32.xlu0 %v1016, 24
        %v2470 = vpop.permute.xlu0 %2469
        %2471 = vrot.lane.b32.xlu0 %v1017, 24
        %v2472 = vpop.permute.xlu0 %2471
        %s2473 = sld [smem:[#allocation2 + $0x50]]
        %v2474 = vstv %s2473
        %v2475 = vmul.f32 %v2464, %v2474
        %v2476 = vmul.f32 %v2466, %v2474
        %v2477 = vmul.f32 %v2468, %v2474
        %v2478 = vmul.f32 %v2470, %v2474
        %v2479 = vmul.f32 %v2472, %v2474
        %v2480 = vadd.f32 %v2374, %v2475
        %v2481 = vadd.f32 %v2375, %v2476
        %v2482 = vadd.f32 %v2376, %v2477
        %v2483 = vadd.f32 %v2377, %v2478
        %v2484 = vadd.f32 %v2378, %v2479
        %s2485 = sld [smem:[#allocation2 + $0x7d]]
        %v2486 = vstv %s2485
        %v2487 = vmul.f32 %v2464, %v2486
        %v2488 = vmul.f32 %v2466, %v2486
        %v2489 = vmul.f32 %v2468, %v2486
        %v2490 = vmul.f32 %v2470, %v2486
        %v2491 = vmul.f32 %v2472, %v2486
        %v2492 = vadd.f32 %v2386, %v2487
        %v2493 = vadd.f32 %v2387, %v2488
        %v2494 = vadd.f32 %v2388, %v2489
        %v2495 = vadd.f32 %v2389, %v2490
        %v2496 = vadd.f32 %v2390, %v2491
        %s2497 = sld [smem:[#allocation2 + $0xaa]]
        %v2498 = vstv %s2497
        %v2499 = vmul.f32 %v2464, %v2498
        %v2500 = vmul.f32 %v2466, %v2498
        %v2501 = vmul.f32 %v2468, %v2498
        %v2502 = vmul.f32 %v2470, %v2498
        %v2503 = vmul.f32 %v2472, %v2498
        %v2504 = vadd.f32 %v2398, %v2499
        %v2505 = vadd.f32 %v2399, %v2500
        %v2506 = vadd.f32 %v2400, %v2501
        %v2507 = vadd.f32 %v2401, %v2502
        %v2508 = vadd.f32 %v2402, %v2503
        %s2509 = sld [smem:[#allocation2 + $0xd7]]
        %v2510 = vstv %s2509
        %v2511 = vmul.f32 %v2464, %v2510
        %v2512 = vmul.f32 %v2466, %v2510
        %v2513 = vmul.f32 %v2468, %v2510
        %v2514 = vmul.f32 %v2470, %v2510
        %v2515 = vmul.f32 %v2472, %v2510
        %v2516 = vadd.f32 %v2410, %v2511
        %v2517 = vadd.f32 %v2411, %v2512
        %v2518 = vadd.f32 %v2412, %v2513
        %v2519 = vadd.f32 %v2413, %v2514
        %v2520 = vadd.f32 %v2414, %v2515
        %s2521 = sld [smem:[#allocation2 + $0x104]]
        %v2522 = vstv %s2521
        %v2523 = vmul.f32 %v2464, %v2522
        %v2524 = vmul.f32 %v2466, %v2522
        %v2525 = vmul.f32 %v2468, %v2522
        %v2526 = vmul.f32 %v2470, %v2522
        %v2527 = vmul.f32 %v2472, %v2522
        %v2528 = vadd.f32 %v2422, %v2523
        %v2529 = vadd.f32 %v2423, %v2524
        %v2530 = vadd.f32 %v2424, %v2525
        %v2531 = vadd.f32 %v2425, %v2526
        %v2532 = vadd.f32 %v2426, %v2527
        %s2533 = sld [smem:[#allocation2 + $0x131]]
        %v2534 = vstv %s2533
        %v2535 = vmul.f32 %v2464, %v2534
        %v2536 = vmul.f32 %v2466, %v2534
        %v2537 = vmul.f32 %v2468, %v2534
        %v2538 = vmul.f32 %v2470, %v2534
        %v2539 = vmul.f32 %v2472, %v2534
        %v2540 = vadd.f32 %v2434, %v2535
        %v2541 = vadd.f32 %v2435, %v2536
        %v2542 = vadd.f32 %v2436, %v2537
        %v2543 = vadd.f32 %v2437, %v2538
        %v2544 = vadd.f32 %v2438, %v2539
        %s2545 = sld [smem:[#allocation2 + $0x15e]]
        %v2546 = vstv %s2545
        %v2547 = vmul.f32 %v2464, %v2546
        %v2548 = vmul.f32 %v2466, %v2546
        %v2549 = vmul.f32 %v2468, %v2546
        %v2550 = vmul.f32 %v2470, %v2546
        %v2551 = vmul.f32 %v2472, %v2546
        %v2552 = vadd.f32 %v2446, %v2547
        %v2553 = vadd.f32 %v2447, %v2548
        %v2554 = vadd.f32 %v2448, %v2549
        %v2555 = vadd.f32 %v2449, %v2550
        %v2556 = vadd.f32 %v2450, %v2551
        %s2557 = sld [smem:[#allocation2 + $0x18b]]
        %v2558 = vstv %s2557
        %v2559 = vmul.f32 %v2464, %v2558
        %v2560 = vmul.f32 %v2466, %v2558
        %v2561 = vmul.f32 %v2468, %v2558
        %v2562 = vmul.f32 %v2470, %v2558
        %v2563 = vmul.f32 %v2472, %v2558
        %v2564 = vadd.f32 %v2458, %v2559
        %v2565 = vadd.f32 %v2459, %v2560
        %v2566 = vadd.f32 %v2460, %v2561
        %v2567 = vadd.f32 %v2461, %v2562
        %v2568 = vadd.f32 %v2462, %v2563
        %2569 = vrot.lane.b32.xlu0 %v1013, 16
        %v2570 = vpop.permute.xlu0 %2569
        %2571 = vrot.lane.b32.xlu0 %v1014, 16
        %v2572 = vpop.permute.xlu0 %2571
        %2573 = vrot.lane.b32.xlu0 %v1015, 16
        %v2574 = vpop.permute.xlu0 %2573
        %2575 = vrot.lane.b32.xlu0 %v1016, 16
        %v2576 = vpop.permute.xlu0 %2575
        %2577 = vrot.lane.b32.xlu0 %v1017, 16
        %v2578 = vpop.permute.xlu0 %2577
        %s2579 = sld [smem:[#allocation2 + $0x51]]
        %v2580 = vstv %s2579
        %v2581 = vmul.f32 %v2570, %v2580
        %v2582 = vmul.f32 %v2572, %v2580
        %v2583 = vmul.f32 %v2574, %v2580
        %v2584 = vmul.f32 %v2576, %v2580
        %v2585 = vmul.f32 %v2578, %v2580
        %v2586 = vadd.f32 %v2480, %v2581
        %v2587 = vadd.f32 %v2481, %v2582
        %v2588 = vadd.f32 %v2482, %v2583
        %v2589 = vadd.f32 %v2483, %v2584
        %v2590 = vadd.f32 %v2484, %v2585
        %s2591 = sld [smem:[#allocation2 + $0x7e]]
        %v2592 = vstv %s2591
        %v2593 = vmul.f32 %v2570, %v2592
        %v2594 = vmul.f32 %v2572, %v2592
        %v2595 = vmul.f32 %v2574, %v2592
        %v2596 = vmul.f32 %v2576, %v2592
        %v2597 = vmul.f32 %v2578, %v2592
        %v2598 = vadd.f32 %v2492, %v2593
        %v2599 = vadd.f32 %v2493, %v2594
        %v2600 = vadd.f32 %v2494, %v2595
        %v2601 = vadd.f32 %v2495, %v2596
        %v2602 = vadd.f32 %v2496, %v2597
        %s2603 = sld [smem:[#allocation2 + $0xab]]
        %v2604 = vstv %s2603
        %v2605 = vmul.f32 %v2570, %v2604
        %v2606 = vmul.f32 %v2572, %v2604
        %v2607 = vmul.f32 %v2574, %v2604
        %v2608 = vmul.f32 %v2576, %v2604
        %v2609 = vmul.f32 %v2578, %v2604
        %v2610 = vadd.f32 %v2504, %v2605
        %v2611 = vadd.f32 %v2505, %v2606
        %v2612 = vadd.f32 %v2506, %v2607
        %v2613 = vadd.f32 %v2507, %v2608
        %v2614 = vadd.f32 %v2508, %v2609
        %s2615 = sld [smem:[#allocation2 + $0xd8]]
        %v2616 = vstv %s2615
        %v2617 = vmul.f32 %v2570, %v2616
        %v2618 = vmul.f32 %v2572, %v2616
        %v2619 = vmul.f32 %v2574, %v2616
        %v2620 = vmul.f32 %v2576, %v2616
        %v2621 = vmul.f32 %v2578, %v2616
        %v2622 = vadd.f32 %v2516, %v2617
        %v2623 = vadd.f32 %v2517, %v2618
        %v2624 = vadd.f32 %v2518, %v2619
        %v2625 = vadd.f32 %v2519, %v2620
        %v2626 = vadd.f32 %v2520, %v2621
        %s2627 = sld [smem:[#allocation2 + $0x105]]
        %v2628 = vstv %s2627
        %v2629 = vmul.f32 %v2570, %v2628
        %v2630 = vmul.f32 %v2572, %v2628
        %v2631 = vmul.f32 %v2574, %v2628
        %v2632 = vmul.f32 %v2576, %v2628
        %v2633 = vmul.f32 %v2578, %v2628
        %v2634 = vadd.f32 %v2528, %v2629
        %v2635 = vadd.f32 %v2529, %v2630
        %v2636 = vadd.f32 %v2530, %v2631
        %v2637 = vadd.f32 %v2531, %v2632
        %v2638 = vadd.f32 %v2532, %v2633
        %s2639 = sld [smem:[#allocation2 + $0x132]]
        %v2640 = vstv %s2639
        %v2641 = vmul.f32 %v2570, %v2640
        %v2642 = vmul.f32 %v2572, %v2640
        %v2643 = vmul.f32 %v2574, %v2640
        %v2644 = vmul.f32 %v2576, %v2640
        %v2645 = vmul.f32 %v2578, %v2640
        %v2646 = vadd.f32 %v2540, %v2641
        %v2647 = vadd.f32 %v2541, %v2642
        %v2648 = vadd.f32 %v2542, %v2643
        %v2649 = vadd.f32 %v2543, %v2644
        %v2650 = vadd.f32 %v2544, %v2645
        %s2651 = sld [smem:[#allocation2 + $0x15f]]
        %v2652 = vstv %s2651
        %v2653 = vmul.f32 %v2570, %v2652
        %v2654 = vmul.f32 %v2572, %v2652
        %v2655 = vmul.f32 %v2574, %v2652
        %v2656 = vmul.f32 %v2576, %v2652
        %v2657 = vmul.f32 %v2578, %v2652
        %v2658 = vadd.f32 %v2552, %v2653
        %v2659 = vadd.f32 %v2553, %v2654
        %v2660 = vadd.f32 %v2554, %v2655
        %v2661 = vadd.f32 %v2555, %v2656
        %v2662 = vadd.f32 %v2556, %v2657
        %s2663 = sld [smem:[#allocation2 + $0x18c]]
        %v2664 = vstv %s2663
        %v2665 = vmul.f32 %v2570, %v2664
        %v2666 = vmul.f32 %v2572, %v2664
        %v2667 = vmul.f32 %v2574, %v2664
        %v2668 = vmul.f32 %v2576, %v2664
        %v2669 = vmul.f32 %v2578, %v2664
        %v2670 = vadd.f32 %v2564, %v2665
        %v2671 = vadd.f32 %v2565, %v2666
        %v2672 = vadd.f32 %v2566, %v2667
        %v2673 = vadd.f32 %v2567, %v2668
        %v2674 = vadd.f32 %v2568, %v2669
        %2675 = vrot.lane.b32.xlu0 %v1013, 8
        %v2676 = vpop.permute.xlu0 %2675
        %2677 = vrot.lane.b32.xlu0 %v1014, 8
        %v2678 = vpop.permute.xlu0 %2677
        %2679 = vrot.lane.b32.xlu0 %v1015, 8
        %v2680 = vpop.permute.xlu0 %2679
        %2681 = vrot.lane.b32.xlu0 %v1016, 8
        %v2682 = vpop.permute.xlu0 %2681
        %2683 = vrot.lane.b32.xlu0 %v1017, 8
        %v2684 = vpop.permute.xlu0 %2683
        %s2685 = sld [smem:[#allocation2 + $0x52]]
        %v2686 = vstv %s2685
        %v2687 = vmul.f32 %v2676, %v2686
        %v2688 = vmul.f32 %v2678, %v2686
        %v2689 = vmul.f32 %v2680, %v2686
        %v2690 = vmul.f32 %v2682, %v2686
        %v2691 = vmul.f32 %v2684, %v2686
        %v2692 = vadd.f32 %v2586, %v2687
        %v2693 = vadd.f32 %v2587, %v2688
        %v2694 = vadd.f32 %v2588, %v2689
        %v2695 = vadd.f32 %v2589, %v2690
        %v2696 = vadd.f32 %v2590, %v2691
        %s2697 = sld [smem:[#allocation2 + $0x7f]]
        %v2698 = vstv %s2697
        %v2699 = vmul.f32 %v2676, %v2698
        %v2700 = vmul.f32 %v2678, %v2698
        %v2701 = vmul.f32 %v2680, %v2698
        %v2702 = vmul.f32 %v2682, %v2698
        %v2703 = vmul.f32 %v2684, %v2698
        %v2704 = vadd.f32 %v2598, %v2699
        %v2705 = vadd.f32 %v2599, %v2700
        %v2706 = vadd.f32 %v2600, %v2701
        %v2707 = vadd.f32 %v2601, %v2702
        %v2708 = vadd.f32 %v2602, %v2703
        %s2709 = sld [smem:[#allocation2 + $0xac]]
        %v2710 = vstv %s2709
        %v2711 = vmul.f32 %v2676, %v2710
        %v2712 = vmul.f32 %v2678, %v2710
        %v2713 = vmul.f32 %v2680, %v2710
        %v2714 = vmul.f32 %v2682, %v2710
        %v2715 = vmul.f32 %v2684, %v2710
        %v2716 = vadd.f32 %v2610, %v2711
        %v2717 = vadd.f32 %v2611, %v2712
        %v2718 = vadd.f32 %v2612, %v2713
        %v2719 = vadd.f32 %v2613, %v2714
        %v2720 = vadd.f32 %v2614, %v2715
        %s2721 = sld [smem:[#allocation2 + $0xd9]]
        %v2722 = vstv %s2721
        %v2723 = vmul.f32 %v2676, %v2722
        %v2724 = vmul.f32 %v2678, %v2722
        %v2725 = vmul.f32 %v2680, %v2722
        %v2726 = vmul.f32 %v2682, %v2722
        %v2727 = vmul.f32 %v2684, %v2722
        %v2728 = vadd.f32 %v2622, %v2723
        %v2729 = vadd.f32 %v2623, %v2724
        %v2730 = vadd.f32 %v2624, %v2725
        %v2731 = vadd.f32 %v2625, %v2726
        %v2732 = vadd.f32 %v2626, %v2727
        %s2733 = sld [smem:[#allocation2 + $0x106]]
        %v2734 = vstv %s2733
        %v2735 = vmul.f32 %v2676, %v2734
        %v2736 = vmul.f32 %v2678, %v2734
        %v2737 = vmul.f32 %v2680, %v2734
        %v2738 = vmul.f32 %v2682, %v2734
        %v2739 = vmul.f32 %v2684, %v2734
        %v2740 = vadd.f32 %v2634, %v2735
        %v2741 = vadd.f32 %v2635, %v2736
        %v2742 = vadd.f32 %v2636, %v2737
        %v2743 = vadd.f32 %v2637, %v2738
        %v2744 = vadd.f32 %v2638, %v2739
        %s2745 = sld [smem:[#allocation2 + $0x133]]
        %v2746 = vstv %s2745
        %v2747 = vmul.f32 %v2676, %v2746
        %v2748 = vmul.f32 %v2678, %v2746
        %v2749 = vmul.f32 %v2680, %v2746
        %v2750 = vmul.f32 %v2682, %v2746
        %v2751 = vmul.f32 %v2684, %v2746
        %v2752 = vadd.f32 %v2646, %v2747
        %v2753 = vadd.f32 %v2647, %v2748
        %v2754 = vadd.f32 %v2648, %v2749
        %v2755 = vadd.f32 %v2649, %v2750
        %v2756 = vadd.f32 %v2650, %v2751
        %s2757 = sld [smem:[#allocation2 + $0x160]]
        %v2758 = vstv %s2757
        %v2759 = vmul.f32 %v2676, %v2758
        %v2760 = vmul.f32 %v2678, %v2758
        %v2761 = vmul.f32 %v2680, %v2758
        %v2762 = vmul.f32 %v2682, %v2758
        %v2763 = vmul.f32 %v2684, %v2758
        %v2764 = vadd.f32 %v2658, %v2759
        %v2765 = vadd.f32 %v2659, %v2760
        %v2766 = vadd.f32 %v2660, %v2761
        %v2767 = vadd.f32 %v2661, %v2762
        %v2768 = vadd.f32 %v2662, %v2763
        %s2769 = sld [smem:[#allocation2 + $0x18d]]
        %v2770 = vstv %s2769
        %v2771 = vmul.f32 %v2676, %v2770
        %v2772 = vmul.f32 %v2678, %v2770
        %v2773 = vmul.f32 %v2680, %v2770
        %v2774 = vmul.f32 %v2682, %v2770
        %v2775 = vmul.f32 %v2684, %v2770
        %v2776 = vadd.f32 %v2670, %v2771
        %v2777 = vadd.f32 %v2671, %v2772
        %v2778 = vadd.f32 %v2672, %v2773
        %v2779 = vadd.f32 %v2673, %v2774
        %v2780 = vadd.f32 %v2674, %v2775
        %s2781 = sld [smem:[#allocation2 + $0x53]]
        %v2782 = vstv %s2781
        %v2783 = vmul.f32 %v1013, %v2782
        %v2784 = vmul.f32 %v1014, %v2782
        %v2785 = vmul.f32 %v1015, %v2782
        %v2786 = vmul.f32 %v1016, %v2782
        %v2787 = vmul.f32 %v1017, %v2782
        %v2788 = vadd.f32 %v2692, %v2783
        %v2789 = vadd.f32 %v2693, %v2784
        %v2790 = vadd.f32 %v2694, %v2785
        %v2791 = vadd.f32 %v2695, %v2786
        %v2792 = vadd.f32 %v2696, %v2787
        %s2793 = sld [smem:[#allocation2 + $0x80]]
        %v2794 = vstv %s2793
        %v2795 = vmul.f32 %v1013, %v2794
        %v2796 = vmul.f32 %v1014, %v2794
        %v2797 = vmul.f32 %v1015, %v2794
        %v2798 = vmul.f32 %v1016, %v2794
        %v2799 = vmul.f32 %v1017, %v2794
        %v2800 = vadd.f32 %v2704, %v2795
        %v2801 = vadd.f32 %v2705, %v2796
        %v2802 = vadd.f32 %v2706, %v2797
        %v2803 = vadd.f32 %v2707, %v2798
        %v2804 = vadd.f32 %v2708, %v2799
        %s2805 = sld [smem:[#allocation2 + $0xad]]
        %v2806 = vstv %s2805
        %v2807 = vmul.f32 %v1013, %v2806
        %v2808 = vmul.f32 %v1014, %v2806
        %v2809 = vmul.f32 %v1015, %v2806
        %v2810 = vmul.f32 %v1016, %v2806
        %v2811 = vmul.f32 %v1017, %v2806
        %v2812 = vadd.f32 %v2716, %v2807
        %v2813 = vadd.f32 %v2717, %v2808
        %v2814 = vadd.f32 %v2718, %v2809
        %v2815 = vadd.f32 %v2719, %v2810
        %v2816 = vadd.f32 %v2720, %v2811
        %s2817 = sld [smem:[#allocation2 + $0xda]]
        %v2818 = vstv %s2817
        %v2819 = vmul.f32 %v1013, %v2818
        %v2820 = vmul.f32 %v1014, %v2818
        %v2821 = vmul.f32 %v1015, %v2818
        %v2822 = vmul.f32 %v1016, %v2818
        %v2823 = vmul.f32 %v1017, %v2818
        %v2824 = vadd.f32 %v2728, %v2819
        %v2825 = vadd.f32 %v2729, %v2820
        %v2826 = vadd.f32 %v2730, %v2821
        %v2827 = vadd.f32 %v2731, %v2822
        %v2828 = vadd.f32 %v2732, %v2823
        %s2829 = sld [smem:[#allocation2 + $0x107]]
        %v2830 = vstv %s2829
        %v2831 = vmul.f32 %v1013, %v2830
        %v2832 = vmul.f32 %v1014, %v2830
        %v2833 = vmul.f32 %v1015, %v2830
        %v2834 = vmul.f32 %v1016, %v2830
        %v2835 = vmul.f32 %v1017, %v2830
        %v2836 = vadd.f32 %v2740, %v2831
        %v2837 = vadd.f32 %v2741, %v2832
        %v2838 = vadd.f32 %v2742, %v2833
        %v2839 = vadd.f32 %v2743, %v2834
        %v2840 = vadd.f32 %v2744, %v2835
        %s2841 = sld [smem:[#allocation2 + $0x134]]
        %v2842 = vstv %s2841
        %v2843 = vmul.f32 %v1013, %v2842
        %v2844 = vmul.f32 %v1014, %v2842
        %v2845 = vmul.f32 %v1015, %v2842
        %v2846 = vmul.f32 %v1016, %v2842
        %v2847 = vmul.f32 %v1017, %v2842
        %v2848 = vadd.f32 %v2752, %v2843
        %v2849 = vadd.f32 %v2753, %v2844
        %v2850 = vadd.f32 %v2754, %v2845
        %v2851 = vadd.f32 %v2755, %v2846
        %v2852 = vadd.f32 %v2756, %v2847
        %s2853 = sld [smem:[#allocation2 + $0x161]]
        %v2854 = vstv %s2853
        %v2855 = vmul.f32 %v1013, %v2854
        %v2856 = vmul.f32 %v1014, %v2854
        %v2857 = vmul.f32 %v1015, %v2854
        %v2858 = vmul.f32 %v1016, %v2854
        %v2859 = vmul.f32 %v1017, %v2854
        %v2860 = vadd.f32 %v2764, %v2855
        %v2861 = vadd.f32 %v2765, %v2856
        %v2862 = vadd.f32 %v2766, %v2857
        %v2863 = vadd.f32 %v2767, %v2858
        %v2864 = vadd.f32 %v2768, %v2859
        %s2865 = sld [smem:[#allocation2 + $0x18e]]
        %v2866 = vstv %s2865
        %v2867 = vmul.f32 %v1013, %v2866
        %v2868 = vmul.f32 %v1014, %v2866
        %v2869 = vmul.f32 %v1015, %v2866
        %v2870 = vmul.f32 %v1016, %v2866
        %v2871 = vmul.f32 %v1017, %v2866
        %v2872 = vadd.f32 %v2776, %v2867
        %v2873 = vadd.f32 %v2777, %v2868
        %v2874 = vadd.f32 %v2778, %v2869
        %v2875 = vadd.f32 %v2779, %v2870
        %v2876 = vadd.f32 %v2780, %v2871
        %2877 = vrot.lane.b32.xlu0 %v1013, 120
        %v2878 = vpop.permute.xlu0 %2877
        %2879 = vrot.lane.b32.xlu0 %v1014, 120
        %v2880 = vpop.permute.xlu0 %2879
        %2881 = vrot.lane.b32.xlu0 %v1015, 120
        %v2882 = vpop.permute.xlu0 %2881
        %2883 = vrot.lane.b32.xlu0 %v1016, 120
        %v2884 = vpop.permute.xlu0 %2883
        %2885 = vrot.lane.b32.xlu0 %v1017, 120
        %v2886 = vpop.permute.xlu0 %2885
        %s2887 = sld [smem:[#allocation2 + $0x54]]
        %v2888 = vstv %s2887
        %v2889 = vmul.f32 %v2878, %v2888
        %v2890 = vmul.f32 %v2880, %v2888
        %v2891 = vmul.f32 %v2882, %v2888
        %v2892 = vmul.f32 %v2884, %v2888
        %v2893 = vmul.f32 %v2886, %v2888
        %v2894 = vadd.f32 %v2788, %v2889
        %v2895 = vadd.f32 %v2789, %v2890
        %v2896 = vadd.f32 %v2790, %v2891
        %v2897 = vadd.f32 %v2791, %v2892
        %v2898 = vadd.f32 %v2792, %v2893
        %s2899 = sld [smem:[#allocation2 + $0x81]]
        %v2900 = vstv %s2899
        %v2901 = vmul.f32 %v2878, %v2900
        %v2902 = vmul.f32 %v2880, %v2900
        %v2903 = vmul.f32 %v2882, %v2900
        %v2904 = vmul.f32 %v2884, %v2900
        %v2905 = vmul.f32 %v2886, %v2900
        %v2906 = vadd.f32 %v2800, %v2901
        %v2907 = vadd.f32 %v2801, %v2902
        %v2908 = vadd.f32 %v2802, %v2903
        %v2909 = vadd.f32 %v2803, %v2904
        %v2910 = vadd.f32 %v2804, %v2905
        %s2911 = sld [smem:[#allocation2 + $0xae]]
        %v2912 = vstv %s2911
        %v2913 = vmul.f32 %v2878, %v2912
        %v2914 = vmul.f32 %v2880, %v2912
        %v2915 = vmul.f32 %v2882, %v2912
        %v2916 = vmul.f32 %v2884, %v2912
        %v2917 = vmul.f32 %v2886, %v2912
        %v2918 = vadd.f32 %v2812, %v2913
        %v2919 = vadd.f32 %v2813, %v2914
        %v2920 = vadd.f32 %v2814, %v2915
        %v2921 = vadd.f32 %v2815, %v2916
        %v2922 = vadd.f32 %v2816, %v2917
        %s2923 = sld [smem:[#allocation2 + $0xdb]]
        %v2924 = vstv %s2923
        %v2925 = vmul.f32 %v2878, %v2924
        %v2926 = vmul.f32 %v2880, %v2924
        %v2927 = vmul.f32 %v2882, %v2924
        %v2928 = vmul.f32 %v2884, %v2924
        %v2929 = vmul.f32 %v2886, %v2924
        %v2930 = vadd.f32 %v2824, %v2925
        %v2931 = vadd.f32 %v2825, %v2926
        %v2932 = vadd.f32 %v2826, %v2927
        %v2933 = vadd.f32 %v2827, %v2928
        %v2934 = vadd.f32 %v2828, %v2929
        %s2935 = sld [smem:[#allocation2 + $0x108]]
        %v2936 = vstv %s2935
        %v2937 = vmul.f32 %v2878, %v2936
        %v2938 = vmul.f32 %v2880, %v2936
        %v2939 = vmul.f32 %v2882, %v2936
        %v2940 = vmul.f32 %v2884, %v2936
        %v2941 = vmul.f32 %v2886, %v2936
        %v2942 = vadd.f32 %v2836, %v2937
        %v2943 = vadd.f32 %v2837, %v2938
        %v2944 = vadd.f32 %v2838, %v2939
        %v2945 = vadd.f32 %v2839, %v2940
        %v2946 = vadd.f32 %v2840, %v2941
        %s2947 = sld [smem:[#allocation2 + $0x135]]
        %v2948 = vstv %s2947
        %v2949 = vmul.f32 %v2878, %v2948
        %v2950 = vmul.f32 %v2880, %v2948
        %v2951 = vmul.f32 %v2882, %v2948
        %v2952 = vmul.f32 %v2884, %v2948
        %v2953 = vmul.f32 %v2886, %v2948
        %v2954 = vadd.f32 %v2848, %v2949
        %v2955 = vadd.f32 %v2849, %v2950
        %v2956 = vadd.f32 %v2850, %v2951
        %v2957 = vadd.f32 %v2851, %v2952
        %v2958 = vadd.f32 %v2852, %v2953
        %s2959 = sld [smem:[#allocation2 + $0x162]]
        %v2960 = vstv %s2959
        %v2961 = vmul.f32 %v2878, %v2960
        %v2962 = vmul.f32 %v2880, %v2960
        %v2963 = vmul.f32 %v2882, %v2960
        %v2964 = vmul.f32 %v2884, %v2960
        %v2965 = vmul.f32 %v2886, %v2960
        %v2966 = vadd.f32 %v2860, %v2961
        %v2967 = vadd.f32 %v2861, %v2962
        %v2968 = vadd.f32 %v2862, %v2963
        %v2969 = vadd.f32 %v2863, %v2964
        %v2970 = vadd.f32 %v2864, %v2965
        %s2971 = sld [smem:[#allocation2 + $0x18f]]
        %v2972 = vstv %s2971
        %v2973 = vmul.f32 %v2878, %v2972
        %v2974 = vmul.f32 %v2880, %v2972
        %v2975 = vmul.f32 %v2882, %v2972
        %v2976 = vmul.f32 %v2884, %v2972
        %v2977 = vmul.f32 %v2886, %v2972
        %v2978 = vadd.f32 %v2872, %v2973
        %v2979 = vadd.f32 %v2873, %v2974
        %v2980 = vadd.f32 %v2874, %v2975
        %v2981 = vadd.f32 %v2875, %v2976
        %v2982 = vadd.f32 %v2876, %v2977
        %2983 = vrot.lane.b32.xlu0 %v1013, 112
        %v2984 = vpop.permute.xlu0 %2983
        %2985 = vrot.lane.b32.xlu0 %v1014, 112
        %v2986 = vpop.permute.xlu0 %2985
        %2987 = vrot.lane.b32.xlu0 %v1015, 112
        %v2988 = vpop.permute.xlu0 %2987
        %2989 = vrot.lane.b32.xlu0 %v1016, 112
        %v2990 = vpop.permute.xlu0 %2989
        %2991 = vrot.lane.b32.xlu0 %v1017, 112
        %v2992 = vpop.permute.xlu0 %2991
        %s2993 = sld [smem:[#allocation2 + $0x55]]
        %v2994 = vstv %s2993
        %v2995 = vmul.f32 %v2984, %v2994
        %v2996 = vmul.f32 %v2986, %v2994
        %v2997 = vmul.f32 %v2988, %v2994
        %v2998 = vmul.f32 %v2990, %v2994
        %v2999 = vmul.f32 %v2992, %v2994
        %v3000 = vadd.f32 %v2894, %v2995
        %v3001 = vadd.f32 %v2895, %v2996
        %v3002 = vadd.f32 %v2896, %v2997
        %v3003 = vadd.f32 %v2897, %v2998
        %v3004 = vadd.f32 %v2898, %v2999
        %s3005 = sld [smem:[#allocation2 + $0x82]]
        %v3006 = vstv %s3005
        %v3007 = vmul.f32 %v2984, %v3006
        %v3008 = vmul.f32 %v2986, %v3006
        %v3009 = vmul.f32 %v2988, %v3006
        %v3010 = vmul.f32 %v2990, %v3006
        %v3011 = vmul.f32 %v2992, %v3006
        %v3012 = vadd.f32 %v2906, %v3007
        %v3013 = vadd.f32 %v2907, %v3008
        %v3014 = vadd.f32 %v2908, %v3009
        %v3015 = vadd.f32 %v2909, %v3010
        %v3016 = vadd.f32 %v2910, %v3011
        %s3017 = sld [smem:[#allocation2 + $0xaf]]
        %v3018 = vstv %s3017
        %v3019 = vmul.f32 %v2984, %v3018
        %v3020 = vmul.f32 %v2986, %v3018
        %v3021 = vmul.f32 %v2988, %v3018
        %v3022 = vmul.f32 %v2990, %v3018
        %v3023 = vmul.f32 %v2992, %v3018
        %v3024 = vadd.f32 %v2918, %v3019
        %v3025 = vadd.f32 %v2919, %v3020
        %v3026 = vadd.f32 %v2920, %v3021
        %v3027 = vadd.f32 %v2921, %v3022
        %v3028 = vadd.f32 %v2922, %v3023
        %s3029 = sld [smem:[#allocation2 + $0xdc]]
        %v3030 = vstv %s3029
        %v3031 = vmul.f32 %v2984, %v3030
        %v3032 = vmul.f32 %v2986, %v3030
        %v3033 = vmul.f32 %v2988, %v3030
        %v3034 = vmul.f32 %v2990, %v3030
        %v3035 = vmul.f32 %v2992, %v3030
        %v3036 = vadd.f32 %v2930, %v3031
        %v3037 = vadd.f32 %v2931, %v3032
        %v3038 = vadd.f32 %v2932, %v3033
        %v3039 = vadd.f32 %v2933, %v3034
        %v3040 = vadd.f32 %v2934, %v3035
        %s3041 = sld [smem:[#allocation2 + $0x109]]
        %v3042 = vstv %s3041
        %v3043 = vmul.f32 %v2984, %v3042
        %v3044 = vmul.f32 %v2986, %v3042
        %v3045 = vmul.f32 %v2988, %v3042
        %v3046 = vmul.f32 %v2990, %v3042
        %v3047 = vmul.f32 %v2992, %v3042
        %v3048 = vadd.f32 %v2942, %v3043
        %v3049 = vadd.f32 %v2943, %v3044
        %v3050 = vadd.f32 %v2944, %v3045
        %v3051 = vadd.f32 %v2945, %v3046
        %v3052 = vadd.f32 %v2946, %v3047
        %s3053 = sld [smem:[#allocation2 + $0x136]]
        %v3054 = vstv %s3053
        %v3055 = vmul.f32 %v2984, %v3054
        %v3056 = vmul.f32 %v2986, %v3054
        %v3057 = vmul.f32 %v2988, %v3054
        %v3058 = vmul.f32 %v2990, %v3054
        %v3059 = vmul.f32 %v2992, %v3054
        %v3060 = vadd.f32 %v2954, %v3055
        %v3061 = vadd.f32 %v2955, %v3056
        %v3062 = vadd.f32 %v2956, %v3057
        %v3063 = vadd.f32 %v2957, %v3058
        %v3064 = vadd.f32 %v2958, %v3059
        %s3065 = sld [smem:[#allocation2 + $0x163]]
        %v3066 = vstv %s3065
        %v3067 = vmul.f32 %v2984, %v3066
        %v3068 = vmul.f32 %v2986, %v3066
        %v3069 = vmul.f32 %v2988, %v3066
        %v3070 = vmul.f32 %v2990, %v3066
        %v3071 = vmul.f32 %v2992, %v3066
        %v3072 = vadd.f32 %v2966, %v3067
        %v3073 = vadd.f32 %v2967, %v3068
        %v3074 = vadd.f32 %v2968, %v3069
        %v3075 = vadd.f32 %v2969, %v3070
        %v3076 = vadd.f32 %v2970, %v3071
        %s3077 = sld [smem:[#allocation2 + $0x190]]
        %v3078 = vstv %s3077
        %v3079 = vmul.f32 %v2984, %v3078
        %v3080 = vmul.f32 %v2986, %v3078
        %v3081 = vmul.f32 %v2988, %v3078
        %v3082 = vmul.f32 %v2990, %v3078
        %v3083 = vmul.f32 %v2992, %v3078
        %v3084 = vadd.f32 %v2978, %v3079
        %v3085 = vadd.f32 %v2979, %v3080
        %v3086 = vadd.f32 %v2980, %v3081
        %v3087 = vadd.f32 %v2981, %v3082
        %v3088 = vadd.f32 %v2982, %v3083
        %3089 = vrot.lane.b32.xlu0 %v1013, 104
        %v3090 = vpop.permute.xlu0 %3089
        %3091 = vrot.lane.b32.xlu0 %v1014, 104
        %v3092 = vpop.permute.xlu0 %3091
        %3093 = vrot.lane.b32.xlu0 %v1015, 104
        %v3094 = vpop.permute.xlu0 %3093
        %3095 = vrot.lane.b32.xlu0 %v1016, 104
        %v3096 = vpop.permute.xlu0 %3095
        %3097 = vrot.lane.b32.xlu0 %v1017, 104
        %v3098 = vpop.permute.xlu0 %3097
        %s3099 = sld [smem:[#allocation2 + $0x56]]
        %v3100 = vstv %s3099
        %v3101 = vmul.f32 %v3090, %v3100
        %v3102 = vmul.f32 %v3092, %v3100
        %v3103 = vmul.f32 %v3094, %v3100
        %v3104 = vmul.f32 %v3096, %v3100
        %v3105 = vmul.f32 %v3098, %v3100
        %v3106 = vadd.f32 %v3000, %v3101
        %v3107 = vadd.f32 %v3001, %v3102
        %v3108 = vadd.f32 %v3002, %v3103
        %v3109 = vadd.f32 %v3003, %v3104
        %v3110 = vadd.f32 %v3004, %v3105
        %s3111 = sld [smem:[#allocation2 + $0x83]]
        %v3112 = vstv %s3111
        %v3113 = vmul.f32 %v3090, %v3112
        %v3114 = vmul.f32 %v3092, %v3112
        %v3115 = vmul.f32 %v3094, %v3112
        %v3116 = vmul.f32 %v3096, %v3112
        %v3117 = vmul.f32 %v3098, %v3112
        %v3118 = vadd.f32 %v3012, %v3113
        %v3119 = vadd.f32 %v3013, %v3114
        %v3120 = vadd.f32 %v3014, %v3115
        %v3121 = vadd.f32 %v3015, %v3116
        %v3122 = vadd.f32 %v3016, %v3117
        %s3123 = sld [smem:[#allocation2 + $0xb0]]
        %v3124 = vstv %s3123
        %v3125 = vmul.f32 %v3090, %v3124
        %v3126 = vmul.f32 %v3092, %v3124
        %v3127 = vmul.f32 %v3094, %v3124
        %v3128 = vmul.f32 %v3096, %v3124
        %v3129 = vmul.f32 %v3098, %v3124
        %v3130 = vadd.f32 %v3024, %v3125
        %v3131 = vadd.f32 %v3025, %v3126
        %v3132 = vadd.f32 %v3026, %v3127
        %v3133 = vadd.f32 %v3027, %v3128
        %v3134 = vadd.f32 %v3028, %v3129
        %s3135 = sld [smem:[#allocation2 + $0xdd]]
        %v3136 = vstv %s3135
        %v3137 = vmul.f32 %v3090, %v3136
        %v3138 = vmul.f32 %v3092, %v3136
        %v3139 = vmul.f32 %v3094, %v3136
        %v3140 = vmul.f32 %v3096, %v3136
        %v3141 = vmul.f32 %v3098, %v3136
        %v3142 = vadd.f32 %v3036, %v3137
        %v3143 = vadd.f32 %v3037, %v3138
        %v3144 = vadd.f32 %v3038, %v3139
        %v3145 = vadd.f32 %v3039, %v3140
        %v3146 = vadd.f32 %v3040, %v3141
        %s3147 = sld [smem:[#allocation2 + $0x10a]]
        %v3148 = vstv %s3147
        %v3149 = vmul.f32 %v3090, %v3148
        %v3150 = vmul.f32 %v3092, %v3148
        %v3151 = vmul.f32 %v3094, %v3148
        %v3152 = vmul.f32 %v3096, %v3148
        %v3153 = vmul.f32 %v3098, %v3148
        %v3154 = vadd.f32 %v3048, %v3149
        %v3155 = vadd.f32 %v3049, %v3150
        %v3156 = vadd.f32 %v3050, %v3151
        %v3157 = vadd.f32 %v3051, %v3152
        %v3158 = vadd.f32 %v3052, %v3153
        %s3159 = sld [smem:[#allocation2 + $0x137]]
        %v3160 = vstv %s3159
        %v3161 = vmul.f32 %v3090, %v3160
        %v3162 = vmul.f32 %v3092, %v3160
        %v3163 = vmul.f32 %v3094, %v3160
        %v3164 = vmul.f32 %v3096, %v3160
        %v3165 = vmul.f32 %v3098, %v3160
        %v3166 = vadd.f32 %v3060, %v3161
        %v3167 = vadd.f32 %v3061, %v3162
        %v3168 = vadd.f32 %v3062, %v3163
        %v3169 = vadd.f32 %v3063, %v3164
        %v3170 = vadd.f32 %v3064, %v3165
        %s3171 = sld [smem:[#allocation2 + $0x164]]
        %v3172 = vstv %s3171
        %v3173 = vmul.f32 %v3090, %v3172
        %v3174 = vmul.f32 %v3092, %v3172
        %v3175 = vmul.f32 %v3094, %v3172
        %v3176 = vmul.f32 %v3096, %v3172
        %v3177 = vmul.f32 %v3098, %v3172
        %v3178 = vadd.f32 %v3072, %v3173
        %v3179 = vadd.f32 %v3073, %v3174
        %v3180 = vadd.f32 %v3074, %v3175
        %v3181 = vadd.f32 %v3075, %v3176
        %v3182 = vadd.f32 %v3076, %v3177
        %s3183 = sld [smem:[#allocation2 + $0x191]]
        %v3184 = vstv %s3183
        %v3185 = vmul.f32 %v3090, %v3184
        %v3186 = vmul.f32 %v3092, %v3184
        %v3187 = vmul.f32 %v3094, %v3184
        %v3188 = vmul.f32 %v3096, %v3184
        %v3189 = vmul.f32 %v3098, %v3184
        %v3190 = vadd.f32 %v3084, %v3185
        %v3191 = vadd.f32 %v3085, %v3186
        %v3192 = vadd.f32 %v3086, %v3187
        %v3193 = vadd.f32 %v3087, %v3188
        %v3194 = vadd.f32 %v3088, %v3189
        %3195 = vrot.lane.b32.xlu0 %v1013, 96
        %v3196 = vpop.permute.xlu0 %3195
        %3197 = vrot.lane.b32.xlu0 %v1014, 96
        %v3198 = vpop.permute.xlu0 %3197
        %3199 = vrot.lane.b32.xlu0 %v1015, 96
        %v3200 = vpop.permute.xlu0 %3199
        %3201 = vrot.lane.b32.xlu0 %v1016, 96
        %v3202 = vpop.permute.xlu0 %3201
        %3203 = vrot.lane.b32.xlu0 %v1017, 96
        %v3204 = vpop.permute.xlu0 %3203
        %s3205 = sld [smem:[#allocation2 + $0x57]]
        %v3206 = vstv %s3205
        %v3207 = vmul.f32 %v3196, %v3206
        %v3208 = vmul.f32 %v3198, %v3206
        %v3209 = vmul.f32 %v3200, %v3206
        %v3210 = vmul.f32 %v3202, %v3206
        %v3211 = vmul.f32 %v3204, %v3206
        %v3212 = vadd.f32 %v3106, %v3207
        %v3213 = vadd.f32 %v3107, %v3208
        %v3214 = vadd.f32 %v3108, %v3209
        %v3215 = vadd.f32 %v3109, %v3210
        %v3216 = vadd.f32 %v3110, %v3211
        %s3217 = sld [smem:[#allocation2 + $0x84]]
        %v3218 = vstv %s3217
        %v3219 = vmul.f32 %v3196, %v3218
        %v3220 = vmul.f32 %v3198, %v3218
        %v3221 = vmul.f32 %v3200, %v3218
        %v3222 = vmul.f32 %v3202, %v3218
        %v3223 = vmul.f32 %v3204, %v3218
        %v3224 = vadd.f32 %v3118, %v3219
        %v3225 = vadd.f32 %v3119, %v3220
        %v3226 = vadd.f32 %v3120, %v3221
        %v3227 = vadd.f32 %v3121, %v3222
        %v3228 = vadd.f32 %v3122, %v3223
        %s3229 = sld [smem:[#allocation2 + $0xb1]]
        %v3230 = vstv %s3229
        %v3231 = vmul.f32 %v3196, %v3230
        %v3232 = vmul.f32 %v3198, %v3230
        %v3233 = vmul.f32 %v3200, %v3230
        %v3234 = vmul.f32 %v3202, %v3230
        %v3235 = vmul.f32 %v3204, %v3230
        %v3236 = vadd.f32 %v3130, %v3231
        %v3237 = vadd.f32 %v3131, %v3232
        %v3238 = vadd.f32 %v3132, %v3233
        %v3239 = vadd.f32 %v3133, %v3234
        %v3240 = vadd.f32 %v3134, %v3235
        %s3241 = sld [smem:[#allocation2 + $0xde]]
        %v3242 = vstv %s3241
        %v3243 = vmul.f32 %v3196, %v3242
        %v3244 = vmul.f32 %v3198, %v3242
        %v3245 = vmul.f32 %v3200, %v3242
        %v3246 = vmul.f32 %v3202, %v3242
        %v3247 = vmul.f32 %v3204, %v3242
        %v3248 = vadd.f32 %v3142, %v3243
        %v3249 = vadd.f32 %v3143, %v3244
        %v3250 = vadd.f32 %v3144, %v3245
        %v3251 = vadd.f32 %v3145, %v3246
        %v3252 = vadd.f32 %v3146, %v3247
        %s3253 = sld [smem:[#allocation2 + $0x10b]]
        %v3254 = vstv %s3253
        %v3255 = vmul.f32 %v3196, %v3254
        %v3256 = vmul.f32 %v3198, %v3254
        %v3257 = vmul.f32 %v3200, %v3254
        %v3258 = vmul.f32 %v3202, %v3254
        %v3259 = vmul.f32 %v3204, %v3254
        %v3260 = vadd.f32 %v3154, %v3255
        %v3261 = vadd.f32 %v3155, %v3256
        %v3262 = vadd.f32 %v3156, %v3257
        %v3263 = vadd.f32 %v3157, %v3258
        %v3264 = vadd.f32 %v3158, %v3259
        %s3265 = sld [smem:[#allocation2 + $0x138]]
        %v3266 = vstv %s3265
        %v3267 = vmul.f32 %v3196, %v3266
        %v3268 = vmul.f32 %v3198, %v3266
        %v3269 = vmul.f32 %v3200, %v3266
        %v3270 = vmul.f32 %v3202, %v3266
        %v3271 = vmul.f32 %v3204, %v3266
        %v3272 = vadd.f32 %v3166, %v3267
        %v3273 = vadd.f32 %v3167, %v3268
        %v3274 = vadd.f32 %v3168, %v3269
        %v3275 = vadd.f32 %v3169, %v3270
        %v3276 = vadd.f32 %v3170, %v3271
        %s3277 = sld [smem:[#allocation2 + $0x165]]
        %v3278 = vstv %s3277
        %v3279 = vmul.f32 %v3196, %v3278
        %v3280 = vmul.f32 %v3198, %v3278
        %v3281 = vmul.f32 %v3200, %v3278
        %v3282 = vmul.f32 %v3202, %v3278
        %v3283 = vmul.f32 %v3204, %v3278
        %v3284 = vadd.f32 %v3178, %v3279
        %v3285 = vadd.f32 %v3179, %v3280
        %v3286 = vadd.f32 %v3180, %v3281
        %v3287 = vadd.f32 %v3181, %v3282
        %v3288 = vadd.f32 %v3182, %v3283
        %s3289 = sld [smem:[#allocation2 + $0x192]]
        %v3290 = vstv %s3289
        %v3291 = vmul.f32 %v3196, %v3290
        %v3292 = vmul.f32 %v3198, %v3290
        %v3293 = vmul.f32 %v3200, %v3290
        %v3294 = vmul.f32 %v3202, %v3290
        %v3295 = vmul.f32 %v3204, %v3290
        %v3296 = vadd.f32 %v3190, %v3291
        %v3297 = vadd.f32 %v3191, %v3292
        %v3298 = vadd.f32 %v3192, %v3293
        %v3299 = vadd.f32 %v3193, %v3294
        %v3300 = vadd.f32 %v3194, %v3295
        %3301 = vrot.lane.b32.xlu0 %v1158, 32
        %v3302 = vpop.permute.xlu0 %3301
        %3303 = vrot.lane.b32.xlu0 %v1159, 32
        %v3304 = vpop.permute.xlu0 %3303
        %3305 = vrot.lane.b32.xlu0 %v1160, 32
        %v3306 = vpop.permute.xlu0 %3305
        %3307 = vrot.lane.b32.xlu0 %v1161, 32
        %v3308 = vpop.permute.xlu0 %3307
        %3309 = vrot.lane.b32.xlu0 %v1162, 32
        %v3310 = vpop.permute.xlu0 %3309
        %s3311 = sld [smem:[#allocation2 + $0x58]]
        %v3312 = vstv %s3311
        %v3313 = vmul.f32 %v3302, %v3312
        %v3314 = vmul.f32 %v3304, %v3312
        %v3315 = vmul.f32 %v3306, %v3312
        %v3316 = vmul.f32 %v3308, %v3312
        %v3317 = vmul.f32 %v3310, %v3312
        %v3318 = vadd.f32 %v3212, %v3313
        %v3319 = vadd.f32 %v3213, %v3314
        %v3320 = vadd.f32 %v3214, %v3315
        %v3321 = vadd.f32 %v3215, %v3316
        %v3322 = vadd.f32 %v3216, %v3317
        %s3323 = sld [smem:[#allocation2 + $0x85]]
        %v3324 = vstv %s3323
        %v3325 = vmul.f32 %v3302, %v3324
        %v3326 = vmul.f32 %v3304, %v3324
        %v3327 = vmul.f32 %v3306, %v3324
        %v3328 = vmul.f32 %v3308, %v3324
        %v3329 = vmul.f32 %v3310, %v3324
        %v3330 = vadd.f32 %v3224, %v3325
        %v3331 = vadd.f32 %v3225, %v3326
        %v3332 = vadd.f32 %v3226, %v3327
        %v3333 = vadd.f32 %v3227, %v3328
        %v3334 = vadd.f32 %v3228, %v3329
        %s3335 = sld [smem:[#allocation2 + $0xb2]]
        %v3336 = vstv %s3335
        %v3337 = vmul.f32 %v3302, %v3336
        %v3338 = vmul.f32 %v3304, %v3336
        %v3339 = vmul.f32 %v3306, %v3336
        %v3340 = vmul.f32 %v3308, %v3336
        %v3341 = vmul.f32 %v3310, %v3336
        %v3342 = vadd.f32 %v3236, %v3337
        %v3343 = vadd.f32 %v3237, %v3338
        %v3344 = vadd.f32 %v3238, %v3339
        %v3345 = vadd.f32 %v3239, %v3340
        %v3346 = vadd.f32 %v3240, %v3341
        %s3347 = sld [smem:[#allocation2 + $0xdf]]
        %v3348 = vstv %s3347
        %v3349 = vmul.f32 %v3302, %v3348
        %v3350 = vmul.f32 %v3304, %v3348
        %v3351 = vmul.f32 %v3306, %v3348
        %v3352 = vmul.f32 %v3308, %v3348
        %v3353 = vmul.f32 %v3310, %v3348
        %v3354 = vadd.f32 %v3248, %v3349
        %v3355 = vadd.f32 %v3249, %v3350
        %v3356 = vadd.f32 %v3250, %v3351
        %v3357 = vadd.f32 %v3251, %v3352
        %v3358 = vadd.f32 %v3252, %v3353
        %s3359 = sld [smem:[#allocation2 + $0x10c]]
        %v3360 = vstv %s3359
        %v3361 = vmul.f32 %v3302, %v3360
        %v3362 = vmul.f32 %v3304, %v3360
        %v3363 = vmul.f32 %v3306, %v3360
        %v3364 = vmul.f32 %v3308, %v3360
        %v3365 = vmul.f32 %v3310, %v3360
        %v3366 = vadd.f32 %v3260, %v3361
        %v3367 = vadd.f32 %v3261, %v3362
        %v3368 = vadd.f32 %v3262, %v3363
        %v3369 = vadd.f32 %v3263, %v3364
        %v3370 = vadd.f32 %v3264, %v3365
        %s3371 = sld [smem:[#allocation2 + $0x139]]
        %v3372 = vstv %s3371
        %v3373 = vmul.f32 %v3302, %v3372
        %v3374 = vmul.f32 %v3304, %v3372
        %v3375 = vmul.f32 %v3306, %v3372
        %v3376 = vmul.f32 %v3308, %v3372
        %v3377 = vmul.f32 %v3310, %v3372
        %v3378 = vadd.f32 %v3272, %v3373
        %v3379 = vadd.f32 %v3273, %v3374
        %v3380 = vadd.f32 %v3274, %v3375
        %v3381 = vadd.f32 %v3275, %v3376
        %v3382 = vadd.f32 %v3276, %v3377
        %s3383 = sld [smem:[#allocation2 + $0x166]]
        %v3384 = vstv %s3383
        %v3385 = vmul.f32 %v3302, %v3384
        %v3386 = vmul.f32 %v3304, %v3384
        %v3387 = vmul.f32 %v3306, %v3384
        %v3388 = vmul.f32 %v3308, %v3384
        %v3389 = vmul.f32 %v3310, %v3384
        %v3390 = vadd.f32 %v3284, %v3385
        %v3391 = vadd.f32 %v3285, %v3386
        %v3392 = vadd.f32 %v3286, %v3387
        %v3393 = vadd.f32 %v3287, %v3388
        %v3394 = vadd.f32 %v3288, %v3389
        %s3395 = sld [smem:[#allocation2 + $0x193]]
        %v3396 = vstv %s3395
        %v3397 = vmul.f32 %v3302, %v3396
        %v3398 = vmul.f32 %v3304, %v3396
        %v3399 = vmul.f32 %v3306, %v3396
        %v3400 = vmul.f32 %v3308, %v3396
        %v3401 = vmul.f32 %v3310, %v3396
        %v3402 = vadd.f32 %v3296, %v3397
        %v3403 = vadd.f32 %v3297, %v3398
        %v3404 = vadd.f32 %v3298, %v3399
        %v3405 = vadd.f32 %v3299, %v3400
        %v3406 = vadd.f32 %v3300, %v3401
        %3407 = vrot.lane.b32.xlu0 %v1158, 24
        %v3408 = vpop.permute.xlu0 %3407
        %3409 = vrot.lane.b32.xlu0 %v1159, 24
        %v3410 = vpop.permute.xlu0 %3409
        %3411 = vrot.lane.b32.xlu0 %v1160, 24
        %v3412 = vpop.permute.xlu0 %3411
        %3413 = vrot.lane.b32.xlu0 %v1161, 24
        %v3414 = vpop.permute.xlu0 %3413
        %3415 = vrot.lane.b32.xlu0 %v1162, 24
        %v3416 = vpop.permute.xlu0 %3415
        %s3417 = sld [smem:[#allocation2 + $0x59]]
        %v3418 = vstv %s3417
        %v3419 = vmul.f32 %v3408, %v3418
        %v3420 = vmul.f32 %v3410, %v3418
        %v3421 = vmul.f32 %v3412, %v3418
        %v3422 = vmul.f32 %v3414, %v3418
        %v3423 = vmul.f32 %v3416, %v3418
        %v3424 = vadd.f32 %v3318, %v3419
        %v3425 = vadd.f32 %v3319, %v3420
        %v3426 = vadd.f32 %v3320, %v3421
        %v3427 = vadd.f32 %v3321, %v3422
        %v3428 = vadd.f32 %v3322, %v3423
        %s3429 = sld [smem:[#allocation2 + $0x86]]
        %v3430 = vstv %s3429
        %v3431 = vmul.f32 %v3408, %v3430
        %v3432 = vmul.f32 %v3410, %v3430
        %v3433 = vmul.f32 %v3412, %v3430
        %v3434 = vmul.f32 %v3414, %v3430
        %v3435 = vmul.f32 %v3416, %v3430
        %v3436 = vadd.f32 %v3330, %v3431
        %v3437 = vadd.f32 %v3331, %v3432
        %v3438 = vadd.f32 %v3332, %v3433
        %v3439 = vadd.f32 %v3333, %v3434
        %v3440 = vadd.f32 %v3334, %v3435
        %s3441 = sld [smem:[#allocation2 + $0xb3]]
        %v3442 = vstv %s3441
        %v3443 = vmul.f32 %v3408, %v3442
        %v3444 = vmul.f32 %v3410, %v3442
        %v3445 = vmul.f32 %v3412, %v3442
        %v3446 = vmul.f32 %v3414, %v3442
        %v3447 = vmul.f32 %v3416, %v3442
        %v3448 = vadd.f32 %v3342, %v3443
        %v3449 = vadd.f32 %v3343, %v3444
        %v3450 = vadd.f32 %v3344, %v3445
        %v3451 = vadd.f32 %v3345, %v3446
        %v3452 = vadd.f32 %v3346, %v3447
        %s3453 = sld [smem:[#allocation2 + $0xe0]]
        %v3454 = vstv %s3453
        %v3455 = vmul.f32 %v3408, %v3454
        %v3456 = vmul.f32 %v3410, %v3454
        %v3457 = vmul.f32 %v3412, %v3454
        %v3458 = vmul.f32 %v3414, %v3454
        %v3459 = vmul.f32 %v3416, %v3454
        %v3460 = vadd.f32 %v3354, %v3455
        %v3461 = vadd.f32 %v3355, %v3456
        %v3462 = vadd.f32 %v3356, %v3457
        %v3463 = vadd.f32 %v3357, %v3458
        %v3464 = vadd.f32 %v3358, %v3459
        %s3465 = sld [smem:[#allocation2 + $0x10d]]
        %v3466 = vstv %s3465
        %v3467 = vmul.f32 %v3408, %v3466
        %v3468 = vmul.f32 %v3410, %v3466
        %v3469 = vmul.f32 %v3412, %v3466
        %v3470 = vmul.f32 %v3414, %v3466
        %v3471 = vmul.f32 %v3416, %v3466
        %v3472 = vadd.f32 %v3366, %v3467
        %v3473 = vadd.f32 %v3367, %v3468
        %v3474 = vadd.f32 %v3368, %v3469
        %v3475 = vadd.f32 %v3369, %v3470
        %v3476 = vadd.f32 %v3370, %v3471
        %s3477 = sld [smem:[#allocation2 + $0x13a]]
        %v3478 = vstv %s3477
        %v3479 = vmul.f32 %v3408, %v3478
        %v3480 = vmul.f32 %v3410, %v3478
        %v3481 = vmul.f32 %v3412, %v3478
        %v3482 = vmul.f32 %v3414, %v3478
        %v3483 = vmul.f32 %v3416, %v3478
        %v3484 = vadd.f32 %v3378, %v3479
        %v3485 = vadd.f32 %v3379, %v3480
        %v3486 = vadd.f32 %v3380, %v3481
        %v3487 = vadd.f32 %v3381, %v3482
        %v3488 = vadd.f32 %v3382, %v3483
        %s3489 = sld [smem:[#allocation2 + $0x167]]
        %v3490 = vstv %s3489
        %v3491 = vmul.f32 %v3408, %v3490
        %v3492 = vmul.f32 %v3410, %v3490
        %v3493 = vmul.f32 %v3412, %v3490
        %v3494 = vmul.f32 %v3414, %v3490
        %v3495 = vmul.f32 %v3416, %v3490
        %v3496 = vadd.f32 %v3390, %v3491
        %v3497 = vadd.f32 %v3391, %v3492
        %v3498 = vadd.f32 %v3392, %v3493
        %v3499 = vadd.f32 %v3393, %v3494
        %v3500 = vadd.f32 %v3394, %v3495
        %s3501 = sld [smem:[#allocation2 + $0x194]]
        %v3502 = vstv %s3501
        %v3503 = vmul.f32 %v3408, %v3502
        %v3504 = vmul.f32 %v3410, %v3502
        %v3505 = vmul.f32 %v3412, %v3502
        %v3506 = vmul.f32 %v3414, %v3502
        %v3507 = vmul.f32 %v3416, %v3502
        %v3508 = vadd.f32 %v3402, %v3503
        %v3509 = vadd.f32 %v3403, %v3504
        %v3510 = vadd.f32 %v3404, %v3505
        %v3511 = vadd.f32 %v3405, %v3506
        %v3512 = vadd.f32 %v3406, %v3507
        %3513 = vrot.lane.b32.xlu0 %v1158, 16
        %v3514 = vpop.permute.xlu0 %3513
        %3515 = vrot.lane.b32.xlu0 %v1159, 16
        %v3516 = vpop.permute.xlu0 %3515
        %3517 = vrot.lane.b32.xlu0 %v1160, 16
        %v3518 = vpop.permute.xlu0 %3517
        %3519 = vrot.lane.b32.xlu0 %v1161, 16
        %v3520 = vpop.permute.xlu0 %3519
        %3521 = vrot.lane.b32.xlu0 %v1162, 16
        %v3522 = vpop.permute.xlu0 %3521
        %s3523 = sld [smem:[#allocation2 + $0x5a]]
        %v3524 = vstv %s3523
        %v3525 = vmul.f32 %v3514, %v3524
        %v3526 = vmul.f32 %v3516, %v3524
        %v3527 = vmul.f32 %v3518, %v3524
        %v3528 = vmul.f32 %v3520, %v3524
        %v3529 = vmul.f32 %v3522, %v3524
        %v3530 = vadd.f32 %v3424, %v3525
        %v3531 = vadd.f32 %v3425, %v3526
        %v3532 = vadd.f32 %v3426, %v3527
        %v3533 = vadd.f32 %v3427, %v3528
        %v3534 = vadd.f32 %v3428, %v3529
        %s3535 = sld [smem:[#allocation2 + $0x87]]
        %v3536 = vstv %s3535
        %v3537 = vmul.f32 %v3514, %v3536
        %v3538 = vmul.f32 %v3516, %v3536
        %v3539 = vmul.f32 %v3518, %v3536
        %v3540 = vmul.f32 %v3520, %v3536
        %v3541 = vmul.f32 %v3522, %v3536
        %v3542 = vadd.f32 %v3436, %v3537
        %v3543 = vadd.f32 %v3437, %v3538
        %v3544 = vadd.f32 %v3438, %v3539
        %v3545 = vadd.f32 %v3439, %v3540
        %v3546 = vadd.f32 %v3440, %v3541
        %s3547 = sld [smem:[#allocation2 + $0xb4]]
        %v3548 = vstv %s3547
        %v3549 = vmul.f32 %v3514, %v3548
        %v3550 = vmul.f32 %v3516, %v3548
        %v3551 = vmul.f32 %v3518, %v3548
        %v3552 = vmul.f32 %v3520, %v3548
        %v3553 = vmul.f32 %v3522, %v3548
        %v3554 = vadd.f32 %v3448, %v3549
        %v3555 = vadd.f32 %v3449, %v3550
        %v3556 = vadd.f32 %v3450, %v3551
        %v3557 = vadd.f32 %v3451, %v3552
        %v3558 = vadd.f32 %v3452, %v3553
        %s3559 = sld [smem:[#allocation2 + $0xe1]]
        %v3560 = vstv %s3559
        %v3561 = vmul.f32 %v3514, %v3560
        %v3562 = vmul.f32 %v3516, %v3560
        %v3563 = vmul.f32 %v3518, %v3560
        %v3564 = vmul.f32 %v3520, %v3560
        %v3565 = vmul.f32 %v3522, %v3560
        %v3566 = vadd.f32 %v3460, %v3561
        %v3567 = vadd.f32 %v3461, %v3562
        %v3568 = vadd.f32 %v3462, %v3563
        %v3569 = vadd.f32 %v3463, %v3564
        %v3570 = vadd.f32 %v3464, %v3565
        %s3571 = sld [smem:[#allocation2 + $0x10e]]
        %v3572 = vstv %s3571
        %v3573 = vmul.f32 %v3514, %v3572
        %v3574 = vmul.f32 %v3516, %v3572
        %v3575 = vmul.f32 %v3518, %v3572
        %v3576 = vmul.f32 %v3520, %v3572
        %v3577 = vmul.f32 %v3522, %v3572
        %v3578 = vadd.f32 %v3472, %v3573
        %v3579 = vadd.f32 %v3473, %v3574
        %v3580 = vadd.f32 %v3474, %v3575
        %v3581 = vadd.f32 %v3475, %v3576
        %v3582 = vadd.f32 %v3476, %v3577
        %s3583 = sld [smem:[#allocation2 + $0x13b]]
        %v3584 = vstv %s3583
        %v3585 = vmul.f32 %v3514, %v3584
        %v3586 = vmul.f32 %v3516, %v3584
        %v3587 = vmul.f32 %v3518, %v3584
        %v3588 = vmul.f32 %v3520, %v3584
        %v3589 = vmul.f32 %v3522, %v3584
        %v3590 = vadd.f32 %v3484, %v3585
        %v3591 = vadd.f32 %v3485, %v3586
        %v3592 = vadd.f32 %v3486, %v3587
        %v3593 = vadd.f32 %v3487, %v3588
        %v3594 = vadd.f32 %v3488, %v3589
        %s3595 = sld [smem:[#allocation2 + $0x168]]
        %v3596 = vstv %s3595
        %v3597 = vmul.f32 %v3514, %v3596
        %v3598 = vmul.f32 %v3516, %v3596
        %v3599 = vmul.f32 %v3518, %v3596
        %v3600 = vmul.f32 %v3520, %v3596
        %v3601 = vmul.f32 %v3522, %v3596
        %v3602 = vadd.f32 %v3496, %v3597
        %v3603 = vadd.f32 %v3497, %v3598
        %v3604 = vadd.f32 %v3498, %v3599
        %v3605 = vadd.f32 %v3499, %v3600
        %v3606 = vadd.f32 %v3500, %v3601
        %s3607 = sld [smem:[#allocation2 + $0x195]]
        %v3608 = vstv %s3607
        %v3609 = vmul.f32 %v3514, %v3608
        %v3610 = vmul.f32 %v3516, %v3608
        %v3611 = vmul.f32 %v3518, %v3608
        %v3612 = vmul.f32 %v3520, %v3608
        %v3613 = vmul.f32 %v3522, %v3608
        %v3614 = vadd.f32 %v3508, %v3609
        %v3615 = vadd.f32 %v3509, %v3610
        %v3616 = vadd.f32 %v3510, %v3611
        %v3617 = vadd.f32 %v3511, %v3612
        %v3618 = vadd.f32 %v3512, %v3613
        %3619 = vrot.lane.b32.xlu0 %v1158, 8
        %v3620 = vpop.permute.xlu0 %3619
        %3621 = vrot.lane.b32.xlu0 %v1159, 8
        %v3622 = vpop.permute.xlu0 %3621
        %3623 = vrot.lane.b32.xlu0 %v1160, 8
        %v3624 = vpop.permute.xlu0 %3623
        %3625 = vrot.lane.b32.xlu0 %v1161, 8
        %v3626 = vpop.permute.xlu0 %3625
        %3627 = vrot.lane.b32.xlu0 %v1162, 8
        %v3628 = vpop.permute.xlu0 %3627
        %s3629 = sld [smem:[#allocation2 + $0x5b]]
        %v3630 = vstv %s3629
        %v3631 = vmul.f32 %v3620, %v3630
        %v3632 = vmul.f32 %v3622, %v3630
        %v3633 = vmul.f32 %v3624, %v3630
        %v3634 = vmul.f32 %v3626, %v3630
        %v3635 = vmul.f32 %v3628, %v3630
        %v3636 = vadd.f32 %v3530, %v3631
        %v3637 = vadd.f32 %v3531, %v3632
        %v3638 = vadd.f32 %v3532, %v3633
        %v3639 = vadd.f32 %v3533, %v3634
        %v3640 = vadd.f32 %v3534, %v3635
        %s3641 = sld [smem:[#allocation2 + $0x88]]
        %v3642 = vstv %s3641
        %v3643 = vmul.f32 %v3620, %v3642
        %v3644 = vmul.f32 %v3622, %v3642
        %v3645 = vmul.f32 %v3624, %v3642
        %v3646 = vmul.f32 %v3626, %v3642
        %v3647 = vmul.f32 %v3628, %v3642
        %v3648 = vadd.f32 %v3542, %v3643
        %v3649 = vadd.f32 %v3543, %v3644
        %v3650 = vadd.f32 %v3544, %v3645
        %v3651 = vadd.f32 %v3545, %v3646
        %v3652 = vadd.f32 %v3546, %v3647
        %s3653 = sld [smem:[#allocation2 + $0xb5]]
        %v3654 = vstv %s3653
        %v3655 = vmul.f32 %v3620, %v3654
        %v3656 = vmul.f32 %v3622, %v3654
        %v3657 = vmul.f32 %v3624, %v3654
        %v3658 = vmul.f32 %v3626, %v3654
        %v3659 = vmul.f32 %v3628, %v3654
        %v3660 = vadd.f32 %v3554, %v3655
        %v3661 = vadd.f32 %v3555, %v3656
        %v3662 = vadd.f32 %v3556, %v3657
        %v3663 = vadd.f32 %v3557, %v3658
        %v3664 = vadd.f32 %v3558, %v3659
        %s3665 = sld [smem:[#allocation2 + $0xe2]]
        %v3666 = vstv %s3665
        %v3667 = vmul.f32 %v3620, %v3666
        %v3668 = vmul.f32 %v3622, %v3666
        %v3669 = vmul.f32 %v3624, %v3666
        %v3670 = vmul.f32 %v3626, %v3666
        %v3671 = vmul.f32 %v3628, %v3666
        %v3672 = vadd.f32 %v3566, %v3667
        %v3673 = vadd.f32 %v3567, %v3668
        %v3674 = vadd.f32 %v3568, %v3669
        %v3675 = vadd.f32 %v3569, %v3670
        %v3676 = vadd.f32 %v3570, %v3671
        %s3677 = sld [smem:[#allocation2 + $0x10f]]
        %v3678 = vstv %s3677
        %v3679 = vmul.f32 %v3620, %v3678
        %v3680 = vmul.f32 %v3622, %v3678
        %v3681 = vmul.f32 %v3624, %v3678
        %v3682 = vmul.f32 %v3626, %v3678
        %v3683 = vmul.f32 %v3628, %v3678
        %v3684 = vadd.f32 %v3578, %v3679
        %v3685 = vadd.f32 %v3579, %v3680
        %v3686 = vadd.f32 %v3580, %v3681
        %v3687 = vadd.f32 %v3581, %v3682
        %v3688 = vadd.f32 %v3582, %v3683
        %s3689 = sld [smem:[#allocation2 + $0x13c]]
        %v3690 = vstv %s3689
        %v3691 = vmul.f32 %v3620, %v3690
        %v3692 = vmul.f32 %v3622, %v3690
        %v3693 = vmul.f32 %v3624, %v3690
        %v3694 = vmul.f32 %v3626, %v3690
        %v3695 = vmul.f32 %v3628, %v3690
        %v3696 = vadd.f32 %v3590, %v3691
        %v3697 = vadd.f32 %v3591, %v3692
        %v3698 = vadd.f32 %v3592, %v3693
        %v3699 = vadd.f32 %v3593, %v3694
        %v3700 = vadd.f32 %v3594, %v3695
        %s3701 = sld [smem:[#allocation2 + $0x169]]
        %v3702 = vstv %s3701
        %v3703 = vmul.f32 %v3620, %v3702
        %v3704 = vmul.f32 %v3622, %v3702
        %v3705 = vmul.f32 %v3624, %v3702
        %v3706 = vmul.f32 %v3626, %v3702
        %v3707 = vmul.f32 %v3628, %v3702
        %v3708 = vadd.f32 %v3602, %v3703
        %v3709 = vadd.f32 %v3603, %v3704
        %v3710 = vadd.f32 %v3604, %v3705
        %v3711 = vadd.f32 %v3605, %v3706
        %v3712 = vadd.f32 %v3606, %v3707
        %s3713 = sld [smem:[#allocation2 + $0x196]]
        %v3714 = vstv %s3713
        %v3715 = vmul.f32 %v3620, %v3714
        %v3716 = vmul.f32 %v3622, %v3714
        %v3717 = vmul.f32 %v3624, %v3714
        %v3718 = vmul.f32 %v3626, %v3714
        %v3719 = vmul.f32 %v3628, %v3714
        %v3720 = vadd.f32 %v3614, %v3715
        %v3721 = vadd.f32 %v3615, %v3716
        %v3722 = vadd.f32 %v3616, %v3717
        %v3723 = vadd.f32 %v3617, %v3718
        %v3724 = vadd.f32 %v3618, %v3719
        %s3725 = sld [smem:[#allocation2 + $0x5c]]
        %v3726 = vstv %s3725
        %v3727 = vmul.f32 %v1158, %v3726
        %v3728 = vmul.f32 %v1159, %v3726
        %v3729 = vmul.f32 %v1160, %v3726
        %v3730 = vmul.f32 %v1161, %v3726
        %v3731 = vmul.f32 %v1162, %v3726
        %v3732 = vadd.f32 %v3636, %v3727
        %v3733 = vadd.f32 %v3637, %v3728
        %v3734 = vadd.f32 %v3638, %v3729
        %v3735 = vadd.f32 %v3639, %v3730
        %v3736 = vadd.f32 %v3640, %v3731
        %s3737 = sld [smem:[#allocation2 + $0x89]]
        %v3738 = vstv %s3737
        %v3739 = vmul.f32 %v1158, %v3738
        %v3740 = vmul.f32 %v1159, %v3738
        %v3741 = vmul.f32 %v1160, %v3738
        %v3742 = vmul.f32 %v1161, %v3738
        %v3743 = vmul.f32 %v1162, %v3738
        %v3744 = vadd.f32 %v3648, %v3739
        %v3745 = vadd.f32 %v3649, %v3740
        %v3746 = vadd.f32 %v3650, %v3741
        %v3747 = vadd.f32 %v3651, %v3742
        %v3748 = vadd.f32 %v3652, %v3743
        %s3749 = sld [smem:[#allocation2 + $0xb6]]
        %v3750 = vstv %s3749
        %v3751 = vmul.f32 %v1158, %v3750
        %v3752 = vmul.f32 %v1159, %v3750
        %v3753 = vmul.f32 %v1160, %v3750
        %v3754 = vmul.f32 %v1161, %v3750
        %v3755 = vmul.f32 %v1162, %v3750
        %v3756 = vadd.f32 %v3660, %v3751
        %v3757 = vadd.f32 %v3661, %v3752
        %v3758 = vadd.f32 %v3662, %v3753
        %v3759 = vadd.f32 %v3663, %v3754
        %v3760 = vadd.f32 %v3664, %v3755
        %s3761 = sld [smem:[#allocation2 + $0xe3]]
        %v3762 = vstv %s3761
        %v3763 = vmul.f32 %v1158, %v3762
        %v3764 = vmul.f32 %v1159, %v3762
        %v3765 = vmul.f32 %v1160, %v3762
        %v3766 = vmul.f32 %v1161, %v3762
        %v3767 = vmul.f32 %v1162, %v3762
        %v3768 = vadd.f32 %v3672, %v3763
        %v3769 = vadd.f32 %v3673, %v3764
        %v3770 = vadd.f32 %v3674, %v3765
        %v3771 = vadd.f32 %v3675, %v3766
        %v3772 = vadd.f32 %v3676, %v3767
        %s3773 = sld [smem:[#allocation2 + $0x110]]
        %v3774 = vstv %s3773
        %v3775 = vmul.f32 %v1158, %v3774
        %v3776 = vmul.f32 %v1159, %v3774
        %v3777 = vmul.f32 %v1160, %v3774
        %v3778 = vmul.f32 %v1161, %v3774
        %v3779 = vmul.f32 %v1162, %v3774
        %v3780 = vadd.f32 %v3684, %v3775
        %v3781 = vadd.f32 %v3685, %v3776
        %v3782 = vadd.f32 %v3686, %v3777
        %v3783 = vadd.f32 %v3687, %v3778
        %v3784 = vadd.f32 %v3688, %v3779
        %s3785 = sld [smem:[#allocation2 + $0x13d]]
        %v3786 = vstv %s3785
        %v3787 = vmul.f32 %v1158, %v3786
        %v3788 = vmul.f32 %v1159, %v3786
        %v3789 = vmul.f32 %v1160, %v3786
        %v3790 = vmul.f32 %v1161, %v3786
        %v3791 = vmul.f32 %v1162, %v3786
        %v3792 = vadd.f32 %v3696, %v3787
        %v3793 = vadd.f32 %v3697, %v3788
        %v3794 = vadd.f32 %v3698, %v3789
        %v3795 = vadd.f32 %v3699, %v3790
        %v3796 = vadd.f32 %v3700, %v3791
        %s3797 = sld [smem:[#allocation2 + $0x16a]]
        %v3798 = vstv %s3797
        %v3799 = vmul.f32 %v1158, %v3798
        %v3800 = vmul.f32 %v1159, %v3798
        %v3801 = vmul.f32 %v1160, %v3798
        %v3802 = vmul.f32 %v1161, %v3798
        %v3803 = vmul.f32 %v1162, %v3798
        %v3804 = vadd.f32 %v3708, %v3799
        %v3805 = vadd.f32 %v3709, %v3800
        %v3806 = vadd.f32 %v3710, %v3801
        %v3807 = vadd.f32 %v3711, %v3802
        %v3808 = vadd.f32 %v3712, %v3803
        %s3809 = sld [smem:[#allocation2 + $0x197]]
        %v3810 = vstv %s3809
        %v3811 = vmul.f32 %v1158, %v3810
        %v3812 = vmul.f32 %v1159, %v3810
        %v3813 = vmul.f32 %v1160, %v3810
        %v3814 = vmul.f32 %v1161, %v3810
        %v3815 = vmul.f32 %v1162, %v3810
        %v3816 = vadd.f32 %v3720, %v3811
        %v3817 = vadd.f32 %v3721, %v3812
        %v3818 = vadd.f32 %v3722, %v3813
        %v3819 = vadd.f32 %v3723, %v3814
        %v3820 = vadd.f32 %v3724, %v3815
        %3821 = vrot.lane.b32.xlu0 %v1158, 120
        %v3822 = vpop.permute.xlu0 %3821
        %3823 = vrot.lane.b32.xlu0 %v1159, 120
        %v3824 = vpop.permute.xlu0 %3823
        %3825 = vrot.lane.b32.xlu0 %v1160, 120
        %v3826 = vpop.permute.xlu0 %3825
        %3827 = vrot.lane.b32.xlu0 %v1161, 120
        %v3828 = vpop.permute.xlu0 %3827
        %3829 = vrot.lane.b32.xlu0 %v1162, 120
        %v3830 = vpop.permute.xlu0 %3829
        %s3831 = sld [smem:[#allocation2 + $0x5d]]
        %v3832 = vstv %s3831
        %v3833 = vmul.f32 %v3822, %v3832
        %v3834 = vmul.f32 %v3824, %v3832
        %v3835 = vmul.f32 %v3826, %v3832
        %v3836 = vmul.f32 %v3828, %v3832
        %v3837 = vmul.f32 %v3830, %v3832
        %v3838 = vadd.f32 %v3732, %v3833
        %v3839 = vadd.f32 %v3733, %v3834
        %v3840 = vadd.f32 %v3734, %v3835
        %v3841 = vadd.f32 %v3735, %v3836
        %v3842 = vadd.f32 %v3736, %v3837
        %s3843 = sld [smem:[#allocation2 + $0x8a]]
        %v3844 = vstv %s3843
        %v3845 = vmul.f32 %v3822, %v3844
        %v3846 = vmul.f32 %v3824, %v3844
        %v3847 = vmul.f32 %v3826, %v3844
        %v3848 = vmul.f32 %v3828, %v3844
        %v3849 = vmul.f32 %v3830, %v3844
        %v3850 = vadd.f32 %v3744, %v3845
        %v3851 = vadd.f32 %v3745, %v3846
        %v3852 = vadd.f32 %v3746, %v3847
        %v3853 = vadd.f32 %v3747, %v3848
        %v3854 = vadd.f32 %v3748, %v3849
        %s3855 = sld [smem:[#allocation2 + $0xb7]]
        %v3856 = vstv %s3855
        %v3857 = vmul.f32 %v3822, %v3856
        %v3858 = vmul.f32 %v3824, %v3856
        %v3859 = vmul.f32 %v3826, %v3856
        %v3860 = vmul.f32 %v3828, %v3856
        %v3861 = vmul.f32 %v3830, %v3856
        %v3862 = vadd.f32 %v3756, %v3857
        %v3863 = vadd.f32 %v3757, %v3858
        %v3864 = vadd.f32 %v3758, %v3859
        %v3865 = vadd.f32 %v3759, %v3860
        %v3866 = vadd.f32 %v3760, %v3861
        %s3867 = sld [smem:[#allocation2 + $0xe4]]
        %v3868 = vstv %s3867
        %v3869 = vmul.f32 %v3822, %v3868
        %v3870 = vmul.f32 %v3824, %v3868
        %v3871 = vmul.f32 %v3826, %v3868
        %v3872 = vmul.f32 %v3828, %v3868
        %v3873 = vmul.f32 %v3830, %v3868
        %v3874 = vadd.f32 %v3768, %v3869
        %v3875 = vadd.f32 %v3769, %v3870
        %v3876 = vadd.f32 %v3770, %v3871
        %v3877 = vadd.f32 %v3771, %v3872
        %v3878 = vadd.f32 %v3772, %v3873
        %s3879 = sld [smem:[#allocation2 + $0x111]]
        %v3880 = vstv %s3879
        %v3881 = vmul.f32 %v3822, %v3880
        %v3882 = vmul.f32 %v3824, %v3880
        %v3883 = vmul.f32 %v3826, %v3880
        %v3884 = vmul.f32 %v3828, %v3880
        %v3885 = vmul.f32 %v3830, %v3880
        %v3886 = vadd.f32 %v3780, %v3881
        %v3887 = vadd.f32 %v3781, %v3882
        %v3888 = vadd.f32 %v3782, %v3883
        %v3889 = vadd.f32 %v3783, %v3884
        %v3890 = vadd.f32 %v3784, %v3885
        %s3891 = sld [smem:[#allocation2 + $0x13e]]
        %v3892 = vstv %s3891
        %v3893 = vmul.f32 %v3822, %v3892
        %v3894 = vmul.f32 %v3824, %v3892
        %v3895 = vmul.f32 %v3826, %v3892
        %v3896 = vmul.f32 %v3828, %v3892
        %v3897 = vmul.f32 %v3830, %v3892
        %v3898 = vadd.f32 %v3792, %v3893
        %v3899 = vadd.f32 %v3793, %v3894
        %v3900 = vadd.f32 %v3794, %v3895
        %v3901 = vadd.f32 %v3795, %v3896
        %v3902 = vadd.f32 %v3796, %v3897
        %s3903 = sld [smem:[#allocation2 + $0x16b]]
        %v3904 = vstv %s3903
        %v3905 = vmul.f32 %v3822, %v3904
        %v3906 = vmul.f32 %v3824, %v3904
        %v3907 = vmul.f32 %v3826, %v3904
        %v3908 = vmul.f32 %v3828, %v3904
        %v3909 = vmul.f32 %v3830, %v3904
        %v3910 = vadd.f32 %v3804, %v3905
        %v3911 = vadd.f32 %v3805, %v3906
        %v3912 = vadd.f32 %v3806, %v3907
        %v3913 = vadd.f32 %v3807, %v3908
        %v3914 = vadd.f32 %v3808, %v3909
        %s3915 = sld [smem:[#allocation2 + $0x198]]
        %v3916 = vstv %s3915
        %v3917 = vmul.f32 %v3822, %v3916
        %v3918 = vmul.f32 %v3824, %v3916
        %v3919 = vmul.f32 %v3826, %v3916
        %v3920 = vmul.f32 %v3828, %v3916
        %v3921 = vmul.f32 %v3830, %v3916
        %v3922 = vadd.f32 %v3816, %v3917
        %v3923 = vadd.f32 %v3817, %v3918
        %v3924 = vadd.f32 %v3818, %v3919
        %v3925 = vadd.f32 %v3819, %v3920
        %v3926 = vadd.f32 %v3820, %v3921
        %3927 = vrot.lane.b32.xlu0 %v1158, 112
        %v3928 = vpop.permute.xlu0 %3927
        %3929 = vrot.lane.b32.xlu0 %v1159, 112
        %v3930 = vpop.permute.xlu0 %3929
        %3931 = vrot.lane.b32.xlu0 %v1160, 112
        %v3932 = vpop.permute.xlu0 %3931
        %3933 = vrot.lane.b32.xlu0 %v1161, 112
        %v3934 = vpop.permute.xlu0 %3933
        %3935 = vrot.lane.b32.xlu0 %v1162, 112
        %v3936 = vpop.permute.xlu0 %3935
        %s3937 = sld [smem:[#allocation2 + $0x5e]]
        %v3938 = vstv %s3937
        %v3939 = vmul.f32 %v3928, %v3938
        %v3940 = vmul.f32 %v3930, %v3938
        %v3941 = vmul.f32 %v3932, %v3938
        %v3942 = vmul.f32 %v3934, %v3938
        %v3943 = vmul.f32 %v3936, %v3938
        %v3944 = vadd.f32 %v3838, %v3939
        %v3945 = vadd.f32 %v3839, %v3940
        %v3946 = vadd.f32 %v3840, %v3941
        %v3947 = vadd.f32 %v3841, %v3942
        %v3948 = vadd.f32 %v3842, %v3943
        %s3949 = sld [smem:[#allocation2 + $0x8b]]
        %v3950 = vstv %s3949
        %v3951 = vmul.f32 %v3928, %v3950
        %v3952 = vmul.f32 %v3930, %v3950
        %v3953 = vmul.f32 %v3932, %v3950
        %v3954 = vmul.f32 %v3934, %v3950
        %v3955 = vmul.f32 %v3936, %v3950
        %v3956 = vadd.f32 %v3850, %v3951
        %v3957 = vadd.f32 %v3851, %v3952
        %v3958 = vadd.f32 %v3852, %v3953
        %v3959 = vadd.f32 %v3853, %v3954
        %v3960 = vadd.f32 %v3854, %v3955
        %s3961 = sld [smem:[#allocation2 + $0xb8]]
        %v3962 = vstv %s3961
        %v3963 = vmul.f32 %v3928, %v3962
        %v3964 = vmul.f32 %v3930, %v3962
        %v3965 = vmul.f32 %v3932, %v3962
        %v3966 = vmul.f32 %v3934, %v3962
        %v3967 = vmul.f32 %v3936, %v3962
        %v3968 = vadd.f32 %v3862, %v3963
        %v3969 = vadd.f32 %v3863, %v3964
        %v3970 = vadd.f32 %v3864, %v3965
        %v3971 = vadd.f32 %v3865, %v3966
        %v3972 = vadd.f32 %v3866, %v3967
        %s3973 = sld [smem:[#allocation2 + $0xe5]]
        %v3974 = vstv %s3973
        %v3975 = vmul.f32 %v3928, %v3974
        %v3976 = vmul.f32 %v3930, %v3974
        %v3977 = vmul.f32 %v3932, %v3974
        %v3978 = vmul.f32 %v3934, %v3974
        %v3979 = vmul.f32 %v3936, %v3974
        %v3980 = vadd.f32 %v3874, %v3975
        %v3981 = vadd.f32 %v3875, %v3976
        %v3982 = vadd.f32 %v3876, %v3977
        %v3983 = vadd.f32 %v3877, %v3978
        %v3984 = vadd.f32 %v3878, %v3979
        %s3985 = sld [smem:[#allocation2 + $0x112]]
        %v3986 = vstv %s3985
        %v3987 = vmul.f32 %v3928, %v3986
        %v3988 = vmul.f32 %v3930, %v3986
        %v3989 = vmul.f32 %v3932, %v3986
        %v3990 = vmul.f32 %v3934, %v3986
        %v3991 = vmul.f32 %v3936, %v3986
        %v3992 = vadd.f32 %v3886, %v3987
        %v3993 = vadd.f32 %v3887, %v3988
        %v3994 = vadd.f32 %v3888, %v3989
        %v3995 = vadd.f32 %v3889, %v3990
        %v3996 = vadd.f32 %v3890, %v3991
        %s3997 = sld [smem:[#allocation2 + $0x13f]]
        %v3998 = vstv %s3997
        %v3999 = vmul.f32 %v3928, %v3998
        %v4000 = vmul.f32 %v3930, %v3998
        %v4001 = vmul.f32 %v3932, %v3998
        %v4002 = vmul.f32 %v3934, %v3998
        %v4003 = vmul.f32 %v3936, %v3998
        %v4004 = vadd.f32 %v3898, %v3999
        %v4005 = vadd.f32 %v3899, %v4000
        %v4006 = vadd.f32 %v3900, %v4001
        %v4007 = vadd.f32 %v3901, %v4002
        %v4008 = vadd.f32 %v3902, %v4003
        %s4009 = sld [smem:[#allocation2 + $0x16c]]
        %v4010 = vstv %s4009
        %v4011 = vmul.f32 %v3928, %v4010
        %v4012 = vmul.f32 %v3930, %v4010
        %v4013 = vmul.f32 %v3932, %v4010
        %v4014 = vmul.f32 %v3934, %v4010
        %v4015 = vmul.f32 %v3936, %v4010
        %v4016 = vadd.f32 %v3910, %v4011
        %v4017 = vadd.f32 %v3911, %v4012
        %v4018 = vadd.f32 %v3912, %v4013
        %v4019 = vadd.f32 %v3913, %v4014
        %v4020 = vadd.f32 %v3914, %v4015
        %s4021 = sld [smem:[#allocation2 + $0x199]]
        %v4022 = vstv %s4021
        %v4023 = vmul.f32 %v3928, %v4022
        %v4024 = vmul.f32 %v3930, %v4022
        %v4025 = vmul.f32 %v3932, %v4022
        %v4026 = vmul.f32 %v3934, %v4022
        %v4027 = vmul.f32 %v3936, %v4022
        %v4028 = vadd.f32 %v3922, %v4023
        %v4029 = vadd.f32 %v3923, %v4024
        %v4030 = vadd.f32 %v3924, %v4025
        %v4031 = vadd.f32 %v3925, %v4026
        %v4032 = vadd.f32 %v3926, %v4027
        %4033 = vrot.lane.b32.xlu0 %v1158, 104
        %v4034 = vpop.permute.xlu0 %4033
        %4035 = vrot.lane.b32.xlu0 %v1159, 104
        %v4036 = vpop.permute.xlu0 %4035
        %4037 = vrot.lane.b32.xlu0 %v1160, 104
        %v4038 = vpop.permute.xlu0 %4037
        %4039 = vrot.lane.b32.xlu0 %v1161, 104
        %v4040 = vpop.permute.xlu0 %4039
        %4041 = vrot.lane.b32.xlu0 %v1162, 104
        %v4042 = vpop.permute.xlu0 %4041
        %s4043 = sld [smem:[#allocation2 + $0x5f]]
        %v4044 = vstv %s4043
        %v4045 = vmul.f32 %v4034, %v4044
        %v4046 = vmul.f32 %v4036, %v4044
        %v4047 = vmul.f32 %v4038, %v4044
        %v4048 = vmul.f32 %v4040, %v4044
        %v4049 = vmul.f32 %v4042, %v4044
        %v4050 = vadd.f32 %v3944, %v4045
        %v4051 = vadd.f32 %v3945, %v4046
        %v4052 = vadd.f32 %v3946, %v4047
        %v4053 = vadd.f32 %v3947, %v4048
        %v4054 = vadd.f32 %v3948, %v4049
        %s4055 = sld [smem:[#allocation2 + $0x8c]]
        %v4056 = vstv %s4055
        %v4057 = vmul.f32 %v4034, %v4056
        %v4058 = vmul.f32 %v4036, %v4056
        %v4059 = vmul.f32 %v4038, %v4056
        %v4060 = vmul.f32 %v4040, %v4056
        %v4061 = vmul.f32 %v4042, %v4056
        %v4062 = vadd.f32 %v3956, %v4057
        %v4063 = vadd.f32 %v3957, %v4058
        %v4064 = vadd.f32 %v3958, %v4059
        %v4065 = vadd.f32 %v3959, %v4060
        %v4066 = vadd.f32 %v3960, %v4061
        %s4067 = sld [smem:[#allocation2 + $0xb9]]
        %v4068 = vstv %s4067
        %v4069 = vmul.f32 %v4034, %v4068
        %v4070 = vmul.f32 %v4036, %v4068
        %v4071 = vmul.f32 %v4038, %v4068
        %v4072 = vmul.f32 %v4040, %v4068
        %v4073 = vmul.f32 %v4042, %v4068
        %v4074 = vadd.f32 %v3968, %v4069
        %v4075 = vadd.f32 %v3969, %v4070
        %v4076 = vadd.f32 %v3970, %v4071
        %v4077 = vadd.f32 %v3971, %v4072
        %v4078 = vadd.f32 %v3972, %v4073
        %s4079 = sld [smem:[#allocation2 + $0xe6]]
        %v4080 = vstv %s4079
        %v4081 = vmul.f32 %v4034, %v4080
        %v4082 = vmul.f32 %v4036, %v4080
        %v4083 = vmul.f32 %v4038, %v4080
        %v4084 = vmul.f32 %v4040, %v4080
        %v4085 = vmul.f32 %v4042, %v4080
        %v4086 = vadd.f32 %v3980, %v4081
        %v4087 = vadd.f32 %v3981, %v4082
        %v4088 = vadd.f32 %v3982, %v4083
        %v4089 = vadd.f32 %v3983, %v4084
        %v4090 = vadd.f32 %v3984, %v4085
        %s4091 = sld [smem:[#allocation2 + $0x113]]
        %v4092 = vstv %s4091
        %v4093 = vmul.f32 %v4034, %v4092
        %v4094 = vmul.f32 %v4036, %v4092
        %v4095 = vmul.f32 %v4038, %v4092
        %v4096 = vmul.f32 %v4040, %v4092
        %v4097 = vmul.f32 %v4042, %v4092
        %v4098 = vadd.f32 %v3992, %v4093
        %v4099 = vadd.f32 %v3993, %v4094
        %v4100 = vadd.f32 %v3994, %v4095
        %v4101 = vadd.f32 %v3995, %v4096
        %v4102 = vadd.f32 %v3996, %v4097
        %s4103 = sld [smem:[#allocation2 + $0x140]]
        %v4104 = vstv %s4103
        %v4105 = vmul.f32 %v4034, %v4104
        %v4106 = vmul.f32 %v4036, %v4104
        %v4107 = vmul.f32 %v4038, %v4104
        %v4108 = vmul.f32 %v4040, %v4104
        %v4109 = vmul.f32 %v4042, %v4104
        %v4110 = vadd.f32 %v4004, %v4105
        %v4111 = vadd.f32 %v4005, %v4106
        %v4112 = vadd.f32 %v4006, %v4107
        %v4113 = vadd.f32 %v4007, %v4108
        %v4114 = vadd.f32 %v4008, %v4109
        %s4115 = sld [smem:[#allocation2 + $0x16d]]
        %v4116 = vstv %s4115
        %v4117 = vmul.f32 %v4034, %v4116
        %v4118 = vmul.f32 %v4036, %v4116
        %v4119 = vmul.f32 %v4038, %v4116
        %v4120 = vmul.f32 %v4040, %v4116
        %v4121 = vmul.f32 %v4042, %v4116
        %v4122 = vadd.f32 %v4016, %v4117
        %v4123 = vadd.f32 %v4017, %v4118
        %v4124 = vadd.f32 %v4018, %v4119
        %v4125 = vadd.f32 %v4019, %v4120
        %v4126 = vadd.f32 %v4020, %v4121
        %s4127 = sld [smem:[#allocation2 + $0x19a]]
        %v4128 = vstv %s4127
        %v4129 = vmul.f32 %v4034, %v4128
        %v4130 = vmul.f32 %v4036, %v4128
        %v4131 = vmul.f32 %v4038, %v4128
        %v4132 = vmul.f32 %v4040, %v4128
        %v4133 = vmul.f32 %v4042, %v4128
        %v4134 = vadd.f32 %v4028, %v4129
        %v4135 = vadd.f32 %v4029, %v4130
        %v4136 = vadd.f32 %v4030, %v4131
        %v4137 = vadd.f32 %v4031, %v4132
        %v4138 = vadd.f32 %v4032, %v4133
        %4139 = vrot.lane.b32.xlu0 %v1158, 96
        %v4140 = vpop.permute.xlu0 %4139
        %4141 = vrot.lane.b32.xlu0 %v1159, 96
        %v4142 = vpop.permute.xlu0 %4141
        %4143 = vrot.lane.b32.xlu0 %v1160, 96
        %v4144 = vpop.permute.xlu0 %4143
        %4145 = vrot.lane.b32.xlu0 %v1161, 96
        %v4146 = vpop.permute.xlu0 %4145
        %4147 = vrot.lane.b32.xlu0 %v1162, 96
        %v4148 = vpop.permute.xlu0 %4147
        %s4149 = sld [smem:[#allocation2 + $0x60]]
        %v4150 = vstv %s4149
        %v4151 = vmul.f32 %v4140, %v4150
        %v4152 = vmul.f32 %v4142, %v4150
        %v4153 = vmul.f32 %v4144, %v4150
        %v4154 = vmul.f32 %v4146, %v4150
        %v4155 = vmul.f32 %v4148, %v4150
        %v4156 = vadd.f32 %v4050, %v4151
        %v4157 = vadd.f32 %v4051, %v4152
        %v4158 = vadd.f32 %v4052, %v4153
        %v4159 = vadd.f32 %v4053, %v4154
        %v4160 = vadd.f32 %v4054, %v4155
        %s4161 = sld [smem:[#allocation2 + $0x8d]]
        %v4162 = vstv %s4161
        %v4163 = vmul.f32 %v4140, %v4162
        %v4164 = vmul.f32 %v4142, %v4162
        %v4165 = vmul.f32 %v4144, %v4162
        %v4166 = vmul.f32 %v4146, %v4162
        %v4167 = vmul.f32 %v4148, %v4162
        %v4168 = vadd.f32 %v4062, %v4163
        %v4169 = vadd.f32 %v4063, %v4164
        %v4170 = vadd.f32 %v4064, %v4165
        %v4171 = vadd.f32 %v4065, %v4166
        %v4172 = vadd.f32 %v4066, %v4167
        %s4173 = sld [smem:[#allocation2 + $0xba]]
        %v4174 = vstv %s4173
        %v4175 = vmul.f32 %v4140, %v4174
        %v4176 = vmul.f32 %v4142, %v4174
        %v4177 = vmul.f32 %v4144, %v4174
        %v4178 = vmul.f32 %v4146, %v4174
        %v4179 = vmul.f32 %v4148, %v4174
        %v4180 = vadd.f32 %v4074, %v4175
        %v4181 = vadd.f32 %v4075, %v4176
        %v4182 = vadd.f32 %v4076, %v4177
        %v4183 = vadd.f32 %v4077, %v4178
        %v4184 = vadd.f32 %v4078, %v4179
        %s4185 = sld [smem:[#allocation2 + $0xe7]]
        %v4186 = vstv %s4185
        %v4187 = vmul.f32 %v4140, %v4186
        %v4188 = vmul.f32 %v4142, %v4186
        %v4189 = vmul.f32 %v4144, %v4186
        %v4190 = vmul.f32 %v4146, %v4186
        %v4191 = vmul.f32 %v4148, %v4186
        %v4192 = vadd.f32 %v4086, %v4187
        %v4193 = vadd.f32 %v4087, %v4188
        %v4194 = vadd.f32 %v4088, %v4189
        %v4195 = vadd.f32 %v4089, %v4190
        %v4196 = vadd.f32 %v4090, %v4191
        %s4197 = sld [smem:[#allocation2 + $0x114]]
        %v4198 = vstv %s4197
        %v4199 = vmul.f32 %v4140, %v4198
        %v4200 = vmul.f32 %v4142, %v4198
        %v4201 = vmul.f32 %v4144, %v4198
        %v4202 = vmul.f32 %v4146, %v4198
        %v4203 = vmul.f32 %v4148, %v4198
        %v4204 = vadd.f32 %v4098, %v4199
        %v4205 = vadd.f32 %v4099, %v4200
        %v4206 = vadd.f32 %v4100, %v4201
        %v4207 = vadd.f32 %v4101, %v4202
        %v4208 = vadd.f32 %v4102, %v4203
        %s4209 = sld [smem:[#allocation2 + $0x141]]
        %v4210 = vstv %s4209
        %v4211 = vmul.f32 %v4140, %v4210
        %v4212 = vmul.f32 %v4142, %v4210
        %v4213 = vmul.f32 %v4144, %v4210
        %v4214 = vmul.f32 %v4146, %v4210
        %v4215 = vmul.f32 %v4148, %v4210
        %v4216 = vadd.f32 %v4110, %v4211
        %v4217 = vadd.f32 %v4111, %v4212
        %v4218 = vadd.f32 %v4112, %v4213
        %v4219 = vadd.f32 %v4113, %v4214
        %v4220 = vadd.f32 %v4114, %v4215
        %s4221 = sld [smem:[#allocation2 + $0x16e]]
        %v4222 = vstv %s4221
        %v4223 = vmul.f32 %v4140, %v4222
        %v4224 = vmul.f32 %v4142, %v4222
        %v4225 = vmul.f32 %v4144, %v4222
        %v4226 = vmul.f32 %v4146, %v4222
        %v4227 = vmul.f32 %v4148, %v4222
        %v4228 = vadd.f32 %v4122, %v4223
        %v4229 = vadd.f32 %v4123, %v4224
        %v4230 = vadd.f32 %v4124, %v4225
        %v4231 = vadd.f32 %v4125, %v4226
        %v4232 = vadd.f32 %v4126, %v4227
        %s4233 = sld [smem:[#allocation2 + $0x19b]]
        %v4234 = vstv %s4233
        %v4235 = vmul.f32 %v4140, %v4234
        %v4236 = vmul.f32 %v4142, %v4234
        %v4237 = vmul.f32 %v4144, %v4234
        %v4238 = vmul.f32 %v4146, %v4234
        %v4239 = vmul.f32 %v4148, %v4234
        %v4240 = vadd.f32 %v4134, %v4235
        %v4241 = vadd.f32 %v4135, %v4236
        %v4242 = vadd.f32 %v4136, %v4237
        %v4243 = vadd.f32 %v4137, %v4238
        %v4244 = vadd.f32 %v4138, %v4239
        %4245 = vrot.lane.b32.xlu0 %v1303, 32
        %v4246 = vpop.permute.xlu0 %4245
        %4247 = vrot.lane.b32.xlu0 %v1304, 32
        %v4248 = vpop.permute.xlu0 %4247
        %4249 = vrot.lane.b32.xlu0 %v1305, 32
        %v4250 = vpop.permute.xlu0 %4249
        %4251 = vrot.lane.b32.xlu0 %v1306, 32
        %v4252 = vpop.permute.xlu0 %4251
        %4253 = vrot.lane.b32.xlu0 %v1307, 32
        %v4254 = vpop.permute.xlu0 %4253
        %s4255 = sld [smem:[#allocation2 + $0x61]]
        %v4256 = vstv %s4255
        %v4257 = vmul.f32 %v4246, %v4256
        %v4258 = vmul.f32 %v4248, %v4256
        %v4259 = vmul.f32 %v4250, %v4256
        %v4260 = vmul.f32 %v4252, %v4256
        %v4261 = vmul.f32 %v4254, %v4256
        %v4262 = vadd.f32 %v4156, %v4257
        %v4263 = vadd.f32 %v4157, %v4258
        %v4264 = vadd.f32 %v4158, %v4259
        %v4265 = vadd.f32 %v4159, %v4260
        %v4266 = vadd.f32 %v4160, %v4261
        %s4267 = sld [smem:[#allocation2 + $0x8e]]
        %v4268 = vstv %s4267
        %v4269 = vmul.f32 %v4246, %v4268
        %v4270 = vmul.f32 %v4248, %v4268
        %v4271 = vmul.f32 %v4250, %v4268
        %v4272 = vmul.f32 %v4252, %v4268
        %v4273 = vmul.f32 %v4254, %v4268
        %v4274 = vadd.f32 %v4168, %v4269
        %v4275 = vadd.f32 %v4169, %v4270
        %v4276 = vadd.f32 %v4170, %v4271
        %v4277 = vadd.f32 %v4171, %v4272
        %v4278 = vadd.f32 %v4172, %v4273
        %s4279 = sld [smem:[#allocation2 + $0xbb]]
        %v4280 = vstv %s4279
        %v4281 = vmul.f32 %v4246, %v4280
        %v4282 = vmul.f32 %v4248, %v4280
        %v4283 = vmul.f32 %v4250, %v4280
        %v4284 = vmul.f32 %v4252, %v4280
        %v4285 = vmul.f32 %v4254, %v4280
        %v4286 = vadd.f32 %v4180, %v4281
        %v4287 = vadd.f32 %v4181, %v4282
        %v4288 = vadd.f32 %v4182, %v4283
        %v4289 = vadd.f32 %v4183, %v4284
        %v4290 = vadd.f32 %v4184, %v4285
        %s4291 = sld [smem:[#allocation2 + $0xe8]]
        %v4292 = vstv %s4291
        %v4293 = vmul.f32 %v4246, %v4292
        %v4294 = vmul.f32 %v4248, %v4292
        %v4295 = vmul.f32 %v4250, %v4292
        %v4296 = vmul.f32 %v4252, %v4292
        %v4297 = vmul.f32 %v4254, %v4292
        %v4298 = vadd.f32 %v4192, %v4293
        %v4299 = vadd.f32 %v4193, %v4294
        %v4300 = vadd.f32 %v4194, %v4295
        %v4301 = vadd.f32 %v4195, %v4296
        %v4302 = vadd.f32 %v4196, %v4297
        %s4303 = sld [smem:[#allocation2 + $0x115]]
        %v4304 = vstv %s4303
        %v4305 = vmul.f32 %v4246, %v4304
        %v4306 = vmul.f32 %v4248, %v4304
        %v4307 = vmul.f32 %v4250, %v4304
        %v4308 = vmul.f32 %v4252, %v4304
        %v4309 = vmul.f32 %v4254, %v4304
        %v4310 = vadd.f32 %v4204, %v4305
        %v4311 = vadd.f32 %v4205, %v4306
        %v4312 = vadd.f32 %v4206, %v4307
        %v4313 = vadd.f32 %v4207, %v4308
        %v4314 = vadd.f32 %v4208, %v4309
        %s4315 = sld [smem:[#allocation2 + $0x142]]
        %v4316 = vstv %s4315
        %v4317 = vmul.f32 %v4246, %v4316
        %v4318 = vmul.f32 %v4248, %v4316
        %v4319 = vmul.f32 %v4250, %v4316
        %v4320 = vmul.f32 %v4252, %v4316
        %v4321 = vmul.f32 %v4254, %v4316
        %v4322 = vadd.f32 %v4216, %v4317
        %v4323 = vadd.f32 %v4217, %v4318
        %v4324 = vadd.f32 %v4218, %v4319
        %v4325 = vadd.f32 %v4219, %v4320
        %v4326 = vadd.f32 %v4220, %v4321
        %s4327 = sld [smem:[#allocation2 + $0x16f]]
        %v4328 = vstv %s4327
        %v4329 = vmul.f32 %v4246, %v4328
        %v4330 = vmul.f32 %v4248, %v4328
        %v4331 = vmul.f32 %v4250, %v4328
        %v4332 = vmul.f32 %v4252, %v4328
        %v4333 = vmul.f32 %v4254, %v4328
        %v4334 = vadd.f32 %v4228, %v4329
        %v4335 = vadd.f32 %v4229, %v4330
        %v4336 = vadd.f32 %v4230, %v4331
        %v4337 = vadd.f32 %v4231, %v4332
        %v4338 = vadd.f32 %v4232, %v4333
        %s4339 = sld [smem:[#allocation2 + $0x19c]]
        %v4340 = vstv %s4339
        %v4341 = vmul.f32 %v4246, %v4340
        %v4342 = vmul.f32 %v4248, %v4340
        %v4343 = vmul.f32 %v4250, %v4340
        %v4344 = vmul.f32 %v4252, %v4340
        %v4345 = vmul.f32 %v4254, %v4340
        %v4346 = vadd.f32 %v4240, %v4341
        %v4347 = vadd.f32 %v4241, %v4342
        %v4348 = vadd.f32 %v4242, %v4343
        %v4349 = vadd.f32 %v4243, %v4344
        %v4350 = vadd.f32 %v4244, %v4345
        %4351 = vrot.lane.b32.xlu0 %v1303, 24
        %v4352 = vpop.permute.xlu0 %4351
        %4353 = vrot.lane.b32.xlu0 %v1304, 24
        %v4354 = vpop.permute.xlu0 %4353
        %4355 = vrot.lane.b32.xlu0 %v1305, 24
        %v4356 = vpop.permute.xlu0 %4355
        %4357 = vrot.lane.b32.xlu0 %v1306, 24
        %v4358 = vpop.permute.xlu0 %4357
        %4359 = vrot.lane.b32.xlu0 %v1307, 24
        %v4360 = vpop.permute.xlu0 %4359
        %s4361 = sld [smem:[#allocation2 + $0x62]]
        %v4362 = vstv %s4361
        %v4363 = vmul.f32 %v4352, %v4362
        %v4364 = vmul.f32 %v4354, %v4362
        %v4365 = vmul.f32 %v4356, %v4362
        %v4366 = vmul.f32 %v4358, %v4362
        %v4367 = vmul.f32 %v4360, %v4362
        %v4368 = vadd.f32 %v4262, %v4363
        %v4369 = vadd.f32 %v4263, %v4364
        %v4370 = vadd.f32 %v4264, %v4365
        %v4371 = vadd.f32 %v4265, %v4366
        %v4372 = vadd.f32 %v4266, %v4367
        %s4373 = sld [smem:[#allocation2 + $0x8f]]
        %v4374 = vstv %s4373
        %v4375 = vmul.f32 %v4352, %v4374
        %v4376 = vmul.f32 %v4354, %v4374
        %v4377 = vmul.f32 %v4356, %v4374
        %v4378 = vmul.f32 %v4358, %v4374
        %v4379 = vmul.f32 %v4360, %v4374
        %v4380 = vadd.f32 %v4274, %v4375
        %v4381 = vadd.f32 %v4275, %v4376
        %v4382 = vadd.f32 %v4276, %v4377
        %v4383 = vadd.f32 %v4277, %v4378
        %v4384 = vadd.f32 %v4278, %v4379
        %s4385 = sld [smem:[#allocation2 + $0xbc]]
        %v4386 = vstv %s4385
        %v4387 = vmul.f32 %v4352, %v4386
        %v4388 = vmul.f32 %v4354, %v4386
        %v4389 = vmul.f32 %v4356, %v4386
        %v4390 = vmul.f32 %v4358, %v4386
        %v4391 = vmul.f32 %v4360, %v4386
        %v4392 = vadd.f32 %v4286, %v4387
        %v4393 = vadd.f32 %v4287, %v4388
        %v4394 = vadd.f32 %v4288, %v4389
        %v4395 = vadd.f32 %v4289, %v4390
        %v4396 = vadd.f32 %v4290, %v4391
        %s4397 = sld [smem:[#allocation2 + $0xe9]]
        %v4398 = vstv %s4397
        %v4399 = vmul.f32 %v4352, %v4398
        %v4400 = vmul.f32 %v4354, %v4398
        %v4401 = vmul.f32 %v4356, %v4398
        %v4402 = vmul.f32 %v4358, %v4398
        %v4403 = vmul.f32 %v4360, %v4398
        %v4404 = vadd.f32 %v4298, %v4399
        %v4405 = vadd.f32 %v4299, %v4400
        %v4406 = vadd.f32 %v4300, %v4401
        %v4407 = vadd.f32 %v4301, %v4402
        %v4408 = vadd.f32 %v4302, %v4403
        %s4409 = sld [smem:[#allocation2 + $0x116]]
        %v4410 = vstv %s4409
        %v4411 = vmul.f32 %v4352, %v4410
        %v4412 = vmul.f32 %v4354, %v4410
        %v4413 = vmul.f32 %v4356, %v4410
        %v4414 = vmul.f32 %v4358, %v4410
        %v4415 = vmul.f32 %v4360, %v4410
        %v4416 = vadd.f32 %v4310, %v4411
        %v4417 = vadd.f32 %v4311, %v4412
        %v4418 = vadd.f32 %v4312, %v4413
        %v4419 = vadd.f32 %v4313, %v4414
        %v4420 = vadd.f32 %v4314, %v4415
        %s4421 = sld [smem:[#allocation2 + $0x143]]
        %v4422 = vstv %s4421
        %v4423 = vmul.f32 %v4352, %v4422
        %v4424 = vmul.f32 %v4354, %v4422
        %v4425 = vmul.f32 %v4356, %v4422
        %v4426 = vmul.f32 %v4358, %v4422
        %v4427 = vmul.f32 %v4360, %v4422
        %v4428 = vadd.f32 %v4322, %v4423
        %v4429 = vadd.f32 %v4323, %v4424
        %v4430 = vadd.f32 %v4324, %v4425
        %v4431 = vadd.f32 %v4325, %v4426
        %v4432 = vadd.f32 %v4326, %v4427
        %s4433 = sld [smem:[#allocation2 + $0x170]]
        %v4434 = vstv %s4433
        %v4435 = vmul.f32 %v4352, %v4434
        %v4436 = vmul.f32 %v4354, %v4434
        %v4437 = vmul.f32 %v4356, %v4434
        %v4438 = vmul.f32 %v4358, %v4434
        %v4439 = vmul.f32 %v4360, %v4434
        %v4440 = vadd.f32 %v4334, %v4435
        %v4441 = vadd.f32 %v4335, %v4436
        %v4442 = vadd.f32 %v4336, %v4437
        %v4443 = vadd.f32 %v4337, %v4438
        %v4444 = vadd.f32 %v4338, %v4439
        %s4445 = sld [smem:[#allocation2 + $0x19d]]
        %v4446 = vstv %s4445
        %v4447 = vmul.f32 %v4352, %v4446
        %v4448 = vmul.f32 %v4354, %v4446
        %v4449 = vmul.f32 %v4356, %v4446
        %v4450 = vmul.f32 %v4358, %v4446
        %v4451 = vmul.f32 %v4360, %v4446
        %v4452 = vadd.f32 %v4346, %v4447
        %v4453 = vadd.f32 %v4347, %v4448
        %v4454 = vadd.f32 %v4348, %v4449
        %v4455 = vadd.f32 %v4349, %v4450
        %v4456 = vadd.f32 %v4350, %v4451
        %4457 = vrot.lane.b32.xlu0 %v1303, 16
        %v4458 = vpop.permute.xlu0 %4457
        %4459 = vrot.lane.b32.xlu0 %v1304, 16
        %v4460 = vpop.permute.xlu0 %4459
        %4461 = vrot.lane.b32.xlu0 %v1305, 16
        %v4462 = vpop.permute.xlu0 %4461
        %4463 = vrot.lane.b32.xlu0 %v1306, 16
        %v4464 = vpop.permute.xlu0 %4463
        %4465 = vrot.lane.b32.xlu0 %v1307, 16
        %v4466 = vpop.permute.xlu0 %4465
        %s4467 = sld [smem:[#allocation2 + $0x63]]
        %v4468 = vstv %s4467
        %v4469 = vmul.f32 %v4458, %v4468
        %v4470 = vmul.f32 %v4460, %v4468
        %v4471 = vmul.f32 %v4462, %v4468
        %v4472 = vmul.f32 %v4464, %v4468
        %v4473 = vmul.f32 %v4466, %v4468
        %v4474 = vadd.f32 %v4368, %v4469
        %v4475 = vadd.f32 %v4369, %v4470
        %v4476 = vadd.f32 %v4370, %v4471
        %v4477 = vadd.f32 %v4371, %v4472
        %v4478 = vadd.f32 %v4372, %v4473
        %s4479 = sld [smem:[#allocation2 + $0x90]]
        %v4480 = vstv %s4479
        %v4481 = vmul.f32 %v4458, %v4480
        %v4482 = vmul.f32 %v4460, %v4480
        %v4483 = vmul.f32 %v4462, %v4480
        %v4484 = vmul.f32 %v4464, %v4480
        %v4485 = vmul.f32 %v4466, %v4480
        %v4486 = vadd.f32 %v4380, %v4481
        %v4487 = vadd.f32 %v4381, %v4482
        %v4488 = vadd.f32 %v4382, %v4483
        %v4489 = vadd.f32 %v4383, %v4484
        %v4490 = vadd.f32 %v4384, %v4485
        %s4491 = sld [smem:[#allocation2 + $0xbd]]
        %v4492 = vstv %s4491
        %v4493 = vmul.f32 %v4458, %v4492
        %v4494 = vmul.f32 %v4460, %v4492
        %v4495 = vmul.f32 %v4462, %v4492
        %v4496 = vmul.f32 %v4464, %v4492
        %v4497 = vmul.f32 %v4466, %v4492
        %v4498 = vadd.f32 %v4392, %v4493
        %v4499 = vadd.f32 %v4393, %v4494
        %v4500 = vadd.f32 %v4394, %v4495
        %v4501 = vadd.f32 %v4395, %v4496
        %v4502 = vadd.f32 %v4396, %v4497
        %s4503 = sld [smem:[#allocation2 + $0xea]]
        %v4504 = vstv %s4503
        %v4505 = vmul.f32 %v4458, %v4504
        %v4506 = vmul.f32 %v4460, %v4504
        %v4507 = vmul.f32 %v4462, %v4504
        %v4508 = vmul.f32 %v4464, %v4504
        %v4509 = vmul.f32 %v4466, %v4504
        %v4510 = vadd.f32 %v4404, %v4505
        %v4511 = vadd.f32 %v4405, %v4506
        %v4512 = vadd.f32 %v4406, %v4507
        %v4513 = vadd.f32 %v4407, %v4508
        %v4514 = vadd.f32 %v4408, %v4509
        %s4515 = sld [smem:[#allocation2 + $0x117]]
        %v4516 = vstv %s4515
        %v4517 = vmul.f32 %v4458, %v4516
        %v4518 = vmul.f32 %v4460, %v4516
        %v4519 = vmul.f32 %v4462, %v4516
        %v4520 = vmul.f32 %v4464, %v4516
        %v4521 = vmul.f32 %v4466, %v4516
        %v4522 = vadd.f32 %v4416, %v4517
        %v4523 = vadd.f32 %v4417, %v4518
        %v4524 = vadd.f32 %v4418, %v4519
        %v4525 = vadd.f32 %v4419, %v4520
        %v4526 = vadd.f32 %v4420, %v4521
        %s4527 = sld [smem:[#allocation2 + $0x144]]
        %v4528 = vstv %s4527
        %v4529 = vmul.f32 %v4458, %v4528
        %v4530 = vmul.f32 %v4460, %v4528
        %v4531 = vmul.f32 %v4462, %v4528
        %v4532 = vmul.f32 %v4464, %v4528
        %v4533 = vmul.f32 %v4466, %v4528
        %v4534 = vadd.f32 %v4428, %v4529
        %v4535 = vadd.f32 %v4429, %v4530
        %v4536 = vadd.f32 %v4430, %v4531
        %v4537 = vadd.f32 %v4431, %v4532
        %v4538 = vadd.f32 %v4432, %v4533
        %s4539 = sld [smem:[#allocation2 + $0x171]]
        %v4540 = vstv %s4539
        %v4541 = vmul.f32 %v4458, %v4540
        %v4542 = vmul.f32 %v4460, %v4540
        %v4543 = vmul.f32 %v4462, %v4540
        %v4544 = vmul.f32 %v4464, %v4540
        %v4545 = vmul.f32 %v4466, %v4540
        %v4546 = vadd.f32 %v4440, %v4541
        %v4547 = vadd.f32 %v4441, %v4542
        %v4548 = vadd.f32 %v4442, %v4543
        %v4549 = vadd.f32 %v4443, %v4544
        %v4550 = vadd.f32 %v4444, %v4545
        %s4551 = sld [smem:[#allocation2 + $0x19e]]
        %v4552 = vstv %s4551
        %v4553 = vmul.f32 %v4458, %v4552
        %v4554 = vmul.f32 %v4460, %v4552
        %v4555 = vmul.f32 %v4462, %v4552
        %v4556 = vmul.f32 %v4464, %v4552
        %v4557 = vmul.f32 %v4466, %v4552
        %v4558 = vadd.f32 %v4452, %v4553
        %v4559 = vadd.f32 %v4453, %v4554
        %v4560 = vadd.f32 %v4454, %v4555
        %v4561 = vadd.f32 %v4455, %v4556
        %v4562 = vadd.f32 %v4456, %v4557
        %4563 = vrot.lane.b32.xlu0 %v1303, 8
        %v4564 = vpop.permute.xlu0 %4563
        %4565 = vrot.lane.b32.xlu0 %v1304, 8
        %v4566 = vpop.permute.xlu0 %4565
        %4567 = vrot.lane.b32.xlu0 %v1305, 8
        %v4568 = vpop.permute.xlu0 %4567
        %4569 = vrot.lane.b32.xlu0 %v1306, 8
        %v4570 = vpop.permute.xlu0 %4569
        %4571 = vrot.lane.b32.xlu0 %v1307, 8
        %v4572 = vpop.permute.xlu0 %4571
        %s4573 = sld [smem:[#allocation2 + $0x64]]
        %v4574 = vstv %s4573
        %v4575 = vmul.f32 %v4564, %v4574
        %v4576 = vmul.f32 %v4566, %v4574
        %v4577 = vmul.f32 %v4568, %v4574
        %v4578 = vmul.f32 %v4570, %v4574
        %v4579 = vmul.f32 %v4572, %v4574
        %v4580 = vadd.f32 %v4474, %v4575
        %v4581 = vadd.f32 %v4475, %v4576
        %v4582 = vadd.f32 %v4476, %v4577
        %v4583 = vadd.f32 %v4477, %v4578
        %v4584 = vadd.f32 %v4478, %v4579
        %s4585 = sld [smem:[#allocation2 + $0x91]]
        %v4586 = vstv %s4585
        %v4587 = vmul.f32 %v4564, %v4586
        %v4588 = vmul.f32 %v4566, %v4586
        %v4589 = vmul.f32 %v4568, %v4586
        %v4590 = vmul.f32 %v4570, %v4586
        %v4591 = vmul.f32 %v4572, %v4586
        %v4592 = vadd.f32 %v4486, %v4587
        %v4593 = vadd.f32 %v4487, %v4588
        %v4594 = vadd.f32 %v4488, %v4589
        %v4595 = vadd.f32 %v4489, %v4590
        %v4596 = vadd.f32 %v4490, %v4591
        %s4597 = sld [smem:[#allocation2 + $0xbe]]
        %v4598 = vstv %s4597
        %v4599 = vmul.f32 %v4564, %v4598
        %v4600 = vmul.f32 %v4566, %v4598
        %v4601 = vmul.f32 %v4568, %v4598
        %v4602 = vmul.f32 %v4570, %v4598
        %v4603 = vmul.f32 %v4572, %v4598
        %v4604 = vadd.f32 %v4498, %v4599
        %v4605 = vadd.f32 %v4499, %v4600
        %v4606 = vadd.f32 %v4500, %v4601
        %v4607 = vadd.f32 %v4501, %v4602
        %v4608 = vadd.f32 %v4502, %v4603
        %s4609 = sld [smem:[#allocation2 + $0xeb]]
        %v4610 = vstv %s4609
        %v4611 = vmul.f32 %v4564, %v4610
        %v4612 = vmul.f32 %v4566, %v4610
        %v4613 = vmul.f32 %v4568, %v4610
        %v4614 = vmul.f32 %v4570, %v4610
        %v4615 = vmul.f32 %v4572, %v4610
        %v4616 = vadd.f32 %v4510, %v4611
        %v4617 = vadd.f32 %v4511, %v4612
        %v4618 = vadd.f32 %v4512, %v4613
        %v4619 = vadd.f32 %v4513, %v4614
        %v4620 = vadd.f32 %v4514, %v4615
        %s4621 = sld [smem:[#allocation2 + $0x118]]
        %v4622 = vstv %s4621
        %v4623 = vmul.f32 %v4564, %v4622
        %v4624 = vmul.f32 %v4566, %v4622
        %v4625 = vmul.f32 %v4568, %v4622
        %v4626 = vmul.f32 %v4570, %v4622
        %v4627 = vmul.f32 %v4572, %v4622
        %v4628 = vadd.f32 %v4522, %v4623
        %v4629 = vadd.f32 %v4523, %v4624
        %v4630 = vadd.f32 %v4524, %v4625
        %v4631 = vadd.f32 %v4525, %v4626
        %v4632 = vadd.f32 %v4526, %v4627
        %s4633 = sld [smem:[#allocation2 + $0x145]]
        %v4634 = vstv %s4633
        %v4635 = vmul.f32 %v4564, %v4634
        %v4636 = vmul.f32 %v4566, %v4634
        %v4637 = vmul.f32 %v4568, %v4634
        %v4638 = vmul.f32 %v4570, %v4634
        %v4639 = vmul.f32 %v4572, %v4634
        %v4640 = vadd.f32 %v4534, %v4635
        %v4641 = vadd.f32 %v4535, %v4636
        %v4642 = vadd.f32 %v4536, %v4637
        %v4643 = vadd.f32 %v4537, %v4638
        %v4644 = vadd.f32 %v4538, %v4639
        %s4645 = sld [smem:[#allocation2 + $0x172]]
        %v4646 = vstv %s4645
        %v4647 = vmul.f32 %v4564, %v4646
        %v4648 = vmul.f32 %v4566, %v4646
        %v4649 = vmul.f32 %v4568, %v4646
        %v4650 = vmul.f32 %v4570, %v4646
        %v4651 = vmul.f32 %v4572, %v4646
        %v4652 = vadd.f32 %v4546, %v4647
        %v4653 = vadd.f32 %v4547, %v4648
        %v4654 = vadd.f32 %v4548, %v4649
        %v4655 = vadd.f32 %v4549, %v4650
        %v4656 = vadd.f32 %v4550, %v4651
        %s4657 = sld [smem:[#allocation2 + $0x19f]]
        %v4658 = vstv %s4657
        %v4659 = vmul.f32 %v4564, %v4658
        %v4660 = vmul.f32 %v4566, %v4658
        %v4661 = vmul.f32 %v4568, %v4658
        %v4662 = vmul.f32 %v4570, %v4658
        %v4663 = vmul.f32 %v4572, %v4658
        %v4664 = vadd.f32 %v4558, %v4659
        %v4665 = vadd.f32 %v4559, %v4660
        %v4666 = vadd.f32 %v4560, %v4661
        %v4667 = vadd.f32 %v4561, %v4662
        %v4668 = vadd.f32 %v4562, %v4663
        %s4669 = sld [smem:[#allocation2 + $0x65]]
        %v4670 = vstv %s4669
        %v4671 = vmul.f32 %v1303, %v4670
        %v4672 = vmul.f32 %v1304, %v4670
        %v4673 = vmul.f32 %v1305, %v4670
        %v4674 = vmul.f32 %v1306, %v4670
        %v4675 = vmul.f32 %v1307, %v4670
        %v4676 = vadd.f32 %v4580, %v4671
        %v4677 = vadd.f32 %v4581, %v4672
        %v4678 = vadd.f32 %v4582, %v4673
        %v4679 = vadd.f32 %v4583, %v4674
        %v4680 = vadd.f32 %v4584, %v4675
        %s4681 = sld [smem:[#allocation2 + $0x92]]
        %v4682 = vstv %s4681
        %v4683 = vmul.f32 %v1303, %v4682
        %v4684 = vmul.f32 %v1304, %v4682
        %v4685 = vmul.f32 %v1305, %v4682
        %v4686 = vmul.f32 %v1306, %v4682
        %v4687 = vmul.f32 %v1307, %v4682
        %v4688 = vadd.f32 %v4592, %v4683
        %v4689 = vadd.f32 %v4593, %v4684
        %v4690 = vadd.f32 %v4594, %v4685
        %v4691 = vadd.f32 %v4595, %v4686
        %v4692 = vadd.f32 %v4596, %v4687
        %s4693 = sld [smem:[#allocation2 + $0xbf]]
        %v4694 = vstv %s4693
        %v4695 = vmul.f32 %v1303, %v4694
        %v4696 = vmul.f32 %v1304, %v4694
        %v4697 = vmul.f32 %v1305, %v4694
        %v4698 = vmul.f32 %v1306, %v4694
        %v4699 = vmul.f32 %v1307, %v4694
        %v4700 = vadd.f32 %v4604, %v4695
        %v4701 = vadd.f32 %v4605, %v4696
        %v4702 = vadd.f32 %v4606, %v4697
        %v4703 = vadd.f32 %v4607, %v4698
        %v4704 = vadd.f32 %v4608, %v4699
        %s4705 = sld [smem:[#allocation2 + $0xec]]
        %v4706 = vstv %s4705
        %v4707 = vmul.f32 %v1303, %v4706
        %v4708 = vmul.f32 %v1304, %v4706
        %v4709 = vmul.f32 %v1305, %v4706
        %v4710 = vmul.f32 %v1306, %v4706
        %v4711 = vmul.f32 %v1307, %v4706
        %v4712 = vadd.f32 %v4616, %v4707
        %v4713 = vadd.f32 %v4617, %v4708
        %v4714 = vadd.f32 %v4618, %v4709
        %v4715 = vadd.f32 %v4619, %v4710
        %v4716 = vadd.f32 %v4620, %v4711
        %s4717 = sld [smem:[#allocation2 + $0x119]]
        %v4718 = vstv %s4717
        %v4719 = vmul.f32 %v1303, %v4718
        %v4720 = vmul.f32 %v1304, %v4718
        %v4721 = vmul.f32 %v1305, %v4718
        %v4722 = vmul.f32 %v1306, %v4718
        %v4723 = vmul.f32 %v1307, %v4718
        %v4724 = vadd.f32 %v4628, %v4719
        %v4725 = vadd.f32 %v4629, %v4720
        %v4726 = vadd.f32 %v4630, %v4721
        %v4727 = vadd.f32 %v4631, %v4722
        %v4728 = vadd.f32 %v4632, %v4723
        %s4729 = sld [smem:[#allocation2 + $0x146]]
        %v4730 = vstv %s4729
        %v4731 = vmul.f32 %v1303, %v4730
        %v4732 = vmul.f32 %v1304, %v4730
        %v4733 = vmul.f32 %v1305, %v4730
        %v4734 = vmul.f32 %v1306, %v4730
        %v4735 = vmul.f32 %v1307, %v4730
        %v4736 = vadd.f32 %v4640, %v4731
        %v4737 = vadd.f32 %v4641, %v4732
        %v4738 = vadd.f32 %v4642, %v4733
        %v4739 = vadd.f32 %v4643, %v4734
        %v4740 = vadd.f32 %v4644, %v4735
        %s4741 = sld [smem:[#allocation2 + $0x173]]
        %v4742 = vstv %s4741
        %v4743 = vmul.f32 %v1303, %v4742
        %v4744 = vmul.f32 %v1304, %v4742
        %v4745 = vmul.f32 %v1305, %v4742
        %v4746 = vmul.f32 %v1306, %v4742
        %v4747 = vmul.f32 %v1307, %v4742
        %v4748 = vadd.f32 %v4652, %v4743
        %v4749 = vadd.f32 %v4653, %v4744
        %v4750 = vadd.f32 %v4654, %v4745
        %v4751 = vadd.f32 %v4655, %v4746
        %v4752 = vadd.f32 %v4656, %v4747
        %s4753 = sld [smem:[#allocation2 + $0x1a0]]
        %v4754 = vstv %s4753
        %v4755 = vmul.f32 %v1303, %v4754
        %v4756 = vmul.f32 %v1304, %v4754
        %v4757 = vmul.f32 %v1305, %v4754
        %v4758 = vmul.f32 %v1306, %v4754
        %v4759 = vmul.f32 %v1307, %v4754
        %v4760 = vadd.f32 %v4664, %v4755
        %v4761 = vadd.f32 %v4665, %v4756
        %v4762 = vadd.f32 %v4666, %v4757
        %v4763 = vadd.f32 %v4667, %v4758
        %v4764 = vadd.f32 %v4668, %v4759
        %4765 = vrot.lane.b32.xlu0 %v1303, 120
        %v4766 = vpop.permute.xlu0 %4765
        %4767 = vrot.lane.b32.xlu0 %v1304, 120
        %v4768 = vpop.permute.xlu0 %4767
        %4769 = vrot.lane.b32.xlu0 %v1305, 120
        %v4770 = vpop.permute.xlu0 %4769
        %4771 = vrot.lane.b32.xlu0 %v1306, 120
        %v4772 = vpop.permute.xlu0 %4771
        %4773 = vrot.lane.b32.xlu0 %v1307, 120
        %v4774 = vpop.permute.xlu0 %4773
        %s4775 = sld [smem:[#allocation2 + $0x66]]
        %v4776 = vstv %s4775
        %v4777 = vmul.f32 %v4766, %v4776
        %v4778 = vmul.f32 %v4768, %v4776
        %v4779 = vmul.f32 %v4770, %v4776
        %v4780 = vmul.f32 %v4772, %v4776
        %v4781 = vmul.f32 %v4774, %v4776
        %v4782 = vadd.f32 %v4676, %v4777
        %v4783 = vadd.f32 %v4677, %v4778
        %v4784 = vadd.f32 %v4678, %v4779
        %v4785 = vadd.f32 %v4679, %v4780
        %v4786 = vadd.f32 %v4680, %v4781
        %s4787 = sld [smem:[#allocation2 + $0x93]]
        %v4788 = vstv %s4787
        %v4789 = vmul.f32 %v4766, %v4788
        %v4790 = vmul.f32 %v4768, %v4788
        %v4791 = vmul.f32 %v4770, %v4788
        %v4792 = vmul.f32 %v4772, %v4788
        %v4793 = vmul.f32 %v4774, %v4788
        %v4794 = vadd.f32 %v4688, %v4789
        %v4795 = vadd.f32 %v4689, %v4790
        %v4796 = vadd.f32 %v4690, %v4791
        %v4797 = vadd.f32 %v4691, %v4792
        %v4798 = vadd.f32 %v4692, %v4793
        %s4799 = sld [smem:[#allocation2 + $0xc0]]
        %v4800 = vstv %s4799
        %v4801 = vmul.f32 %v4766, %v4800
        %v4802 = vmul.f32 %v4768, %v4800
        %v4803 = vmul.f32 %v4770, %v4800
        %v4804 = vmul.f32 %v4772, %v4800
        %v4805 = vmul.f32 %v4774, %v4800
        %v4806 = vadd.f32 %v4700, %v4801
        %v4807 = vadd.f32 %v4701, %v4802
        %v4808 = vadd.f32 %v4702, %v4803
        %v4809 = vadd.f32 %v4703, %v4804
        %v4810 = vadd.f32 %v4704, %v4805
        %s4811 = sld [smem:[#allocation2 + $0xed]]
        %v4812 = vstv %s4811
        %v4813 = vmul.f32 %v4766, %v4812
        %v4814 = vmul.f32 %v4768, %v4812
        %v4815 = vmul.f32 %v4770, %v4812
        %v4816 = vmul.f32 %v4772, %v4812
        %v4817 = vmul.f32 %v4774, %v4812
        %v4818 = vadd.f32 %v4712, %v4813
        %v4819 = vadd.f32 %v4713, %v4814
        %v4820 = vadd.f32 %v4714, %v4815
        %v4821 = vadd.f32 %v4715, %v4816
        %v4822 = vadd.f32 %v4716, %v4817
        %s4823 = sld [smem:[#allocation2 + $0x11a]]
        %v4824 = vstv %s4823
        %v4825 = vmul.f32 %v4766, %v4824
        %v4826 = vmul.f32 %v4768, %v4824
        %v4827 = vmul.f32 %v4770, %v4824
        %v4828 = vmul.f32 %v4772, %v4824
        %v4829 = vmul.f32 %v4774, %v4824
        %v4830 = vadd.f32 %v4724, %v4825
        %v4831 = vadd.f32 %v4725, %v4826
        %v4832 = vadd.f32 %v4726, %v4827
        %v4833 = vadd.f32 %v4727, %v4828
        %v4834 = vadd.f32 %v4728, %v4829
        %s4835 = sld [smem:[#allocation2 + $0x147]]
        %v4836 = vstv %s4835
        %v4837 = vmul.f32 %v4766, %v4836
        %v4838 = vmul.f32 %v4768, %v4836
        %v4839 = vmul.f32 %v4770, %v4836
        %v4840 = vmul.f32 %v4772, %v4836
        %v4841 = vmul.f32 %v4774, %v4836
        %v4842 = vadd.f32 %v4736, %v4837
        %v4843 = vadd.f32 %v4737, %v4838
        %v4844 = vadd.f32 %v4738, %v4839
        %v4845 = vadd.f32 %v4739, %v4840
        %v4846 = vadd.f32 %v4740, %v4841
        %s4847 = sld [smem:[#allocation2 + $0x174]]
        %v4848 = vstv %s4847
        %v4849 = vmul.f32 %v4766, %v4848
        %v4850 = vmul.f32 %v4768, %v4848
        %v4851 = vmul.f32 %v4770, %v4848
        %v4852 = vmul.f32 %v4772, %v4848
        %v4853 = vmul.f32 %v4774, %v4848
        %v4854 = vadd.f32 %v4748, %v4849
        %v4855 = vadd.f32 %v4749, %v4850
        %v4856 = vadd.f32 %v4750, %v4851
        %v4857 = vadd.f32 %v4751, %v4852
        %v4858 = vadd.f32 %v4752, %v4853
        %s4859 = sld [smem:[#allocation2 + $0x1a1]]
        %v4860 = vstv %s4859
        %v4861 = vmul.f32 %v4766, %v4860
        %v4862 = vmul.f32 %v4768, %v4860
        %v4863 = vmul.f32 %v4770, %v4860
        %v4864 = vmul.f32 %v4772, %v4860
        %v4865 = vmul.f32 %v4774, %v4860
        %v4866 = vadd.f32 %v4760, %v4861
        %v4867 = vadd.f32 %v4761, %v4862
        %v4868 = vadd.f32 %v4762, %v4863
        %v4869 = vadd.f32 %v4763, %v4864
        %v4870 = vadd.f32 %v4764, %v4865
        %4871 = vrot.lane.b32.xlu0 %v1303, 112
        %v4872 = vpop.permute.xlu0 %4871
        %4873 = vrot.lane.b32.xlu0 %v1304, 112
        %v4874 = vpop.permute.xlu0 %4873
        %4875 = vrot.lane.b32.xlu0 %v1305, 112
        %v4876 = vpop.permute.xlu0 %4875
        %4877 = vrot.lane.b32.xlu0 %v1306, 112
        %v4878 = vpop.permute.xlu0 %4877
        %4879 = vrot.lane.b32.xlu0 %v1307, 112
        %v4880 = vpop.permute.xlu0 %4879
        %s4881 = sld [smem:[#allocation2 + $0x67]]
        %v4882 = vstv %s4881
        %v4883 = vmul.f32 %v4872, %v4882
        %v4884 = vmul.f32 %v4874, %v4882
        %v4885 = vmul.f32 %v4876, %v4882
        %v4886 = vmul.f32 %v4878, %v4882
        %v4887 = vmul.f32 %v4880, %v4882
        %v4888 = vadd.f32 %v4782, %v4883
        %v4889 = vadd.f32 %v4783, %v4884
        %v4890 = vadd.f32 %v4784, %v4885
        %v4891 = vadd.f32 %v4785, %v4886
        %v4892 = vadd.f32 %v4786, %v4887
        %s4893 = sld [smem:[#allocation2 + $0x94]]
        %v4894 = vstv %s4893
        %v4895 = vmul.f32 %v4872, %v4894
        %v4896 = vmul.f32 %v4874, %v4894
        %v4897 = vmul.f32 %v4876, %v4894
        %v4898 = vmul.f32 %v4878, %v4894
        %v4899 = vmul.f32 %v4880, %v4894
        %v4900 = vadd.f32 %v4794, %v4895
        %v4901 = vadd.f32 %v4795, %v4896
        %v4902 = vadd.f32 %v4796, %v4897
        %v4903 = vadd.f32 %v4797, %v4898
        %v4904 = vadd.f32 %v4798, %v4899
        %s4905 = sld [smem:[#allocation2 + $0xc1]]
        %v4906 = vstv %s4905
        %v4907 = vmul.f32 %v4872, %v4906
        %v4908 = vmul.f32 %v4874, %v4906
        %v4909 = vmul.f32 %v4876, %v4906
        %v4910 = vmul.f32 %v4878, %v4906
        %v4911 = vmul.f32 %v4880, %v4906
        %v4912 = vadd.f32 %v4806, %v4907
        %v4913 = vadd.f32 %v4807, %v4908
        %v4914 = vadd.f32 %v4808, %v4909
        %v4915 = vadd.f32 %v4809, %v4910
        %v4916 = vadd.f32 %v4810, %v4911
        %s4917 = sld [smem:[#allocation2 + $0xee]]
        %v4918 = vstv %s4917
        %v4919 = vmul.f32 %v4872, %v4918
        %v4920 = vmul.f32 %v4874, %v4918
        %v4921 = vmul.f32 %v4876, %v4918
        %v4922 = vmul.f32 %v4878, %v4918
        %v4923 = vmul.f32 %v4880, %v4918
        %v4924 = vadd.f32 %v4818, %v4919
        %v4925 = vadd.f32 %v4819, %v4920
        %v4926 = vadd.f32 %v4820, %v4921
        %v4927 = vadd.f32 %v4821, %v4922
        %v4928 = vadd.f32 %v4822, %v4923
        %s4929 = sld [smem:[#allocation2 + $0x11b]]
        %v4930 = vstv %s4929
        %v4931 = vmul.f32 %v4872, %v4930
        %v4932 = vmul.f32 %v4874, %v4930
        %v4933 = vmul.f32 %v4876, %v4930
        %v4934 = vmul.f32 %v4878, %v4930
        %v4935 = vmul.f32 %v4880, %v4930
        %v4936 = vadd.f32 %v4830, %v4931
        %v4937 = vadd.f32 %v4831, %v4932
        %v4938 = vadd.f32 %v4832, %v4933
        %v4939 = vadd.f32 %v4833, %v4934
        %v4940 = vadd.f32 %v4834, %v4935
        %s4941 = sld [smem:[#allocation2 + $0x148]]
        %v4942 = vstv %s4941
        %v4943 = vmul.f32 %v4872, %v4942
        %v4944 = vmul.f32 %v4874, %v4942
        %v4945 = vmul.f32 %v4876, %v4942
        %v4946 = vmul.f32 %v4878, %v4942
        %v4947 = vmul.f32 %v4880, %v4942
        %v4948 = vadd.f32 %v4842, %v4943
        %v4949 = vadd.f32 %v4843, %v4944
        %v4950 = vadd.f32 %v4844, %v4945
        %v4951 = vadd.f32 %v4845, %v4946
        %v4952 = vadd.f32 %v4846, %v4947
        %s4953 = sld [smem:[#allocation2 + $0x175]]
        %v4954 = vstv %s4953
        %v4955 = vmul.f32 %v4872, %v4954
        %v4956 = vmul.f32 %v4874, %v4954
        %v4957 = vmul.f32 %v4876, %v4954
        %v4958 = vmul.f32 %v4878, %v4954
        %v4959 = vmul.f32 %v4880, %v4954
        %v4960 = vadd.f32 %v4854, %v4955
        %v4961 = vadd.f32 %v4855, %v4956
        %v4962 = vadd.f32 %v4856, %v4957
        %v4963 = vadd.f32 %v4857, %v4958
        %v4964 = vadd.f32 %v4858, %v4959
        %s4965 = sld [smem:[#allocation2 + $0x1a2]]
        %v4966 = vstv %s4965
        %v4967 = vmul.f32 %v4872, %v4966
        %v4968 = vmul.f32 %v4874, %v4966
        %v4969 = vmul.f32 %v4876, %v4966
        %v4970 = vmul.f32 %v4878, %v4966
        %v4971 = vmul.f32 %v4880, %v4966
        %v4972 = vadd.f32 %v4866, %v4967
        %v4973 = vadd.f32 %v4867, %v4968
        %v4974 = vadd.f32 %v4868, %v4969
        %v4975 = vadd.f32 %v4869, %v4970
        %v4976 = vadd.f32 %v4870, %v4971
        %4977 = vrot.lane.b32.xlu0 %v1303, 104
        %v4978 = vpop.permute.xlu0 %4977
        %4979 = vrot.lane.b32.xlu0 %v1304, 104
        %v4980 = vpop.permute.xlu0 %4979
        %4981 = vrot.lane.b32.xlu0 %v1305, 104
        %v4982 = vpop.permute.xlu0 %4981
        %4983 = vrot.lane.b32.xlu0 %v1306, 104
        %v4984 = vpop.permute.xlu0 %4983
        %4985 = vrot.lane.b32.xlu0 %v1307, 104
        %v4986 = vpop.permute.xlu0 %4985
        %s4987 = sld [smem:[#allocation2 + $0x68]]
        %v4988 = vstv %s4987
        %v4989 = vmul.f32 %v4978, %v4988
        %v4990 = vmul.f32 %v4980, %v4988
        %v4991 = vmul.f32 %v4982, %v4988
        %v4992 = vmul.f32 %v4984, %v4988
        %v4993 = vmul.f32 %v4986, %v4988
        %v4994 = vadd.f32 %v4888, %v4989
        %v4995 = vadd.f32 %v4889, %v4990
        %v4996 = vadd.f32 %v4890, %v4991
        %v4997 = vadd.f32 %v4891, %v4992
        %v4998 = vadd.f32 %v4892, %v4993
        %s4999 = sld [smem:[#allocation2 + $0x95]]
        %v5000 = vstv %s4999
        %v5001 = vmul.f32 %v4978, %v5000
        %v5002 = vmul.f32 %v4980, %v5000
        %v5003 = vmul.f32 %v4982, %v5000
        %v5004 = vmul.f32 %v4984, %v5000
        %v5005 = vmul.f32 %v4986, %v5000
        %v5006 = vadd.f32 %v4900, %v5001
        %v5007 = vadd.f32 %v4901, %v5002
        %v5008 = vadd.f32 %v4902, %v5003
        %v5009 = vadd.f32 %v4903, %v5004
        %v5010 = vadd.f32 %v4904, %v5005
        %s5011 = sld [smem:[#allocation2 + $0xc2]]
        %v5012 = vstv %s5011
        %v5013 = vmul.f32 %v4978, %v5012
        %v5014 = vmul.f32 %v4980, %v5012
        %v5015 = vmul.f32 %v4982, %v5012
        %v5016 = vmul.f32 %v4984, %v5012
        %v5017 = vmul.f32 %v4986, %v5012
        %v5018 = vadd.f32 %v4912, %v5013
        %v5019 = vadd.f32 %v4913, %v5014
        %v5020 = vadd.f32 %v4914, %v5015
        %v5021 = vadd.f32 %v4915, %v5016
        %v5022 = vadd.f32 %v4916, %v5017
        %s5023 = sld [smem:[#allocation2 + $0xef]]
        %v5024 = vstv %s5023
        %v5025 = vmul.f32 %v4978, %v5024
        %v5026 = vmul.f32 %v4980, %v5024
        %v5027 = vmul.f32 %v4982, %v5024
        %v5028 = vmul.f32 %v4984, %v5024
        %v5029 = vmul.f32 %v4986, %v5024
        %v5030 = vadd.f32 %v4924, %v5025
        %v5031 = vadd.f32 %v4925, %v5026
        %v5032 = vadd.f32 %v4926, %v5027
        %v5033 = vadd.f32 %v4927, %v5028
        %v5034 = vadd.f32 %v4928, %v5029
        %s5035 = sld [smem:[#allocation2 + $0x11c]]
        %v5036 = vstv %s5035
        %v5037 = vmul.f32 %v4978, %v5036
        %v5038 = vmul.f32 %v4980, %v5036
        %v5039 = vmul.f32 %v4982, %v5036
        %v5040 = vmul.f32 %v4984, %v5036
        %v5041 = vmul.f32 %v4986, %v5036
        %v5042 = vadd.f32 %v4936, %v5037
        %v5043 = vadd.f32 %v4937, %v5038
        %v5044 = vadd.f32 %v4938, %v5039
        %v5045 = vadd.f32 %v4939, %v5040
        %v5046 = vadd.f32 %v4940, %v5041
        %s5047 = sld [smem:[#allocation2 + $0x149]]
        %v5048 = vstv %s5047
        %v5049 = vmul.f32 %v4978, %v5048
        %v5050 = vmul.f32 %v4980, %v5048
        %v5051 = vmul.f32 %v4982, %v5048
        %v5052 = vmul.f32 %v4984, %v5048
        %v5053 = vmul.f32 %v4986, %v5048
        %v5054 = vadd.f32 %v4948, %v5049
        %v5055 = vadd.f32 %v4949, %v5050
        %v5056 = vadd.f32 %v4950, %v5051
        %v5057 = vadd.f32 %v4951, %v5052
        %v5058 = vadd.f32 %v4952, %v5053
        %s5059 = sld [smem:[#allocation2 + $0x176]]
        %v5060 = vstv %s5059
        %v5061 = vmul.f32 %v4978, %v5060
        %v5062 = vmul.f32 %v4980, %v5060
        %v5063 = vmul.f32 %v4982, %v5060
        %v5064 = vmul.f32 %v4984, %v5060
        %v5065 = vmul.f32 %v4986, %v5060
        %v5066 = vadd.f32 %v4960, %v5061
        %v5067 = vadd.f32 %v4961, %v5062
        %v5068 = vadd.f32 %v4962, %v5063
        %v5069 = vadd.f32 %v4963, %v5064
        %v5070 = vadd.f32 %v4964, %v5065
        %s5071 = sld [smem:[#allocation2 + $0x1a3]]
        %v5072 = vstv %s5071
        %v5073 = vmul.f32 %v4978, %v5072
        %v5074 = vmul.f32 %v4980, %v5072
        %v5075 = vmul.f32 %v4982, %v5072
        %v5076 = vmul.f32 %v4984, %v5072
        %v5077 = vmul.f32 %v4986, %v5072
        %v5078 = vadd.f32 %v4972, %v5073
        %v5079 = vadd.f32 %v4973, %v5074
        %v5080 = vadd.f32 %v4974, %v5075
        %v5081 = vadd.f32 %v4975, %v5076
        %v5082 = vadd.f32 %v4976, %v5077
        %5083 = vrot.lane.b32.xlu0 %v1303, 96
        %v5084 = vpop.permute.xlu0 %5083
        %5085 = vrot.lane.b32.xlu0 %v1304, 96
        %v5086 = vpop.permute.xlu0 %5085
        %5087 = vrot.lane.b32.xlu0 %v1305, 96
        %v5088 = vpop.permute.xlu0 %5087
        %5089 = vrot.lane.b32.xlu0 %v1306, 96
        %v5090 = vpop.permute.xlu0 %5089
        %5091 = vrot.lane.b32.xlu0 %v1307, 96
        %v5092 = vpop.permute.xlu0 %5091
        %s5093 = sld [smem:[#allocation2 + $0x69]]
        %v5094 = vstv %s5093
        %v5095 = vmul.f32 %v5084, %v5094
        %v5096 = vmul.f32 %v5086, %v5094
        %v5097 = vmul.f32 %v5088, %v5094
        %v5098 = vmul.f32 %v5090, %v5094
        %v5099 = vmul.f32 %v5092, %v5094
        %v5100 = vadd.f32 %v4994, %v5095
        %v5101 = vadd.f32 %v4995, %v5096
        %v5102 = vadd.f32 %v4996, %v5097
        %v5103 = vadd.f32 %v4997, %v5098
        %v5104 = vadd.f32 %v4998, %v5099
        %s5105 = sld [smem:[#allocation2 + $0x96]]
        %v5106 = vstv %s5105
        %v5107 = vmul.f32 %v5084, %v5106
        %v5108 = vmul.f32 %v5086, %v5106
        %v5109 = vmul.f32 %v5088, %v5106
        %v5110 = vmul.f32 %v5090, %v5106
        %v5111 = vmul.f32 %v5092, %v5106
        %v5112 = vadd.f32 %v5006, %v5107
        %v5113 = vadd.f32 %v5007, %v5108
        %v5114 = vadd.f32 %v5008, %v5109
        %v5115 = vadd.f32 %v5009, %v5110
        %v5116 = vadd.f32 %v5010, %v5111
        %s5117 = sld [smem:[#allocation2 + $0xc3]]
        %v5118 = vstv %s5117
        %v5119 = vmul.f32 %v5084, %v5118
        %v5120 = vmul.f32 %v5086, %v5118
        %v5121 = vmul.f32 %v5088, %v5118
        %v5122 = vmul.f32 %v5090, %v5118
        %v5123 = vmul.f32 %v5092, %v5118
        %v5124 = vadd.f32 %v5018, %v5119
        %v5125 = vadd.f32 %v5019, %v5120
        %v5126 = vadd.f32 %v5020, %v5121
        %v5127 = vadd.f32 %v5021, %v5122
        %v5128 = vadd.f32 %v5022, %v5123
        %s5129 = sld [smem:[#allocation2 + $0xf0]]
        %v5130 = vstv %s5129
        %v5131 = vmul.f32 %v5084, %v5130
        %v5132 = vmul.f32 %v5086, %v5130
        %v5133 = vmul.f32 %v5088, %v5130
        %v5134 = vmul.f32 %v5090, %v5130
        %v5135 = vmul.f32 %v5092, %v5130
        %v5136 = vadd.f32 %v5030, %v5131
        %v5137 = vadd.f32 %v5031, %v5132
        %v5138 = vadd.f32 %v5032, %v5133
        %v5139 = vadd.f32 %v5033, %v5134
        %v5140 = vadd.f32 %v5034, %v5135
        %s5141 = sld [smem:[#allocation2 + $0x11d]]
        %v5142 = vstv %s5141
        %v5143 = vmul.f32 %v5084, %v5142
        %v5144 = vmul.f32 %v5086, %v5142
        %v5145 = vmul.f32 %v5088, %v5142
        %v5146 = vmul.f32 %v5090, %v5142
        %v5147 = vmul.f32 %v5092, %v5142
        %v5148 = vadd.f32 %v5042, %v5143
        %v5149 = vadd.f32 %v5043, %v5144
        %v5150 = vadd.f32 %v5044, %v5145
        %v5151 = vadd.f32 %v5045, %v5146
        %v5152 = vadd.f32 %v5046, %v5147
        %s5153 = sld [smem:[#allocation2 + $0x14a]]
        %v5154 = vstv %s5153
        %v5155 = vmul.f32 %v5084, %v5154
        %v5156 = vmul.f32 %v5086, %v5154
        %v5157 = vmul.f32 %v5088, %v5154
        %v5158 = vmul.f32 %v5090, %v5154
        %v5159 = vmul.f32 %v5092, %v5154
        %v5160 = vadd.f32 %v5054, %v5155
        %v5161 = vadd.f32 %v5055, %v5156
        %v5162 = vadd.f32 %v5056, %v5157
        %v5163 = vadd.f32 %v5057, %v5158
        %v5164 = vadd.f32 %v5058, %v5159
        %s5165 = sld [smem:[#allocation2 + $0x177]]
        %v5166 = vstv %s5165
        %v5167 = vmul.f32 %v5084, %v5166
        %v5168 = vmul.f32 %v5086, %v5166
        %v5169 = vmul.f32 %v5088, %v5166
        %v5170 = vmul.f32 %v5090, %v5166
        %v5171 = vmul.f32 %v5092, %v5166
        %v5172 = vadd.f32 %v5066, %v5167
        %v5173 = vadd.f32 %v5067, %v5168
        %v5174 = vadd.f32 %v5068, %v5169
        %v5175 = vadd.f32 %v5069, %v5170
        %v5176 = vadd.f32 %v5070, %v5171
        %s5177 = sld [smem:[#allocation2 + $0x1a4]]
        %v5178 = vstv %s5177
        %v5179 = vmul.f32 %v5084, %v5178
        %v5180 = vmul.f32 %v5086, %v5178
        %v5181 = vmul.f32 %v5088, %v5178
        %v5182 = vmul.f32 %v5090, %v5178
        %v5183 = vmul.f32 %v5092, %v5178
        %v5184 = vadd.f32 %v5078, %v5179
        %v5185 = vadd.f32 %v5079, %v5180
        %v5186 = vadd.f32 %v5080, %v5181
        %v5187 = vadd.f32 %v5081, %v5182
        %v5188 = vadd.f32 %v5082, %v5183
        %5189 = vrot.lane.b32.xlu0 %v1448, 32
        %v5190 = vpop.permute.xlu0 %5189
        %5191 = vrot.lane.b32.xlu0 %v1449, 32
        %v5192 = vpop.permute.xlu0 %5191
        %5193 = vrot.lane.b32.xlu0 %v1450, 32
        %v5194 = vpop.permute.xlu0 %5193
        %5195 = vrot.lane.b32.xlu0 %v1451, 32
        %v5196 = vpop.permute.xlu0 %5195
        %5197 = vrot.lane.b32.xlu0 %v1452, 32
        %v5198 = vpop.permute.xlu0 %5197
        %s5199 = sld [smem:[#allocation2 + $0x6a]]
        %v5200 = vstv %s5199
        %v5201 = vmul.f32 %v5190, %v5200
        %v5202 = vmul.f32 %v5192, %v5200
        %v5203 = vmul.f32 %v5194, %v5200
        %v5204 = vmul.f32 %v5196, %v5200
        %v5205 = vmul.f32 %v5198, %v5200
        %v5206 = vadd.f32 %v5100, %v5201
        %v5207 = vadd.f32 %v5101, %v5202
        %v5208 = vadd.f32 %v5102, %v5203
        %v5209 = vadd.f32 %v5103, %v5204
        %v5210 = vadd.f32 %v5104, %v5205
        %s5211 = sld [smem:[#allocation2 + $0x97]]
        %v5212 = vstv %s5211
        %v5213 = vmul.f32 %v5190, %v5212
        %v5214 = vmul.f32 %v5192, %v5212
        %v5215 = vmul.f32 %v5194, %v5212
        %v5216 = vmul.f32 %v5196, %v5212
        %v5217 = vmul.f32 %v5198, %v5212
        %v5218 = vadd.f32 %v5112, %v5213
        %v5219 = vadd.f32 %v5113, %v5214
        %v5220 = vadd.f32 %v5114, %v5215
        %v5221 = vadd.f32 %v5115, %v5216
        %v5222 = vadd.f32 %v5116, %v5217
        %s5223 = sld [smem:[#allocation2 + $0xc4]]
        %v5224 = vstv %s5223
        %v5225 = vmul.f32 %v5190, %v5224
        %v5226 = vmul.f32 %v5192, %v5224
        %v5227 = vmul.f32 %v5194, %v5224
        %v5228 = vmul.f32 %v5196, %v5224
        %v5229 = vmul.f32 %v5198, %v5224
        %v5230 = vadd.f32 %v5124, %v5225
        %v5231 = vadd.f32 %v5125, %v5226
        %v5232 = vadd.f32 %v5126, %v5227
        %v5233 = vadd.f32 %v5127, %v5228
        %v5234 = vadd.f32 %v5128, %v5229
        %s5235 = sld [smem:[#allocation2 + $0xf1]]
        %v5236 = vstv %s5235
        %v5237 = vmul.f32 %v5190, %v5236
        %v5238 = vmul.f32 %v5192, %v5236
        %v5239 = vmul.f32 %v5194, %v5236
        %v5240 = vmul.f32 %v5196, %v5236
        %v5241 = vmul.f32 %v5198, %v5236
        %v5242 = vadd.f32 %v5136, %v5237
        %v5243 = vadd.f32 %v5137, %v5238
        %v5244 = vadd.f32 %v5138, %v5239
        %v5245 = vadd.f32 %v5139, %v5240
        %v5246 = vadd.f32 %v5140, %v5241
        %s5247 = sld [smem:[#allocation2 + $0x11e]]
        %v5248 = vstv %s5247
        %v5249 = vmul.f32 %v5190, %v5248
        %v5250 = vmul.f32 %v5192, %v5248
        %v5251 = vmul.f32 %v5194, %v5248
        %v5252 = vmul.f32 %v5196, %v5248
        %v5253 = vmul.f32 %v5198, %v5248
        %v5254 = vadd.f32 %v5148, %v5249
        %v5255 = vadd.f32 %v5149, %v5250
        %v5256 = vadd.f32 %v5150, %v5251
        %v5257 = vadd.f32 %v5151, %v5252
        %v5258 = vadd.f32 %v5152, %v5253
        %s5259 = sld [smem:[#allocation2 + $0x14b]]
        %v5260 = vstv %s5259
        %v5261 = vmul.f32 %v5190, %v5260
        %v5262 = vmul.f32 %v5192, %v5260
        %v5263 = vmul.f32 %v5194, %v5260
        %v5264 = vmul.f32 %v5196, %v5260
        %v5265 = vmul.f32 %v5198, %v5260
        %v5266 = vadd.f32 %v5160, %v5261
        %v5267 = vadd.f32 %v5161, %v5262
        %v5268 = vadd.f32 %v5162, %v5263
        %v5269 = vadd.f32 %v5163, %v5264
        %v5270 = vadd.f32 %v5164, %v5265
        %s5271 = sld [smem:[#allocation2 + $0x178]]
        %v5272 = vstv %s5271
        %v5273 = vmul.f32 %v5190, %v5272
        %v5274 = vmul.f32 %v5192, %v5272
        %v5275 = vmul.f32 %v5194, %v5272
        %v5276 = vmul.f32 %v5196, %v5272
        %v5277 = vmul.f32 %v5198, %v5272
        %v5278 = vadd.f32 %v5172, %v5273
        %v5279 = vadd.f32 %v5173, %v5274
        %v5280 = vadd.f32 %v5174, %v5275
        %v5281 = vadd.f32 %v5175, %v5276
        %v5282 = vadd.f32 %v5176, %v5277
        %s5283 = sld [smem:[#allocation2 + $0x1a5]]
        %v5284 = vstv %s5283
        %v5285 = vmul.f32 %v5190, %v5284
        %v5286 = vmul.f32 %v5192, %v5284
        %v5287 = vmul.f32 %v5194, %v5284
        %v5288 = vmul.f32 %v5196, %v5284
        %v5289 = vmul.f32 %v5198, %v5284
        %v5290 = vadd.f32 %v5184, %v5285
        %v5291 = vadd.f32 %v5185, %v5286
        %v5292 = vadd.f32 %v5186, %v5287
        %v5293 = vadd.f32 %v5187, %v5288
        %v5294 = vadd.f32 %v5188, %v5289
        %5295 = vrot.lane.b32.xlu0 %v1448, 24
        %v5296 = vpop.permute.xlu0 %5295
        %5297 = vrot.lane.b32.xlu0 %v1449, 24
        %v5298 = vpop.permute.xlu0 %5297
        %5299 = vrot.lane.b32.xlu0 %v1450, 24
        %v5300 = vpop.permute.xlu0 %5299
        %5301 = vrot.lane.b32.xlu0 %v1451, 24
        %v5302 = vpop.permute.xlu0 %5301
        %5303 = vrot.lane.b32.xlu0 %v1452, 24
        %v5304 = vpop.permute.xlu0 %5303
        %s5305 = sld [smem:[#allocation2 + $0x6b]]
        %v5306 = vstv %s5305
        %v5307 = vmul.f32 %v5296, %v5306
        %v5308 = vmul.f32 %v5298, %v5306
        %v5309 = vmul.f32 %v5300, %v5306
        %v5310 = vmul.f32 %v5302, %v5306
        %v5311 = vmul.f32 %v5304, %v5306
        %v5312 = vadd.f32 %v5206, %v5307
        %v5313 = vadd.f32 %v5207, %v5308
        %v5314 = vadd.f32 %v5208, %v5309
        %v5315 = vadd.f32 %v5209, %v5310
        %v5316 = vadd.f32 %v5210, %v5311
        %s5317 = sld [smem:[#allocation2 + $0x98]]
        %v5318 = vstv %s5317
        %v5319 = vmul.f32 %v5296, %v5318
        %v5320 = vmul.f32 %v5298, %v5318
        %v5321 = vmul.f32 %v5300, %v5318
        %v5322 = vmul.f32 %v5302, %v5318
        %v5323 = vmul.f32 %v5304, %v5318
        %v5324 = vadd.f32 %v5218, %v5319
        %v5325 = vadd.f32 %v5219, %v5320
        %v5326 = vadd.f32 %v5220, %v5321
        %v5327 = vadd.f32 %v5221, %v5322
        %v5328 = vadd.f32 %v5222, %v5323
        %s5329 = sld [smem:[#allocation2 + $0xc5]]
        %v5330 = vstv %s5329
        %v5331 = vmul.f32 %v5296, %v5330
        %v5332 = vmul.f32 %v5298, %v5330
        %v5333 = vmul.f32 %v5300, %v5330
        %v5334 = vmul.f32 %v5302, %v5330
        %v5335 = vmul.f32 %v5304, %v5330
        %v5336 = vadd.f32 %v5230, %v5331
        %v5337 = vadd.f32 %v5231, %v5332
        %v5338 = vadd.f32 %v5232, %v5333
        %v5339 = vadd.f32 %v5233, %v5334
        %v5340 = vadd.f32 %v5234, %v5335
        %s5341 = sld [smem:[#allocation2 + $0xf2]]
        %v5342 = vstv %s5341
        %v5343 = vmul.f32 %v5296, %v5342
        %v5344 = vmul.f32 %v5298, %v5342
        %v5345 = vmul.f32 %v5300, %v5342
        %v5346 = vmul.f32 %v5302, %v5342
        %v5347 = vmul.f32 %v5304, %v5342
        %v5348 = vadd.f32 %v5242, %v5343
        %v5349 = vadd.f32 %v5243, %v5344
        %v5350 = vadd.f32 %v5244, %v5345
        %v5351 = vadd.f32 %v5245, %v5346
        %v5352 = vadd.f32 %v5246, %v5347
        %s5353 = sld [smem:[#allocation2 + $0x11f]]
        %v5354 = vstv %s5353
        %v5355 = vmul.f32 %v5296, %v5354
        %v5356 = vmul.f32 %v5298, %v5354
        %v5357 = vmul.f32 %v5300, %v5354
        %v5358 = vmul.f32 %v5302, %v5354
        %v5359 = vmul.f32 %v5304, %v5354
        %v5360 = vadd.f32 %v5254, %v5355
        %v5361 = vadd.f32 %v5255, %v5356
        %v5362 = vadd.f32 %v5256, %v5357
        %v5363 = vadd.f32 %v5257, %v5358
        %v5364 = vadd.f32 %v5258, %v5359
        %s5365 = sld [smem:[#allocation2 + $0x14c]]
        %v5366 = vstv %s5365
        %v5367 = vmul.f32 %v5296, %v5366
        %v5368 = vmul.f32 %v5298, %v5366
        %v5369 = vmul.f32 %v5300, %v5366
        %v5370 = vmul.f32 %v5302, %v5366
        %v5371 = vmul.f32 %v5304, %v5366
        %v5372 = vadd.f32 %v5266, %v5367
        %v5373 = vadd.f32 %v5267, %v5368
        %v5374 = vadd.f32 %v5268, %v5369
        %v5375 = vadd.f32 %v5269, %v5370
        %v5376 = vadd.f32 %v5270, %v5371
        %s5377 = sld [smem:[#allocation2 + $0x179]]
        %v5378 = vstv %s5377
        %v5379 = vmul.f32 %v5296, %v5378
        %v5380 = vmul.f32 %v5298, %v5378
        %v5381 = vmul.f32 %v5300, %v5378
        %v5382 = vmul.f32 %v5302, %v5378
        %v5383 = vmul.f32 %v5304, %v5378
        %v5384 = vadd.f32 %v5278, %v5379
        %v5385 = vadd.f32 %v5279, %v5380
        %v5386 = vadd.f32 %v5280, %v5381
        %v5387 = vadd.f32 %v5281, %v5382
        %v5388 = vadd.f32 %v5282, %v5383
        %s5389 = sld [smem:[#allocation2 + $0x1a6]]
        %v5390 = vstv %s5389
        %v5391 = vmul.f32 %v5296, %v5390
        %v5392 = vmul.f32 %v5298, %v5390
        %v5393 = vmul.f32 %v5300, %v5390
        %v5394 = vmul.f32 %v5302, %v5390
        %v5395 = vmul.f32 %v5304, %v5390
        %v5396 = vadd.f32 %v5290, %v5391
        %v5397 = vadd.f32 %v5291, %v5392
        %v5398 = vadd.f32 %v5292, %v5393
        %v5399 = vadd.f32 %v5293, %v5394
        %v5400 = vadd.f32 %v5294, %v5395
        %5401 = vrot.lane.b32.xlu0 %v1448, 16
        %v5402 = vpop.permute.xlu0 %5401
        %5403 = vrot.lane.b32.xlu0 %v1449, 16
        %v5404 = vpop.permute.xlu0 %5403
        %5405 = vrot.lane.b32.xlu0 %v1450, 16
        %v5406 = vpop.permute.xlu0 %5405
        %5407 = vrot.lane.b32.xlu0 %v1451, 16
        %v5408 = vpop.permute.xlu0 %5407
        %5409 = vrot.lane.b32.xlu0 %v1452, 16
        %v5410 = vpop.permute.xlu0 %5409
        %s5411 = sld [smem:[#allocation2 + $0x6c]]
        %v5412 = vstv %s5411
        %v5413 = vmul.f32 %v5402, %v5412
        %v5414 = vmul.f32 %v5404, %v5412
        %v5415 = vmul.f32 %v5406, %v5412
        %v5416 = vmul.f32 %v5408, %v5412
        %v5417 = vmul.f32 %v5410, %v5412
        %v5418 = vadd.f32 %v5312, %v5413
        %v5419 = vadd.f32 %v5313, %v5414
        %v5420 = vadd.f32 %v5314, %v5415
        %v5421 = vadd.f32 %v5315, %v5416
        %v5422 = vadd.f32 %v5316, %v5417
        %s5423 = sld [smem:[#allocation2 + $0x99]]
        %v5424 = vstv %s5423
        %v5425 = vmul.f32 %v5402, %v5424
        %v5426 = vmul.f32 %v5404, %v5424
        %v5427 = vmul.f32 %v5406, %v5424
        %v5428 = vmul.f32 %v5408, %v5424
        %v5429 = vmul.f32 %v5410, %v5424
        %v5430 = vadd.f32 %v5324, %v5425
        %v5431 = vadd.f32 %v5325, %v5426
        %v5432 = vadd.f32 %v5326, %v5427
        %v5433 = vadd.f32 %v5327, %v5428
        %v5434 = vadd.f32 %v5328, %v5429
        %s5435 = sld [smem:[#allocation2 + $0xc6]]
        %v5436 = vstv %s5435
        %v5437 = vmul.f32 %v5402, %v5436
        %v5438 = vmul.f32 %v5404, %v5436
        %v5439 = vmul.f32 %v5406, %v5436
        %v5440 = vmul.f32 %v5408, %v5436
        %v5441 = vmul.f32 %v5410, %v5436
        %v5442 = vadd.f32 %v5336, %v5437
        %v5443 = vadd.f32 %v5337, %v5438
        %v5444 = vadd.f32 %v5338, %v5439
        %v5445 = vadd.f32 %v5339, %v5440
        %v5446 = vadd.f32 %v5340, %v5441
        %s5447 = sld [smem:[#allocation2 + $0xf3]]
        %v5448 = vstv %s5447
        %v5449 = vmul.f32 %v5402, %v5448
        %v5450 = vmul.f32 %v5404, %v5448
        %v5451 = vmul.f32 %v5406, %v5448
        %v5452 = vmul.f32 %v5408, %v5448
        %v5453 = vmul.f32 %v5410, %v5448
        %v5454 = vadd.f32 %v5348, %v5449
        %v5455 = vadd.f32 %v5349, %v5450
        %v5456 = vadd.f32 %v5350, %v5451
        %v5457 = vadd.f32 %v5351, %v5452
        %v5458 = vadd.f32 %v5352, %v5453
        %s5459 = sld [smem:[#allocation2 + $0x120]]
        %v5460 = vstv %s5459
        %v5461 = vmul.f32 %v5402, %v5460
        %v5462 = vmul.f32 %v5404, %v5460
        %v5463 = vmul.f32 %v5406, %v5460
        %v5464 = vmul.f32 %v5408, %v5460
        %v5465 = vmul.f32 %v5410, %v5460
        %v5466 = vadd.f32 %v5360, %v5461
        %v5467 = vadd.f32 %v5361, %v5462
        %v5468 = vadd.f32 %v5362, %v5463
        %v5469 = vadd.f32 %v5363, %v5464
        %v5470 = vadd.f32 %v5364, %v5465
        %s5471 = sld [smem:[#allocation2 + $0x14d]]
        %v5472 = vstv %s5471
        %v5473 = vmul.f32 %v5402, %v5472
        %v5474 = vmul.f32 %v5404, %v5472
        %v5475 = vmul.f32 %v5406, %v5472
        %v5476 = vmul.f32 %v5408, %v5472
        %v5477 = vmul.f32 %v5410, %v5472
        %v5478 = vadd.f32 %v5372, %v5473
        %v5479 = vadd.f32 %v5373, %v5474
        %v5480 = vadd.f32 %v5374, %v5475
        %v5481 = vadd.f32 %v5375, %v5476
        %v5482 = vadd.f32 %v5376, %v5477
        %s5483 = sld [smem:[#allocation2 + $0x17a]]
        %v5484 = vstv %s5483
        %v5485 = vmul.f32 %v5402, %v5484
        %v5486 = vmul.f32 %v5404, %v5484
        %v5487 = vmul.f32 %v5406, %v5484
        %v5488 = vmul.f32 %v5408, %v5484
        %v5489 = vmul.f32 %v5410, %v5484
        %v5490 = vadd.f32 %v5384, %v5485
        %v5491 = vadd.f32 %v5385, %v5486
        %v5492 = vadd.f32 %v5386, %v5487
        %v5493 = vadd.f32 %v5387, %v5488
        %v5494 = vadd.f32 %v5388, %v5489
        %s5495 = sld [smem:[#allocation2 + $0x1a7]]
        %v5496 = vstv %s5495
        %v5497 = vmul.f32 %v5402, %v5496
        %v5498 = vmul.f32 %v5404, %v5496
        %v5499 = vmul.f32 %v5406, %v5496
        %v5500 = vmul.f32 %v5408, %v5496
        %v5501 = vmul.f32 %v5410, %v5496
        %v5502 = vadd.f32 %v5396, %v5497
        %v5503 = vadd.f32 %v5397, %v5498
        %v5504 = vadd.f32 %v5398, %v5499
        %v5505 = vadd.f32 %v5399, %v5500
        %v5506 = vadd.f32 %v5400, %v5501
        %5507 = vrot.lane.b32.xlu0 %v1448, 8
        %v5508 = vpop.permute.xlu0 %5507
        %5509 = vrot.lane.b32.xlu0 %v1449, 8
        %v5510 = vpop.permute.xlu0 %5509
        %5511 = vrot.lane.b32.xlu0 %v1450, 8
        %v5512 = vpop.permute.xlu0 %5511
        %5513 = vrot.lane.b32.xlu0 %v1451, 8
        %v5514 = vpop.permute.xlu0 %5513
        %5515 = vrot.lane.b32.xlu0 %v1452, 8
        %v5516 = vpop.permute.xlu0 %5515
        %s5517 = sld [smem:[#allocation2 + $0x6d]]
        %v5518 = vstv %s5517
        %v5519 = vmul.f32 %v5508, %v5518
        %v5520 = vmul.f32 %v5510, %v5518
        %v5521 = vmul.f32 %v5512, %v5518
        %v5522 = vmul.f32 %v5514, %v5518
        %v5523 = vmul.f32 %v5516, %v5518
        %v5524 = vadd.f32 %v5418, %v5519
        %v5525 = vadd.f32 %v5419, %v5520
        %v5526 = vadd.f32 %v5420, %v5521
        %v5527 = vadd.f32 %v5421, %v5522
        %v5528 = vadd.f32 %v5422, %v5523
        %s5529 = sld [smem:[#allocation2 + $0x9a]]
        %v5530 = vstv %s5529
        %v5531 = vmul.f32 %v5508, %v5530
        %v5532 = vmul.f32 %v5510, %v5530
        %v5533 = vmul.f32 %v5512, %v5530
        %v5534 = vmul.f32 %v5514, %v5530
        %v5535 = vmul.f32 %v5516, %v5530
        %v5536 = vadd.f32 %v5430, %v5531
        %v5537 = vadd.f32 %v5431, %v5532
        %v5538 = vadd.f32 %v5432, %v5533
        %v5539 = vadd.f32 %v5433, %v5534
        %v5540 = vadd.f32 %v5434, %v5535
        %s5541 = sld [smem:[#allocation2 + $0xc7]]
        %v5542 = vstv %s5541
        %v5543 = vmul.f32 %v5508, %v5542
        %v5544 = vmul.f32 %v5510, %v5542
        %v5545 = vmul.f32 %v5512, %v5542
        %v5546 = vmul.f32 %v5514, %v5542
        %v5547 = vmul.f32 %v5516, %v5542
        %v5548 = vadd.f32 %v5442, %v5543
        %v5549 = vadd.f32 %v5443, %v5544
        %v5550 = vadd.f32 %v5444, %v5545
        %v5551 = vadd.f32 %v5445, %v5546
        %v5552 = vadd.f32 %v5446, %v5547
        %s5553 = sld [smem:[#allocation2 + $0xf4]]
        %v5554 = vstv %s5553
        %v5555 = vmul.f32 %v5508, %v5554
        %v5556 = vmul.f32 %v5510, %v5554
        %v5557 = vmul.f32 %v5512, %v5554
        %v5558 = vmul.f32 %v5514, %v5554
        %v5559 = vmul.f32 %v5516, %v5554
        %v5560 = vadd.f32 %v5454, %v5555
        %v5561 = vadd.f32 %v5455, %v5556
        %v5562 = vadd.f32 %v5456, %v5557
        %v5563 = vadd.f32 %v5457, %v5558
        %v5564 = vadd.f32 %v5458, %v5559
        %s5565 = sld [smem:[#allocation2 + $0x121]]
        %v5566 = vstv %s5565
        %v5567 = vmul.f32 %v5508, %v5566
        %v5568 = vmul.f32 %v5510, %v5566
        %v5569 = vmul.f32 %v5512, %v5566
        %v5570 = vmul.f32 %v5514, %v5566
        %v5571 = vmul.f32 %v5516, %v5566
        %v5572 = vadd.f32 %v5466, %v5567
        %v5573 = vadd.f32 %v5467, %v5568
        %v5574 = vadd.f32 %v5468, %v5569
        %v5575 = vadd.f32 %v5469, %v5570
        %v5576 = vadd.f32 %v5470, %v5571
        %s5577 = sld [smem:[#allocation2 + $0x14e]]
        %v5578 = vstv %s5577
        %v5579 = vmul.f32 %v5508, %v5578
        %v5580 = vmul.f32 %v5510, %v5578
        %v5581 = vmul.f32 %v5512, %v5578
        %v5582 = vmul.f32 %v5514, %v5578
        %v5583 = vmul.f32 %v5516, %v5578
        %v5584 = vadd.f32 %v5478, %v5579
        %v5585 = vadd.f32 %v5479, %v5580
        %v5586 = vadd.f32 %v5480, %v5581
        %v5587 = vadd.f32 %v5481, %v5582
        %v5588 = vadd.f32 %v5482, %v5583
        %s5589 = sld [smem:[#allocation2 + $0x17b]]
        %v5590 = vstv %s5589
        %v5591 = vmul.f32 %v5508, %v5590
        %v5592 = vmul.f32 %v5510, %v5590
        %v5593 = vmul.f32 %v5512, %v5590
        %v5594 = vmul.f32 %v5514, %v5590
        %v5595 = vmul.f32 %v5516, %v5590
        %v5596 = vadd.f32 %v5490, %v5591
        %v5597 = vadd.f32 %v5491, %v5592
        %v5598 = vadd.f32 %v5492, %v5593
        %v5599 = vadd.f32 %v5493, %v5594
        %v5600 = vadd.f32 %v5494, %v5595
        %s5601 = sld [smem:[#allocation2 + $0x1a8]]
        %v5602 = vstv %s5601
        %v5603 = vmul.f32 %v5508, %v5602
        %v5604 = vmul.f32 %v5510, %v5602
        %v5605 = vmul.f32 %v5512, %v5602
        %v5606 = vmul.f32 %v5514, %v5602
        %v5607 = vmul.f32 %v5516, %v5602
        %v5608 = vadd.f32 %v5502, %v5603
        %v5609 = vadd.f32 %v5503, %v5604
        %v5610 = vadd.f32 %v5504, %v5605
        %v5611 = vadd.f32 %v5505, %v5606
        %v5612 = vadd.f32 %v5506, %v5607
        %s5613 = sld [smem:[#allocation2 + $0x6e]]
        %v5614 = vstv %s5613
        %v5615 = vmul.f32 %v1448, %v5614
        %v5616 = vmul.f32 %v1449, %v5614
        %v5617 = vmul.f32 %v1450, %v5614
        %v5618 = vmul.f32 %v1451, %v5614
        %v5619 = vmul.f32 %v1452, %v5614
        %v5620 = vadd.f32 %v5524, %v5615
        %v5621 = vadd.f32 %v5525, %v5616
        %v5622 = vadd.f32 %v5526, %v5617
        %v5623 = vadd.f32 %v5527, %v5618
        %v5624 = vadd.f32 %v5528, %v5619
        %s5625 = sld [smem:[#allocation2 + $0x9b]]
        %v5626 = vstv %s5625
        %v5627 = vmul.f32 %v1448, %v5626
        %v5628 = vmul.f32 %v1449, %v5626
        %v5629 = vmul.f32 %v1450, %v5626
        %v5630 = vmul.f32 %v1451, %v5626
        %v5631 = vmul.f32 %v1452, %v5626
        %v5632 = vadd.f32 %v5536, %v5627
        %v5633 = vadd.f32 %v5537, %v5628
        %v5634 = vadd.f32 %v5538, %v5629
        %v5635 = vadd.f32 %v5539, %v5630
        %v5636 = vadd.f32 %v5540, %v5631
        %s5637 = sld [smem:[#allocation2 + $0xc8]]
        %v5638 = vstv %s5637
        %v5639 = vmul.f32 %v1448, %v5638
        %v5640 = vmul.f32 %v1449, %v5638
        %v5641 = vmul.f32 %v1450, %v5638
        %v5642 = vmul.f32 %v1451, %v5638
        %v5643 = vmul.f32 %v1452, %v5638
        %v5644 = vadd.f32 %v5548, %v5639
        %v5645 = vadd.f32 %v5549, %v5640
        %v5646 = vadd.f32 %v5550, %v5641
        %v5647 = vadd.f32 %v5551, %v5642
        %v5648 = vadd.f32 %v5552, %v5643
        %s5649 = sld [smem:[#allocation2 + $0xf5]]
        %v5650 = vstv %s5649
        %v5651 = vmul.f32 %v1448, %v5650
        %v5652 = vmul.f32 %v1449, %v5650
        %v5653 = vmul.f32 %v1450, %v5650
        %v5654 = vmul.f32 %v1451, %v5650
        %v5655 = vmul.f32 %v1452, %v5650
        %v5656 = vadd.f32 %v5560, %v5651
        %v5657 = vadd.f32 %v5561, %v5652
        %v5658 = vadd.f32 %v5562, %v5653
        %v5659 = vadd.f32 %v5563, %v5654
        %v5660 = vadd.f32 %v5564, %v5655
        %s5661 = sld [smem:[#allocation2 + $0x122]]
        %v5662 = vstv %s5661
        %v5663 = vmul.f32 %v1448, %v5662
        %v5664 = vmul.f32 %v1449, %v5662
        %v5665 = vmul.f32 %v1450, %v5662
        %v5666 = vmul.f32 %v1451, %v5662
        %v5667 = vmul.f32 %v1452, %v5662
        %v5668 = vadd.f32 %v5572, %v5663
        %v5669 = vadd.f32 %v5573, %v5664
        %v5670 = vadd.f32 %v5574, %v5665
        %v5671 = vadd.f32 %v5575, %v5666
        %v5672 = vadd.f32 %v5576, %v5667
        %s5673 = sld [smem:[#allocation2 + $0x14f]]
        %v5674 = vstv %s5673
        %v5675 = vmul.f32 %v1448, %v5674
        %v5676 = vmul.f32 %v1449, %v5674
        %v5677 = vmul.f32 %v1450, %v5674
        %v5678 = vmul.f32 %v1451, %v5674
        %v5679 = vmul.f32 %v1452, %v5674
        %v5680 = vadd.f32 %v5584, %v5675
        %v5681 = vadd.f32 %v5585, %v5676
        %v5682 = vadd.f32 %v5586, %v5677
        %v5683 = vadd.f32 %v5587, %v5678
        %v5684 = vadd.f32 %v5588, %v5679
        %s5685 = sld [smem:[#allocation2 + $0x17c]]
        %v5686 = vstv %s5685
        %v5687 = vmul.f32 %v1448, %v5686
        %v5688 = vmul.f32 %v1449, %v5686
        %v5689 = vmul.f32 %v1450, %v5686
        %v5690 = vmul.f32 %v1451, %v5686
        %v5691 = vmul.f32 %v1452, %v5686
        %v5692 = vadd.f32 %v5596, %v5687
        %v5693 = vadd.f32 %v5597, %v5688
        %v5694 = vadd.f32 %v5598, %v5689
        %v5695 = vadd.f32 %v5599, %v5690
        %v5696 = vadd.f32 %v5600, %v5691
        %s5697 = sld [smem:[#allocation2 + $0x1a9]]
        %v5698 = vstv %s5697
        %v5699 = vmul.f32 %v1448, %v5698
        %v5700 = vmul.f32 %v1449, %v5698
        %v5701 = vmul.f32 %v1450, %v5698
        %v5702 = vmul.f32 %v1451, %v5698
        %v5703 = vmul.f32 %v1452, %v5698
        %v5704 = vadd.f32 %v5608, %v5699
        %v5705 = vadd.f32 %v5609, %v5700
        %v5706 = vadd.f32 %v5610, %v5701
        %v5707 = vadd.f32 %v5611, %v5702
        %v5708 = vadd.f32 %v5612, %v5703
        %5709 = vrot.lane.b32.xlu0 %v1448, 120
        %v5710 = vpop.permute.xlu0 %5709
        %5711 = vrot.lane.b32.xlu0 %v1449, 120
        %v5712 = vpop.permute.xlu0 %5711
        %5713 = vrot.lane.b32.xlu0 %v1450, 120
        %v5714 = vpop.permute.xlu0 %5713
        %5715 = vrot.lane.b32.xlu0 %v1451, 120
        %v5716 = vpop.permute.xlu0 %5715
        %5717 = vrot.lane.b32.xlu0 %v1452, 120
        %v5718 = vpop.permute.xlu0 %5717
        %s5719 = sld [smem:[#allocation2 + $0x6f]]
        %v5720 = vstv %s5719
        %v5721 = vmul.f32 %v5710, %v5720
        %v5722 = vmul.f32 %v5712, %v5720
        %v5723 = vmul.f32 %v5714, %v5720
        %v5724 = vmul.f32 %v5716, %v5720
        %v5725 = vmul.f32 %v5718, %v5720
        %v5726 = vadd.f32 %v5620, %v5721
        %v5727 = vadd.f32 %v5621, %v5722
        %v5728 = vadd.f32 %v5622, %v5723
        %v5729 = vadd.f32 %v5623, %v5724
        %v5730 = vadd.f32 %v5624, %v5725
        %s5731 = sld [smem:[#allocation2 + $0x9c]]
        %v5732 = vstv %s5731
        %v5733 = vmul.f32 %v5710, %v5732
        %v5734 = vmul.f32 %v5712, %v5732
        %v5735 = vmul.f32 %v5714, %v5732
        %v5736 = vmul.f32 %v5716, %v5732
        %v5737 = vmul.f32 %v5718, %v5732
        %v5738 = vadd.f32 %v5632, %v5733
        %v5739 = vadd.f32 %v5633, %v5734
        %v5740 = vadd.f32 %v5634, %v5735
        %v5741 = vadd.f32 %v5635, %v5736
        %v5742 = vadd.f32 %v5636, %v5737
        %s5743 = sld [smem:[#allocation2 + $0xc9]]
        %v5744 = vstv %s5743
        %v5745 = vmul.f32 %v5710, %v5744
        %v5746 = vmul.f32 %v5712, %v5744
        %v5747 = vmul.f32 %v5714, %v5744
        %v5748 = vmul.f32 %v5716, %v5744
        %v5749 = vmul.f32 %v5718, %v5744
        %v5750 = vadd.f32 %v5644, %v5745
        %v5751 = vadd.f32 %v5645, %v5746
        %v5752 = vadd.f32 %v5646, %v5747
        %v5753 = vadd.f32 %v5647, %v5748
        %v5754 = vadd.f32 %v5648, %v5749
        %s5755 = sld [smem:[#allocation2 + $0xf6]]
        %v5756 = vstv %s5755
        %v5757 = vmul.f32 %v5710, %v5756
        %v5758 = vmul.f32 %v5712, %v5756
        %v5759 = vmul.f32 %v5714, %v5756
        %v5760 = vmul.f32 %v5716, %v5756
        %v5761 = vmul.f32 %v5718, %v5756
        %v5762 = vadd.f32 %v5656, %v5757
        %v5763 = vadd.f32 %v5657, %v5758
        %v5764 = vadd.f32 %v5658, %v5759
        %v5765 = vadd.f32 %v5659, %v5760
        %v5766 = vadd.f32 %v5660, %v5761
        %s5767 = sld [smem:[#allocation2 + $0x123]]
        %v5768 = vstv %s5767
        %v5769 = vmul.f32 %v5710, %v5768
        %v5770 = vmul.f32 %v5712, %v5768
        %v5771 = vmul.f32 %v5714, %v5768
        %v5772 = vmul.f32 %v5716, %v5768
        %v5773 = vmul.f32 %v5718, %v5768
        %v5774 = vadd.f32 %v5668, %v5769
        %v5775 = vadd.f32 %v5669, %v5770
        %v5776 = vadd.f32 %v5670, %v5771
        %v5777 = vadd.f32 %v5671, %v5772
        %v5778 = vadd.f32 %v5672, %v5773
        %s5779 = sld [smem:[#allocation2 + $0x150]]
        %v5780 = vstv %s5779
        %v5781 = vmul.f32 %v5710, %v5780
        %v5782 = vmul.f32 %v5712, %v5780
        %v5783 = vmul.f32 %v5714, %v5780
        %v5784 = vmul.f32 %v5716, %v5780
        %v5785 = vmul.f32 %v5718, %v5780
        %v5786 = vadd.f32 %v5680, %v5781
        %v5787 = vadd.f32 %v5681, %v5782
        %v5788 = vadd.f32 %v5682, %v5783
        %v5789 = vadd.f32 %v5683, %v5784
        %v5790 = vadd.f32 %v5684, %v5785
        %s5791 = sld [smem:[#allocation2 + $0x17d]]
        %v5792 = vstv %s5791
        %v5793 = vmul.f32 %v5710, %v5792
        %v5794 = vmul.f32 %v5712, %v5792
        %v5795 = vmul.f32 %v5714, %v5792
        %v5796 = vmul.f32 %v5716, %v5792
        %v5797 = vmul.f32 %v5718, %v5792
        %v5798 = vadd.f32 %v5692, %v5793
        %v5799 = vadd.f32 %v5693, %v5794
        %v5800 = vadd.f32 %v5694, %v5795
        %v5801 = vadd.f32 %v5695, %v5796
        %v5802 = vadd.f32 %v5696, %v5797
        %s5803 = sld [smem:[#allocation2 + $0x1aa]]
        %v5804 = vstv %s5803
        %v5805 = vmul.f32 %v5710, %v5804
        %v5806 = vmul.f32 %v5712, %v5804
        %v5807 = vmul.f32 %v5714, %v5804
        %v5808 = vmul.f32 %v5716, %v5804
        %v5809 = vmul.f32 %v5718, %v5804
        %v5810 = vadd.f32 %v5704, %v5805
        %v5811 = vadd.f32 %v5705, %v5806
        %v5812 = vadd.f32 %v5706, %v5807
        %v5813 = vadd.f32 %v5707, %v5808
        %v5814 = vadd.f32 %v5708, %v5809
        %5815 = vrot.lane.b32.xlu0 %v1448, 112
        %v5816 = vpop.permute.xlu0 %5815
        %5817 = vrot.lane.b32.xlu0 %v1449, 112
        %v5818 = vpop.permute.xlu0 %5817
        %5819 = vrot.lane.b32.xlu0 %v1450, 112
        %v5820 = vpop.permute.xlu0 %5819
        %5821 = vrot.lane.b32.xlu0 %v1451, 112
        %v5822 = vpop.permute.xlu0 %5821
        %5823 = vrot.lane.b32.xlu0 %v1452, 112
        %v5824 = vpop.permute.xlu0 %5823
        %s5825 = sld [smem:[#allocation2 + $0x70]]
        %v5826 = vstv %s5825
        %v5827 = vmul.f32 %v5816, %v5826
        %v5828 = vmul.f32 %v5818, %v5826
        %v5829 = vmul.f32 %v5820, %v5826
        %v5830 = vmul.f32 %v5822, %v5826
        %v5831 = vmul.f32 %v5824, %v5826
        %v5832 = vadd.f32 %v5726, %v5827
        %v5833 = vadd.f32 %v5727, %v5828
        %v5834 = vadd.f32 %v5728, %v5829
        %v5835 = vadd.f32 %v5729, %v5830
        %v5836 = vadd.f32 %v5730, %v5831
        %s5837 = sld [smem:[#allocation2 + $0x9d]]
        %v5838 = vstv %s5837
        %v5839 = vmul.f32 %v5816, %v5838
        %v5840 = vmul.f32 %v5818, %v5838
        %v5841 = vmul.f32 %v5820, %v5838
        %v5842 = vmul.f32 %v5822, %v5838
        %v5843 = vmul.f32 %v5824, %v5838
        %v5844 = vadd.f32 %v5738, %v5839
        %v5845 = vadd.f32 %v5739, %v5840
        %v5846 = vadd.f32 %v5740, %v5841
        %v5847 = vadd.f32 %v5741, %v5842
        %v5848 = vadd.f32 %v5742, %v5843
        %s5849 = sld [smem:[#allocation2 + $0xca]]
        %v5850 = vstv %s5849
        %v5851 = vmul.f32 %v5816, %v5850
        %v5852 = vmul.f32 %v5818, %v5850
        %v5853 = vmul.f32 %v5820, %v5850
        %v5854 = vmul.f32 %v5822, %v5850
        %v5855 = vmul.f32 %v5824, %v5850
        %v5856 = vadd.f32 %v5750, %v5851
        %v5857 = vadd.f32 %v5751, %v5852
        %v5858 = vadd.f32 %v5752, %v5853
        %v5859 = vadd.f32 %v5753, %v5854
        %v5860 = vadd.f32 %v5754, %v5855
        %s5861 = sld [smem:[#allocation2 + $0xf7]]
        %v5862 = vstv %s5861
        %v5863 = vmul.f32 %v5816, %v5862
        %v5864 = vmul.f32 %v5818, %v5862
        %v5865 = vmul.f32 %v5820, %v5862
        %v5866 = vmul.f32 %v5822, %v5862
        %v5867 = vmul.f32 %v5824, %v5862
        %v5868 = vadd.f32 %v5762, %v5863
        %v5869 = vadd.f32 %v5763, %v5864
        %v5870 = vadd.f32 %v5764, %v5865
        %v5871 = vadd.f32 %v5765, %v5866
        %v5872 = vadd.f32 %v5766, %v5867
        %s5873 = sld [smem:[#allocation2 + $0x124]]
        %v5874 = vstv %s5873
        %v5875 = vmul.f32 %v5816, %v5874
        %v5876 = vmul.f32 %v5818, %v5874
        %v5877 = vmul.f32 %v5820, %v5874
        %v5878 = vmul.f32 %v5822, %v5874
        %v5879 = vmul.f32 %v5824, %v5874
        %v5880 = vadd.f32 %v5774, %v5875
        %v5881 = vadd.f32 %v5775, %v5876
        %v5882 = vadd.f32 %v5776, %v5877
        %v5883 = vadd.f32 %v5777, %v5878
        %v5884 = vadd.f32 %v5778, %v5879
        %s5885 = sld [smem:[#allocation2 + $0x151]]
        %v5886 = vstv %s5885
        %v5887 = vmul.f32 %v5816, %v5886
        %v5888 = vmul.f32 %v5818, %v5886
        %v5889 = vmul.f32 %v5820, %v5886
        %v5890 = vmul.f32 %v5822, %v5886
        %v5891 = vmul.f32 %v5824, %v5886
        %v5892 = vadd.f32 %v5786, %v5887
        %v5893 = vadd.f32 %v5787, %v5888
        %v5894 = vadd.f32 %v5788, %v5889
        %v5895 = vadd.f32 %v5789, %v5890
        %v5896 = vadd.f32 %v5790, %v5891
        %s5897 = sld [smem:[#allocation2 + $0x17e]]
        %v5898 = vstv %s5897
        %v5899 = vmul.f32 %v5816, %v5898
        %v5900 = vmul.f32 %v5818, %v5898
        %v5901 = vmul.f32 %v5820, %v5898
        %v5902 = vmul.f32 %v5822, %v5898
        %v5903 = vmul.f32 %v5824, %v5898
        %v5904 = vadd.f32 %v5798, %v5899
        %v5905 = vadd.f32 %v5799, %v5900
        %v5906 = vadd.f32 %v5800, %v5901
        %v5907 = vadd.f32 %v5801, %v5902
        %v5908 = vadd.f32 %v5802, %v5903
        %s5909 = sld [smem:[#allocation2 + $0x1ab]]
        %v5910 = vstv %s5909
        %v5911 = vmul.f32 %v5816, %v5910
        %v5912 = vmul.f32 %v5818, %v5910
        %v5913 = vmul.f32 %v5820, %v5910
        %v5914 = vmul.f32 %v5822, %v5910
        %v5915 = vmul.f32 %v5824, %v5910
        %v5916 = vadd.f32 %v5810, %v5911
        %v5917 = vadd.f32 %v5811, %v5912
        %v5918 = vadd.f32 %v5812, %v5913
        %v5919 = vadd.f32 %v5813, %v5914
        %v5920 = vadd.f32 %v5814, %v5915
        %5921 = vrot.lane.b32.xlu0 %v1448, 104
        %v5922 = vpop.permute.xlu0 %5921
        %5923 = vrot.lane.b32.xlu0 %v1449, 104
        %v5924 = vpop.permute.xlu0 %5923
        %5925 = vrot.lane.b32.xlu0 %v1450, 104
        %v5926 = vpop.permute.xlu0 %5925
        %5927 = vrot.lane.b32.xlu0 %v1451, 104
        %v5928 = vpop.permute.xlu0 %5927
        %5929 = vrot.lane.b32.xlu0 %v1452, 104
        %v5930 = vpop.permute.xlu0 %5929
        %s5931 = sld [smem:[#allocation2 + $0x71]]
        %v5932 = vstv %s5931
        %v5933 = vmul.f32 %v5922, %v5932
        %v5934 = vmul.f32 %v5924, %v5932
        %v5935 = vmul.f32 %v5926, %v5932
        %v5936 = vmul.f32 %v5928, %v5932
        %v5937 = vmul.f32 %v5930, %v5932
        %v5938 = vadd.f32 %v5832, %v5933
        %v5939 = vadd.f32 %v5833, %v5934
        %v5940 = vadd.f32 %v5834, %v5935
        %v5941 = vadd.f32 %v5835, %v5936
        %v5942 = vadd.f32 %v5836, %v5937
        %s5943 = sld [smem:[#allocation2 + $0x9e]]
        %v5944 = vstv %s5943
        %v5945 = vmul.f32 %v5922, %v5944
        %v5946 = vmul.f32 %v5924, %v5944
        %v5947 = vmul.f32 %v5926, %v5944
        %v5948 = vmul.f32 %v5928, %v5944
        %v5949 = vmul.f32 %v5930, %v5944
        %v5950 = vadd.f32 %v5844, %v5945
        %v5951 = vadd.f32 %v5845, %v5946
        %v5952 = vadd.f32 %v5846, %v5947
        %v5953 = vadd.f32 %v5847, %v5948
        %v5954 = vadd.f32 %v5848, %v5949
        %s5955 = sld [smem:[#allocation2 + $0xcb]]
        %v5956 = vstv %s5955
        %v5957 = vmul.f32 %v5922, %v5956
        %v5958 = vmul.f32 %v5924, %v5956
        %v5959 = vmul.f32 %v5926, %v5956
        %v5960 = vmul.f32 %v5928, %v5956
        %v5961 = vmul.f32 %v5930, %v5956
        %v5962 = vadd.f32 %v5856, %v5957
        %v5963 = vadd.f32 %v5857, %v5958
        %v5964 = vadd.f32 %v5858, %v5959
        %v5965 = vadd.f32 %v5859, %v5960
        %v5966 = vadd.f32 %v5860, %v5961
        %s5967 = sld [smem:[#allocation2 + $0xf8]]
        %v5968 = vstv %s5967
        %v5969 = vmul.f32 %v5922, %v5968
        %v5970 = vmul.f32 %v5924, %v5968
        %v5971 = vmul.f32 %v5926, %v5968
        %v5972 = vmul.f32 %v5928, %v5968
        %v5973 = vmul.f32 %v5930, %v5968
        %v5974 = vadd.f32 %v5868, %v5969
        %v5975 = vadd.f32 %v5869, %v5970
        %v5976 = vadd.f32 %v5870, %v5971
        %v5977 = vadd.f32 %v5871, %v5972
        %v5978 = vadd.f32 %v5872, %v5973
        %s5979 = sld [smem:[#allocation2 + $0x125]]
        %v5980 = vstv %s5979
        %v5981 = vmul.f32 %v5922, %v5980
        %v5982 = vmul.f32 %v5924, %v5980
        %v5983 = vmul.f32 %v5926, %v5980
        %v5984 = vmul.f32 %v5928, %v5980
        %v5985 = vmul.f32 %v5930, %v5980
        %v5986 = vadd.f32 %v5880, %v5981
        %v5987 = vadd.f32 %v5881, %v5982
        %v5988 = vadd.f32 %v5882, %v5983
        %v5989 = vadd.f32 %v5883, %v5984
        %v5990 = vadd.f32 %v5884, %v5985
        %s5991 = sld [smem:[#allocation2 + $0x152]]
        %v5992 = vstv %s5991
        %v5993 = vmul.f32 %v5922, %v5992
        %v5994 = vmul.f32 %v5924, %v5992
        %v5995 = vmul.f32 %v5926, %v5992
        %v5996 = vmul.f32 %v5928, %v5992
        %v5997 = vmul.f32 %v5930, %v5992
        %v5998 = vadd.f32 %v5892, %v5993
        %v5999 = vadd.f32 %v5893, %v5994
        %v6000 = vadd.f32 %v5894, %v5995
        %v6001 = vadd.f32 %v5895, %v5996
        %v6002 = vadd.f32 %v5896, %v5997
        %s6003 = sld [smem:[#allocation2 + $0x17f]]
        %v6004 = vstv %s6003
        %v6005 = vmul.f32 %v5922, %v6004
        %v6006 = vmul.f32 %v5924, %v6004
        %v6007 = vmul.f32 %v5926, %v6004
        %v6008 = vmul.f32 %v5928, %v6004
        %v6009 = vmul.f32 %v5930, %v6004
        %v6010 = vadd.f32 %v5904, %v6005
        %v6011 = vadd.f32 %v5905, %v6006
        %v6012 = vadd.f32 %v5906, %v6007
        %v6013 = vadd.f32 %v5907, %v6008
        %v6014 = vadd.f32 %v5908, %v6009
        %s6015 = sld [smem:[#allocation2 + $0x1ac]]
        %v6016 = vstv %s6015
        %v6017 = vmul.f32 %v5922, %v6016
        %v6018 = vmul.f32 %v5924, %v6016
        %v6019 = vmul.f32 %v5926, %v6016
        %v6020 = vmul.f32 %v5928, %v6016
        %v6021 = vmul.f32 %v5930, %v6016
        %v6022 = vadd.f32 %v5916, %v6017
        %v6023 = vadd.f32 %v5917, %v6018
        %v6024 = vadd.f32 %v5918, %v6019
        %v6025 = vadd.f32 %v5919, %v6020
        %v6026 = vadd.f32 %v5920, %v6021
        %6027 = vrot.lane.b32.xlu0 %v1448, 96
        %v6028 = vpop.permute.xlu0 %6027
        %6029 = vrot.lane.b32.xlu0 %v1449, 96
        %v6030 = vpop.permute.xlu0 %6029
        %6031 = vrot.lane.b32.xlu0 %v1450, 96
        %v6032 = vpop.permute.xlu0 %6031
        %6033 = vrot.lane.b32.xlu0 %v1451, 96
        %v6034 = vpop.permute.xlu0 %6033
        %6035 = vrot.lane.b32.xlu0 %v1452, 96
        %v6036 = vpop.permute.xlu0 %6035
        %s6037 = sld [smem:[#allocation2 + $0x72]]
        %v6038 = vstv %s6037
        %v6039 = vmul.f32 %v6028, %v6038
        %v6040 = vmul.f32 %v6030, %v6038
        %v6041 = vmul.f32 %v6032, %v6038
        %v6042 = vmul.f32 %v6034, %v6038
        %v6043 = vmul.f32 %v6036, %v6038
        %v6044 = vadd.f32 %v5938, %v6039
        %v6045 = vadd.f32 %v5939, %v6040
        %v6046 = vadd.f32 %v5940, %v6041
        %v6047 = vadd.f32 %v5941, %v6042
        %v6048 = vadd.f32 %v5942, %v6043
        %s6049 = sld [smem:[#allocation2 + $0x9f]]
        %v6050 = vstv %s6049
        %v6051 = vmul.f32 %v6028, %v6050
        %v6052 = vmul.f32 %v6030, %v6050
        %v6053 = vmul.f32 %v6032, %v6050
        %v6054 = vmul.f32 %v6034, %v6050
        %v6055 = vmul.f32 %v6036, %v6050
        %v6056 = vadd.f32 %v5950, %v6051
        %v6057 = vadd.f32 %v5951, %v6052
        %v6058 = vadd.f32 %v5952, %v6053
        %v6059 = vadd.f32 %v5953, %v6054
        %v6060 = vadd.f32 %v5954, %v6055
        %s6061 = sld [smem:[#allocation2 + $0xcc]]
        %v6062 = vstv %s6061
        %v6063 = vmul.f32 %v6028, %v6062
        %v6064 = vmul.f32 %v6030, %v6062
        %v6065 = vmul.f32 %v6032, %v6062
        %v6066 = vmul.f32 %v6034, %v6062
        %v6067 = vmul.f32 %v6036, %v6062
        %v6068 = vadd.f32 %v5962, %v6063
        %v6069 = vadd.f32 %v5963, %v6064
        %v6070 = vadd.f32 %v5964, %v6065
        %v6071 = vadd.f32 %v5965, %v6066
        %v6072 = vadd.f32 %v5966, %v6067
        %s6073 = sld [smem:[#allocation2 + $0xf9]]
        %v6074 = vstv %s6073
        %v6075 = vmul.f32 %v6028, %v6074
        %v6076 = vmul.f32 %v6030, %v6074
        %v6077 = vmul.f32 %v6032, %v6074
        %v6078 = vmul.f32 %v6034, %v6074
        %v6079 = vmul.f32 %v6036, %v6074
        %v6080 = vadd.f32 %v5974, %v6075
        %v6081 = vadd.f32 %v5975, %v6076
        %v6082 = vadd.f32 %v5976, %v6077
        %v6083 = vadd.f32 %v5977, %v6078
        %v6084 = vadd.f32 %v5978, %v6079
        %s6085 = sld [smem:[#allocation2 + $0x126]]
        %v6086 = vstv %s6085
        %v6087 = vmul.f32 %v6028, %v6086
        %v6088 = vmul.f32 %v6030, %v6086
        %v6089 = vmul.f32 %v6032, %v6086
        %v6090 = vmul.f32 %v6034, %v6086
        %v6091 = vmul.f32 %v6036, %v6086
        %v6092 = vadd.f32 %v5986, %v6087
        %v6093 = vadd.f32 %v5987, %v6088
        %v6094 = vadd.f32 %v5988, %v6089
        %v6095 = vadd.f32 %v5989, %v6090
        %v6096 = vadd.f32 %v5990, %v6091
        %s6097 = sld [smem:[#allocation2 + $0x153]]
        %v6098 = vstv %s6097
        %v6099 = vmul.f32 %v6028, %v6098
        %v6100 = vmul.f32 %v6030, %v6098
        %v6101 = vmul.f32 %v6032, %v6098
        %v6102 = vmul.f32 %v6034, %v6098
        %v6103 = vmul.f32 %v6036, %v6098
        %v6104 = vadd.f32 %v5998, %v6099
        %v6105 = vadd.f32 %v5999, %v6100
        %v6106 = vadd.f32 %v6000, %v6101
        %v6107 = vadd.f32 %v6001, %v6102
        %v6108 = vadd.f32 %v6002, %v6103
        %s6109 = sld [smem:[#allocation2 + $0x180]]
        %v6110 = vstv %s6109
        %v6111 = vmul.f32 %v6028, %v6110
        %v6112 = vmul.f32 %v6030, %v6110
        %v6113 = vmul.f32 %v6032, %v6110
        %v6114 = vmul.f32 %v6034, %v6110
        %v6115 = vmul.f32 %v6036, %v6110
        %v6116 = vadd.f32 %v6010, %v6111
        %v6117 = vadd.f32 %v6011, %v6112
        %v6118 = vadd.f32 %v6012, %v6113
        %v6119 = vadd.f32 %v6013, %v6114
        %v6120 = vadd.f32 %v6014, %v6115
        %s6121 = sld [smem:[#allocation2 + $0x1ad]]
        %v6122 = vstv %s6121
        %v6123 = vmul.f32 %v6028, %v6122
        %v6124 = vmul.f32 %v6030, %v6122
        %v6125 = vmul.f32 %v6032, %v6122
        %v6126 = vmul.f32 %v6034, %v6122
        %v6127 = vmul.f32 %v6036, %v6122
        %v6128 = vadd.f32 %v6022, %v6123
        %v6129 = vadd.f32 %v6023, %v6124
        %v6130 = vadd.f32 %v6024, %v6125
        %v6131 = vadd.f32 %v6025, %v6126
        %v6132 = vadd.f32 %v6026, %v6127
        %s6133 = sld [smem:[#allocation2 + $0x1ae]]
        %v6134 = vstv %s6133
        %v6135 = vadd.f32 %v6044, %v6134
        %v6136 = vadd.f32 %v6045, %v6134
        %v6137 = vadd.f32 %v6046, %v6134
        %v6138 = vadd.f32 %v6047, %v6134
        %v6139 = vadd.f32 %v6048, %v6134
        %v6140 = vtanh.pop %v6135
        %v6141 = vtanh.pop %v6136
        %v6142 = vtanh.pop %v6137
        %v6143 = vtanh.pop %v6138
        %v6144 = vtanh.pop %v6139
        %s6145 = sld [smem:[#allocation2 + $0x1af]]
        %v6146 = vstv %s6145
        %v6147 = vadd.f32 %v6056, %v6146
        %v6148 = vadd.f32 %v6057, %v6146
        %v6149 = vadd.f32 %v6058, %v6146
        %v6150 = vadd.f32 %v6059, %v6146
        %v6151 = vadd.f32 %v6060, %v6146
        %v6152 = vtanh.pop %v6147
        %v6153 = vtanh.pop %v6148
        %v6154 = vtanh.pop %v6149
        %v6155 = vtanh.pop %v6150
        %v6156 = vtanh.pop %v6151
        %s6157 = sld [smem:[#allocation2 + $0x1b0]]
        %v6158 = vstv %s6157
        %v6159 = vadd.f32 %v6068, %v6158
        %v6160 = vadd.f32 %v6069, %v6158
        %v6161 = vadd.f32 %v6070, %v6158
        %v6162 = vadd.f32 %v6071, %v6158
        %v6163 = vadd.f32 %v6072, %v6158
        %v6164 = vtanh.pop %v6159
        %v6165 = vtanh.pop %v6160
        %v6166 = vtanh.pop %v6161
        %v6167 = vtanh.pop %v6162
        %v6168 = vtanh.pop %v6163
        %s6169 = sld [smem:[#allocation2 + $0x1b1]]
        %v6170 = vstv %s6169
        %v6171 = vadd.f32 %v6080, %v6170
        %v6172 = vadd.f32 %v6081, %v6170
        %v6173 = vadd.f32 %v6082, %v6170
        %v6174 = vadd.f32 %v6083, %v6170
        %v6175 = vadd.f32 %v6084, %v6170
        %v6176 = vtanh.pop %v6171
        %v6177 = vtanh.pop %v6172
        %v6178 = vtanh.pop %v6173
        %v6179 = vtanh.pop %v6174
        %v6180 = vtanh.pop %v6175
        %s6181 = sld [smem:[#allocation2 + $0x1b2]]
        %v6182 = vstv %s6181
        %v6183 = vadd.f32 %v6092, %v6182
        %v6184 = vadd.f32 %v6093, %v6182
        %v6185 = vadd.f32 %v6094, %v6182
        %v6186 = vadd.f32 %v6095, %v6182
        %v6187 = vadd.f32 %v6096, %v6182
        %v6188 = vtanh.pop %v6183
        %v6189 = vtanh.pop %v6184
        %v6190 = vtanh.pop %v6185
        %v6191 = vtanh.pop %v6186
        %v6192 = vtanh.pop %v6187
        %s6193 = sld [smem:[#allocation2 + $0x1b3]]
        %v6194 = vstv %s6193
        %v6195 = vadd.f32 %v6104, %v6194
        %v6196 = vadd.f32 %v6105, %v6194
        %v6197 = vadd.f32 %v6106, %v6194
        %v6198 = vadd.f32 %v6107, %v6194
        %v6199 = vadd.f32 %v6108, %v6194
        %v6200 = vtanh.pop %v6195
        %v6201 = vtanh.pop %v6196
        %v6202 = vtanh.pop %v6197
        %v6203 = vtanh.pop %v6198
        %v6204 = vtanh.pop %v6199
        %s6205 = sld [smem:[#allocation2 + $0x1b4]]
        %v6206 = vstv %s6205
        %v6207 = vadd.f32 %v6116, %v6206
        %v6208 = vadd.f32 %v6117, %v6206
        %v6209 = vadd.f32 %v6118, %v6206
        %v6210 = vadd.f32 %v6119, %v6206
        %v6211 = vadd.f32 %v6120, %v6206
        %v6212 = vtanh.pop %v6207
        %v6213 = vtanh.pop %v6208
        %v6214 = vtanh.pop %v6209
        %v6215 = vtanh.pop %v6210
        %v6216 = vtanh.pop %v6211
        %s6217 = sld [smem:[#allocation2 + $0x1b5]]
        %v6218 = vstv %s6217
        %v6219 = vadd.f32 %v6128, %v6218
        %v6220 = vadd.f32 %v6129, %v6218
        %v6221 = vadd.f32 %v6130, %v6218
        %v6222 = vadd.f32 %v6131, %v6218
        %v6223 = vadd.f32 %v6132, %v6218
        %v6224 = vtanh.pop %v6219
        %v6225 = vtanh.pop %v6220
        %v6226 = vtanh.pop %v6221
        %v6227 = vtanh.pop %v6222
        %v6228 = vtanh.pop %v6223
        %6229 = vrot.lane.b32.xlu0 %v6140, 64
        %v6230 = vpop.permute.xlu0 %6229
        %6231 = vrot.lane.b32.xlu0 %v6141, 64
        %v6232 = vpop.permute.xlu0 %6231
        %6233 = vrot.lane.b32.xlu0 %v6142, 64
        %v6234 = vpop.permute.xlu0 %6233
        %6235 = vrot.lane.b32.xlu0 %v6143, 64
        %v6236 = vpop.permute.xlu0 %6235
        %6237 = vrot.lane.b32.xlu0 %v6144, 64
        %v6238 = vpop.permute.xlu0 %6237
        %s6239 = sld [smem:[#allocation2 + $0x1b6]]
        %v6240 = vstv %s6239
        %v6241 = vmul.f32 %v6230, %v6240
        %v6242 = vmul.f32 %v6232, %v6240
        %v6243 = vmul.f32 %v6234, %v6240
        %v6244 = vmul.f32 %v6236, %v6240
        %v6245 = vmul.f32 %v6238, %v6240
        %6246 = vrot.lane.b32.xlu0 %v6140, 48
        %v6247 = vpop.permute.xlu0 %6246
        %6248 = vrot.lane.b32.xlu0 %v6141, 48
        %v6249 = vpop.permute.xlu0 %6248
        %6250 = vrot.lane.b32.xlu0 %v6142, 48
        %v6251 = vpop.permute.xlu0 %6250
        %6252 = vrot.lane.b32.xlu0 %v6143, 48
        %v6253 = vpop.permute.xlu0 %6252
        %6254 = vrot.lane.b32.xlu0 %v6144, 48
        %v6255 = vpop.permute.xlu0 %6254
        %s6256 = sld [smem:[#allocation2 + $0x1b7]]
        %v6257 = vstv %s6256
        %v6258 = vmul.f32 %v6247, %v6257
        %v6259 = vmul.f32 %v6249, %v6257
        %v6260 = vmul.f32 %v6251, %v6257
        %v6261 = vmul.f32 %v6253, %v6257
        %v6262 = vmul.f32 %v6255, %v6257
        %v6263 = vadd.f32 %v6241, %v6258
        %v6264 = vadd.f32 %v6242, %v6259
        %v6265 = vadd.f32 %v6243, %v6260
        %v6266 = vadd.f32 %v6244, %v6261
        %v6267 = vadd.f32 %v6245, %v6262
        %6268 = vrot.lane.b32.xlu0 %v6140, 32
        %v6269 = vpop.permute.xlu0 %6268
        %6270 = vrot.lane.b32.xlu0 %v6141, 32
        %v6271 = vpop.permute.xlu0 %6270
        %6272 = vrot.lane.b32.xlu0 %v6142, 32
        %v6273 = vpop.permute.xlu0 %6272
        %6274 = vrot.lane.b32.xlu0 %v6143, 32
        %v6275 = vpop.permute.xlu0 %6274
        %6276 = vrot.lane.b32.xlu0 %v6144, 32
        %v6277 = vpop.permute.xlu0 %6276
        %s6278 = sld [smem:[#allocation2 + $0x1b8]]
        %v6279 = vstv %s6278
        %v6280 = vmul.f32 %v6269, %v6279
        %v6281 = vmul.f32 %v6271, %v6279
        %v6282 = vmul.f32 %v6273, %v6279
        %v6283 = vmul.f32 %v6275, %v6279
        %v6284 = vmul.f32 %v6277, %v6279
        %v6285 = vadd.f32 %v6263, %v6280
        %v6286 = vadd.f32 %v6264, %v6281
        %v6287 = vadd.f32 %v6265, %v6282
        %v6288 = vadd.f32 %v6266, %v6283
        %v6289 = vadd.f32 %v6267, %v6284
        %6290 = vrot.lane.b32.xlu0 %v6140, 16
        %v6291 = vpop.permute.xlu0 %6290
        %6292 = vrot.lane.b32.xlu0 %v6141, 16
        %v6293 = vpop.permute.xlu0 %6292
        %6294 = vrot.lane.b32.xlu0 %v6142, 16
        %v6295 = vpop.permute.xlu0 %6294
        %6296 = vrot.lane.b32.xlu0 %v6143, 16
        %v6297 = vpop.permute.xlu0 %6296
        %6298 = vrot.lane.b32.xlu0 %v6144, 16
        %v6299 = vpop.permute.xlu0 %6298
        %s6300 = sld [smem:[#allocation2 + $0x1b9]]
        %v6301 = vstv %s6300
        %v6302 = vmul.f32 %v6291, %v6301
        %v6303 = vmul.f32 %v6293, %v6301
        %v6304 = vmul.f32 %v6295, %v6301
        %v6305 = vmul.f32 %v6297, %v6301
        %v6306 = vmul.f32 %v6299, %v6301
        %v6307 = vadd.f32 %v6285, %v6302
        %v6308 = vadd.f32 %v6286, %v6303
        %v6309 = vadd.f32 %v6287, %v6304
        %v6310 = vadd.f32 %v6288, %v6305
        %v6311 = vadd.f32 %v6289, %v6306
        %s6312 = sld [smem:[#allocation2 + $0x1ba]]
        %v6313 = vstv %s6312
        %v6314 = vmul.f32 %v6140, %v6313
        %v6315 = vmul.f32 %v6141, %v6313
        %v6316 = vmul.f32 %v6142, %v6313
        %v6317 = vmul.f32 %v6143, %v6313
        %v6318 = vmul.f32 %v6144, %v6313
        %v6319 = vadd.f32 %v6307, %v6314
        %v6320 = vadd.f32 %v6308, %v6315
        %v6321 = vadd.f32 %v6309, %v6316
        %v6322 = vadd.f32 %v6310, %v6317
        %v6323 = vadd.f32 %v6311, %v6318
        %6324 = vrot.lane.b32.xlu0 %v6140, 112
        %v6325 = vpop.permute.xlu0 %6324
        %6326 = vrot.lane.b32.xlu0 %v6141, 112
        %v6327 = vpop.permute.xlu0 %6326
        %6328 = vrot.lane.b32.xlu0 %v6142, 112
        %v6329 = vpop.permute.xlu0 %6328
        %6330 = vrot.lane.b32.xlu0 %v6143, 112
        %v6331 = vpop.permute.xlu0 %6330
        %6332 = vrot.lane.b32.xlu0 %v6144, 112
        %v6333 = vpop.permute.xlu0 %6332
        %s6334 = sld [smem:[#allocation2 + $0x1bb]]
        %v6335 = vstv %s6334
        %v6336 = vmul.f32 %v6325, %v6335
        %v6337 = vmul.f32 %v6327, %v6335
        %v6338 = vmul.f32 %v6329, %v6335
        %v6339 = vmul.f32 %v6331, %v6335
        %v6340 = vmul.f32 %v6333, %v6335
        %v6341 = vadd.f32 %v6319, %v6336
        %v6342 = vadd.f32 %v6320, %v6337
        %v6343 = vadd.f32 %v6321, %v6338
        %v6344 = vadd.f32 %v6322, %v6339
        %v6345 = vadd.f32 %v6323, %v6340
        %6346 = vrot.lane.b32.xlu0 %v6140, 96
        %v6347 = vpop.permute.xlu0 %6346
        %6348 = vrot.lane.b32.xlu0 %v6141, 96
        %v6349 = vpop.permute.xlu0 %6348
        %6350 = vrot.lane.b32.xlu0 %v6142, 96
        %v6351 = vpop.permute.xlu0 %6350
        %6352 = vrot.lane.b32.xlu0 %v6143, 96
        %v6353 = vpop.permute.xlu0 %6352
        %6354 = vrot.lane.b32.xlu0 %v6144, 96
        %v6355 = vpop.permute.xlu0 %6354
        %s6356 = sld [smem:[#allocation2 + $0x1bc]]
        %v6357 = vstv %s6356
        %v6358 = vmul.f32 %v6347, %v6357
        %v6359 = vmul.f32 %v6349, %v6357
        %v6360 = vmul.f32 %v6351, %v6357
        %v6361 = vmul.f32 %v6353, %v6357
        %v6362 = vmul.f32 %v6355, %v6357
        %v6363 = vadd.f32 %v6341, %v6358
        %v6364 = vadd.f32 %v6342, %v6359
        %v6365 = vadd.f32 %v6343, %v6360
        %v6366 = vadd.f32 %v6344, %v6361
        %v6367 = vadd.f32 %v6345, %v6362
        %6368 = vrot.lane.b32.xlu0 %v6140, 80
        %v6369 = vpop.permute.xlu0 %6368
        %6370 = vrot.lane.b32.xlu0 %v6141, 80
        %v6371 = vpop.permute.xlu0 %6370
        %6372 = vrot.lane.b32.xlu0 %v6142, 80
        %v6373 = vpop.permute.xlu0 %6372
        %6374 = vrot.lane.b32.xlu0 %v6143, 80
        %v6375 = vpop.permute.xlu0 %6374
        %6376 = vrot.lane.b32.xlu0 %v6144, 80
        %v6377 = vpop.permute.xlu0 %6376
        %s6378 = sld [smem:[#allocation2 + $0x1bd]]
        %v6379 = vstv %s6378
        %v6380 = vmul.f32 %v6369, %v6379
        %v6381 = vmul.f32 %v6371, %v6379
        %v6382 = vmul.f32 %v6373, %v6379
        %v6383 = vmul.f32 %v6375, %v6379
        %v6384 = vmul.f32 %v6377, %v6379
        %v6385 = vadd.f32 %v6363, %v6380
        %v6386 = vadd.f32 %v6364, %v6381
        %v6387 = vadd.f32 %v6365, %v6382
        %v6388 = vadd.f32 %v6366, %v6383
        %v6389 = vadd.f32 %v6367, %v6384
        %s6390 = sld [smem:[#allocation2 + $0x1be]]
        %v6391 = vstv %s6390
        %v6392 = vmul.f32 %v6230, %v6391
        %v6393 = vmul.f32 %v6232, %v6391
        %v6394 = vmul.f32 %v6234, %v6391
        %v6395 = vmul.f32 %v6236, %v6391
        %v6396 = vmul.f32 %v6238, %v6391
        %v6397 = vadd.f32 %v6385, %v6392
        %v6398 = vadd.f32 %v6386, %v6393
        %v6399 = vadd.f32 %v6387, %v6394
        %v6400 = vadd.f32 %v6388, %v6395
        %v6401 = vadd.f32 %v6389, %v6396
        %6402 = vrot.lane.b32.xlu0 %v6152, 64
        %v6403 = vpop.permute.xlu0 %6402
        %6404 = vrot.lane.b32.xlu0 %v6153, 64
        %v6405 = vpop.permute.xlu0 %6404
        %6406 = vrot.lane.b32.xlu0 %v6154, 64
        %v6407 = vpop.permute.xlu0 %6406
        %6408 = vrot.lane.b32.xlu0 %v6155, 64
        %v6409 = vpop.permute.xlu0 %6408
        %6410 = vrot.lane.b32.xlu0 %v6156, 64
        %v6411 = vpop.permute.xlu0 %6410
        %s6412 = sld [smem:[#allocation2 + $0x1bf]]
        %v6413 = vstv %s6412
        %v6414 = vmul.f32 %v6403, %v6413
        %v6415 = vmul.f32 %v6405, %v6413
        %v6416 = vmul.f32 %v6407, %v6413
        %v6417 = vmul.f32 %v6409, %v6413
        %v6418 = vmul.f32 %v6411, %v6413
        %v6419 = vadd.f32 %v6397, %v6414
        %v6420 = vadd.f32 %v6398, %v6415
        %v6421 = vadd.f32 %v6399, %v6416
        %v6422 = vadd.f32 %v6400, %v6417
        %v6423 = vadd.f32 %v6401, %v6418
        %6424 = vrot.lane.b32.xlu0 %v6152, 48
        %v6425 = vpop.permute.xlu0 %6424
        %6426 = vrot.lane.b32.xlu0 %v6153, 48
        %v6427 = vpop.permute.xlu0 %6426
        %6428 = vrot.lane.b32.xlu0 %v6154, 48
        %v6429 = vpop.permute.xlu0 %6428
        %6430 = vrot.lane.b32.xlu0 %v6155, 48
        %v6431 = vpop.permute.xlu0 %6430
        %6432 = vrot.lane.b32.xlu0 %v6156, 48
        %v6433 = vpop.permute.xlu0 %6432
        %s6434 = sld [smem:[#allocation2 + $0x1c0]]
        %v6435 = vstv %s6434
        %v6436 = vmul.f32 %v6425, %v6435
        %v6437 = vmul.f32 %v6427, %v6435
        %v6438 = vmul.f32 %v6429, %v6435
        %v6439 = vmul.f32 %v6431, %v6435
        %v6440 = vmul.f32 %v6433, %v6435
        %v6441 = vadd.f32 %v6419, %v6436
        %v6442 = vadd.f32 %v6420, %v6437
        %v6443 = vadd.f32 %v6421, %v6438
        %v6444 = vadd.f32 %v6422, %v6439
        %v6445 = vadd.f32 %v6423, %v6440
        %6446 = vrot.lane.b32.xlu0 %v6152, 32
        %v6447 = vpop.permute.xlu0 %6446
        %6448 = vrot.lane.b32.xlu0 %v6153, 32
        %v6449 = vpop.permute.xlu0 %6448
        %6450 = vrot.lane.b32.xlu0 %v6154, 32
        %v6451 = vpop.permute.xlu0 %6450
        %6452 = vrot.lane.b32.xlu0 %v6155, 32
        %v6453 = vpop.permute.xlu0 %6452
        %6454 = vrot.lane.b32.xlu0 %v6156, 32
        %v6455 = vpop.permute.xlu0 %6454
        %s6456 = sld [smem:[#allocation2 + $0x1c1]]
        %v6457 = vstv %s6456
        %v6458 = vmul.f32 %v6447, %v6457
        %v6459 = vmul.f32 %v6449, %v6457
        %v6460 = vmul.f32 %v6451, %v6457
        %v6461 = vmul.f32 %v6453, %v6457
        %v6462 = vmul.f32 %v6455, %v6457
        %v6463 = vadd.f32 %v6441, %v6458
        %v6464 = vadd.f32 %v6442, %v6459
        %v6465 = vadd.f32 %v6443, %v6460
        %v6466 = vadd.f32 %v6444, %v6461
        %v6467 = vadd.f32 %v6445, %v6462
        %6468 = vrot.lane.b32.xlu0 %v6152, 16
        %v6469 = vpop.permute.xlu0 %6468
        %6470 = vrot.lane.b32.xlu0 %v6153, 16
        %v6471 = vpop.permute.xlu0 %6470
        %6472 = vrot.lane.b32.xlu0 %v6154, 16
        %v6473 = vpop.permute.xlu0 %6472
        %6474 = vrot.lane.b32.xlu0 %v6155, 16
        %v6475 = vpop.permute.xlu0 %6474
        %6476 = vrot.lane.b32.xlu0 %v6156, 16
        %v6477 = vpop.permute.xlu0 %6476
        %s6478 = sld [smem:[#allocation2 + $0x1c2]]
        %v6479 = vstv %s6478
        %v6480 = vmul.f32 %v6469, %v6479
        %v6481 = vmul.f32 %v6471, %v6479
        %v6482 = vmul.f32 %v6473, %v6479
        %v6483 = vmul.f32 %v6475, %v6479
        %v6484 = vmul.f32 %v6477, %v6479
        %v6485 = vadd.f32 %v6463, %v6480
        %v6486 = vadd.f32 %v6464, %v6481
        %v6487 = vadd.f32 %v6465, %v6482
        %v6488 = vadd.f32 %v6466, %v6483
        %v6489 = vadd.f32 %v6467, %v6484
        %s6490 = sld [smem:[#allocation2 + $0x1c3]]
        %v6491 = vstv %s6490
        %v6492 = vmul.f32 %v6152, %v6491
        %v6493 = vmul.f32 %v6153, %v6491
        %v6494 = vmul.f32 %v6154, %v6491
        %v6495 = vmul.f32 %v6155, %v6491
        %v6496 = vmul.f32 %v6156, %v6491
        %v6497 = vadd.f32 %v6485, %v6492
        %v6498 = vadd.f32 %v6486, %v6493
        %v6499 = vadd.f32 %v6487, %v6494
        %v6500 = vadd.f32 %v6488, %v6495
        %v6501 = vadd.f32 %v6489, %v6496
        %6502 = vrot.lane.b32.xlu0 %v6152, 112
        %v6503 = vpop.permute.xlu0 %6502
        %6504 = vrot.lane.b32.xlu0 %v6153, 112
        %v6505 = vpop.permute.xlu0 %6504
        %6506 = vrot.lane.b32.xlu0 %v6154, 112
        %v6507 = vpop.permute.xlu0 %6506
        %6508 = vrot.lane.b32.xlu0 %v6155, 112
        %v6509 = vpop.permute.xlu0 %6508
        %6510 = vrot.lane.b32.xlu0 %v6156, 112
        %v6511 = vpop.permute.xlu0 %6510
        %s6512 = sld [smem:[#allocation2 + $0x1c4]]
        %v6513 = vstv %s6512
        %v6514 = vmul.f32 %v6503, %v6513
        %v6515 = vmul.f32 %v6505, %v6513
        %v6516 = vmul.f32 %v6507, %v6513
        %v6517 = vmul.f32 %v6509, %v6513
        %v6518 = vmul.f32 %v6511, %v6513
        %v6519 = vadd.f32 %v6497, %v6514
        %v6520 = vadd.f32 %v6498, %v6515
        %v6521 = vadd.f32 %v6499, %v6516
        %v6522 = vadd.f32 %v6500, %v6517
        %v6523 = vadd.f32 %v6501, %v6518
        %6524 = vrot.lane.b32.xlu0 %v6152, 96
        %v6525 = vpop.permute.xlu0 %6524
        %6526 = vrot.lane.b32.xlu0 %v6153, 96
        %v6527 = vpop.permute.xlu0 %6526
        %6528 = vrot.lane.b32.xlu0 %v6154, 96
        %v6529 = vpop.permute.xlu0 %6528
        %6530 = vrot.lane.b32.xlu0 %v6155, 96
        %v6531 = vpop.permute.xlu0 %6530
        %6532 = vrot.lane.b32.xlu0 %v6156, 96
        %v6533 = vpop.permute.xlu0 %6532
        %s6534 = sld [smem:[#allocation2 + $0x1c5]]
        %v6535 = vstv %s6534
        %v6536 = vmul.f32 %v6525, %v6535
        %v6537 = vmul.f32 %v6527, %v6535
        %v6538 = vmul.f32 %v6529, %v6535
        %v6539 = vmul.f32 %v6531, %v6535
        %v6540 = vmul.f32 %v6533, %v6535
        %v6541 = vadd.f32 %v6519, %v6536
        %v6542 = vadd.f32 %v6520, %v6537
        %v6543 = vadd.f32 %v6521, %v6538
        %v6544 = vadd.f32 %v6522, %v6539
        %v6545 = vadd.f32 %v6523, %v6540
        %6546 = vrot.lane.b32.xlu0 %v6152, 80
        %v6547 = vpop.permute.xlu0 %6546
        %6548 = vrot.lane.b32.xlu0 %v6153, 80
        %v6549 = vpop.permute.xlu0 %6548
        %6550 = vrot.lane.b32.xlu0 %v6154, 80
        %v6551 = vpop.permute.xlu0 %6550
        %6552 = vrot.lane.b32.xlu0 %v6155, 80
        %v6553 = vpop.permute.xlu0 %6552
        %6554 = vrot.lane.b32.xlu0 %v6156, 80
        %v6555 = vpop.permute.xlu0 %6554
        %s6556 = sld [smem:[#allocation2 + $0x1c6]]
        %v6557 = vstv %s6556
        %v6558 = vmul.f32 %v6547, %v6557
        %v6559 = vmul.f32 %v6549, %v6557
        %v6560 = vmul.f32 %v6551, %v6557
        %v6561 = vmul.f32 %v6553, %v6557
        %v6562 = vmul.f32 %v6555, %v6557
        %v6563 = vadd.f32 %v6541, %v6558
        %v6564 = vadd.f32 %v6542, %v6559
        %v6565 = vadd.f32 %v6543, %v6560
        %v6566 = vadd.f32 %v6544, %v6561
        %v6567 = vadd.f32 %v6545, %v6562
        %s6568 = sld [smem:[#allocation2 + $0x1c7]]
        %v6569 = vstv %s6568
        %v6570 = vmul.f32 %v6403, %v6569
        %v6571 = vmul.f32 %v6405, %v6569
        %v6572 = vmul.f32 %v6407, %v6569
        %v6573 = vmul.f32 %v6409, %v6569
        %v6574 = vmul.f32 %v6411, %v6569
        %v6575 = vadd.f32 %v6563, %v6570
        %v6576 = vadd.f32 %v6564, %v6571
        %v6577 = vadd.f32 %v6565, %v6572
        %v6578 = vadd.f32 %v6566, %v6573
        %v6579 = vadd.f32 %v6567, %v6574
        %6580 = vrot.lane.b32.xlu0 %v6164, 64
        %v6581 = vpop.permute.xlu0 %6580
        %6582 = vrot.lane.b32.xlu0 %v6165, 64
        %v6583 = vpop.permute.xlu0 %6582
        %6584 = vrot.lane.b32.xlu0 %v6166, 64
        %v6585 = vpop.permute.xlu0 %6584
        %6586 = vrot.lane.b32.xlu0 %v6167, 64
        %v6587 = vpop.permute.xlu0 %6586
        %6588 = vrot.lane.b32.xlu0 %v6168, 64
        %v6589 = vpop.permute.xlu0 %6588
        %s6590 = sld [smem:[#allocation2 + $0x1c8]]
        %v6591 = vstv %s6590
        %v6592 = vmul.f32 %v6581, %v6591
        %v6593 = vmul.f32 %v6583, %v6591
        %v6594 = vmul.f32 %v6585, %v6591
        %v6595 = vmul.f32 %v6587, %v6591
        %v6596 = vmul.f32 %v6589, %v6591
        %v6597 = vadd.f32 %v6575, %v6592
        %v6598 = vadd.f32 %v6576, %v6593
        %v6599 = vadd.f32 %v6577, %v6594
        %v6600 = vadd.f32 %v6578, %v6595
        %v6601 = vadd.f32 %v6579, %v6596
        %6602 = vrot.lane.b32.xlu0 %v6164, 48
        %v6603 = vpop.permute.xlu0 %6602
        %6604 = vrot.lane.b32.xlu0 %v6165, 48
        %v6605 = vpop.permute.xlu0 %6604
        %6606 = vrot.lane.b32.xlu0 %v6166, 48
        %v6607 = vpop.permute.xlu0 %6606
        %6608 = vrot.lane.b32.xlu0 %v6167, 48
        %v6609 = vpop.permute.xlu0 %6608
        %6610 = vrot.lane.b32.xlu0 %v6168, 48
        %v6611 = vpop.permute.xlu0 %6610
        %s6612 = sld [smem:[#allocation2 + $0x1c9]]
        %v6613 = vstv %s6612
        %v6614 = vmul.f32 %v6603, %v6613
        %v6615 = vmul.f32 %v6605, %v6613
        %v6616 = vmul.f32 %v6607, %v6613
        %v6617 = vmul.f32 %v6609, %v6613
        %v6618 = vmul.f32 %v6611, %v6613
        %v6619 = vadd.f32 %v6597, %v6614
        %v6620 = vadd.f32 %v6598, %v6615
        %v6621 = vadd.f32 %v6599, %v6616
        %v6622 = vadd.f32 %v6600, %v6617
        %v6623 = vadd.f32 %v6601, %v6618
        %6624 = vrot.lane.b32.xlu0 %v6164, 32
        %v6625 = vpop.permute.xlu0 %6624
        %6626 = vrot.lane.b32.xlu0 %v6165, 32
        %v6627 = vpop.permute.xlu0 %6626
        %6628 = vrot.lane.b32.xlu0 %v6166, 32
        %v6629 = vpop.permute.xlu0 %6628
        %6630 = vrot.lane.b32.xlu0 %v6167, 32
        %v6631 = vpop.permute.xlu0 %6630
        %6632 = vrot.lane.b32.xlu0 %v6168, 32
        %v6633 = vpop.permute.xlu0 %6632
        %s6634 = sld [smem:[#allocation2 + $0x1ca]]
        %v6635 = vstv %s6634
        %v6636 = vmul.f32 %v6625, %v6635
        %v6637 = vmul.f32 %v6627, %v6635
        %v6638 = vmul.f32 %v6629, %v6635
        %v6639 = vmul.f32 %v6631, %v6635
        %v6640 = vmul.f32 %v6633, %v6635
        %v6641 = vadd.f32 %v6619, %v6636
        %v6642 = vadd.f32 %v6620, %v6637
        %v6643 = vadd.f32 %v6621, %v6638
        %v6644 = vadd.f32 %v6622, %v6639
        %v6645 = vadd.f32 %v6623, %v6640
        %6646 = vrot.lane.b32.xlu0 %v6164, 16
        %v6647 = vpop.permute.xlu0 %6646
        %6648 = vrot.lane.b32.xlu0 %v6165, 16
        %v6649 = vpop.permute.xlu0 %6648
        %6650 = vrot.lane.b32.xlu0 %v6166, 16
        %v6651 = vpop.permute.xlu0 %6650
        %6652 = vrot.lane.b32.xlu0 %v6167, 16
        %v6653 = vpop.permute.xlu0 %6652
        %6654 = vrot.lane.b32.xlu0 %v6168, 16
        %v6655 = vpop.permute.xlu0 %6654
        %s6656 = sld [smem:[#allocation2 + $0x1cb]]
        %v6657 = vstv %s6656
        %v6658 = vmul.f32 %v6647, %v6657
        %v6659 = vmul.f32 %v6649, %v6657
        %v6660 = vmul.f32 %v6651, %v6657
        %v6661 = vmul.f32 %v6653, %v6657
        %v6662 = vmul.f32 %v6655, %v6657
        %v6663 = vadd.f32 %v6641, %v6658
        %v6664 = vadd.f32 %v6642, %v6659
        %v6665 = vadd.f32 %v6643, %v6660
        %v6666 = vadd.f32 %v6644, %v6661
        %v6667 = vadd.f32 %v6645, %v6662
        %s6668 = sld [smem:[#allocation2 + $0x1cc]]
        %v6669 = vstv %s6668
        %v6670 = vmul.f32 %v6164, %v6669
        %v6671 = vmul.f32 %v6165, %v6669
        %v6672 = vmul.f32 %v6166, %v6669
        %v6673 = vmul.f32 %v6167, %v6669
        %v6674 = vmul.f32 %v6168, %v6669
        %v6675 = vadd.f32 %v6663, %v6670
        %v6676 = vadd.f32 %v6664, %v6671
        %v6677 = vadd.f32 %v6665, %v6672
        %v6678 = vadd.f32 %v6666, %v6673
        %v6679 = vadd.f32 %v6667, %v6674
        %6680 = vrot.lane.b32.xlu0 %v6164, 112
        %v6681 = vpop.permute.xlu0 %6680
        %6682 = vrot.lane.b32.xlu0 %v6165, 112
        %v6683 = vpop.permute.xlu0 %6682
        %6684 = vrot.lane.b32.xlu0 %v6166, 112
        %v6685 = vpop.permute.xlu0 %6684
        %6686 = vrot.lane.b32.xlu0 %v6167, 112
        %v6687 = vpop.permute.xlu0 %6686
        %6688 = vrot.lane.b32.xlu0 %v6168, 112
        %v6689 = vpop.permute.xlu0 %6688
        %s6690 = sld [smem:[#allocation2 + $0x1cd]]
        %v6691 = vstv %s6690
        %v6692 = vmul.f32 %v6681, %v6691
        %v6693 = vmul.f32 %v6683, %v6691
        %v6694 = vmul.f32 %v6685, %v6691
        %v6695 = vmul.f32 %v6687, %v6691
        %v6696 = vmul.f32 %v6689, %v6691
        %v6697 = vadd.f32 %v6675, %v6692
        %v6698 = vadd.f32 %v6676, %v6693
        %v6699 = vadd.f32 %v6677, %v6694
        %v6700 = vadd.f32 %v6678, %v6695
        %v6701 = vadd.f32 %v6679, %v6696
        %6702 = vrot.lane.b32.xlu0 %v6164, 96
        %v6703 = vpop.permute.xlu0 %6702
        %6704 = vrot.lane.b32.xlu0 %v6165, 96
        %v6705 = vpop.permute.xlu0 %6704
        %6706 = vrot.lane.b32.xlu0 %v6166, 96
        %v6707 = vpop.permute.xlu0 %6706
        %6708 = vrot.lane.b32.xlu0 %v6167, 96
        %v6709 = vpop.permute.xlu0 %6708
        %6710 = vrot.lane.b32.xlu0 %v6168, 96
        %v6711 = vpop.permute.xlu0 %6710
        %s6712 = sld [smem:[#allocation2 + $0x1ce]]
        %v6713 = vstv %s6712
        %v6714 = vmul.f32 %v6703, %v6713
        %v6715 = vmul.f32 %v6705, %v6713
        %v6716 = vmul.f32 %v6707, %v6713
        %v6717 = vmul.f32 %v6709, %v6713
        %v6718 = vmul.f32 %v6711, %v6713
        %v6719 = vadd.f32 %v6697, %v6714
        %v6720 = vadd.f32 %v6698, %v6715
        %v6721 = vadd.f32 %v6699, %v6716
        %v6722 = vadd.f32 %v6700, %v6717
        %v6723 = vadd.f32 %v6701, %v6718
        %6724 = vrot.lane.b32.xlu0 %v6164, 80
        %v6725 = vpop.permute.xlu0 %6724
        %6726 = vrot.lane.b32.xlu0 %v6165, 80
        %v6727 = vpop.permute.xlu0 %6726
        %6728 = vrot.lane.b32.xlu0 %v6166, 80
        %v6729 = vpop.permute.xlu0 %6728
        %6730 = vrot.lane.b32.xlu0 %v6167, 80
        %v6731 = vpop.permute.xlu0 %6730
        %6732 = vrot.lane.b32.xlu0 %v6168, 80
        %v6733 = vpop.permute.xlu0 %6732
        %s6734 = sld [smem:[#allocation2 + $0x1cf]]
        %v6735 = vstv %s6734
        %v6736 = vmul.f32 %v6725, %v6735
        %v6737 = vmul.f32 %v6727, %v6735
        %v6738 = vmul.f32 %v6729, %v6735
        %v6739 = vmul.f32 %v6731, %v6735
        %v6740 = vmul.f32 %v6733, %v6735
        %v6741 = vadd.f32 %v6719, %v6736
        %v6742 = vadd.f32 %v6720, %v6737
        %v6743 = vadd.f32 %v6721, %v6738
        %v6744 = vadd.f32 %v6722, %v6739
        %v6745 = vadd.f32 %v6723, %v6740
        %s6746 = sld [smem:[#allocation2 + $0x1d0]]
        %v6747 = vstv %s6746
        %v6748 = vmul.f32 %v6581, %v6747
        %v6749 = vmul.f32 %v6583, %v6747
        %v6750 = vmul.f32 %v6585, %v6747
        %v6751 = vmul.f32 %v6587, %v6747
        %v6752 = vmul.f32 %v6589, %v6747
        %v6753 = vadd.f32 %v6741, %v6748
        %v6754 = vadd.f32 %v6742, %v6749
        %v6755 = vadd.f32 %v6743, %v6750
        %v6756 = vadd.f32 %v6744, %v6751
        %v6757 = vadd.f32 %v6745, %v6752
        %6758 = vrot.lane.b32.xlu0 %v6176, 64
        %v6759 = vpop.permute.xlu0 %6758
        %6760 = vrot.lane.b32.xlu0 %v6177, 64
        %v6761 = vpop.permute.xlu0 %6760
        %6762 = vrot.lane.b32.xlu0 %v6178, 64
        %v6763 = vpop.permute.xlu0 %6762
        %6764 = vrot.lane.b32.xlu0 %v6179, 64
        %v6765 = vpop.permute.xlu0 %6764
        %6766 = vrot.lane.b32.xlu0 %v6180, 64
        %v6767 = vpop.permute.xlu0 %6766
        %s6768 = sld [smem:[#allocation2 + $0x1d1]]
        %v6769 = vstv %s6768
        %v6770 = vmul.f32 %v6759, %v6769
        %v6771 = vmul.f32 %v6761, %v6769
        %v6772 = vmul.f32 %v6763, %v6769
        %v6773 = vmul.f32 %v6765, %v6769
        %v6774 = vmul.f32 %v6767, %v6769
        %v6775 = vadd.f32 %v6753, %v6770
        %v6776 = vadd.f32 %v6754, %v6771
        %v6777 = vadd.f32 %v6755, %v6772
        %v6778 = vadd.f32 %v6756, %v6773
        %v6779 = vadd.f32 %v6757, %v6774
        %6780 = vrot.lane.b32.xlu0 %v6176, 48
        %v6781 = vpop.permute.xlu0 %6780
        %6782 = vrot.lane.b32.xlu0 %v6177, 48
        %v6783 = vpop.permute.xlu0 %6782
        %6784 = vrot.lane.b32.xlu0 %v6178, 48
        %v6785 = vpop.permute.xlu0 %6784
        %6786 = vrot.lane.b32.xlu0 %v6179, 48
        %v6787 = vpop.permute.xlu0 %6786
        %6788 = vrot.lane.b32.xlu0 %v6180, 48
        %v6789 = vpop.permute.xlu0 %6788
        %s6790 = sld [smem:[#allocation2 + $0x1d2]]
        %v6791 = vstv %s6790
        %v6792 = vmul.f32 %v6781, %v6791
        %v6793 = vmul.f32 %v6783, %v6791
        %v6794 = vmul.f32 %v6785, %v6791
        %v6795 = vmul.f32 %v6787, %v6791
        %v6796 = vmul.f32 %v6789, %v6791
        %v6797 = vadd.f32 %v6775, %v6792
        %v6798 = vadd.f32 %v6776, %v6793
        %v6799 = vadd.f32 %v6777, %v6794
        %v6800 = vadd.f32 %v6778, %v6795
        %v6801 = vadd.f32 %v6779, %v6796
        %6802 = vrot.lane.b32.xlu0 %v6176, 32
        %v6803 = vpop.permute.xlu0 %6802
        %6804 = vrot.lane.b32.xlu0 %v6177, 32
        %v6805 = vpop.permute.xlu0 %6804
        %6806 = vrot.lane.b32.xlu0 %v6178, 32
        %v6807 = vpop.permute.xlu0 %6806
        %6808 = vrot.lane.b32.xlu0 %v6179, 32
        %v6809 = vpop.permute.xlu0 %6808
        %6810 = vrot.lane.b32.xlu0 %v6180, 32
        %v6811 = vpop.permute.xlu0 %6810
        %s6812 = sld [smem:[#allocation2 + $0x1d3]]
        %v6813 = vstv %s6812
        %v6814 = vmul.f32 %v6803, %v6813
        %v6815 = vmul.f32 %v6805, %v6813
        %v6816 = vmul.f32 %v6807, %v6813
        %v6817 = vmul.f32 %v6809, %v6813
        %v6818 = vmul.f32 %v6811, %v6813
        %v6819 = vadd.f32 %v6797, %v6814
        %v6820 = vadd.f32 %v6798, %v6815
        %v6821 = vadd.f32 %v6799, %v6816
        %v6822 = vadd.f32 %v6800, %v6817
        %v6823 = vadd.f32 %v6801, %v6818
        %6824 = vrot.lane.b32.xlu0 %v6176, 16
        %v6825 = vpop.permute.xlu0 %6824
        %6826 = vrot.lane.b32.xlu0 %v6177, 16
        %v6827 = vpop.permute.xlu0 %6826
        %6828 = vrot.lane.b32.xlu0 %v6178, 16
        %v6829 = vpop.permute.xlu0 %6828
        %6830 = vrot.lane.b32.xlu0 %v6179, 16
        %v6831 = vpop.permute.xlu0 %6830
        %6832 = vrot.lane.b32.xlu0 %v6180, 16
        %v6833 = vpop.permute.xlu0 %6832
        %s6834 = sld [smem:[#allocation2 + $0x1d4]]
        %v6835 = vstv %s6834
        %v6836 = vmul.f32 %v6825, %v6835
        %v6837 = vmul.f32 %v6827, %v6835
        %v6838 = vmul.f32 %v6829, %v6835
        %v6839 = vmul.f32 %v6831, %v6835
        %v6840 = vmul.f32 %v6833, %v6835
        %v6841 = vadd.f32 %v6819, %v6836
        %v6842 = vadd.f32 %v6820, %v6837
        %v6843 = vadd.f32 %v6821, %v6838
        %v6844 = vadd.f32 %v6822, %v6839
        %v6845 = vadd.f32 %v6823, %v6840
        %s6846 = sld [smem:[#allocation2 + $0x1d5]]
        %v6847 = vstv %s6846
        %v6848 = vmul.f32 %v6176, %v6847
        %v6849 = vmul.f32 %v6177, %v6847
        %v6850 = vmul.f32 %v6178, %v6847
        %v6851 = vmul.f32 %v6179, %v6847
        %v6852 = vmul.f32 %v6180, %v6847
        %v6853 = vadd.f32 %v6841, %v6848
        %v6854 = vadd.f32 %v6842, %v6849
        %v6855 = vadd.f32 %v6843, %v6850
        %v6856 = vadd.f32 %v6844, %v6851
        %v6857 = vadd.f32 %v6845, %v6852
        %6858 = vrot.lane.b32.xlu0 %v6176, 112
        %v6859 = vpop.permute.xlu0 %6858
        %6860 = vrot.lane.b32.xlu0 %v6177, 112
        %v6861 = vpop.permute.xlu0 %6860
        %6862 = vrot.lane.b32.xlu0 %v6178, 112
        %v6863 = vpop.permute.xlu0 %6862
        %6864 = vrot.lane.b32.xlu0 %v6179, 112
        %v6865 = vpop.permute.xlu0 %6864
        %6866 = vrot.lane.b32.xlu0 %v6180, 112
        %v6867 = vpop.permute.xlu0 %6866
        %s6868 = sld [smem:[#allocation2 + $0x1d6]]
        %v6869 = vstv %s6868
        %v6870 = vmul.f32 %v6859, %v6869
        %v6871 = vmul.f32 %v6861, %v6869
        %v6872 = vmul.f32 %v6863, %v6869
        %v6873 = vmul.f32 %v6865, %v6869
        %v6874 = vmul.f32 %v6867, %v6869
        %v6875 = vadd.f32 %v6853, %v6870
        %v6876 = vadd.f32 %v6854, %v6871
        %v6877 = vadd.f32 %v6855, %v6872
        %v6878 = vadd.f32 %v6856, %v6873
        %v6879 = vadd.f32 %v6857, %v6874
        %6880 = vrot.lane.b32.xlu0 %v6176, 96
        %v6881 = vpop.permute.xlu0 %6880
        %6882 = vrot.lane.b32.xlu0 %v6177, 96
        %v6883 = vpop.permute.xlu0 %6882
        %6884 = vrot.lane.b32.xlu0 %v6178, 96
        %v6885 = vpop.permute.xlu0 %6884
        %6886 = vrot.lane.b32.xlu0 %v6179, 96
        %v6887 = vpop.permute.xlu0 %6886
        %6888 = vrot.lane.b32.xlu0 %v6180, 96
        %v6889 = vpop.permute.xlu0 %6888
        %s6890 = sld [smem:[#allocation2 + $0x1d7]]
        %v6891 = vstv %s6890
        %v6892 = vmul.f32 %v6881, %v6891
        %v6893 = vmul.f32 %v6883, %v6891
        %v6894 = vmul.f32 %v6885, %v6891
        %v6895 = vmul.f32 %v6887, %v6891
        %v6896 = vmul.f32 %v6889, %v6891
        %v6897 = vadd.f32 %v6875, %v6892
        %v6898 = vadd.f32 %v6876, %v6893
        %v6899 = vadd.f32 %v6877, %v6894
        %v6900 = vadd.f32 %v6878, %v6895
        %v6901 = vadd.f32 %v6879, %v6896
        %6902 = vrot.lane.b32.xlu0 %v6176, 80
        %v6903 = vpop.permute.xlu0 %6902
        %6904 = vrot.lane.b32.xlu0 %v6177, 80
        %v6905 = vpop.permute.xlu0 %6904
        %6906 = vrot.lane.b32.xlu0 %v6178, 80
        %v6907 = vpop.permute.xlu0 %6906
        %6908 = vrot.lane.b32.xlu0 %v6179, 80
        %v6909 = vpop.permute.xlu0 %6908
        %6910 = vrot.lane.b32.xlu0 %v6180, 80
        %v6911 = vpop.permute.xlu0 %6910
        %s6912 = sld [smem:[#allocation2 + $0x1d8]]
        %v6913 = vstv %s6912
        %v6914 = vmul.f32 %v6903, %v6913
        %v6915 = vmul.f32 %v6905, %v6913
        %v6916 = vmul.f32 %v6907, %v6913
        %v6917 = vmul.f32 %v6909, %v6913
        %v6918 = vmul.f32 %v6911, %v6913
        %v6919 = vadd.f32 %v6897, %v6914
        %v6920 = vadd.f32 %v6898, %v6915
        %v6921 = vadd.f32 %v6899, %v6916
        %v6922 = vadd.f32 %v6900, %v6917
        %v6923 = vadd.f32 %v6901, %v6918
        %s6924 = sld [smem:[#allocation2 + $0x1d9]]
        %v6925 = vstv %s6924
        %v6926 = vmul.f32 %v6759, %v6925
        %v6927 = vmul.f32 %v6761, %v6925
        %v6928 = vmul.f32 %v6763, %v6925
        %v6929 = vmul.f32 %v6765, %v6925
        %v6930 = vmul.f32 %v6767, %v6925
        %v6931 = vadd.f32 %v6919, %v6926
        %v6932 = vadd.f32 %v6920, %v6927
        %v6933 = vadd.f32 %v6921, %v6928
        %v6934 = vadd.f32 %v6922, %v6929
        %v6935 = vadd.f32 %v6923, %v6930
        %6936 = vrot.lane.b32.xlu0 %v6188, 64
        %v6937 = vpop.permute.xlu0 %6936
        %6938 = vrot.lane.b32.xlu0 %v6189, 64
        %v6939 = vpop.permute.xlu0 %6938
        %6940 = vrot.lane.b32.xlu0 %v6190, 64
        %v6941 = vpop.permute.xlu0 %6940
        %6942 = vrot.lane.b32.xlu0 %v6191, 64
        %v6943 = vpop.permute.xlu0 %6942
        %6944 = vrot.lane.b32.xlu0 %v6192, 64
        %v6945 = vpop.permute.xlu0 %6944
        %s6946 = sld [smem:[#allocation2 + $0x1da]]
        %v6947 = vstv %s6946
        %v6948 = vmul.f32 %v6937, %v6947
        %v6949 = vmul.f32 %v6939, %v6947
        %v6950 = vmul.f32 %v6941, %v6947
        %v6951 = vmul.f32 %v6943, %v6947
        %v6952 = vmul.f32 %v6945, %v6947
        %v6953 = vadd.f32 %v6931, %v6948
        %v6954 = vadd.f32 %v6932, %v6949
        %v6955 = vadd.f32 %v6933, %v6950
        %v6956 = vadd.f32 %v6934, %v6951
        %v6957 = vadd.f32 %v6935, %v6952
        %6958 = vrot.lane.b32.xlu0 %v6188, 48
        %v6959 = vpop.permute.xlu0 %6958
        %6960 = vrot.lane.b32.xlu0 %v6189, 48
        %v6961 = vpop.permute.xlu0 %6960
        %6962 = vrot.lane.b32.xlu0 %v6190, 48
        %v6963 = vpop.permute.xlu0 %6962
        %6964 = vrot.lane.b32.xlu0 %v6191, 48
        %v6965 = vpop.permute.xlu0 %6964
        %6966 = vrot.lane.b32.xlu0 %v6192, 48
        %v6967 = vpop.permute.xlu0 %6966
        %s6968 = sld [smem:[#allocation2 + $0x1db]]
        %v6969 = vstv %s6968
        %v6970 = vmul.f32 %v6959, %v6969
        %v6971 = vmul.f32 %v6961, %v6969
        %v6972 = vmul.f32 %v6963, %v6969
        %v6973 = vmul.f32 %v6965, %v6969
        %v6974 = vmul.f32 %v6967, %v6969
        %v6975 = vadd.f32 %v6953, %v6970
        %v6976 = vadd.f32 %v6954, %v6971
        %v6977 = vadd.f32 %v6955, %v6972
        %v6978 = vadd.f32 %v6956, %v6973
        %v6979 = vadd.f32 %v6957, %v6974
        %6980 = vrot.lane.b32.xlu0 %v6188, 32
        %v6981 = vpop.permute.xlu0 %6980
        %6982 = vrot.lane.b32.xlu0 %v6189, 32
        %v6983 = vpop.permute.xlu0 %6982
        %6984 = vrot.lane.b32.xlu0 %v6190, 32
        %v6985 = vpop.permute.xlu0 %6984
        %6986 = vrot.lane.b32.xlu0 %v6191, 32
        %v6987 = vpop.permute.xlu0 %6986
        %6988 = vrot.lane.b32.xlu0 %v6192, 32
        %v6989 = vpop.permute.xlu0 %6988
        %s6990 = sld [smem:[#allocation2 + $0x1dc]]
        %v6991 = vstv %s6990
        %v6992 = vmul.f32 %v6981, %v6991
        %v6993 = vmul.f32 %v6983, %v6991
        %v6994 = vmul.f32 %v6985, %v6991
        %v6995 = vmul.f32 %v6987, %v6991
        %v6996 = vmul.f32 %v6989, %v6991
        %v6997 = vadd.f32 %v6975, %v6992
        %v6998 = vadd.f32 %v6976, %v6993
        %v6999 = vadd.f32 %v6977, %v6994
        %v7000 = vadd.f32 %v6978, %v6995
        %v7001 = vadd.f32 %v6979, %v6996
        %7002 = vrot.lane.b32.xlu0 %v6188, 16
        %v7003 = vpop.permute.xlu0 %7002
        %7004 = vrot.lane.b32.xlu0 %v6189, 16
        %v7005 = vpop.permute.xlu0 %7004
        %7006 = vrot.lane.b32.xlu0 %v6190, 16
        %v7007 = vpop.permute.xlu0 %7006
        %7008 = vrot.lane.b32.xlu0 %v6191, 16
        %v7009 = vpop.permute.xlu0 %7008
        %7010 = vrot.lane.b32.xlu0 %v6192, 16
        %v7011 = vpop.permute.xlu0 %7010
        %s7012 = sld [smem:[#allocation2 + $0x1dd]]
        %v7013 = vstv %s7012
        %v7014 = vmul.f32 %v7003, %v7013
        %v7015 = vmul.f32 %v7005, %v7013
        %v7016 = vmul.f32 %v7007, %v7013
        %v7017 = vmul.f32 %v7009, %v7013
        %v7018 = vmul.f32 %v7011, %v7013
        %v7019 = vadd.f32 %v6997, %v7014
        %v7020 = vadd.f32 %v6998, %v7015
        %v7021 = vadd.f32 %v6999, %v7016
        %v7022 = vadd.f32 %v7000, %v7017
        %v7023 = vadd.f32 %v7001, %v7018
        %s7024 = sld [smem:[#allocation2 + $0x1de]]
        %v7025 = vstv %s7024
        %v7026 = vmul.f32 %v6188, %v7025
        %v7027 = vmul.f32 %v6189, %v7025
        %v7028 = vmul.f32 %v6190, %v7025
        %v7029 = vmul.f32 %v6191, %v7025
        %v7030 = vmul.f32 %v6192, %v7025
        %v7031 = vadd.f32 %v7019, %v7026
        %v7032 = vadd.f32 %v7020, %v7027
        %v7033 = vadd.f32 %v7021, %v7028
        %v7034 = vadd.f32 %v7022, %v7029
        %v7035 = vadd.f32 %v7023, %v7030
        %7036 = vrot.lane.b32.xlu0 %v6188, 112
        %v7037 = vpop.permute.xlu0 %7036
        %7038 = vrot.lane.b32.xlu0 %v6189, 112
        %v7039 = vpop.permute.xlu0 %7038
        %7040 = vrot.lane.b32.xlu0 %v6190, 112
        %v7041 = vpop.permute.xlu0 %7040
        %7042 = vrot.lane.b32.xlu0 %v6191, 112
        %v7043 = vpop.permute.xlu0 %7042
        %7044 = vrot.lane.b32.xlu0 %v6192, 112
        %v7045 = vpop.permute.xlu0 %7044
        %s7046 = sld [smem:[#allocation2 + $0x1df]]
        %v7047 = vstv %s7046
        %v7048 = vmul.f32 %v7037, %v7047
        %v7049 = vmul.f32 %v7039, %v7047
        %v7050 = vmul.f32 %v7041, %v7047
        %v7051 = vmul.f32 %v7043, %v7047
        %v7052 = vmul.f32 %v7045, %v7047
        %v7053 = vadd.f32 %v7031, %v7048
        %v7054 = vadd.f32 %v7032, %v7049
        %v7055 = vadd.f32 %v7033, %v7050
        %v7056 = vadd.f32 %v7034, %v7051
        %v7057 = vadd.f32 %v7035, %v7052
        %7058 = vrot.lane.b32.xlu0 %v6188, 96
        %v7059 = vpop.permute.xlu0 %7058
        %7060 = vrot.lane.b32.xlu0 %v6189, 96
        %v7061 = vpop.permute.xlu0 %7060
        %7062 = vrot.lane.b32.xlu0 %v6190, 96
        %v7063 = vpop.permute.xlu0 %7062
        %7064 = vrot.lane.b32.xlu0 %v6191, 96
        %v7065 = vpop.permute.xlu0 %7064
        %7066 = vrot.lane.b32.xlu0 %v6192, 96
        %v7067 = vpop.permute.xlu0 %7066
        %s7068 = sld [smem:[#allocation2 + $0x1e0]]
        %v7069 = vstv %s7068
        %v7070 = vmul.f32 %v7059, %v7069
        %v7071 = vmul.f32 %v7061, %v7069
        %v7072 = vmul.f32 %v7063, %v7069
        %v7073 = vmul.f32 %v7065, %v7069
        %v7074 = vmul.f32 %v7067, %v7069
        %v7075 = vadd.f32 %v7053, %v7070
        %v7076 = vadd.f32 %v7054, %v7071
        %v7077 = vadd.f32 %v7055, %v7072
        %v7078 = vadd.f32 %v7056, %v7073
        %v7079 = vadd.f32 %v7057, %v7074
        %7080 = vrot.lane.b32.xlu0 %v6188, 80
        %v7081 = vpop.permute.xlu0 %7080
        %7082 = vrot.lane.b32.xlu0 %v6189, 80
        %v7083 = vpop.permute.xlu0 %7082
        %7084 = vrot.lane.b32.xlu0 %v6190, 80
        %v7085 = vpop.permute.xlu0 %7084
        %7086 = vrot.lane.b32.xlu0 %v6191, 80
        %v7087 = vpop.permute.xlu0 %7086
        %7088 = vrot.lane.b32.xlu0 %v6192, 80
        %v7089 = vpop.permute.xlu0 %7088
        %s7090 = sld [smem:[#allocation2 + $0x1e1]]
        %v7091 = vstv %s7090
        %v7092 = vmul.f32 %v7081, %v7091
        %v7093 = vmul.f32 %v7083, %v7091
        %v7094 = vmul.f32 %v7085, %v7091
        %v7095 = vmul.f32 %v7087, %v7091
        %v7096 = vmul.f32 %v7089, %v7091
        %v7097 = vadd.f32 %v7075, %v7092
        %v7098 = vadd.f32 %v7076, %v7093
        %v7099 = vadd.f32 %v7077, %v7094
        %v7100 = vadd.f32 %v7078, %v7095
        %v7101 = vadd.f32 %v7079, %v7096
        %s7102 = sld [smem:[#allocation2 + $0x1e2]]
        %v7103 = vstv %s7102
        %v7104 = vmul.f32 %v6937, %v7103
        %v7105 = vmul.f32 %v6939, %v7103
        %v7106 = vmul.f32 %v6941, %v7103
        %v7107 = vmul.f32 %v6943, %v7103
        %v7108 = vmul.f32 %v6945, %v7103
        %v7109 = vadd.f32 %v7097, %v7104
        %v7110 = vadd.f32 %v7098, %v7105
        %v7111 = vadd.f32 %v7099, %v7106
        %v7112 = vadd.f32 %v7100, %v7107
        %v7113 = vadd.f32 %v7101, %v7108
        %7114 = vrot.lane.b32.xlu0 %v6200, 64
        %v7115 = vpop.permute.xlu0 %7114
        %7116 = vrot.lane.b32.xlu0 %v6201, 64
        %v7117 = vpop.permute.xlu0 %7116
        %7118 = vrot.lane.b32.xlu0 %v6202, 64
        %v7119 = vpop.permute.xlu0 %7118
        %7120 = vrot.lane.b32.xlu0 %v6203, 64
        %v7121 = vpop.permute.xlu0 %7120
        %7122 = vrot.lane.b32.xlu0 %v6204, 64
        %v7123 = vpop.permute.xlu0 %7122
        %s7124 = sld [smem:[#allocation2 + $0x1e3]]
        %v7125 = vstv %s7124
        %v7126 = vmul.f32 %v7115, %v7125
        %v7127 = vmul.f32 %v7117, %v7125
        %v7128 = vmul.f32 %v7119, %v7125
        %v7129 = vmul.f32 %v7121, %v7125
        %v7130 = vmul.f32 %v7123, %v7125
        %v7131 = vadd.f32 %v7109, %v7126
        %v7132 = vadd.f32 %v7110, %v7127
        %v7133 = vadd.f32 %v7111, %v7128
        %v7134 = vadd.f32 %v7112, %v7129
        %v7135 = vadd.f32 %v7113, %v7130
        %7136 = vrot.lane.b32.xlu0 %v6200, 48
        %v7137 = vpop.permute.xlu0 %7136
        %7138 = vrot.lane.b32.xlu0 %v6201, 48
        %v7139 = vpop.permute.xlu0 %7138
        %7140 = vrot.lane.b32.xlu0 %v6202, 48
        %v7141 = vpop.permute.xlu0 %7140
        %7142 = vrot.lane.b32.xlu0 %v6203, 48
        %v7143 = vpop.permute.xlu0 %7142
        %7144 = vrot.lane.b32.xlu0 %v6204, 48
        %v7145 = vpop.permute.xlu0 %7144
        %s7146 = sld [smem:[#allocation2 + $0x1e4]]
        %v7147 = vstv %s7146
        %v7148 = vmul.f32 %v7137, %v7147
        %v7149 = vmul.f32 %v7139, %v7147
        %v7150 = vmul.f32 %v7141, %v7147
        %v7151 = vmul.f32 %v7143, %v7147
        %v7152 = vmul.f32 %v7145, %v7147
        %v7153 = vadd.f32 %v7131, %v7148
        %v7154 = vadd.f32 %v7132, %v7149
        %v7155 = vadd.f32 %v7133, %v7150
        %v7156 = vadd.f32 %v7134, %v7151
        %v7157 = vadd.f32 %v7135, %v7152
        %7158 = vrot.lane.b32.xlu0 %v6200, 32
        %v7159 = vpop.permute.xlu0 %7158
        %7160 = vrot.lane.b32.xlu0 %v6201, 32
        %v7161 = vpop.permute.xlu0 %7160
        %7162 = vrot.lane.b32.xlu0 %v6202, 32
        %v7163 = vpop.permute.xlu0 %7162
        %7164 = vrot.lane.b32.xlu0 %v6203, 32
        %v7165 = vpop.permute.xlu0 %7164
        %7166 = vrot.lane.b32.xlu0 %v6204, 32
        %v7167 = vpop.permute.xlu0 %7166
        %s7168 = sld [smem:[#allocation2 + $0x1e5]]
        %v7169 = vstv %s7168
        %v7170 = vmul.f32 %v7159, %v7169
        %v7171 = vmul.f32 %v7161, %v7169
        %v7172 = vmul.f32 %v7163, %v7169
        %v7173 = vmul.f32 %v7165, %v7169
        %v7174 = vmul.f32 %v7167, %v7169
        %v7175 = vadd.f32 %v7153, %v7170
        %v7176 = vadd.f32 %v7154, %v7171
        %v7177 = vadd.f32 %v7155, %v7172
        %v7178 = vadd.f32 %v7156, %v7173
        %v7179 = vadd.f32 %v7157, %v7174
        %7180 = vrot.lane.b32.xlu0 %v6200, 16
        %v7181 = vpop.permute.xlu0 %7180
        %7182 = vrot.lane.b32.xlu0 %v6201, 16
        %v7183 = vpop.permute.xlu0 %7182
        %7184 = vrot.lane.b32.xlu0 %v6202, 16
        %v7185 = vpop.permute.xlu0 %7184
        %7186 = vrot.lane.b32.xlu0 %v6203, 16
        %v7187 = vpop.permute.xlu0 %7186
        %7188 = vrot.lane.b32.xlu0 %v6204, 16
        %v7189 = vpop.permute.xlu0 %7188
        %s7190 = sld [smem:[#allocation2 + $0x1e6]]
        %v7191 = vstv %s7190
        %v7192 = vmul.f32 %v7181, %v7191
        %v7193 = vmul.f32 %v7183, %v7191
        %v7194 = vmul.f32 %v7185, %v7191
        %v7195 = vmul.f32 %v7187, %v7191
        %v7196 = vmul.f32 %v7189, %v7191
        %v7197 = vadd.f32 %v7175, %v7192
        %v7198 = vadd.f32 %v7176, %v7193
        %v7199 = vadd.f32 %v7177, %v7194
        %v7200 = vadd.f32 %v7178, %v7195
        %v7201 = vadd.f32 %v7179, %v7196
        %s7202 = sld [smem:[#allocation2 + $0x1e7]]
        %v7203 = vstv %s7202
        %v7204 = vmul.f32 %v6200, %v7203
        %v7205 = vmul.f32 %v6201, %v7203
        %v7206 = vmul.f32 %v6202, %v7203
        %v7207 = vmul.f32 %v6203, %v7203
        %v7208 = vmul.f32 %v6204, %v7203
        %v7209 = vadd.f32 %v7197, %v7204
        %v7210 = vadd.f32 %v7198, %v7205
        %v7211 = vadd.f32 %v7199, %v7206
        %v7212 = vadd.f32 %v7200, %v7207
        %v7213 = vadd.f32 %v7201, %v7208
        %7214 = vrot.lane.b32.xlu0 %v6200, 112
        %v7215 = vpop.permute.xlu0 %7214
        %7216 = vrot.lane.b32.xlu0 %v6201, 112
        %v7217 = vpop.permute.xlu0 %7216
        %7218 = vrot.lane.b32.xlu0 %v6202, 112
        %v7219 = vpop.permute.xlu0 %7218
        %7220 = vrot.lane.b32.xlu0 %v6203, 112
        %v7221 = vpop.permute.xlu0 %7220
        %7222 = vrot.lane.b32.xlu0 %v6204, 112
        %v7223 = vpop.permute.xlu0 %7222
        %s7224 = sld [smem:[#allocation2 + $0x1e8]]
        %v7225 = vstv %s7224
        %v7226 = vmul.f32 %v7215, %v7225
        %v7227 = vmul.f32 %v7217, %v7225
        %v7228 = vmul.f32 %v7219, %v7225
        %v7229 = vmul.f32 %v7221, %v7225
        %v7230 = vmul.f32 %v7223, %v7225
        %v7231 = vadd.f32 %v7209, %v7226
        %v7232 = vadd.f32 %v7210, %v7227
        %v7233 = vadd.f32 %v7211, %v7228
        %v7234 = vadd.f32 %v7212, %v7229
        %v7235 = vadd.f32 %v7213, %v7230
        %7236 = vrot.lane.b32.xlu0 %v6200, 96
        %v7237 = vpop.permute.xlu0 %7236
        %7238 = vrot.lane.b32.xlu0 %v6201, 96
        %v7239 = vpop.permute.xlu0 %7238
        %7240 = vrot.lane.b32.xlu0 %v6202, 96
        %v7241 = vpop.permute.xlu0 %7240
        %7242 = vrot.lane.b32.xlu0 %v6203, 96
        %v7243 = vpop.permute.xlu0 %7242
        %7244 = vrot.lane.b32.xlu0 %v6204, 96
        %v7245 = vpop.permute.xlu0 %7244
        %s7246 = sld [smem:[#allocation2 + $0x1e9]]
        %v7247 = vstv %s7246
        %v7248 = vmul.f32 %v7237, %v7247
        %v7249 = vmul.f32 %v7239, %v7247
        %v7250 = vmul.f32 %v7241, %v7247
        %v7251 = vmul.f32 %v7243, %v7247
        %v7252 = vmul.f32 %v7245, %v7247
        %v7253 = vadd.f32 %v7231, %v7248
        %v7254 = vadd.f32 %v7232, %v7249
        %v7255 = vadd.f32 %v7233, %v7250
        %v7256 = vadd.f32 %v7234, %v7251
        %v7257 = vadd.f32 %v7235, %v7252
        %7258 = vrot.lane.b32.xlu0 %v6200, 80
        %v7259 = vpop.permute.xlu0 %7258
        %7260 = vrot.lane.b32.xlu0 %v6201, 80
        %v7261 = vpop.permute.xlu0 %7260
        %7262 = vrot.lane.b32.xlu0 %v6202, 80
        %v7263 = vpop.permute.xlu0 %7262
        %7264 = vrot.lane.b32.xlu0 %v6203, 80
        %v7265 = vpop.permute.xlu0 %7264
        %7266 = vrot.lane.b32.xlu0 %v6204, 80
        %v7267 = vpop.permute.xlu0 %7266
        %s7268 = sld [smem:[#allocation2 + $0x1ea]]
        %v7269 = vstv %s7268
        %v7270 = vmul.f32 %v7259, %v7269
        %v7271 = vmul.f32 %v7261, %v7269
        %v7272 = vmul.f32 %v7263, %v7269
        %v7273 = vmul.f32 %v7265, %v7269
        %v7274 = vmul.f32 %v7267, %v7269
        %v7275 = vadd.f32 %v7253, %v7270
        %v7276 = vadd.f32 %v7254, %v7271
        %v7277 = vadd.f32 %v7255, %v7272
        %v7278 = vadd.f32 %v7256, %v7273
        %v7279 = vadd.f32 %v7257, %v7274
        %s7280 = sld [smem:[#allocation2 + $0x1eb]]
        %v7281 = vstv %s7280
        %v7282 = vmul.f32 %v7115, %v7281
        %v7283 = vmul.f32 %v7117, %v7281
        %v7284 = vmul.f32 %v7119, %v7281
        %v7285 = vmul.f32 %v7121, %v7281
        %v7286 = vmul.f32 %v7123, %v7281
        %v7287 = vadd.f32 %v7275, %v7282
        %v7288 = vadd.f32 %v7276, %v7283
        %v7289 = vadd.f32 %v7277, %v7284
        %v7290 = vadd.f32 %v7278, %v7285
        %v7291 = vadd.f32 %v7279, %v7286
        %7292 = vrot.lane.b32.xlu0 %v6212, 64
        %v7293 = vpop.permute.xlu0 %7292
        %7294 = vrot.lane.b32.xlu0 %v6213, 64
        %v7295 = vpop.permute.xlu0 %7294
        %7296 = vrot.lane.b32.xlu0 %v6214, 64
        %v7297 = vpop.permute.xlu0 %7296
        %7298 = vrot.lane.b32.xlu0 %v6215, 64
        %v7299 = vpop.permute.xlu0 %7298
        %7300 = vrot.lane.b32.xlu0 %v6216, 64
        %v7301 = vpop.permute.xlu0 %7300
        %s7302 = sld [smem:[#allocation2 + $0x1ec]]
        %v7303 = vstv %s7302
        %v7304 = vmul.f32 %v7293, %v7303
        %v7305 = vmul.f32 %v7295, %v7303
        %v7306 = vmul.f32 %v7297, %v7303
        %v7307 = vmul.f32 %v7299, %v7303
        %v7308 = vmul.f32 %v7301, %v7303
        %v7309 = vadd.f32 %v7287, %v7304
        %v7310 = vadd.f32 %v7288, %v7305
        %v7311 = vadd.f32 %v7289, %v7306
        %v7312 = vadd.f32 %v7290, %v7307
        %v7313 = vadd.f32 %v7291, %v7308
        %7314 = vrot.lane.b32.xlu0 %v6212, 48
        %v7315 = vpop.permute.xlu0 %7314
        %7316 = vrot.lane.b32.xlu0 %v6213, 48
        %v7317 = vpop.permute.xlu0 %7316
        %7318 = vrot.lane.b32.xlu0 %v6214, 48
        %v7319 = vpop.permute.xlu0 %7318
        %7320 = vrot.lane.b32.xlu0 %v6215, 48
        %v7321 = vpop.permute.xlu0 %7320
        %7322 = vrot.lane.b32.xlu0 %v6216, 48
        %v7323 = vpop.permute.xlu0 %7322
        %s7324 = sld [smem:[#allocation2 + $0x1ed]]
        %v7325 = vstv %s7324
        %v7326 = vmul.f32 %v7315, %v7325
        %v7327 = vmul.f32 %v7317, %v7325
        %v7328 = vmul.f32 %v7319, %v7325
        %v7329 = vmul.f32 %v7321, %v7325
        %v7330 = vmul.f32 %v7323, %v7325
        %v7331 = vadd.f32 %v7309, %v7326
        %v7332 = vadd.f32 %v7310, %v7327
        %v7333 = vadd.f32 %v7311, %v7328
        %v7334 = vadd.f32 %v7312, %v7329
        %v7335 = vadd.f32 %v7313, %v7330
        %7336 = vrot.lane.b32.xlu0 %v6212, 32
        %v7337 = vpop.permute.xlu0 %7336
        %7338 = vrot.lane.b32.xlu0 %v6213, 32
        %v7339 = vpop.permute.xlu0 %7338
        %7340 = vrot.lane.b32.xlu0 %v6214, 32
        %v7341 = vpop.permute.xlu0 %7340
        %7342 = vrot.lane.b32.xlu0 %v6215, 32
        %v7343 = vpop.permute.xlu0 %7342
        %7344 = vrot.lane.b32.xlu0 %v6216, 32
        %v7345 = vpop.permute.xlu0 %7344
        %s7346 = sld [smem:[#allocation2 + $0x1ee]]
        %v7347 = vstv %s7346
        %v7348 = vmul.f32 %v7337, %v7347
        %v7349 = vmul.f32 %v7339, %v7347
        %v7350 = vmul.f32 %v7341, %v7347
        %v7351 = vmul.f32 %v7343, %v7347
        %v7352 = vmul.f32 %v7345, %v7347
        %v7353 = vadd.f32 %v7331, %v7348
        %v7354 = vadd.f32 %v7332, %v7349
        %v7355 = vadd.f32 %v7333, %v7350
        %v7356 = vadd.f32 %v7334, %v7351
        %v7357 = vadd.f32 %v7335, %v7352
        %7358 = vrot.lane.b32.xlu0 %v6212, 16
        %v7359 = vpop.permute.xlu0 %7358
        %7360 = vrot.lane.b32.xlu0 %v6213, 16
        %v7361 = vpop.permute.xlu0 %7360
        %7362 = vrot.lane.b32.xlu0 %v6214, 16
        %v7363 = vpop.permute.xlu0 %7362
        %7364 = vrot.lane.b32.xlu0 %v6215, 16
        %v7365 = vpop.permute.xlu0 %7364
        %7366 = vrot.lane.b32.xlu0 %v6216, 16
        %v7367 = vpop.permute.xlu0 %7366
        %s7368 = sld [smem:[#allocation2 + $0x1ef]]
        %v7369 = vstv %s7368
        %v7370 = vmul.f32 %v7359, %v7369
        %v7371 = vmul.f32 %v7361, %v7369
        %v7372 = vmul.f32 %v7363, %v7369
        %v7373 = vmul.f32 %v7365, %v7369
        %v7374 = vmul.f32 %v7367, %v7369
        %v7375 = vadd.f32 %v7353, %v7370
        %v7376 = vadd.f32 %v7354, %v7371
        %v7377 = vadd.f32 %v7355, %v7372
        %v7378 = vadd.f32 %v7356, %v7373
        %v7379 = vadd.f32 %v7357, %v7374
        %s7380 = sld [smem:[#allocation2 + $0x1f0]]
        %v7381 = vstv %s7380
        %v7382 = vmul.f32 %v6212, %v7381
        %v7383 = vmul.f32 %v6213, %v7381
        %v7384 = vmul.f32 %v6214, %v7381
        %v7385 = vmul.f32 %v6215, %v7381
        %v7386 = vmul.f32 %v6216, %v7381
        %v7387 = vadd.f32 %v7375, %v7382
        %v7388 = vadd.f32 %v7376, %v7383
        %v7389 = vadd.f32 %v7377, %v7384
        %v7390 = vadd.f32 %v7378, %v7385
        %v7391 = vadd.f32 %v7379, %v7386
        %7392 = vrot.lane.b32.xlu0 %v6212, 112
        %v7393 = vpop.permute.xlu0 %7392
        %7394 = vrot.lane.b32.xlu0 %v6213, 112
        %v7395 = vpop.permute.xlu0 %7394
        %7396 = vrot.lane.b32.xlu0 %v6214, 112
        %v7397 = vpop.permute.xlu0 %7396
        %7398 = vrot.lane.b32.xlu0 %v6215, 112
        %v7399 = vpop.permute.xlu0 %7398
        %7400 = vrot.lane.b32.xlu0 %v6216, 112
        %v7401 = vpop.permute.xlu0 %7400
        %s7402 = sld [smem:[#allocation2 + $0x1f1]]
        %v7403 = vstv %s7402
        %v7404 = vmul.f32 %v7393, %v7403
        %v7405 = vmul.f32 %v7395, %v7403
        %v7406 = vmul.f32 %v7397, %v7403
        %v7407 = vmul.f32 %v7399, %v7403
        %v7408 = vmul.f32 %v7401, %v7403
        %v7409 = vadd.f32 %v7387, %v7404
        %v7410 = vadd.f32 %v7388, %v7405
        %v7411 = vadd.f32 %v7389, %v7406
        %v7412 = vadd.f32 %v7390, %v7407
        %v7413 = vadd.f32 %v7391, %v7408
        %7414 = vrot.lane.b32.xlu0 %v6212, 96
        %v7415 = vpop.permute.xlu0 %7414
        %7416 = vrot.lane.b32.xlu0 %v6213, 96
        %v7417 = vpop.permute.xlu0 %7416
        %7418 = vrot.lane.b32.xlu0 %v6214, 96
        %v7419 = vpop.permute.xlu0 %7418
        %7420 = vrot.lane.b32.xlu0 %v6215, 96
        %v7421 = vpop.permute.xlu0 %7420
        %7422 = vrot.lane.b32.xlu0 %v6216, 96
        %v7423 = vpop.permute.xlu0 %7422
        %s7424 = sld [smem:[#allocation2 + $0x1f2]]
        %v7425 = vstv %s7424
        %v7426 = vmul.f32 %v7415, %v7425
        %v7427 = vmul.f32 %v7417, %v7425
        %v7428 = vmul.f32 %v7419, %v7425
        %v7429 = vmul.f32 %v7421, %v7425
        %v7430 = vmul.f32 %v7423, %v7425
        %v7431 = vadd.f32 %v7409, %v7426
        %v7432 = vadd.f32 %v7410, %v7427
        %v7433 = vadd.f32 %v7411, %v7428
        %v7434 = vadd.f32 %v7412, %v7429
        %v7435 = vadd.f32 %v7413, %v7430
        %7436 = vrot.lane.b32.xlu0 %v6212, 80
        %v7437 = vpop.permute.xlu0 %7436
        %7438 = vrot.lane.b32.xlu0 %v6213, 80
        %v7439 = vpop.permute.xlu0 %7438
        %7440 = vrot.lane.b32.xlu0 %v6214, 80
        %v7441 = vpop.permute.xlu0 %7440
        %7442 = vrot.lane.b32.xlu0 %v6215, 80
        %v7443 = vpop.permute.xlu0 %7442
        %7444 = vrot.lane.b32.xlu0 %v6216, 80
        %v7445 = vpop.permute.xlu0 %7444
        %s7446 = sld [smem:[#allocation2 + $0x1f3]]
        %v7447 = vstv %s7446
        %v7448 = vmul.f32 %v7437, %v7447
        %v7449 = vmul.f32 %v7439, %v7447
        %v7450 = vmul.f32 %v7441, %v7447
        %v7451 = vmul.f32 %v7443, %v7447
        %v7452 = vmul.f32 %v7445, %v7447
        %v7453 = vadd.f32 %v7431, %v7448
        %v7454 = vadd.f32 %v7432, %v7449
        %v7455 = vadd.f32 %v7433, %v7450
        %v7456 = vadd.f32 %v7434, %v7451
        %v7457 = vadd.f32 %v7435, %v7452
        %s7458 = sld [smem:[#allocation2 + $0x1f4]]
        %v7459 = vstv %s7458
        %v7460 = vmul.f32 %v7293, %v7459
        %v7461 = vmul.f32 %v7295, %v7459
        %v7462 = vmul.f32 %v7297, %v7459
        %v7463 = vmul.f32 %v7299, %v7459
        %v7464 = vmul.f32 %v7301, %v7459
        %v7465 = vadd.f32 %v7453, %v7460
        %v7466 = vadd.f32 %v7454, %v7461
        %v7467 = vadd.f32 %v7455, %v7462
        %v7468 = vadd.f32 %v7456, %v7463
        %v7469 = vadd.f32 %v7457, %v7464
        %7470 = vrot.lane.b32.xlu0 %v6224, 64
        %v7471 = vpop.permute.xlu0 %7470
        %7472 = vrot.lane.b32.xlu0 %v6225, 64
        %v7473 = vpop.permute.xlu0 %7472
        %7474 = vrot.lane.b32.xlu0 %v6226, 64
        %v7475 = vpop.permute.xlu0 %7474
        %7476 = vrot.lane.b32.xlu0 %v6227, 64
        %v7477 = vpop.permute.xlu0 %7476
        %7478 = vrot.lane.b32.xlu0 %v6228, 64
        %v7479 = vpop.permute.xlu0 %7478
        %s7480 = sld [smem:[#allocation2 + $0x1f5]]
        %v7481 = vstv %s7480
        %v7482 = vmul.f32 %v7471, %v7481
        %v7483 = vmul.f32 %v7473, %v7481
        %v7484 = vmul.f32 %v7475, %v7481
        %v7485 = vmul.f32 %v7477, %v7481
        %v7486 = vmul.f32 %v7479, %v7481
        %v7487 = vadd.f32 %v7465, %v7482
        %v7488 = vadd.f32 %v7466, %v7483
        %v7489 = vadd.f32 %v7467, %v7484
        %v7490 = vadd.f32 %v7468, %v7485
        %v7491 = vadd.f32 %v7469, %v7486
        %7492 = vrot.lane.b32.xlu0 %v6224, 48
        %v7493 = vpop.permute.xlu0 %7492
        %7494 = vrot.lane.b32.xlu0 %v6225, 48
        %v7495 = vpop.permute.xlu0 %7494
        %7496 = vrot.lane.b32.xlu0 %v6226, 48
        %v7497 = vpop.permute.xlu0 %7496
        %7498 = vrot.lane.b32.xlu0 %v6227, 48
        %v7499 = vpop.permute.xlu0 %7498
        %7500 = vrot.lane.b32.xlu0 %v6228, 48
        %v7501 = vpop.permute.xlu0 %7500
        %s7502 = sld [smem:[#allocation2 + $0x1f6]]
        %v7503 = vstv %s7502
        %v7504 = vmul.f32 %v7493, %v7503
        %v7505 = vmul.f32 %v7495, %v7503
        %v7506 = vmul.f32 %v7497, %v7503
        %v7507 = vmul.f32 %v7499, %v7503
        %v7508 = vmul.f32 %v7501, %v7503
        %v7509 = vadd.f32 %v7487, %v7504
        %v7510 = vadd.f32 %v7488, %v7505
        %v7511 = vadd.f32 %v7489, %v7506
        %v7512 = vadd.f32 %v7490, %v7507
        %v7513 = vadd.f32 %v7491, %v7508
        %7514 = vrot.lane.b32.xlu0 %v6224, 32
        %v7515 = vpop.permute.xlu0 %7514
        %7516 = vrot.lane.b32.xlu0 %v6225, 32
        %v7517 = vpop.permute.xlu0 %7516
        %7518 = vrot.lane.b32.xlu0 %v6226, 32
        %v7519 = vpop.permute.xlu0 %7518
        %7520 = vrot.lane.b32.xlu0 %v6227, 32
        %v7521 = vpop.permute.xlu0 %7520
        %7522 = vrot.lane.b32.xlu0 %v6228, 32
        %v7523 = vpop.permute.xlu0 %7522
        %s7524 = sld [smem:[#allocation2 + $0x1f7]]
        %v7525 = vstv %s7524
        %v7526 = vmul.f32 %v7515, %v7525
        %v7527 = vmul.f32 %v7517, %v7525
        %v7528 = vmul.f32 %v7519, %v7525
        %v7529 = vmul.f32 %v7521, %v7525
        %v7530 = vmul.f32 %v7523, %v7525
        %v7531 = vadd.f32 %v7509, %v7526
        %v7532 = vadd.f32 %v7510, %v7527
        %v7533 = vadd.f32 %v7511, %v7528
        %v7534 = vadd.f32 %v7512, %v7529
        %v7535 = vadd.f32 %v7513, %v7530
        %7536 = vrot.lane.b32.xlu0 %v6224, 16
        %v7537 = vpop.permute.xlu0 %7536
        %7538 = vrot.lane.b32.xlu0 %v6225, 16
        %v7539 = vpop.permute.xlu0 %7538
        %7540 = vrot.lane.b32.xlu0 %v6226, 16
        %v7541 = vpop.permute.xlu0 %7540
        %7542 = vrot.lane.b32.xlu0 %v6227, 16
        %v7543 = vpop.permute.xlu0 %7542
        %7544 = vrot.lane.b32.xlu0 %v6228, 16
        %v7545 = vpop.permute.xlu0 %7544
        %s7546 = sld [smem:[#allocation2 + $0x1f8]]
        %v7547 = vstv %s7546
        %v7548 = vmul.f32 %v7537, %v7547
        %v7549 = vmul.f32 %v7539, %v7547
        %v7550 = vmul.f32 %v7541, %v7547
        %v7551 = vmul.f32 %v7543, %v7547
        %v7552 = vmul.f32 %v7545, %v7547
        %v7553 = vadd.f32 %v7531, %v7548
        %v7554 = vadd.f32 %v7532, %v7549
        %v7555 = vadd.f32 %v7533, %v7550
        %v7556 = vadd.f32 %v7534, %v7551
        %v7557 = vadd.f32 %v7535, %v7552
        %s7558 = sld [smem:[#allocation2 + $0x1f9]]
        %v7559 = vstv %s7558
        %v7560 = vmul.f32 %v6224, %v7559
        %v7561 = vmul.f32 %v6225, %v7559
        %v7562 = vmul.f32 %v6226, %v7559
        %v7563 = vmul.f32 %v6227, %v7559
        %v7564 = vmul.f32 %v6228, %v7559
        %v7565 = vadd.f32 %v7553, %v7560
        %v7566 = vadd.f32 %v7554, %v7561
        %v7567 = vadd.f32 %v7555, %v7562
        %v7568 = vadd.f32 %v7556, %v7563
        %v7569 = vadd.f32 %v7557, %v7564
        %7570 = vrot.lane.b32.xlu0 %v6224, 112
        %v7571 = vpop.permute.xlu0 %7570
        %7572 = vrot.lane.b32.xlu0 %v6225, 112
        %v7573 = vpop.permute.xlu0 %7572
        %7574 = vrot.lane.b32.xlu0 %v6226, 112
        %v7575 = vpop.permute.xlu0 %7574
        %7576 = vrot.lane.b32.xlu0 %v6227, 112
        %v7577 = vpop.permute.xlu0 %7576
        %7578 = vrot.lane.b32.xlu0 %v6228, 112
        %v7579 = vpop.permute.xlu0 %7578
        %s7580 = sld [smem:[#allocation2 + $0x1fa]]
        %v7581 = vstv %s7580
        %v7582 = vmul.f32 %v7571, %v7581
        %v7583 = vmul.f32 %v7573, %v7581
        %v7584 = vmul.f32 %v7575, %v7581
        %v7585 = vmul.f32 %v7577, %v7581
        %v7586 = vmul.f32 %v7579, %v7581
        %v7587 = vadd.f32 %v7565, %v7582
        %v7588 = vadd.f32 %v7566, %v7583
        %v7589 = vadd.f32 %v7567, %v7584
        %v7590 = vadd.f32 %v7568, %v7585
        %v7591 = vadd.f32 %v7569, %v7586
        %7592 = vrot.lane.b32.xlu0 %v6224, 96
        %v7593 = vpop.permute.xlu0 %7592
        %7594 = vrot.lane.b32.xlu0 %v6225, 96
        %v7595 = vpop.permute.xlu0 %7594
        %7596 = vrot.lane.b32.xlu0 %v6226, 96
        %v7597 = vpop.permute.xlu0 %7596
        %7598 = vrot.lane.b32.xlu0 %v6227, 96
        %v7599 = vpop.permute.xlu0 %7598
        %7600 = vrot.lane.b32.xlu0 %v6228, 96
        %v7601 = vpop.permute.xlu0 %7600
        %s7602 = sld [smem:[#allocation2 + $0x1fb]]
        %v7603 = vstv %s7602
        %v7604 = vmul.f32 %v7593, %v7603
        %v7605 = vmul.f32 %v7595, %v7603
        %v7606 = vmul.f32 %v7597, %v7603
        %v7607 = vmul.f32 %v7599, %v7603
        %v7608 = vmul.f32 %v7601, %v7603
        %v7609 = vadd.f32 %v7587, %v7604
        %v7610 = vadd.f32 %v7588, %v7605
        %v7611 = vadd.f32 %v7589, %v7606
        %v7612 = vadd.f32 %v7590, %v7607
        %v7613 = vadd.f32 %v7591, %v7608
        %7614 = vrot.lane.b32.xlu0 %v6224, 80
        %v7615 = vpop.permute.xlu0 %7614
        %7616 = vrot.lane.b32.xlu0 %v6225, 80
        %v7617 = vpop.permute.xlu0 %7616
        %7618 = vrot.lane.b32.xlu0 %v6226, 80
        %v7619 = vpop.permute.xlu0 %7618
        %7620 = vrot.lane.b32.xlu0 %v6227, 80
        %v7621 = vpop.permute.xlu0 %7620
        %7622 = vrot.lane.b32.xlu0 %v6228, 80
        %v7623 = vpop.permute.xlu0 %7622
        %s7624 = sld [smem:[#allocation2 + $0x1fc]]
        %v7625 = vstv %s7624
        %v7626 = vmul.f32 %v7615, %v7625
        %v7627 = vmul.f32 %v7617, %v7625
        %v7628 = vmul.f32 %v7619, %v7625
        %v7629 = vmul.f32 %v7621, %v7625
        %v7630 = vmul.f32 %v7623, %v7625
        %v7631 = vadd.f32 %v7609, %v7626
        %v7632 = vadd.f32 %v7610, %v7627
        %v7633 = vadd.f32 %v7611, %v7628
        %v7634 = vadd.f32 %v7612, %v7629
        %v7635 = vadd.f32 %v7613, %v7630
        %s7636 = sld [smem:[#allocation2 + $0x1fd]]
        %v7637 = vstv %s7636
        %v7638 = vmul.f32 %v7471, %v7637
        %v7639 = vmul.f32 %v7473, %v7637
        %v7640 = vmul.f32 %v7475, %v7637
        %v7641 = vmul.f32 %v7477, %v7637
        %v7642 = vmul.f32 %v7479, %v7637
        %v7643 = vadd.f32 %v7631, %v7638
        %v7644 = vadd.f32 %v7632, %v7639
        %v7645 = vadd.f32 %v7633, %v7640
        %v7646 = vadd.f32 %v7634, %v7641
        %v7647 = vadd.f32 %v7635, %v7642
        %s7648 = sld [smem:[#allocation2 + $0x1fe]]
        %v7649 = vstv %s7648
        %v7650 = vadd.f32 %v7643, %v7649
        %v7651 = vadd.f32 %v7644, %v7649
        %v7652 = vadd.f32 %v7645, %v7649
        %v7653 = vadd.f32 %v7646, %v7649
        %v7654 = vadd.f32 %v7647, %v7649
        %v7655 = vadd.f32 %v7650, %v208
        %v7656 = vadd.f32 %v7651, %v209
        %v7657 = vadd.f32 %v7652, %v210
        %v7658 = vadd.f32 %v7653, %v211
        %v7659 = vadd.f32 %v7654, %v212
        %7660 = vadd.xlane.f32.xlu0 %v7655
        %v7661 = vpop.xlane.xlu0 %7660
        %7662 = vadd.xlane.f32.xlu0 %v7656
        %v7663 = vpop.xlane.xlu0 %7662
        %7664 = vadd.xlane.f32.xlu0 %v7657
        %v7665 = vpop.xlane.xlu0 %7664
        %7666 = vadd.xlane.f32.xlu0 %v7658
        %v7667 = vpop.xlane.xlu0 %7666
        %7668 = vadd.xlane.f32.xlu0 %v7659
        %v7669 = vpop.xlane.xlu0 %7668
        %v7670 = vrcp.pop 128.0
        %v7671 = vmul.f32 %v7661, %v7670
        %v7672 = vmul.f32 %v7663, %v7670
        %v7673 = vmul.f32 %v7665, %v7670
        %v7674 = vmul.f32 %v7667, %v7670
        %v7675 = vmul.f32 %v7669, %v7670
        %v7676 = vsub.f32 %v7655, %v7671
        %v7677 = vsub.f32 %v7656, %v7672
        %v7678 = vsub.f32 %v7657, %v7673
        %v7679 = vsub.f32 %v7658, %v7674
        %v7680 = vsub.f32 %v7659, %v7675
        %7681 = vst [vmem:[%s194] sm:$0xff] %v7676
        %7682 = vst [vmem:[%s194 + $0x8] sm:$0xff] %v7677
        %7683 = vst [vmem:[%s194 + $0x10] sm:$0xff] %v7678
        %7684 = vst [vmem:[%s194 + $0x18] sm:$0xff] %v7679
        %7685 = vst [vmem:[%s194 + $0x20] sm:$0xff] %v7680
        %s7686 = sand.u32 %s99, 1
        %s7687 = scalar_lea.sflag [#allocation3], %s7686
        %s7688 = sand.u32 %s99, 1
        %s7689 = smul.addr %s7688, 40
        %s7690 = scalar_lea.vmem [#allocation5], %s7689
        // Predicated region
        $region37: #{tpu_custom_call.1} parent=31 // pred_check
          %p7691 = pneg %p109
        $region38: #{tpu_custom_call.1} parent=31 // pred_check_branch
          %7693 = sbr.rel (%p7691) target = $region40
        $region39: #{tpu_custom_call.1} parent=31 // pred_region
          %s7694 = smul.u32 5, %s18
          %s7696 = ssub.s32 640, 640
          %7697 = vsyncadd %s7687, %s7696
          %s7698 = smul.addr %s7694, 128
          %s7699 = scalar_lea.hbm %s3, %s7698
          %s7700 = sshll.u32 %s7690, 4
          %s7701 = int_to_ptr.vmem [resolvable:$true] %s7700
          %7706 = dma.vmem_to_hbm [thread:$0]  %s7701, 640, %s7699, %s7687, 128, 128, 8
        $region40: #{tpu_custom_call.1} parent=31 // pred_fallthru
          _
      $region32: #{tpu_custom_call.1} parent=5 // pred_fallthru
        _
      %p7707 = scmp.le.s32.totalorder 2, %s13
      // Predicated region
      $region41: #{tpu_custom_call.1} parent=5 // pred_check
        %p7708 = pneg %p7707
      $region42: #{tpu_custom_call.1} parent=5 // pred_check_branch
        %7710 = sbr.rel (%p7708) target = $region44
      $region43: #{tpu_custom_call.1} parent=5 // pred_region
        %s7711 = ssub.s32 %s13, 2
        // Predicated region
        $region45: #{tpu_custom_call.1} parent=43 // pred_check
          %p7712 = pneg %p115
        $region46: #{tpu_custom_call.1} parent=43 // pred_check_branch
          %7714 = sbr.rel (%p7712) target = $region48
        $region47: #{tpu_custom_call.1} parent=43 // pred_region
          %s7715 = sand.u32 %s100, 1
          %s7716 = scalar_lea.sflag [#allocation3], %s7715
          %s7717 = sand.u32 %s100, 1
          %s7718 = smul.addr %s7717, 40
          %s7719 = scalar_lea.vmem [#allocation5], %s7718
          %7720 = dma.done %s7716, 640
        $region48: #{tpu_custom_call.1} parent=43 // pred_fallthru
          _
      $region44: #{tpu_custom_call.1} parent=5 // pred_fallthru
        _
    $region6: #{tpu_custom_call.1} parent=1 // loop_footer
      %s17 = sadd.s32 1, %s13
    $region7: #{tpu_custom_call.1} parent=1 // loop_footer_branch
      %12 = sbr.rel target = $region3
    $region8: #{tpu_custom_call.1} parent=1 // loop_exit
      _
    %7721 = vsyncpa [#allocation3], 1
    %s7722 = scalar_lea.sflag [#allocation3], 1
    %7723 = vsyncpa %s7722, 1
    %7724 = vsyncpa [#allocation4], 1
    %s7725 = scalar_lea.sflag [#allocation4], 1
    %7726 = vsyncpa %s7725, 1

</llo_original>
